<compile_context>
chip_gen: v5e
topology: v5e:2x2
jax: 0.10.0
libtpu: 0.0.40
codegen_flags: <defaults>
</compile_context>

<pallas_src>
import functools

import numpy as np
import jax
import jax.numpy as jnp
from jax import lax
from jax.experimental import pallas as pl
from jax.experimental.pallas import tpu as pltpu

KSZ = 3            # every layer uses a 3x3 kernel
TAPS = KSZ * KSZ   # 9
LANE = 128         # TPU lane width; folded (batch*channel) dims are padded to this


# ---------------------------------------------------------------------------
# Host-side (trace-time) spatial selection matrices.
# S[tap, o, i] == 1  iff flat (row-major) input position i feeds tap `tap` of flat
# output position o.  Stride / padding / dilation / output_padding fold in here, so
# the kernel only does dense matmuls.
# ---------------------------------------------------------------------------
@functools.lru_cache(maxsize=None)
def _conv_selection(h, w, stride, pad):
    ho = (h + 2 * pad - KSZ) // stride + 1
    wo = (w + 2 * pad - KSZ) // stride + 1
    s = np.zeros((TAPS, ho * wo, h * w), np.float32)
    for dh in range(KSZ):
        for dw in range(KSZ):
            t = dh * KSZ + dw
            for oh in range(ho):
                ih = stride * oh + dh - pad
                if ih < 0 or ih >= h:
                    continue
                for ow in range(wo):
                    iw = stride * ow + dw - pad
                    if iw < 0 or iw >= w:
                        continue
                    s[t, oh * wo + ow, ih * w + iw] = 1.0
    return s, ho, wo


@functools.lru_cache(maxsize=None)
def _deconv_selection(h, w, stride=2, pad=1, opad=1):
    """ConvTranspose2d(k=3, stride=2, padding=1, output_padding=1) expressed as a
    stride-1 conv over the zero-dilated, asymmetrically padded input (weights are
    flipped in `_deconv_w_taps`)."""
    ho = (h - 1) * stride - 2 * pad + KSZ + opad
    wo = (w - 1) * stride - 2 * pad + KSZ + opad
    pb = KSZ - 1 - pad                       # leading pad of the equivalent conv
    s = np.zeros((TAPS, ho * wo, h * w), np.float32)
    for dh in range(KSZ):
        for dw in range(KSZ):
            t = dh * KSZ + dw
            for oh in range(ho):
                r = oh + dh - pb             # row coordinate in the dilated input
                if r < 0 or r % stride != 0:
                    continue
                ih = r // stride
                if ih >= h:
                    continue
                for ow in range(wo):
                    c = ow + dw - pb
                    if c < 0 or c % stride != 0:
                        continue
                    iw = c // stride
                    if iw >= w:
                        continue
                    s[t, oh * wo + ow, ih * w + iw] = 1.0
    return s, ho, wo


# ---------------------------------------------------------------------------
# Weight layout conversion (host-side, tiny).
# ---------------------------------------------------------------------------
def _conv_w_taps(w_oihw):
    """(Cout, Cin, kh, kw) -> (9, Cin, Cout), tap index = kh*3 + kw."""
    cout, cin = w_oihw.shape[0], w_oihw.shape[1]
    return jnp.transpose(w_oihw, (2, 3, 1, 0)).reshape(TAPS, cin, cout)


def _deconv_w_taps(wt_iohw):
    """ConvTranspose2d weight (Cin, Cout, kh, kw) -> (9, Cin, Cout) of the equivalent
    forward conv (spatially flipped taps)."""
    cin, cout = wt_iohw.shape[0], wt_iohw.shape[1]
    wf = jnp.flip(wt_iohw, axis=(2, 3))
    return jnp.transpose(wf, (2, 3, 0, 1)).reshape(TAPS, cin, cout)


def _round_up(v, m):
    return -(-v // m) * m


def _choose_order(hw, howo, p_in, p_out):
    """MXU-tile-rounded cost of the two evaluation orders (M->8, K/N->128). Returns the
    cheaper of 'cols' (S first, single deep-K weight matmul) or 'xw' (weights first,
    nine lane-sliced S matmuls).  128 rounding is chip-agnostic (conservative for the
    256-wide v6e/v7x MXU; exact for v5e)."""
    r = _round_up
    cols = (TAPS * r(howo, 8) * r(hw, LANE) * r(p_in, LANE)
            + r(howo, 8) * r(TAPS * p_in, LANE) * r(p_out, LANE))
    xw = (r(hw, 8) * r(p_in, LANE) * r(TAPS * p_out, LANE)
          + TAPS * r(howo, 8) * r(hw, LANE) * r(p_out, LANE))
    return "cols" if cols <= xw else "xw"


def _default_b_blk(batch):
    """>=2 grid steps on multi-TensorCore chips (v4/v5p/v7x) so ('parallel',) spreads
    work; a single big step on single-TC chips (v5e/v6e).  Capped at 4 so the
    block-diagonal batch expansion of the weights stays tiny."""
    try:
        kind = jax.devices()[0].device_kind.lower()
    except Exception:
        kind = ""
    multi_tc = any(t in kind for t in ("v4", "v5p", "v7", "7x"))
    if multi_tc and batch >= 2:
        return max(1, min(4, -(-batch // 2)))
    return max(1, min(batch, 4))


def _pack_weights(taps, bias, b_blk, cin, cout, p_in, p_out, order):
    """Expand per-tap weights (9, Cin, Cout) into a lane-padded, block-diagonal-over-
    batch operator matching the folded (image, channel) lane layout, plus the tiled
    bias row.  All host/XLA-side."""
    eye = jnp.eye(b_blk, dtype=taps.dtype)
    wb = jnp.einsum("tcu,bd->tbcdu", taps, eye)               # (9, B, Cin, B, Cout)
    wb = wb.reshape(TAPS, b_blk * cin, b_blk * cout)
    wb = jnp.pad(wb, ((0, 0), (0, p_in - b_blk * cin), (0, p_out - b_blk * cout)))
    if order == "cols":
        w_op = wb.reshape(TAPS * p_in, p_out)                 # rows ordered (tap, image, cin)
    else:
        w_op = jnp.transpose(wb, (1, 0, 2)).reshape(p_in, TAPS * p_out)  # lanes (tap, image, cout)
    b_op = jnp.pad(jnp.tile(bias, b_blk), (0, p_out - b_blk * cout)).reshape(1, p_out)
    return w_op, b_op


def _const_index_map(nd):
    return lambda i: (0,) * nd


# ---------------------------------------------------------------------------
# Fused kernel: one grid step = b_blk images, all 4 layers resident in VMEM.
# ---------------------------------------------------------------------------
def _layer_compute(x, s_ref, w_ref, b_ref, order, act):
    """One conv / transposed-conv layer on a lane-padded, batch-folded activation.

    x      : (HW, P_in) f32; lanes = (image-in-block, channel), zero padded to P_in.
    s_ref  : (9, HoWo, HW) bf16 0/1 selection matrices (one per 3x3 tap).
    w_ref  : 'cols' -> (9*P_in, P_out);  'xw' -> (P_in, 9*P_out).
    b_ref  : (1, P_out) f32 bias, tiled per image, zero in pad lanes.
    """
    howo = s_ref.shape[1]
    p_out = b_ref.shape[1]
    if order == "cols":
        # 9 lane-dense spatial gathers, then ONE deep-K channel-mixing matmul.
        pieces = [jnp.dot(s_ref[t].astype(jnp.float32), x,
                          preferred_element_type=jnp.float32)
                  for t in range(TAPS)]
        cols = jnp.concatenate(pieces, axis=1)                 # (HoWo, 9*P_in), 128-aligned
        y = jnp.dot(cols, w_ref[...], preferred_element_type=jnp.float32)
    else:
        # ONE channel-mixing matmul for all taps, then 9 lane-sliced spatial gathers.
        xw = jnp.dot(x, w_ref[...], preferred_element_type=jnp.float32)  # (HW, 9*P_out)
        y = jnp.zeros((howo, p_out), jnp.float32)
        for t in range(TAPS):
            y = y + jnp.dot(s_ref[t].astype(jnp.float32),
                            xw[:, t * p_out:(t + 1) * p_out],
                            preferred_element_type=jnp.float32)
    y = y + b_ref[...]
    if act == "relu":
        return jnp.maximum(y, 0.0)
    return jax.nn.sigmoid(y)


def _build_kernel(orders, acts):
    def kernel(x_ref,
               s1, w1, b1, s2, w2, b2, s3, w3, b3, s4, w4, b4,
               o_ref):
        h = x_ref[0]                                          # (HW, P_in) for this block
        layer_refs = ((s1, w1, b1), (s2, w2, b2), (s3, w3, b3), (s4, w4, b4))
        for (s_ref, w_ref, b_ref), order, act in zip(layer_refs, orders, acts):
            h = _layer_compute(h, s_ref, w_ref, b_ref, order, act)
        o_ref[0] = h                                          # lane-dense (HoWo, P_out)
    return kernel


# ---------------------------------------------------------------------------
# Forward wrapper: NCHW in, NCHW out (matches the PyTorch module).
# ---------------------------------------------------------------------------
@functools.partial(jax.jit, static_argnames=("b_blk",))
def autoencoder_forward(x_nchw, params, b_blk=None):
    b, c, h, w = x_nchw.shape
    if b_blk is None:
        b_blk = _default_b_blk(b)
    nblk = -(-b // b_blk)
    b_pad = nblk * b_blk

    s1, h1, w1 = _conv_selection(h, w, 2, 1)        # 16x16 -> 8x8
    s2, h2, w2 = _conv_selection(h1, w1, 2, 1)      # 8x8   -> 4x4
    s3, h3, w3 = _deconv_selection(h2, w2)          # 4x4   -> 8x8
    s4, h4, w4 = _deconv_selection(h3, w3)          # 8x8   -> 16x16

    layer_defs = [
        (s1, h * w,   h1 * w1, 3,  32, _conv_w_taps(params["w1"]),   params["b1"], "relu"),
        (s2, h1 * w1, h2 * w2, 32, 64, _conv_w_taps(params["w2"]),   params["b2"], "relu"),
        (s3, h2 * w2, h3 * w3, 64, 32, _deconv_w_taps(params["w3"]), params["b3"], "relu"),
        (s4, h3 * w3, h4 * w4, 32, 3,  _deconv_w_taps(params["w4"]), params["b4"], "sigmoid"),
    ]

    const_ops, orders, acts = [], [], []
    for s_np, hw, howo, cin, cout, taps, bias, act in layer_defs:
        p_in = _round_up(b_blk * cin, LANE)
        p_out = _round_up(b_blk * cout, LANE)
        order = _choose_order(hw, howo, p_in, p_out)
        w_op, b_op = _pack_weights(taps, bias, b_blk, cin, cout, p_in, p_out, order)
        const_ops += [jnp.asarray(s_np, jnp.bfloat16), w_op, b_op]   # S is exact in bf16
        orders.append(order)
        acts.append(act)

    p_in1 = _round_up(b_blk * c, LANE)
    cout4 = layer_defs[-1][4]
    p_out4 = _round_up(b_blk * cout4, LANE)

    # NCHW -> per-block lane-dense slabs (HW, b_blk*C), zero padded to 128-mult lanes.
    x = jnp.pad(x_nchw, ((0, b_pad - b), (0, 0), (0, 0), (0, 0)))
    x = x.reshape(nblk, b_blk, c, h * w)
    x = jnp.transpose(x, (0, 3, 1, 2)).reshape(nblk, h * w, b_blk * c)
    x = jnp.pad(x, ((0, 0), (0, 0), (0, p_in1 - b_blk * c)))

    in_specs = [pl.BlockSpec((1, h * w, p_in1), lambda i: (i, 0, 0))]
    for op in const_ops:
        in_specs.append(pl.BlockSpec(op.shape, _const_index_map(op.ndim)))

    out = pl.pallas_call(
        _build_kernel(tuple(orders), tuple(acts)),
        out_shape=jax.ShapeDtypeStruct((nblk, h4 * w4, p_out4), jnp.float32),
        grid=(nblk,),
        in_specs=in_specs,
        out_specs=pl.BlockSpec((1, h4 * w4, p_out4), lambda i: (i, 0, 0)),
        compiler_params=pltpu.CompilerParams(
            dimension_semantics=("parallel",),
        ),
    )(x, *const_ops)

    # (nblk, Ho*Wo, padded b_blk*Cout) -> NCHW, dropping lane + batch padding.
    y = out[:, :, :b_blk * cout4].reshape(nblk, h4 * w4, b_blk, cout4)
    y = jnp.transpose(y, (0, 2, 3, 1)).reshape(b_pad, cout4, h4, w4)
    return y[:b]


# ---------------------------------------------------------------------------
# Pure-JAX reference (lax conv) for correctness checking.
# ---------------------------------------------------------------------------
def reference_forward(x_nchw, p):
    dn = ("NHWC", "HWIO", "NHWC")
    hi = lax.Precision.HIGHEST
    x = jnp.transpose(x_nchw, (0, 2, 3, 1))

    def conv(x, w_oihw, bias, act):
        w = jnp.transpose(w_oihw, (2, 3, 1, 0))
        y = lax.conv_general_dilated(x, w, (2, 2), ((1, 1), (1, 1)),
                                     dimension_numbers=dn, precision=hi) + bias
        return act(y)

    def deconv(x, wt_iohw, bias, act):
        w_conv = jnp.transpose(jnp.flip(wt_iohw, (2, 3)), (1, 0, 2, 3))
        w = jnp.transpose(w_conv, (2, 3, 1, 0))
        y = lax.conv_general_dilated(x, w, (1, 1), ((1, 2), (1, 2)),
                                     lhs_dilation=(2, 2),
                                     dimension_numbers=dn, precision=hi) + bias
        return act(y)

    x = conv(x, p["w1"], p["b1"], jax.nn.relu)
    x = conv(x, p["w2"], p["b2"], jax.nn.relu)
    x = deconv(x, p["w3"], p["b3"], jax.nn.relu)
    x = deconv(x, p["w4"], p["b4"], jax.nn.sigmoid)
    return jnp.transpose(x, (0, 3, 1, 2))


if __name__ == "__main__":
    key = jax.random.PRNGKey(0)
    ks = jax.random.split(key, 10)

    # deterministic synthetic parameters (shapes from the PyTorch __init__)
    params = {
        "w1": 0.1 * jax.random.normal(ks[1], (32, 3, 3, 3), jnp.float32),    # Conv2d(3,32)
        "b1": 0.1 * jax.random.normal(ks[2], (32,), jnp.float32),
        "w2": 0.05 * jax.random.normal(ks[3], (64, 32, 3, 3), jnp.float32),  # Conv2d(32,64)
        "b2": 0.1 * jax.random.normal(ks[4], (64,), jnp.float32),
        "w3": 0.05 * jax.random.normal(ks[5], (64, 32, 3, 3), jnp.float32),  # ConvT(64,32): (Cin,Cout,k,k)
        "b3": 0.1 * jax.random.normal(ks[6], (32,), jnp.float32),
        "w4": 0.1 * jax.random.normal(ks[7], (32, 3, 3, 3), jnp.float32),    # ConvT(32,3): (Cin,Cout,k,k)
        "b4": 0.1 * jax.random.normal(ks[8], (3,), jnp.float32),
    }

    x = jax.random.normal(ks[0], (2, 3, 16, 16), jnp.float32)   # NCHW like PyTorch

    y = jax.block_until_ready(autoencoder_forward(x, params))
    assert y.shape == (2, 3, 16, 16), y.shape
    y_ref = jax.block_until_ready(reference_forward(x, params))
    np.testing.assert_allclose(np.asarray(y), np.asarray(y_ref), atol=1e-4, rtol=1e-4)

    # Also exercise the multi-step grid + batch-tail padding path (B=3, b_blk=2).
    x3 = jax.random.normal(ks[9], (3, 3, 16, 16), jnp.float32)
    y3 = jax.block_until_ready(autoencoder_forward(x3, params, b_blk=2))
    y3_ref = jax.block_until_ready(reference_forward(x3, params))
    np.testing.assert_allclose(np.asarray(y3), np.asarray(y3_ref), atol=1e-4, rtol=1e-4)

    print("KERNEL_OK")
</pallas_src>

<mosaic_0001>
module attributes {stable_mosaic.version = 11 : i64} {
  func.func @kernel(%arg0: i32, %arg1: memref<1x256x128xf32, #tpu.memory_space<vmem>>, %arg2: memref<9x64x256xbf16, #tpu.memory_space<vmem>>, %arg3: memref<1152x128xf32, #tpu.memory_space<vmem>>, %arg4: memref<1x128xf32, #tpu.memory_space<vmem>>, %arg5: memref<9x16x64xbf16, #tpu.memory_space<vmem>>, %arg6: memref<1152x128xf32, #tpu.memory_space<vmem>>, %arg7: memref<1x128xf32, #tpu.memory_space<vmem>>, %arg8: memref<9x64x16xbf16, #tpu.memory_space<vmem>>, %arg9: memref<128x1152xf32, #tpu.memory_space<vmem>>, %arg10: memref<1x128xf32, #tpu.memory_space<vmem>>, %arg11: memref<9x256x64xbf16, #tpu.memory_space<vmem>>, %arg12: memref<128x1152xf32, #tpu.memory_space<vmem>>, %arg13: memref<1x128xf32, #tpu.memory_space<vmem>>, %arg14: memref<1x256x128xf32, #tpu.memory_space<vmem>>) attributes {dimension_semantics = [#tpu.dimension_semantics<parallel>], iteration_bounds = array<i64: 1>, scalar_prefetch = 0 : i64, scratch_operands = 0 : i64, tpu.core_type = #tpu.core_type<tc>, window_params = [{transform_indices = @transform_0, window_bounds = array<i64: 1, 256, 128>}, {pipeline_mode = #tpu.pipeline_mode<synchronous>, transform_indices = @transform_1, window_bounds = array<i64: 9, 64, 256>}, {pipeline_mode = #tpu.pipeline_mode<synchronous>, transform_indices = @transform_2, window_bounds = array<i64: 1152, 128>}, {pipeline_mode = #tpu.pipeline_mode<synchronous>, transform_indices = @transform_3, window_bounds = array<i64: 1, 128>}, {pipeline_mode = #tpu.pipeline_mode<synchronous>, transform_indices = @transform_4, window_bounds = array<i64: 9, 16, 64>}, {pipeline_mode = #tpu.pipeline_mode<synchronous>, transform_indices = @transform_5, window_bounds = array<i64: 1152, 128>}, {pipeline_mode = #tpu.pipeline_mode<synchronous>, transform_indices = @transform_6, window_bounds = array<i64: 1, 128>}, {pipeline_mode = #tpu.pipeline_mode<synchronous>, transform_indices = @transform_7, window_bounds = array<i64: 9, 64, 16>}, {pipeline_mode = #tpu.pipeline_mode<synchronous>, transform_indices = @transform_8, window_bounds = array<i64: 128, 1152>}, {pipeline_mode = #tpu.pipeline_mode<synchronous>, transform_indices = @transform_9, window_bounds = array<i64: 1, 128>}, {pipeline_mode = #tpu.pipeline_mode<synchronous>, transform_indices = @transform_10, window_bounds = array<i64: 9, 256, 64>}, {pipeline_mode = #tpu.pipeline_mode<synchronous>, transform_indices = @transform_11, window_bounds = array<i64: 128, 1152>}, {pipeline_mode = #tpu.pipeline_mode<synchronous>, transform_indices = @transform_12, window_bounds = array<i64: 1, 128>}, {transform_indices = @transform_13, window_bounds = array<i64: 1, 256, 128>}]} {
    %c0 = arith.constant 0 : index
    %c0_0 = arith.constant 0 : index
    %c0_1 = arith.constant 0 : index
    %0 = vector.load %arg1[%c0, %c0_0, %c0_1] : memref<1x256x128xf32, #tpu.memory_space<vmem>>, vector<1x256x128xf32>
    %1 = vector.shape_cast %0 : vector<1x256x128xf32> to vector<256x128xf32>
    %c0_2 = arith.constant 0 : index
    %c0_3 = arith.constant 0 : index
    %c0_4 = arith.constant 0 : index
    %2 = vector.load %arg2[%c0_2, %c0_3, %c0_4] : memref<9x64x256xbf16, #tpu.memory_space<vmem>>, vector<1x64x256xbf16>
    %3 = vector.shape_cast %2 : vector<1x64x256xbf16> to vector<64x256xbf16>
    %4 = arith.extf %3 : vector<64x256xbf16> to vector<64x256xf32>
    %cst = arith.constant dense<0.000000e+00> : vector<64x128xf32>
    %5 = tpu.matmul %4, %1, %cst {dimension_numbers = #tpu.dot_dimension_numbers<[1], [0], [0], [1], [0, 0, 1, 1], [], []>} : vector<64x256xf32>, vector<256x128xf32>, vector<64x128xf32> -> vector<64x128xf32>
    %c1 = arith.constant 1 : index
    %c0_5 = arith.constant 0 : index
    %c0_6 = arith.constant 0 : index
    %6 = vector.load %arg2[%c1, %c0_5, %c0_6] : memref<9x64x256xbf16, #tpu.memory_space<vmem>>, vector<1x64x256xbf16>
    %7 = vector.shape_cast %6 : vector<1x64x256xbf16> to vector<64x256xbf16>
    %8 = arith.extf %7 : vector<64x256xbf16> to vector<64x256xf32>
    %cst_7 = arith.constant dense<0.000000e+00> : vector<64x128xf32>
    %9 = tpu.matmul %8, %1, %cst_7 {dimension_numbers = #tpu.dot_dimension_numbers<[1], [0], [0], [1], [0, 0, 1, 1], [], []>} : vector<64x256xf32>, vector<256x128xf32>, vector<64x128xf32> -> vector<64x128xf32>
    %c2 = arith.constant 2 : index
    %c0_8 = arith.constant 0 : index
    %c0_9 = arith.constant 0 : index
    %10 = vector.load %arg2[%c2, %c0_8, %c0_9] : memref<9x64x256xbf16, #tpu.memory_space<vmem>>, vector<1x64x256xbf16>
    %11 = vector.shape_cast %10 : vector<1x64x256xbf16> to vector<64x256xbf16>
    %12 = arith.extf %11 : vector<64x256xbf16> to vector<64x256xf32>
    %cst_10 = arith.constant dense<0.000000e+00> : vector<64x128xf32>
    %13 = tpu.matmul %12, %1, %cst_10 {dimension_numbers = #tpu.dot_dimension_numbers<[1], [0], [0], [1], [0, 0, 1, 1], [], []>} : vector<64x256xf32>, vector<256x128xf32>, vector<64x128xf32> -> vector<64x128xf32>
    %c3 = arith.constant 3 : index
    %c0_11 = arith.constant 0 : index
    %c0_12 = arith.constant 0 : index
    %14 = vector.load %arg2[%c3, %c0_11, %c0_12] : memref<9x64x256xbf16, #tpu.memory_space<vmem>>, vector<1x64x256xbf16>
    %15 = vector.shape_cast %14 : vector<1x64x256xbf16> to vector<64x256xbf16>
    %16 = arith.extf %15 : vector<64x256xbf16> to vector<64x256xf32>
    %cst_13 = arith.constant dense<0.000000e+00> : vector<64x128xf32>
    %17 = tpu.matmul %16, %1, %cst_13 {dimension_numbers = #tpu.dot_dimension_numbers<[1], [0], [0], [1], [0, 0, 1, 1], [], []>} : vector<64x256xf32>, vector<256x128xf32>, vector<64x128xf32> -> vector<64x128xf32>
    %c4 = arith.constant 4 : index
    %c0_14 = arith.constant 0 : index
    %c0_15 = arith.constant 0 : index
    %18 = vector.load %arg2[%c4, %c0_14, %c0_15] : memref<9x64x256xbf16, #tpu.memory_space<vmem>>, vector<1x64x256xbf16>
    %19 = vector.shape_cast %18 : vector<1x64x256xbf16> to vector<64x256xbf16>
    %20 = arith.extf %19 : vector<64x256xbf16> to vector<64x256xf32>
    %cst_16 = arith.constant dense<0.000000e+00> : vector<64x128xf32>
    %21 = tpu.matmul %20, %1, %cst_16 {dimension_numbers = #tpu.dot_dimension_numbers<[1], [0], [0], [1], [0, 0, 1, 1], [], []>} : vector<64x256xf32>, vector<256x128xf32>, vector<64x128xf32> -> vector<64x128xf32>
    %c5 = arith.constant 5 : index
    %c0_17 = arith.constant 0 : index
    %c0_18 = arith.constant 0 : index
    %22 = vector.load %arg2[%c5, %c0_17, %c0_18] : memref<9x64x256xbf16, #tpu.memory_space<vmem>>, vector<1x64x256xbf16>
    %23 = vector.shape_cast %22 : vector<1x64x256xbf16> to vector<64x256xbf16>
    %24 = arith.extf %23 : vector<64x256xbf16> to vector<64x256xf32>
    %cst_19 = arith.constant dense<0.000000e+00> : vector<64x128xf32>
    %25 = tpu.matmul %24, %1, %cst_19 {dimension_numbers = #tpu.dot_dimension_numbers<[1], [0], [0], [1], [0, 0, 1, 1], [], []>} : vector<64x256xf32>, vector<256x128xf32>, vector<64x128xf32> -> vector<64x128xf32>
    %c6 = arith.constant 6 : index
    %c0_20 = arith.constant 0 : index
    %c0_21 = arith.constant 0 : index
    %26 = vector.load %arg2[%c6, %c0_20, %c0_21] : memref<9x64x256xbf16, #tpu.memory_space<vmem>>, vector<1x64x256xbf16>
    %27 = vector.shape_cast %26 : vector<1x64x256xbf16> to vector<64x256xbf16>
    %28 = arith.extf %27 : vector<64x256xbf16> to vector<64x256xf32>
    %cst_22 = arith.constant dense<0.000000e+00> : vector<64x128xf32>
    %29 = tpu.matmul %28, %1, %cst_22 {dimension_numbers = #tpu.dot_dimension_numbers<[1], [0], [0], [1], [0, 0, 1, 1], [], []>} : vector<64x256xf32>, vector<256x128xf32>, vector<64x128xf32> -> vector<64x128xf32>
    %c7 = arith.constant 7 : index
    %c0_23 = arith.constant 0 : index
    %c0_24 = arith.constant 0 : index
    %30 = vector.load %arg2[%c7, %c0_23, %c0_24] : memref<9x64x256xbf16, #tpu.memory_space<vmem>>, vector<1x64x256xbf16>
    %31 = vector.shape_cast %30 : vector<1x64x256xbf16> to vector<64x256xbf16>
    %32 = arith.extf %31 : vector<64x256xbf16> to vector<64x256xf32>
    %cst_25 = arith.constant dense<0.000000e+00> : vector<64x128xf32>
    %33 = tpu.matmul %32, %1, %cst_25 {dimension_numbers = #tpu.dot_dimension_numbers<[1], [0], [0], [1], [0, 0, 1, 1], [], []>} : vector<64x256xf32>, vector<256x128xf32>, vector<64x128xf32> -> vector<64x128xf32>
    %c8 = arith.constant 8 : index
    %c0_26 = arith.constant 0 : index
    %c0_27 = arith.constant 0 : index
    %34 = vector.load %arg2[%c8, %c0_26, %c0_27] : memref<9x64x256xbf16, #tpu.memory_space<vmem>>, vector<1x64x256xbf16>
    %35 = vector.shape_cast %34 : vector<1x64x256xbf16> to vector<64x256xbf16>
    %36 = arith.extf %35 : vector<64x256xbf16> to vector<64x256xf32>
    %cst_28 = arith.constant dense<0.000000e+00> : vector<64x128xf32>
    %37 = tpu.matmul %36, %1, %cst_28 {dimension_numbers = #tpu.dot_dimension_numbers<[1], [0], [0], [1], [0, 0, 1, 1], [], []>} : vector<64x256xf32>, vector<256x128xf32>, vector<64x128xf32> -> vector<64x128xf32>
    %38 = tpu.concatenate %5, %9, %13, %17, %21, %25, %29, %33, %37 in 1 : vector<64x128xf32>, vector<64x128xf32>, vector<64x128xf32>, vector<64x128xf32>, vector<64x128xf32>, vector<64x128xf32>, vector<64x128xf32>, vector<64x128xf32>, vector<64x128xf32> -> vector<64x1152xf32>
    %c0_29 = arith.constant 0 : index
    %c0_30 = arith.constant 0 : index
    %39 = vector.load %arg3[%c0_29, %c0_30] : memref<1152x128xf32, #tpu.memory_space<vmem>>, vector<1152x128xf32>
    %cst_31 = arith.constant dense<0.000000e+00> : vector<64x128xf32>
    %40 = tpu.matmul %38, %39, %cst_31 {dimension_numbers = #tpu.dot_dimension_numbers<[1], [0], [0], [1], [0, 0, 1, 1], [], []>} : vector<64x1152xf32>, vector<1152x128xf32>, vector<64x128xf32> -> vector<64x128xf32>
    %c0_32 = arith.constant 0 : index
    %c0_33 = arith.constant 0 : index
    %41 = vector.load %arg4[%c0_32, %c0_33] : memref<1x128xf32, #tpu.memory_space<vmem>>, vector<1x128xf32>
    %42 = vector.broadcast %41 : vector<1x128xf32> to vector<64x128xf32>
    %43 = arith.addf %40, %42 : vector<64x128xf32>
    %cst_34 = arith.constant 0.000000e+00 : f32
    %44 = vector.broadcast %cst_34 : f32 to vector<64x128xf32>
    %45 = arith.maximumf %43, %44 : vector<64x128xf32>
    %c0_35 = arith.constant 0 : index
    %c0_36 = arith.constant 0 : index
    %c0_37 = arith.constant 0 : index
    %46 = vector.load %arg5[%c0_35, %c0_36, %c0_37] : memref<9x16x64xbf16, #tpu.memory_space<vmem>>, vector<1x16x64xbf16>
    %47 = vector.shape_cast %46 : vector<1x16x64xbf16> to vector<16x64xbf16>
    %48 = arith.extf %47 : vector<16x64xbf16> to vector<16x64xf32>
    %cst_38 = arith.constant dense<0.000000e+00> : vector<16x128xf32>
    %49 = tpu.matmul %48, %45, %cst_38 {dimension_numbers = #tpu.dot_dimension_numbers<[1], [0], [0], [1], [0, 0, 1, 1], [], []>} : vector<16x64xf32>, vector<64x128xf32>, vector<16x128xf32> -> vector<16x128xf32>
    %c1_39 = arith.constant 1 : index
    %c0_40 = arith.constant 0 : index
    %c0_41 = arith.constant 0 : index
    %50 = vector.load %arg5[%c1_39, %c0_40, %c0_41] : memref<9x16x64xbf16, #tpu.memory_space<vmem>>, vector<1x16x64xbf16>
    %51 = vector.shape_cast %50 : vector<1x16x64xbf16> to vector<16x64xbf16>
    %52 = arith.extf %51 : vector<16x64xbf16> to vector<16x64xf32>
    %cst_42 = arith.constant dense<0.000000e+00> : vector<16x128xf32>
    %53 = tpu.matmul %52, %45, %cst_42 {dimension_numbers = #tpu.dot_dimension_numbers<[1], [0], [0], [1], [0, 0, 1, 1], [], []>} : vector<16x64xf32>, vector<64x128xf32>, vector<16x128xf32> -> vector<16x128xf32>
    %c2_43 = arith.constant 2 : index
    %c0_44 = arith.constant 0 : index
    %c0_45 = arith.constant 0 : index
    %54 = vector.load %arg5[%c2_43, %c0_44, %c0_45] : memref<9x16x64xbf16, #tpu.memory_space<vmem>>, vector<1x16x64xbf16>
    %55 = vector.shape_cast %54 : vector<1x16x64xbf16> to vector<16x64xbf16>
    %56 = arith.extf %55 : vector<16x64xbf16> to vector<16x64xf32>
    %cst_46 = arith.constant dense<0.000000e+00> : vector<16x128xf32>
    %57 = tpu.matmul %56, %45, %cst_46 {dimension_numbers = #tpu.dot_dimension_numbers<[1], [0], [0], [1], [0, 0, 1, 1], [], []>} : vector<16x64xf32>, vector<64x128xf32>, vector<16x128xf32> -> vector<16x128xf32>
    %c3_47 = arith.constant 3 : index
    %c0_48 = arith.constant 0 : index
    %c0_49 = arith.constant 0 : index
    %58 = vector.load %arg5[%c3_47, %c0_48, %c0_49] : memref<9x16x64xbf16, #tpu.memory_space<vmem>>, vector<1x16x64xbf16>
    %59 = vector.shape_cast %58 : vector<1x16x64xbf16> to vector<16x64xbf16>
    %60 = arith.extf %59 : vector<16x64xbf16> to vector<16x64xf32>
    %cst_50 = arith.constant dense<0.000000e+00> : vector<16x128xf32>
    %61 = tpu.matmul %60, %45, %cst_50 {dimension_numbers = #tpu.dot_dimension_numbers<[1], [0], [0], [1], [0, 0, 1, 1], [], []>} : vector<16x64xf32>, vector<64x128xf32>, vector<16x128xf32> -> vector<16x128xf32>
    %c4_51 = arith.constant 4 : index
    %c0_52 = arith.constant 0 : index
    %c0_53 = arith.constant 0 : index
    %62 = vector.load %arg5[%c4_51, %c0_52, %c0_53] : memref<9x16x64xbf16, #tpu.memory_space<vmem>>, vector<1x16x64xbf16>
    %63 = vector.shape_cast %62 : vector<1x16x64xbf16> to vector<16x64xbf16>
    %64 = arith.extf %63 : vector<16x64xbf16> to vector<16x64xf32>
    %cst_54 = arith.constant dense<0.000000e+00> : vector<16x128xf32>
    %65 = tpu.matmul %64, %45, %cst_54 {dimension_numbers = #tpu.dot_dimension_numbers<[1], [0], [0], [1], [0, 0, 1, 1], [], []>} : vector<16x64xf32>, vector<64x128xf32>, vector<16x128xf32> -> vector<16x128xf32>
    %c5_55 = arith.constant 5 : index
    %c0_56 = arith.constant 0 : index
    %c0_57 = arith.constant 0 : index
    %66 = vector.load %arg5[%c5_55, %c0_56, %c0_57] : memref<9x16x64xbf16, #tpu.memory_space<vmem>>, vector<1x16x64xbf16>
    %67 = vector.shape_cast %66 : vector<1x16x64xbf16> to vector<16x64xbf16>
    %68 = arith.extf %67 : vector<16x64xbf16> to vector<16x64xf32>
    %cst_58 = arith.constant dense<0.000000e+00> : vector<16x128xf32>
    %69 = tpu.matmul %68, %45, %cst_58 {dimension_numbers = #tpu.dot_dimension_numbers<[1], [0], [0], [1], [0, 0, 1, 1], [], []>} : vector<16x64xf32>, vector<64x128xf32>, vector<16x128xf32> -> vector<16x128xf32>
    %c6_59 = arith.constant 6 : index
    %c0_60 = arith.constant 0 : index
    %c0_61 = arith.constant 0 : index
    %70 = vector.load %arg5[%c6_59, %c0_60, %c0_61] : memref<9x16x64xbf16, #tpu.memory_space<vmem>>, vector<1x16x64xbf16>
    %71 = vector.shape_cast %70 : vector<1x16x64xbf16> to vector<16x64xbf16>
    %72 = arith.extf %71 : vector<16x64xbf16> to vector<16x64xf32>
    %cst_62 = arith.constant dense<0.000000e+00> : vector<16x128xf32>
    %73 = tpu.matmul %72, %45, %cst_62 {dimension_numbers = #tpu.dot_dimension_numbers<[1], [0], [0], [1], [0, 0, 1, 1], [], []>} : vector<16x64xf32>, vector<64x128xf32>, vector<16x128xf32> -> vector<16x128xf32>
    %c7_63 = arith.constant 7 : index
    %c0_64 = arith.constant 0 : index
    %c0_65 = arith.constant 0 : index
    %74 = vector.load %arg5[%c7_63, %c0_64, %c0_65] : memref<9x16x64xbf16, #tpu.memory_space<vmem>>, vector<1x16x64xbf16>
    %75 = vector.shape_cast %74 : vector<1x16x64xbf16> to vector<16x64xbf16>
    %76 = arith.extf %75 : vector<16x64xbf16> to vector<16x64xf32>
    %cst_66 = arith.constant dense<0.000000e+00> : vector<16x128xf32>
    %77 = tpu.matmul %76, %45, %cst_66 {dimension_numbers = #tpu.dot_dimension_numbers<[1], [0], [0], [1], [0, 0, 1, 1], [], []>} : vector<16x64xf32>, vector<64x128xf32>, vector<16x128xf32> -> vector<16x128xf32>
    %c8_67 = arith.constant 8 : index
    %c0_68 = arith.constant 0 : index
    %c0_69 = arith.constant 0 : index
    %78 = vector.load %arg5[%c8_67, %c0_68, %c0_69] : memref<9x16x64xbf16, #tpu.memory_space<vmem>>, vector<1x16x64xbf16>
    %79 = vector.shape_cast %78 : vector<1x16x64xbf16> to vector<16x64xbf16>
    %80 = arith.extf %79 : vector<16x64xbf16> to vector<16x64xf32>
    %cst_70 = arith.constant dense<0.000000e+00> : vector<16x128xf32>
    %81 = tpu.matmul %80, %45, %cst_70 {dimension_numbers = #tpu.dot_dimension_numbers<[1], [0], [0], [1], [0, 0, 1, 1], [], []>} : vector<16x64xf32>, vector<64x128xf32>, vector<16x128xf32> -> vector<16x128xf32>
    %82 = tpu.concatenate %49, %53, %57, %61, %65, %69, %73, %77, %81 in 1 : vector<16x128xf32>, vector<16x128xf32>, vector<16x128xf32>, vector<16x128xf32>, vector<16x128xf32>, vector<16x128xf32>, vector<16x128xf32>, vector<16x128xf32>, vector<16x128xf32> -> vector<16x1152xf32>
    %c0_71 = arith.constant 0 : index
    %c0_72 = arith.constant 0 : index
    %83 = vector.load %arg6[%c0_71, %c0_72] : memref<1152x128xf32, #tpu.memory_space<vmem>>, vector<1152x128xf32>
    %cst_73 = arith.constant dense<0.000000e+00> : vector<16x128xf32>
    %84 = tpu.matmul %82, %83, %cst_73 {dimension_numbers = #tpu.dot_dimension_numbers<[1], [0], [0], [1], [0, 0, 1, 1], [], []>} : vector<16x1152xf32>, vector<1152x128xf32>, vector<16x128xf32> -> vector<16x128xf32>
    %c0_74 = arith.constant 0 : index
    %c0_75 = arith.constant 0 : index
    %85 = vector.load %arg7[%c0_74, %c0_75] : memref<1x128xf32, #tpu.memory_space<vmem>>, vector<1x128xf32>
    %86 = vector.broadcast %85 : vector<1x128xf32> to vector<16x128xf32>
    %87 = arith.addf %84, %86 : vector<16x128xf32>
    %cst_76 = arith.constant 0.000000e+00 : f32
    %88 = vector.broadcast %cst_76 : f32 to vector<16x128xf32>
    %89 = arith.maximumf %87, %88 : vector<16x128xf32>
    %c0_77 = arith.constant 0 : index
    %c0_78 = arith.constant 0 : index
    %90 = vector.load %arg9[%c0_77, %c0_78] : memref<128x1152xf32, #tpu.memory_space<vmem>>, vector<128x1152xf32>
    %cst_79 = arith.constant dense<0.000000e+00> : vector<16x1152xf32>
    %91 = tpu.matmul %89, %90, %cst_79 {dimension_numbers = #tpu.dot_dimension_numbers<[1], [0], [0], [1], [0, 0, 1, 1], [], []>} : vector<16x128xf32>, vector<128x1152xf32>, vector<16x1152xf32> -> vector<16x1152xf32>
    %cst_80 = arith.constant 0.000000e+00 : f32
    %92 = vector.broadcast %cst_80 : f32 to vector<64x128xf32>
    %c0_81 = arith.constant 0 : index
    %c0_82 = arith.constant 0 : index
    %c0_83 = arith.constant 0 : index
    %93 = vector.load %arg8[%c0_81, %c0_82, %c0_83] : memref<9x64x16xbf16, #tpu.memory_space<vmem>>, vector<1x64x16xbf16>
    %94 = vector.shape_cast %93 : vector<1x64x16xbf16> to vector<64x16xbf16>
    %95 = arith.extf %94 : vector<64x16xbf16> to vector<64x16xf32>
    %96 = vector.extract_strided_slice %91 {offsets = [0, 0], sizes = [16, 128], strides = [1, 1]} : vector<16x1152xf32> to vector<16x128xf32>
    %cst_84 = arith.constant dense<0.000000e+00> : vector<64x128xf32>
    %97 = tpu.matmul %95, %96, %cst_84 {dimension_numbers = #tpu.dot_dimension_numbers<[1], [0], [0], [1], [0, 0, 1, 1], [], []>} : vector<64x16xf32>, vector<16x128xf32>, vector<64x128xf32> -> vector<64x128xf32>
    %98 = arith.addf %92, %97 : vector<64x128xf32>
    %c1_85 = arith.constant 1 : index
    %c0_86 = arith.constant 0 : index
    %c0_87 = arith.constant 0 : index
    %99 = vector.load %arg8[%c1_85, %c0_86, %c0_87] : memref<9x64x16xbf16, #tpu.memory_space<vmem>>, vector<1x64x16xbf16>
    %100 = vector.shape_cast %99 : vector<1x64x16xbf16> to vector<64x16xbf16>
    %101 = arith.extf %100 : vector<64x16xbf16> to vector<64x16xf32>
    %102 = vector.extract_strided_slice %91 {offsets = [0, 128], sizes = [16, 128], strides = [1, 1]} : vector<16x1152xf32> to vector<16x128xf32>
    %cst_88 = arith.constant dense<0.000000e+00> : vector<64x128xf32>
    %103 = tpu.matmul %101, %102, %cst_88 {dimension_numbers = #tpu.dot_dimension_numbers<[1], [0], [0], [1], [0, 0, 1, 1], [], []>} : vector<64x16xf32>, vector<16x128xf32>, vector<64x128xf32> -> vector<64x128xf32>
    %104 = arith.addf %98, %103 : vector<64x128xf32>
    %c2_89 = arith.constant 2 : index
    %c0_90 = arith.constant 0 : index
    %c0_91 = arith.constant 0 : index
    %105 = vector.load %arg8[%c2_89, %c0_90, %c0_91] : memref<9x64x16xbf16, #tpu.memory_space<vmem>>, vector<1x64x16xbf16>
    %106 = vector.shape_cast %105 : vector<1x64x16xbf16> to vector<64x16xbf16>
    %107 = arith.extf %106 : vector<64x16xbf16> to vector<64x16xf32>
    %108 = vector.extract_strided_slice %91 {offsets = [0, 256], sizes = [16, 128], strides = [1, 1]} : vector<16x1152xf32> to vector<16x128xf32>
    %cst_92 = arith.constant dense<0.000000e+00> : vector<64x128xf32>
    %109 = tpu.matmul %107, %108, %cst_92 {dimension_numbers = #tpu.dot_dimension_numbers<[1], [0], [0], [1], [0, 0, 1, 1], [], []>} : vector<64x16xf32>, vector<16x128xf32>, vector<64x128xf32> -> vector<64x128xf32>
    %110 = arith.addf %104, %109 : vector<64x128xf32>
    %c3_93 = arith.constant 3 : index
    %c0_94 = arith.constant 0 : index
    %c0_95 = arith.constant 0 : index
    %111 = vector.load %arg8[%c3_93, %c0_94, %c0_95] : memref<9x64x16xbf16, #tpu.memory_space<vmem>>, vector<1x64x16xbf16>
    %112 = vector.shape_cast %111 : vector<1x64x16xbf16> to vector<64x16xbf16>
    %113 = arith.extf %112 : vector<64x16xbf16> to vector<64x16xf32>
    %114 = vector.extract_strided_slice %91 {offsets = [0, 384], sizes = [16, 128], strides = [1, 1]} : vector<16x1152xf32> to vector<16x128xf32>
    %cst_96 = arith.constant dense<0.000000e+00> : vector<64x128xf32>
    %115 = tpu.matmul %113, %114, %cst_96 {dimension_numbers = #tpu.dot_dimension_numbers<[1], [0], [0], [1], [0, 0, 1, 1], [], []>} : vector<64x16xf32>, vector<16x128xf32>, vector<64x128xf32> -> vector<64x128xf32>
    %116 = arith.addf %110, %115 : vector<64x128xf32>
    %c4_97 = arith.constant 4 : index
    %c0_98 = arith.constant 0 : index
    %c0_99 = arith.constant 0 : index
    %117 = vector.load %arg8[%c4_97, %c0_98, %c0_99] : memref<9x64x16xbf16, #tpu.memory_space<vmem>>, vector<1x64x16xbf16>
    %118 = vector.shape_cast %117 : vector<1x64x16xbf16> to vector<64x16xbf16>
    %119 = arith.extf %118 : vector<64x16xbf16> to vector<64x16xf32>
    %120 = vector.extract_strided_slice %91 {offsets = [0, 512], sizes = [16, 128], strides = [1, 1]} : vector<16x1152xf32> to vector<16x128xf32>
    %cst_100 = arith.constant dense<0.000000e+00> : vector<64x128xf32>
    %121 = tpu.matmul %119, %120, %cst_100 {dimension_numbers = #tpu.dot_dimension_numbers<[1], [0], [0], [1], [0, 0, 1, 1], [], []>} : vector<64x16xf32>, vector<16x128xf32>, vector<64x128xf32> -> vector<64x128xf32>
    %122 = arith.addf %116, %121 : vector<64x128xf32>
    %c5_101 = arith.constant 5 : index
    %c0_102 = arith.constant 0 : index
    %c0_103 = arith.constant 0 : index
    %123 = vector.load %arg8[%c5_101, %c0_102, %c0_103] : memref<9x64x16xbf16, #tpu.memory_space<vmem>>, vector<1x64x16xbf16>
    %124 = vector.shape_cast %123 : vector<1x64x16xbf16> to vector<64x16xbf16>
    %125 = arith.extf %124 : vector<64x16xbf16> to vector<64x16xf32>
    %126 = vector.extract_strided_slice %91 {offsets = [0, 640], sizes = [16, 128], strides = [1, 1]} : vector<16x1152xf32> to vector<16x128xf32>
    %cst_104 = arith.constant dense<0.000000e+00> : vector<64x128xf32>
    %127 = tpu.matmul %125, %126, %cst_104 {dimension_numbers = #tpu.dot_dimension_numbers<[1], [0], [0], [1], [0, 0, 1, 1], [], []>} : vector<64x16xf32>, vector<16x128xf32>, vector<64x128xf32> -> vector<64x128xf32>
    %128 = arith.addf %122, %127 : vector<64x128xf32>
    %c6_105 = arith.constant 6 : index
    %c0_106 = arith.constant 0 : index
    %c0_107 = arith.constant 0 : index
    %129 = vector.load %arg8[%c6_105, %c0_106, %c0_107] : memref<9x64x16xbf16, #tpu.memory_space<vmem>>, vector<1x64x16xbf16>
    %130 = vector.shape_cast %129 : vector<1x64x16xbf16> to vector<64x16xbf16>
    %131 = arith.extf %130 : vector<64x16xbf16> to vector<64x16xf32>
    %132 = vector.extract_strided_slice %91 {offsets = [0, 768], sizes = [16, 128], strides = [1, 1]} : vector<16x1152xf32> to vector<16x128xf32>
    %cst_108 = arith.constant dense<0.000000e+00> : vector<64x128xf32>
    %133 = tpu.matmul %131, %132, %cst_108 {dimension_numbers = #tpu.dot_dimension_numbers<[1], [0], [0], [1], [0, 0, 1, 1], [], []>} : vector<64x16xf32>, vector<16x128xf32>, vector<64x128xf32> -> vector<64x128xf32>
    %134 = arith.addf %128, %133 : vector<64x128xf32>
    %c7_109 = arith.constant 7 : index
    %c0_110 = arith.constant 0 : index
    %c0_111 = arith.constant 0 : index
    %135 = vector.load %arg8[%c7_109, %c0_110, %c0_111] : memref<9x64x16xbf16, #tpu.memory_space<vmem>>, vector<1x64x16xbf16>
    %136 = vector.shape_cast %135 : vector<1x64x16xbf16> to vector<64x16xbf16>
    %137 = arith.extf %136 : vector<64x16xbf16> to vector<64x16xf32>
    %138 = vector.extract_strided_slice %91 {offsets = [0, 896], sizes = [16, 128], strides = [1, 1]} : vector<16x1152xf32> to vector<16x128xf32>
    %cst_112 = arith.constant dense<0.000000e+00> : vector<64x128xf32>
    %139 = tpu.matmul %137, %138, %cst_112 {dimension_numbers = #tpu.dot_dimension_numbers<[1], [0], [0], [1], [0, 0, 1, 1], [], []>} : vector<64x16xf32>, vector<16x128xf32>, vector<64x128xf32> -> vector<64x128xf32>
    %140 = arith.addf %134, %139 : vector<64x128xf32>
    %c8_113 = arith.constant 8 : index
    %c0_114 = arith.constant 0 : index
    %c0_115 = arith.constant 0 : index
    %141 = vector.load %arg8[%c8_113, %c0_114, %c0_115] : memref<9x64x16xbf16, #tpu.memory_space<vmem>>, vector<1x64x16xbf16>
    %142 = vector.shape_cast %141 : vector<1x64x16xbf16> to vector<64x16xbf16>
    %143 = arith.extf %142 : vector<64x16xbf16> to vector<64x16xf32>
    %144 = vector.extract_strided_slice %91 {offsets = [0, 1024], sizes = [16, 128], strides = [1, 1]} : vector<16x1152xf32> to vector<16x128xf32>
    %cst_116 = arith.constant dense<0.000000e+00> : vector<64x128xf32>
    %145 = tpu.matmul %143, %144, %cst_116 {dimension_numbers = #tpu.dot_dimension_numbers<[1], [0], [0], [1], [0, 0, 1, 1], [], []>} : vector<64x16xf32>, vector<16x128xf32>, vector<64x128xf32> -> vector<64x128xf32>
    %146 = arith.addf %140, %145 : vector<64x128xf32>
    %c0_117 = arith.constant 0 : index
    %c0_118 = arith.constant 0 : index
    %147 = vector.load %arg10[%c0_117, %c0_118] : memref<1x128xf32, #tpu.memory_space<vmem>>, vector<1x128xf32>
    %148 = vector.broadcast %147 : vector<1x128xf32> to vector<64x128xf32>
    %149 = arith.addf %146, %148 : vector<64x128xf32>
    %cst_119 = arith.constant 0.000000e+00 : f32
    %150 = vector.broadcast %cst_119 : f32 to vector<64x128xf32>
    %151 = arith.maximumf %149, %150 : vector<64x128xf32>
    %c0_120 = arith.constant 0 : index
    %c0_121 = arith.constant 0 : index
    %152 = vector.load %arg12[%c0_120, %c0_121] : memref<128x1152xf32, #tpu.memory_space<vmem>>, vector<128x1152xf32>
    %cst_122 = arith.constant dense<0.000000e+00> : vector<64x1152xf32>
    %153 = tpu.matmul %151, %152, %cst_122 {dimension_numbers = #tpu.dot_dimension_numbers<[1], [0], [0], [1], [0, 0, 1, 1], [], []>} : vector<64x128xf32>, vector<128x1152xf32>, vector<64x1152xf32> -> vector<64x1152xf32>
    %cst_123 = arith.constant 0.000000e+00 : f32
    %154 = vector.broadcast %cst_123 : f32 to vector<256x128xf32>
    %c0_124 = arith.constant 0 : index
    %c0_125 = arith.constant 0 : index
    %c0_126 = arith.constant 0 : index
    %155 = vector.load %arg11[%c0_124, %c0_125, %c0_126] : memref<9x256x64xbf16, #tpu.memory_space<vmem>>, vector<1x256x64xbf16>
    %156 = vector.shape_cast %155 : vector<1x256x64xbf16> to vector<256x64xbf16>
    %157 = arith.extf %156 : vector<256x64xbf16> to vector<256x64xf32>
    %158 = vector.extract_strided_slice %153 {offsets = [0, 0], sizes = [64, 128], strides = [1, 1]} : vector<64x1152xf32> to vector<64x128xf32>
    %cst_127 = arith.constant dense<0.000000e+00> : vector<256x128xf32>
    %159 = tpu.matmul %157, %158, %cst_127 {dimension_numbers = #tpu.dot_dimension_numbers<[1], [0], [0], [1], [0, 0, 1, 1], [], []>} : vector<256x64xf32>, vector<64x128xf32>, vector<256x128xf32> -> vector<256x128xf32>
    %160 = arith.addf %154, %159 : vector<256x128xf32>
    %c1_128 = arith.constant 1 : index
    %c0_129 = arith.constant 0 : index
    %c0_130 = arith.constant 0 : index
    %161 = vector.load %arg11[%c1_128, %c0_129, %c0_130] : memref<9x256x64xbf16, #tpu.memory_space<vmem>>, vector<1x256x64xbf16>
    %162 = vector.shape_cast %161 : vector<1x256x64xbf16> to vector<256x64xbf16>
    %163 = arith.extf %162 : vector<256x64xbf16> to vector<256x64xf32>
    %164 = vector.extract_strided_slice %153 {offsets = [0, 128], sizes = [64, 128], strides = [1, 1]} : vector<64x1152xf32> to vector<64x128xf32>
    %cst_131 = arith.constant dense<0.000000e+00> : vector<256x128xf32>
    %165 = tpu.matmul %163, %164, %cst_131 {dimension_numbers = #tpu.dot_dimension_numbers<[1], [0], [0], [1], [0, 0, 1, 1], [], []>} : vector<256x64xf32>, vector<64x128xf32>, vector<256x128xf32> -> vector<256x128xf32>
    %166 = arith.addf %160, %165 : vector<256x128xf32>
    %c2_132 = arith.constant 2 : index
    %c0_133 = arith.constant 0 : index
    %c0_134 = arith.constant 0 : index
    %167 = vector.load %arg11[%c2_132, %c0_133, %c0_134] : memref<9x256x64xbf16, #tpu.memory_space<vmem>>, vector<1x256x64xbf16>
    %168 = vector.shape_cast %167 : vector<1x256x64xbf16> to vector<256x64xbf16>
    %169 = arith.extf %168 : vector<256x64xbf16> to vector<256x64xf32>
    %170 = vector.extract_strided_slice %153 {offsets = [0, 256], sizes = [64, 128], strides = [1, 1]} : vector<64x1152xf32> to vector<64x128xf32>
    %cst_135 = arith.constant dense<0.000000e+00> : vector<256x128xf32>
    %171 = tpu.matmul %169, %170, %cst_135 {dimension_numbers = #tpu.dot_dimension_numbers<[1], [0], [0], [1], [0, 0, 1, 1], [], []>} : vector<256x64xf32>, vector<64x128xf32>, vector<256x128xf32> -> vector<256x128xf32>
    %172 = arith.addf %166, %171 : vector<256x128xf32>
    %c3_136 = arith.constant 3 : index
    %c0_137 = arith.constant 0 : index
    %c0_138 = arith.constant 0 : index
    %173 = vector.load %arg11[%c3_136, %c0_137, %c0_138] : memref<9x256x64xbf16, #tpu.memory_space<vmem>>, vector<1x256x64xbf16>
    %174 = vector.shape_cast %173 : vector<1x256x64xbf16> to vector<256x64xbf16>
    %175 = arith.extf %174 : vector<256x64xbf16> to vector<256x64xf32>
    %176 = vector.extract_strided_slice %153 {offsets = [0, 384], sizes = [64, 128], strides = [1, 1]} : vector<64x1152xf32> to vector<64x128xf32>
    %cst_139 = arith.constant dense<0.000000e+00> : vector<256x128xf32>
    %177 = tpu.matmul %175, %176, %cst_139 {dimension_numbers = #tpu.dot_dimension_numbers<[1], [0], [0], [1], [0, 0, 1, 1], [], []>} : vector<256x64xf32>, vector<64x128xf32>, vector<256x128xf32> -> vector<256x128xf32>
    %178 = arith.addf %172, %177 : vector<256x128xf32>
    %c4_140 = arith.constant 4 : index
    %c0_141 = arith.constant 0 : index
    %c0_142 = arith.constant 0 : index
    %179 = vector.load %arg11[%c4_140, %c0_141, %c0_142] : memref<9x256x64xbf16, #tpu.memory_space<vmem>>, vector<1x256x64xbf16>
    %180 = vector.shape_cast %179 : vector<1x256x64xbf16> to vector<256x64xbf16>
    %181 = arith.extf %180 : vector<256x64xbf16> to vector<256x64xf32>
    %182 = vector.extract_strided_slice %153 {offsets = [0, 512], sizes = [64, 128], strides = [1, 1]} : vector<64x1152xf32> to vector<64x128xf32>
    %cst_143 = arith.constant dense<0.000000e+00> : vector<256x128xf32>
    %183 = tpu.matmul %181, %182, %cst_143 {dimension_numbers = #tpu.dot_dimension_numbers<[1], [0], [0], [1], [0, 0, 1, 1], [], []>} : vector<256x64xf32>, vector<64x128xf32>, vector<256x128xf32> -> vector<256x128xf32>
    %184 = arith.addf %178, %183 : vector<256x128xf32>
    %c5_144 = arith.constant 5 : index
    %c0_145 = arith.constant 0 : index
    %c0_146 = arith.constant 0 : index
    %185 = vector.load %arg11[%c5_144, %c0_145, %c0_146] : memref<9x256x64xbf16, #tpu.memory_space<vmem>>, vector<1x256x64xbf16>
    %186 = vector.shape_cast %185 : vector<1x256x64xbf16> to vector<256x64xbf16>
    %187 = arith.extf %186 : vector<256x64xbf16> to vector<256x64xf32>
    %188 = vector.extract_strided_slice %153 {offsets = [0, 640], sizes = [64, 128], strides = [1, 1]} : vector<64x1152xf32> to vector<64x128xf32>
    %cst_147 = arith.constant dense<0.000000e+00> : vector<256x128xf32>
    %189 = tpu.matmul %187, %188, %cst_147 {dimension_numbers = #tpu.dot_dimension_numbers<[1], [0], [0], [1], [0, 0, 1, 1], [], []>} : vector<256x64xf32>, vector<64x128xf32>, vector<256x128xf32> -> vector<256x128xf32>
    %190 = arith.addf %184, %189 : vector<256x128xf32>
    %c6_148 = arith.constant 6 : index
    %c0_149 = arith.constant 0 : index
    %c0_150 = arith.constant 0 : index
    %191 = vector.load %arg11[%c6_148, %c0_149, %c0_150] : memref<9x256x64xbf16, #tpu.memory_space<vmem>>, vector<1x256x64xbf16>
    %192 = vector.shape_cast %191 : vector<1x256x64xbf16> to vector<256x64xbf16>
    %193 = arith.extf %192 : vector<256x64xbf16> to vector<256x64xf32>
    %194 = vector.extract_strided_slice %153 {offsets = [0, 768], sizes = [64, 128], strides = [1, 1]} : vector<64x1152xf32> to vector<64x128xf32>
    %cst_151 = arith.constant dense<0.000000e+00> : vector<256x128xf32>
    %195 = tpu.matmul %193, %194, %cst_151 {dimension_numbers = #tpu.dot_dimension_numbers<[1], [0], [0], [1], [0, 0, 1, 1], [], []>} : vector<256x64xf32>, vector<64x128xf32>, vector<256x128xf32> -> vector<256x128xf32>
    %196 = arith.addf %190, %195 : vector<256x128xf32>
    %c7_152 = arith.constant 7 : index
    %c0_153 = arith.constant 0 : index
    %c0_154 = arith.constant 0 : index
    %197 = vector.load %arg11[%c7_152, %c0_153, %c0_154] : memref<9x256x64xbf16, #tpu.memory_space<vmem>>, vector<1x256x64xbf16>
    %198 = vector.shape_cast %197 : vector<1x256x64xbf16> to vector<256x64xbf16>
    %199 = arith.extf %198 : vector<256x64xbf16> to vector<256x64xf32>
    %200 = vector.extract_strided_slice %153 {offsets = [0, 896], sizes = [64, 128], strides = [1, 1]} : vector<64x1152xf32> to vector<64x128xf32>
    %cst_155 = arith.constant dense<0.000000e+00> : vector<256x128xf32>
    %201 = tpu.matmul %199, %200, %cst_155 {dimension_numbers = #tpu.dot_dimension_numbers<[1], [0], [0], [1], [0, 0, 1, 1], [], []>} : vector<256x64xf32>, vector<64x128xf32>, vector<256x128xf32> -> vector<256x128xf32>
    %202 = arith.addf %196, %201 : vector<256x128xf32>
    %c8_156 = arith.constant 8 : index
    %c0_157 = arith.constant 0 : index
    %c0_158 = arith.constant 0 : index
    %203 = vector.load %arg11[%c8_156, %c0_157, %c0_158] : memref<9x256x64xbf16, #tpu.memory_space<vmem>>, vector<1x256x64xbf16>
    %204 = vector.shape_cast %203 : vector<1x256x64xbf16> to vector<256x64xbf16>
    %205 = arith.extf %204 : vector<256x64xbf16> to vector<256x64xf32>
    %206 = vector.extract_strided_slice %153 {offsets = [0, 1024], sizes = [64, 128], strides = [1, 1]} : vector<64x1152xf32> to vector<64x128xf32>
    %cst_159 = arith.constant dense<0.000000e+00> : vector<256x128xf32>
    %207 = tpu.matmul %205, %206, %cst_159 {dimension_numbers = #tpu.dot_dimension_numbers<[1], [0], [0], [1], [0, 0, 1, 1], [], []>} : vector<256x64xf32>, vector<64x128xf32>, vector<256x128xf32> -> vector<256x128xf32>
    %208 = arith.addf %202, %207 : vector<256x128xf32>
    %c0_160 = arith.constant 0 : index
    %c0_161 = arith.constant 0 : index
    %209 = vector.load %arg13[%c0_160, %c0_161] : memref<1x128xf32, #tpu.memory_space<vmem>>, vector<1x128xf32>
    %210 = vector.broadcast %209 : vector<1x128xf32> to vector<256x128xf32>
    %211 = arith.addf %208, %210 : vector<256x128xf32>
    %212 = arith.negf %211 : vector<256x128xf32>
    %213 = math.exp %212 : vector<256x128xf32>
    %cst_162 = arith.constant 1.000000e+00 : f32
    %214 = vector.broadcast %cst_162 : f32 to vector<256x128xf32>
    %215 = arith.addf %214, %213 : vector<256x128xf32>
    %216 = arith.divf %214, %215 : vector<256x128xf32>
    %c0_163 = arith.constant 0 : index
    %c0_164 = arith.constant 0 : index
    %c0_165 = arith.constant 0 : index
    %217 = vector.load %arg14[%c0_163, %c0_164, %c0_165] : memref<1x256x128xf32, #tpu.memory_space<vmem>>, vector<1x256x128xf32>
    %218 = vector.shape_cast %217 : vector<1x256x128xf32> to vector<256x128xf32>
    %219 = vector.shape_cast %216 : vector<256x128xf32> to vector<1x256x128xf32>
    tpu.vector_store %arg14[%c0_163, %c0_164, %c0_165], %219 {strides = array<i32>} : memref<1x256x128xf32, #tpu.memory_space<vmem>>, vector<1x256x128xf32>,
    return
  }
  func.func @transform_0(%arg0: i32) -> (i32, i32, i32) {
    %c0_i32 = arith.constant 0 : i32
    %c0_i32_0 = arith.constant 0 : i32
    %c0_i32_1 = arith.constant 0 : i32
    return %arg0, %c0_i32, %c0_i32_0 : i32, i32, i32
  }
  func.func @transform_1(%arg0: i32) -> (i32, i32, i32) {
    %c0_i32 = arith.constant 0 : i32
    %c0_i32_0 = arith.constant 0 : i32
    %c0_i32_1 = arith.constant 0 : i32
    %c0_i32_2 = arith.constant 0 : i32
    return %c0_i32, %c0_i32_0, %c0_i32_1 : i32, i32, i32
  }
  func.func @transform_2(%arg0: i32) -> (i32, i32) {
    %c0_i32 = arith.constant 0 : i32
    %c0_i32_0 = arith.constant 0 : i32
    %c0_i32_1 = arith.constant 0 : i32
    return %c0_i32, %c0_i32_0 : i32, i32
  }
  func.func @transform_3(%arg0: i32) -> (i32, i32) {
    %c0_i32 = arith.constant 0 : i32
    %c0_i32_0 = arith.constant 0 : i32
    %c0_i32_1 = arith.constant 0 : i32
    return %c0_i32, %c0_i32_0 : i32, i32
  }
  func.func @transform_4(%arg0: i32) -> (i32, i32, i32) {
    %c0_i32 = arith.constant 0 : i32
    %c0_i32_0 = arith.constant 0 : i32
    %c0_i32_1 = arith.constant 0 : i32
    %c0_i32_2 = arith.constant 0 : i32
    return %c0_i32, %c0_i32_0, %c0_i32_1 : i32, i32, i32
  }
  func.func @transform_5(%arg0: i32) -> (i32, i32) {
    %c0_i32 = arith.constant 0 : i32
    %c0_i32_0 = arith.constant 0 : i32
    %c0_i32_1 = arith.constant 0 : i32
    return %c0_i32, %c0_i32_0 : i32, i32
  }
  func.func @transform_6(%arg0: i32) -> (i32, i32) {
    %c0_i32 = arith.constant 0 : i32
    %c0_i32_0 = arith.constant 0 : i32
    %c0_i32_1 = arith.constant 0 : i32
    return %c0_i32, %c0_i32_0 : i32, i32
  }
  func.func @transform_7(%arg0: i32) -> (i32, i32, i32) {
    %c0_i32 = arith.constant 0 : i32
    %c0_i32_0 = arith.constant 0 : i32
    %c0_i32_1 = arith.constant 0 : i32
    %c0_i32_2 = arith.constant 0 : i32
    return %c0_i32, %c0_i32_0, %c0_i32_1 : i32, i32, i32
  }
  func.func @transform_8(%arg0: i32) -> (i32, i32) {
    %c0_i32 = arith.constant 0 : i32
    %c0_i32_0 = arith.constant 0 : i32
    %c0_i32_1 = arith.constant 0 : i32
    return %c0_i32, %c0_i32_0 : i32, i32
  }
  func.func @transform_9(%arg0: i32) -> (i32, i32) {
    %c0_i32 = arith.constant 0 : i32
    %c0_i32_0 = arith.constant 0 : i32
    %c0_i32_1 = arith.constant 0 : i32
    return %c0_i32, %c0_i32_0 : i32, i32
  }
  func.func @transform_10(%arg0: i32) -> (i32, i32, i32) {
    %c0_i32 = arith.constant 0 : i32
    %c0_i32_0 = arith.constant 0 : i32
    %c0_i32_1 = arith.constant 0 : i32
    %c0_i32_2 = arith.constant 0 : i32
    return %c0_i32, %c0_i32_0, %c0_i32_1 : i32, i32, i32
  }
  func.func @transform_11(%arg0: i32) -> (i32, i32) {
    %c0_i32 = arith.constant 0 : i32
    %c0_i32_0 = arith.constant 0 : i32
    %c0_i32_1 = arith.constant 0 : i32
    return %c0_i32, %c0_i32_0 : i32, i32
  }
  func.func @transform_12(%arg0: i32) -> (i32, i32) {
    %c0_i32 = arith.constant 0 : i32
    %c0_i32_0 = arith.constant 0 : i32
    %c0_i32_1 = arith.constant 0 : i32
    return %c0_i32, %c0_i32_0 : i32, i32
  }
  func.func @transform_13(%arg0: i32) -> (i32, i32, i32) {
    %c0_i32 = arith.constant 0 : i32
    %c0_i32_0 = arith.constant 0 : i32
    %c0_i32_1 = arith.constant 0 : i32
    return %arg0, %c0_i32, %c0_i32_0 : i32, i32, i32
  }
}

</mosaic_0001>

<llo_original>
// kernel: tile.23
$region0: #{tile.23}
  #allocation0 [shape = 's32[1]{0}', space=sflag, size = 0x4, scoped, tag = 'scoped memory for tile.23']
  %s0 = inlined_call_operand.vmem [shape: f32[32], index: 0, kind: input, shape index: {}]
  %s1 = inlined_call_operand.vmem [shape: f32[2,32], index: 1, kind: output, shape index: {}]
  // Predicated region
  $region2: #{tile.23} parent=0 // pred_check
    _
  $region3: #{tile.23} parent=0 // pred_check_branch
    %3 = sbr.rel (0) target = $region5
  $region4: #{tile.23} parent=0 // pred_region
    _
  $region5: #{tile.23} parent=0 // pred_fallthru
    _
  %v4 = vld [vmem:[%s0] ss:$0 sm:$0xff]
  %5 = vst [vmem:[%s1] sm:$0x3] %v4

// kernel: tile.24
$region0: #{tile.24}
  %s0 = inlined_call_operand.vmem [shape: f32[2,32], index: 0, kind: input, shape index: {}]
  %s1 = inlined_call_operand.vmem [shape: f32[64], index: 1, kind: output, shape index: {}]
  $region1: #{tile.24} parent=0
    #allocation0 [shape = 'u8[4096]{0}', space=vmem, size = 0x1000, scoped, tag = 'scoped mem for output reshape']
    #allocation1 [shape = 'u8[4096]{0}', space=vmem, size = 0x1000, scoped, tag = 'scoped mem for input reshape']
    %s3 = ssub.s32 4, 1
    %v4 = vld [vmem:[%s0] sm:%s3]
    %5 = vst [vmem:[#allocation1] sm:%s3] %v4
    %v6 = vld [vmem:[#allocation1] sm:$0x1]
    %vm7 = vcmask 261120
    %8 = vst.msk [vmem:[#allocation0] sm:$0x1] %vm7, %v6
    %s9 = scalar_lea.vmem [#allocation1], 1
    %v10 = vld [vmem:[%s9] sm:$0x1]
    %11 = vrot.lane.b32.xlu0 %v10, 32
    %v12 = vpop.permute.xlu0 %11
    %vm13 = vcmask 523520
    %14 = vst.msk [vmem:[#allocation0] sm:$0x1] %vm13, %v12
    %s16 = ssub.s32 2, 1
    %v17 = vld [vmem:[#allocation0] sm:%s16]
    %s19 = ssub.s32 2, 1
    %20 = vst [vmem:[%s1] sm:%s19] %v17

// kernel: tile.28
$region0: #{tile.28}
  #allocation0 [shape = 's32[1]{0}', space=sflag, size = 0x4, scoped, tag = 'scoped memory for tile.28']
  %s0 = inlined_call_operand.vmem [shape: f32[64], index: 0, kind: input, shape index: {}]
  %s1 = inlined_call_operand.vmem [shape: f32[2,64], index: 1, kind: output, shape index: {}]
  // Predicated region
  $region2: #{tile.28} parent=0 // pred_check
    _
  $region3: #{tile.28} parent=0 // pred_check_branch
    %3 = sbr.rel (0) target = $region5
  $region4: #{tile.28} parent=0 // pred_region
    _
  $region5: #{tile.28} parent=0 // pred_fallthru
    _
  %v4 = vld [vmem:[%s0] ss:$0 sm:$0xff]
  %5 = vst [vmem:[%s1] sm:$0x3] %v4

// kernel: tile.39
$region0: #{tile.39}
  %s0 = inlined_call_operand.vmem [shape: f32[2,3], index: 0, kind: input, shape index: {}]
  %s1 = inlined_call_operand.vmem [shape: f32[6], index: 1, kind: output, shape index: {}]
  $region1: #{tile.39} parent=0
    #allocation0 [shape = 'u8[4096]{0}', space=vmem, size = 0x1000, scoped, tag = 'scoped mem for output reshape']
    #allocation1 [shape = 'u8[4096]{0}', space=vmem, size = 0x1000, scoped, tag = 'scoped mem for input reshape']
    %s3 = ssub.s32 4, 1
    %v4 = vld [vmem:[%s0] sm:%s3]
    %5 = vst [vmem:[#allocation1] sm:%s3] %v4
    %v6 = vld [vmem:[#allocation1] sm:$0x1]
    %vm7 = vcmask 23552
    %8 = vst.msk [vmem:[#allocation0] sm:$0x1] %vm7, %v6
    %s9 = scalar_lea.vmem [#allocation1], 1
    %v10 = vld [vmem:[%s9] sm:$0x1]
    %11 = vrot.lane.b32.xlu0 %v10, 3
    %v12 = vpop.permute.xlu0 %11
    %vm13 = vcmask 48152
    %14 = vst.msk [vmem:[#allocation0] sm:$0x1] %vm13, %v12
    %s16 = ssub.s32 2, 1
    %v17 = vld [vmem:[#allocation0] sm:%s16]
    %s19 = ssub.s32 2, 1
    %20 = vst [vmem:[%s1] sm:%s19] %v17

// kernel: tile.38
$region0: #{tile.38}
  #allocation0 [shape = 's32[1]{0}', space=sflag, size = 0x4, scoped, tag = 'scoped memory for tile.38']
  %s0 = inlined_call_operand.vmem [shape: f32[3], index: 0, kind: input, shape index: {}]
  %s1 = inlined_call_operand.vmem [shape: f32[2,3], index: 1, kind: output, shape index: {}]
  // Predicated region
  $region2: #{tile.38} parent=0 // pred_check
    _
  $region3: #{tile.38} parent=0 // pred_check_branch
    %3 = sbr.rel (0) target = $region5
  $region4: #{tile.38} parent=0 // pred_region
    _
  $region5: #{tile.38} parent=0 // pred_fallthru
    _
  %v4 = vld [vmem:[%s0] ss:$0 sm:$0xff]
  %5 = vst [vmem:[%s1] sm:$0x3] %v4

// kernel: autoencoder_forward.1
$region0: #{autoencoder_forward.1}
  #allocation0 [shape = 'u32[]', space=smem, size = 0x4, offset = 0x4, fixed_abs, tag = 'smem constant byte address 0x4 - core index']
  #allocation1 [shape = 'u32[72,128]{1,0:T(1,128)}', space=vmem, size = 0x9000, scoped, tag = 'internal scratch']
  %s0 = inlined_call_operand.vmem [shape: f32[1,256,128], index: 0, kind: input, shape index: {}]
  %s1 = inlined_call_operand.vmem [shape: bf16[9,64,256], index: 1, kind: input, shape index: {}]
  %s2 = inlined_call_operand.vmem [shape: f32[1152,128], index: 2, kind: input, shape index: {}]
  %s3 = inlined_call_operand.vmem [shape: f32[1,128], index: 3, kind: input, shape index: {}]
  %s4 = inlined_call_operand.vmem [shape: bf16[9,16,64], index: 4, kind: input, shape index: {}]
  %s5 = inlined_call_operand.vmem [shape: f32[1152,128], index: 5, kind: input, shape index: {}]
  %s6 = inlined_call_operand.vmem [shape: f32[1,128], index: 6, kind: input, shape index: {}]
  %s7 = inlined_call_operand.vmem [shape: bf16[9,64,16], index: 7, kind: input, shape index: {}]
  %s8 = inlined_call_operand.vmem [shape: f32[128,1152], index: 8, kind: input, shape index: {}]
  %s9 = inlined_call_operand.vmem [shape: f32[1,128], index: 9, kind: input, shape index: {}]
  %s10 = inlined_call_operand.vmem [shape: bf16[9,256,64], index: 10, kind: input, shape index: {}]
  %s11 = inlined_call_operand.vmem [shape: f32[128,1152], index: 11, kind: input, shape index: {}]
  %s12 = inlined_call_operand.vmem [shape: f32[1,128], index: 12, kind: input, shape index: {}]
  %s13 = inlined_call_operand.vmem [shape: f32[1,256,128], index: 13, kind: output, shape index: {}]
  %s14 = sld [smem:[#allocation0]]
  $region62: #{autoencoder_forward.1} parent=0
    _
  %s16 = ssub.s32 1, %s14
  %s17 = scalar_select 0, %s16, %s14
  // Predicated region
  $region2: #{autoencoder_forward.1} parent=0 // pred_check
    _
  $region3: #{autoencoder_forward.1} parent=0 // pred_check_branch
    %19 = sbr.rel (0) target = $region5
  $region4: #{autoencoder_forward.1} parent=0 // pred_region
    _
  $region5: #{autoencoder_forward.1} parent=0 // pred_fallthru
    _
  // Predicated region
  $region6: #{autoencoder_forward.1} parent=0 // pred_check
    _
  $region7: #{autoencoder_forward.1} parent=0 // pred_check_branch
    %21 = sbr.rel (0) target = $region9
  $region8: #{autoencoder_forward.1} parent=0 // pred_region
    _
  $region9: #{autoencoder_forward.1} parent=0 // pred_fallthru
    _
  // Predicated region
  $region10: #{autoencoder_forward.1} parent=0 // pred_check
    _
  $region11: #{autoencoder_forward.1} parent=0 // pred_check_branch
    %23 = sbr.rel (0) target = $region13
  $region12: #{autoencoder_forward.1} parent=0 // pred_region
    _
  $region13: #{autoencoder_forward.1} parent=0 // pred_fallthru
    _
  // Predicated region
  $region14: #{autoencoder_forward.1} parent=0 // pred_check
    _
  $region15: #{autoencoder_forward.1} parent=0 // pred_check_branch
    %25 = sbr.rel (0) target = $region17
  $region16: #{autoencoder_forward.1} parent=0 // pred_region
    _
  $region17: #{autoencoder_forward.1} parent=0 // pred_fallthru
    _
  // Predicated region
  $region18: #{autoencoder_forward.1} parent=0 // pred_check
    _
  $region19: #{autoencoder_forward.1} parent=0 // pred_check_branch
    %27 = sbr.rel (0) target = $region21
  $region20: #{autoencoder_forward.1} parent=0 // pred_region
    _
  $region21: #{autoencoder_forward.1} parent=0 // pred_fallthru
    _
  // Predicated region
  $region22: #{autoencoder_forward.1} parent=0 // pred_check
    _
  $region23: #{autoencoder_forward.1} parent=0 // pred_check_branch
    %29 = sbr.rel (0) target = $region25
  $region24: #{autoencoder_forward.1} parent=0 // pred_region
    _
  $region25: #{autoencoder_forward.1} parent=0 // pred_fallthru
    _
  // Predicated region
  $region26: #{autoencoder_forward.1} parent=0 // pred_check
    _
  $region27: #{autoencoder_forward.1} parent=0 // pred_check_branch
    %31 = sbr.rel (0) target = $region29
  $region28: #{autoencoder_forward.1} parent=0 // pred_region
    _
  $region29: #{autoencoder_forward.1} parent=0 // pred_fallthru
    _
  // Predicated region
  $region30: #{autoencoder_forward.1} parent=0 // pred_check
    _
  $region31: #{autoencoder_forward.1} parent=0 // pred_check_branch
    %33 = sbr.rel (0) target = $region33
  $region32: #{autoencoder_forward.1} parent=0 // pred_region
    _
  $region33: #{autoencoder_forward.1} parent=0 // pred_fallthru
    _
  // Predicated region
  $region34: #{autoencoder_forward.1} parent=0 // pred_check
    _
  $region35: #{autoencoder_forward.1} parent=0 // pred_check_branch
    %35 = sbr.rel (0) target = $region37
  $region36: #{autoencoder_forward.1} parent=0 // pred_region
    _
  $region37: #{autoencoder_forward.1} parent=0 // pred_fallthru
    _
  // Predicated region
  $region38: #{autoencoder_forward.1} parent=0 // pred_check
    _
  $region39: #{autoencoder_forward.1} parent=0 // pred_check_branch
    %37 = sbr.rel (0) target = $region41
  $region40: #{autoencoder_forward.1} parent=0 // pred_region
    _
  $region41: #{autoencoder_forward.1} parent=0 // pred_fallthru
    _
  // Predicated region
  $region42: #{autoencoder_forward.1} parent=0 // pred_check
    _
  $region43: #{autoencoder_forward.1} parent=0 // pred_check_branch
    %39 = sbr.rel (0) target = $region45
  $region44: #{autoencoder_forward.1} parent=0 // pred_region
    _
  $region45: #{autoencoder_forward.1} parent=0 // pred_fallthru
    _
  // Predicated region
  $region46: #{autoencoder_forward.1} parent=0 // pred_check
    _
  $region47: #{autoencoder_forward.1} parent=0 // pred_check_branch
    %41 = sbr.rel (0) target = $region49
  $region48: #{autoencoder_forward.1} parent=0 // pred_region
    _
  $region49: #{autoencoder_forward.1} parent=0 // pred_fallthru
    _
  // Predicated region
  $region50: #{autoencoder_forward.1} parent=0 // pred_check
    _
  $region51: #{autoencoder_forward.1} parent=0 // pred_check_branch
    %43 = sbr.rel (0) target = $region53
  $region52: #{autoencoder_forward.1} parent=0 // pred_region
    _
  $region53: #{autoencoder_forward.1} parent=0 // pred_fallthru
    _
  %v44 = vld [vmem:[%s0] sm:$0xff]
  %v45 = vld [vmem:[%s0 + $0x8] sm:$0xff]
  %v46 = vld [vmem:[%s0 + $0x10] sm:$0xff]
  %v47 = vld [vmem:[%s0 + $0x18] sm:$0xff]
  %v48 = vld [vmem:[%s0 + $0x20] sm:$0xff]
  %v49 = vld [vmem:[%s0 + $0x28] sm:$0xff]
  %v50 = vld [vmem:[%s0 + $0x30] sm:$0xff]
  %v51 = vld [vmem:[%s0 + $0x38] sm:$0xff]
  %v52 = vld [vmem:[%s0 + $0x40] sm:$0xff]
  %v53 = vld [vmem:[%s0 + $0x48] sm:$0xff]
  %v54 = vld [vmem:[%s0 + $0x50] sm:$0xff]
  %v55 = vld [vmem:[%s0 + $0x58] sm:$0xff]
  %v56 = vld [vmem:[%s0 + $0x60] sm:$0xff]
  %v57 = vld [vmem:[%s0 + $0x68] sm:$0xff]
  %v58 = vld [vmem:[%s0 + $0x70] sm:$0xff]
  %v59 = vld [vmem:[%s0 + $0x78] sm:$0xff]
  %v60 = vld [vmem:[%s0 + $0x80] sm:$0xff]
  %v61 = vld [vmem:[%s0 + $0x88] sm:$0xff]
  %v62 = vld [vmem:[%s0 + $0x90] sm:$0xff]
  %v63 = vld [vmem:[%s0 + $0x98] sm:$0xff]
  %v64 = vld [vmem:[%s0 + $0xa0] sm:$0xff]
  %v65 = vld [vmem:[%s0 + $0xa8] sm:$0xff]
  %v66 = vld [vmem:[%s0 + $0xb0] sm:$0xff]
  %v67 = vld [vmem:[%s0 + $0xb8] sm:$0xff]
  %v68 = vld [vmem:[%s0 + $0xc0] sm:$0xff]
  %v69 = vld [vmem:[%s0 + $0xc8] sm:$0xff]
  %v70 = vld [vmem:[%s0 + $0xd0] sm:$0xff]
  %v71 = vld [vmem:[%s0 + $0xd8] sm:$0xff]
  %v72 = vld [vmem:[%s0 + $0xe0] sm:$0xff]
  %v73 = vld [vmem:[%s0 + $0xe8] sm:$0xff]
  %v74 = vld [vmem:[%s0 + $0xf0] sm:$0xff]
  %v75 = vld [vmem:[%s0 + $0xf8] sm:$0xff]
  %v76 = vld [vmem:[%s1] sm:$0xff]
  %v77 = vld [vmem:[%s1 + $0x8] sm:$0xff]
  %v78 = vld [vmem:[%s1 + $0x10] sm:$0xff]
  %v79 = vld [vmem:[%s1 + $0x18] sm:$0xff]
  %v80 = vld [vmem:[%s1 + $0x20] sm:$0xff]
  %v81 = vld [vmem:[%s1 + $0x28] sm:$0xff]
  %v82 = vld [vmem:[%s1 + $0x30] sm:$0xff]
  %v83 = vld [vmem:[%s1 + $0x38] sm:$0xff]
  %v84 = vunpack.c.l.bf16 %v76
  %v85 = vunpack.c.h.bf16 %v76
  %v86 = vunpack.c.l.bf16 %v77
  %v87 = vunpack.c.h.bf16 %v77
  %v88 = vunpack.c.l.bf16 %v78
  %v89 = vunpack.c.h.bf16 %v78
  %v90 = vunpack.c.l.bf16 %v79
  %v91 = vunpack.c.h.bf16 %v79
  %v92 = vunpack.c.l.bf16 %v80
  %v93 = vunpack.c.h.bf16 %v80
  %v94 = vunpack.c.l.bf16 %v81
  %v95 = vunpack.c.h.bf16 %v81
  %v96 = vunpack.c.l.bf16 %v82
  %v97 = vunpack.c.h.bf16 %v82
  %v98 = vunpack.c.l.bf16 %v83
  %v99 = vunpack.c.h.bf16 %v83
  %100 = vmatpush.msra.mxu0 %v59
  %101 = vmatpush.msra.mxu0 %v58
  %102 = vmatpush.msra.mxu0 %v57
  %103 = vmatpush.msra.mxu0 %v56
  %104 = vmatpush.msra.mxu0 %v55
  %105 = vmatpush.msra.mxu0 %v54
  %106 = vmatpush.msra.mxu0 %v53
  %107 = vmatpush.msra.mxu0 %v52
  %108 = vmatpush.msra.mxu0 %v51
  %109 = vmatpush.msra.mxu0 %v50
  %110 = vmatpush.msra.mxu0 %v49
  %111 = vmatpush.msra.mxu0 %v48
  %112 = vmatpush.msra.mxu0 %v47
  %113 = vmatpush.msra.mxu0 %v46
  %114 = vmatpush.msra.mxu0 %v45
  %115 = vmatpush.msra.mxu0 %v44
  %116 = vmatmul.f32.gmra.mxu0 %v84
  %v117 = vpop.f32.mrf.mxu0
  %v118 = vadd.f32 0.0, %v117
  %119 = vmatmul.f32.gmra.mxu0 %v86
  %v120 = vpop.f32.mrf.mxu0
  %v121 = vadd.f32 0.0, %v120
  %122 = vmatmul.f32.gmra.mxu0 %v88
  %v123 = vpop.f32.mrf.mxu0
  %v124 = vadd.f32 0.0, %v123
  %125 = vmatmul.f32.gmra.mxu0 %v90
  %v126 = vpop.f32.mrf.mxu0
  %v127 = vadd.f32 0.0, %v126
  %128 = vmatmul.f32.gmra.mxu0 %v92
  %v129 = vpop.f32.mrf.mxu0
  %v130 = vadd.f32 0.0, %v129
  %131 = vmatmul.f32.gmra.mxu0 %v94
  %v132 = vpop.f32.mrf.mxu0
  %v133 = vadd.f32 0.0, %v132
  %134 = vmatmul.f32.gmra.mxu0 %v96
  %v135 = vpop.f32.mrf.mxu0
  %v136 = vadd.f32 0.0, %v135
  %137 = vmatmul.f32.gmra.mxu0 %v98
  %v138 = vpop.f32.mrf.mxu0
  %v139 = vadd.f32 0.0, %v138
  %140 = vdwg.mxu0
  %141 = vmatpush.msra.mxu0 %v75
  %142 = vmatpush.msra.mxu0 %v74
  %143 = vmatpush.msra.mxu0 %v73
  %144 = vmatpush.msra.mxu0 %v72
  %145 = vmatpush.msra.mxu0 %v71
  %146 = vmatpush.msra.mxu0 %v70
  %147 = vmatpush.msra.mxu0 %v69
  %148 = vmatpush.msra.mxu0 %v68
  %149 = vmatpush.msra.mxu0 %v67
  %150 = vmatpush.msra.mxu0 %v66
  %151 = vmatpush.msra.mxu0 %v65
  %152 = vmatpush.msra.mxu0 %v64
  %153 = vmatpush.msra.mxu0 %v63
  %154 = vmatpush.msra.mxu0 %v62
  %155 = vmatpush.msra.mxu0 %v61
  %156 = vmatpush.msra.mxu0 %v60
  %157 = vmatmul.f32.gmra.mxu0 %v85
  %v158 = vpop.f32.mrf.mxu0
  %v159 = vadd.f32 %v118, %v158
  %160 = vmatmul.f32.gmra.mxu0 %v87
  %v161 = vpop.f32.mrf.mxu0
  %v162 = vadd.f32 %v121, %v161
  %163 = vmatmul.f32.gmra.mxu0 %v89
  %v164 = vpop.f32.mrf.mxu0
  %v165 = vadd.f32 %v124, %v164
  %166 = vmatmul.f32.gmra.mxu0 %v91
  %v167 = vpop.f32.mrf.mxu0
  %v168 = vadd.f32 %v127, %v167
  %169 = vmatmul.f32.gmra.mxu0 %v93
  %v170 = vpop.f32.mrf.mxu0
  %v171 = vadd.f32 %v130, %v170
  %172 = vmatmul.f32.gmra.mxu0 %v95
  %v173 = vpop.f32.mrf.mxu0
  %v174 = vadd.f32 %v133, %v173
  %175 = vmatmul.f32.gmra.mxu0 %v97
  %v176 = vpop.f32.mrf.mxu0
  %v177 = vadd.f32 %v136, %v176
  %178 = vmatmul.f32.gmra.mxu0 %v99
  %v179 = vpop.f32.mrf.mxu0
  %v180 = vadd.f32 %v139, %v179
  %181 = vdwg.mxu0
  %s182 = scalar_lea.vmem %s1, 64
  %v183 = vld [vmem:[%s182] sm:$0xff]
  %v184 = vld [vmem:[%s182 + $0x8] sm:$0xff]
  %v185 = vld [vmem:[%s182 + $0x10] sm:$0xff]
  %v186 = vld [vmem:[%s182 + $0x18] sm:$0xff]
  %v187 = vld [vmem:[%s182 + $0x20] sm:$0xff]
  %v188 = vld [vmem:[%s182 + $0x28] sm:$0xff]
  %v189 = vld [vmem:[%s182 + $0x30] sm:$0xff]
  %v190 = vld [vmem:[%s182 + $0x38] sm:$0xff]
  %v191 = vunpack.c.l.bf16 %v183
  %v192 = vunpack.c.h.bf16 %v183
  %v193 = vunpack.c.l.bf16 %v184
  %v194 = vunpack.c.h.bf16 %v184
  %v195 = vunpack.c.l.bf16 %v185
  %v196 = vunpack.c.h.bf16 %v185
  %v197 = vunpack.c.l.bf16 %v186
  %v198 = vunpack.c.h.bf16 %v186
  %v199 = vunpack.c.l.bf16 %v187
  %v200 = vunpack.c.h.bf16 %v187
  %v201 = vunpack.c.l.bf16 %v188
  %v202 = vunpack.c.h.bf16 %v188
  %v203 = vunpack.c.l.bf16 %v189
  %v204 = vunpack.c.h.bf16 %v189
  %v205 = vunpack.c.l.bf16 %v190
  %v206 = vunpack.c.h.bf16 %v190
  %207 = vmatpush.msra.mxu0 %v59
  %208 = vmatpush.msra.mxu0 %v58
  %209 = vmatpush.msra.mxu0 %v57
  %210 = vmatpush.msra.mxu0 %v56
  %211 = vmatpush.msra.mxu0 %v55
  %212 = vmatpush.msra.mxu0 %v54
  %213 = vmatpush.msra.mxu0 %v53
  %214 = vmatpush.msra.mxu0 %v52
  %215 = vmatpush.msra.mxu0 %v51
  %216 = vmatpush.msra.mxu0 %v50
  %217 = vmatpush.msra.mxu0 %v49
  %218 = vmatpush.msra.mxu0 %v48
  %219 = vmatpush.msra.mxu0 %v47
  %220 = vmatpush.msra.mxu0 %v46
  %221 = vmatpush.msra.mxu0 %v45
  %222 = vmatpush.msra.mxu0 %v44
  %223 = vmatmul.f32.gmra.mxu0 %v191
  %v224 = vpop.f32.mrf.mxu0
  %v225 = vadd.f32 0.0, %v224
  %226 = vmatmul.f32.gmra.mxu0 %v193
  %v227 = vpop.f32.mrf.mxu0
  %v228 = vadd.f32 0.0, %v227
  %229 = vmatmul.f32.gmra.mxu0 %v195
  %v230 = vpop.f32.mrf.mxu0
  %v231 = vadd.f32 0.0, %v230
  %232 = vmatmul.f32.gmra.mxu0 %v197
  %v233 = vpop.f32.mrf.mxu0
  %v234 = vadd.f32 0.0, %v233
  %235 = vmatmul.f32.gmra.mxu0 %v199
  %v236 = vpop.f32.mrf.mxu0
  %v237 = vadd.f32 0.0, %v236
  %238 = vmatmul.f32.gmra.mxu0 %v201
  %v239 = vpop.f32.mrf.mxu0
  %v240 = vadd.f32 0.0, %v239
  %241 = vmatmul.f32.gmra.mxu0 %v203
  %v242 = vpop.f32.mrf.mxu0
  %v243 = vadd.f32 0.0, %v242
  %244 = vmatmul.f32.gmra.mxu0 %v205
  %v245 = vpop.f32.mrf.mxu0
  %v246 = vadd.f32 0.0, %v245
  %247 = vdwg.mxu0
  %248 = vmatpush.msra.mxu0 %v75
  %249 = vmatpush.msra.mxu0 %v74
  %250 = vmatpush.msra.mxu0 %v73
  %251 = vmatpush.msra.mxu0 %v72
  %252 = vmatpush.msra.mxu0 %v71
  %253 = vmatpush.msra.mxu0 %v70
  %254 = vmatpush.msra.mxu0 %v69
  %255 = vmatpush.msra.mxu0 %v68
  %256 = vmatpush.msra.mxu0 %v67
  %257 = vmatpush.msra.mxu0 %v66
  %258 = vmatpush.msra.mxu0 %v65
  %259 = vmatpush.msra.mxu0 %v64
  %260 = vmatpush.msra.mxu0 %v63
  %261 = vmatpush.msra.mxu0 %v62
  %262 = vmatpush.msra.mxu0 %v61
  %263 = vmatpush.msra.mxu0 %v60
  %264 = vmatmul.f32.gmra.mxu0 %v192
  %v265 = vpop.f32.mrf.mxu0
  %v266 = vadd.f32 %v225, %v265
  %267 = vmatmul.f32.gmra.mxu0 %v194
  %v268 = vpop.f32.mrf.mxu0
  %v269 = vadd.f32 %v228, %v268
  %270 = vmatmul.f32.gmra.mxu0 %v196
  %v271 = vpop.f32.mrf.mxu0
  %v272 = vadd.f32 %v231, %v271
  %273 = vmatmul.f32.gmra.mxu0 %v198
  %v274 = vpop.f32.mrf.mxu0
  %v275 = vadd.f32 %v234, %v274
  %276 = vmatmul.f32.gmra.mxu0 %v200
  %v277 = vpop.f32.mrf.mxu0
  %v278 = vadd.f32 %v237, %v277
  %279 = vmatmul.f32.gmra.mxu0 %v202
  %v280 = vpop.f32.mrf.mxu0
  %v281 = vadd.f32 %v240, %v280
  %282 = vmatmul.f32.gmra.mxu0 %v204
  %v283 = vpop.f32.mrf.mxu0
  %v284 = vadd.f32 %v243, %v283
  %285 = vmatmul.f32.gmra.mxu0 %v206
  %v286 = vpop.f32.mrf.mxu0
  %v287 = vadd.f32 %v246, %v286
  %288 = vdwg.mxu0
  %s289 = scalar_lea.vmem %s1, 128
  %v290 = vld [vmem:[%s289] sm:$0xff]
  %v291 = vld [vmem:[%s289 + $0x8] sm:$0xff]
  %v292 = vld [vmem:[%s289 + $0x10] sm:$0xff]
  %v293 = vld [vmem:[%s289 + $0x18] sm:$0xff]
  %v294 = vld [vmem:[%s289 + $0x20] sm:$0xff]
  %v295 = vld [vmem:[%s289 + $0x28] sm:$0xff]
  %v296 = vld [vmem:[%s289 + $0x30] sm:$0xff]
  %v297 = vld [vmem:[%s289 + $0x38] sm:$0xff]
  %v298 = vunpack.c.l.bf16 %v290
  %v299 = vunpack.c.h.bf16 %v290
  %v300 = vunpack.c.l.bf16 %v291
  %v301 = vunpack.c.h.bf16 %v291
  %v302 = vunpack.c.l.bf16 %v292
  %v303 = vunpack.c.h.bf16 %v292
  %v304 = vunpack.c.l.bf16 %v293
  %v305 = vunpack.c.h.bf16 %v293
  %v306 = vunpack.c.l.bf16 %v294
  %v307 = vunpack.c.h.bf16 %v294
  %v308 = vunpack.c.l.bf16 %v295
  %v309 = vunpack.c.h.bf16 %v295
  %v310 = vunpack.c.l.bf16 %v296
  %v311 = vunpack.c.h.bf16 %v296
  %v312 = vunpack.c.l.bf16 %v297
  %v313 = vunpack.c.h.bf16 %v297
  %314 = vmatpush.msra.mxu0 %v59
  %315 = vmatpush.msra.mxu0 %v58
  %316 = vmatpush.msra.mxu0 %v57
  %317 = vmatpush.msra.mxu0 %v56
  %318 = vmatpush.msra.mxu0 %v55
  %319 = vmatpush.msra.mxu0 %v54
  %320 = vmatpush.msra.mxu0 %v53
  %321 = vmatpush.msra.mxu0 %v52
  %322 = vmatpush.msra.mxu0 %v51
  %323 = vmatpush.msra.mxu0 %v50
  %324 = vmatpush.msra.mxu0 %v49
  %325 = vmatpush.msra.mxu0 %v48
  %326 = vmatpush.msra.mxu0 %v47
  %327 = vmatpush.msra.mxu0 %v46
  %328 = vmatpush.msra.mxu0 %v45
  %329 = vmatpush.msra.mxu0 %v44
  %330 = vmatmul.f32.gmra.mxu0 %v298
  %v331 = vpop.f32.mrf.mxu0
  %v332 = vadd.f32 0.0, %v331
  %333 = vmatmul.f32.gmra.mxu0 %v300
  %v334 = vpop.f32.mrf.mxu0
  %v335 = vadd.f32 0.0, %v334
  %336 = vmatmul.f32.gmra.mxu0 %v302
  %v337 = vpop.f32.mrf.mxu0
  %v338 = vadd.f32 0.0, %v337
  %339 = vmatmul.f32.gmra.mxu0 %v304
  %v340 = vpop.f32.mrf.mxu0
  %v341 = vadd.f32 0.0, %v340
  %342 = vmatmul.f32.gmra.mxu0 %v306
  %v343 = vpop.f32.mrf.mxu0
  %v344 = vadd.f32 0.0, %v343
  %345 = vmatmul.f32.gmra.mxu0 %v308
  %v346 = vpop.f32.mrf.mxu0
  %v347 = vadd.f32 0.0, %v346
  %348 = vmatmul.f32.gmra.mxu0 %v310
  %v349 = vpop.f32.mrf.mxu0
  %v350 = vadd.f32 0.0, %v349
  %351 = vmatmul.f32.gmra.mxu0 %v312
  %v352 = vpop.f32.mrf.mxu0
  %v353 = vadd.f32 0.0, %v352
  %354 = vdwg.mxu0
  %355 = vmatpush.msra.mxu0 %v75
  %356 = vmatpush.msra.mxu0 %v74
  %357 = vmatpush.msra.mxu0 %v73
  %358 = vmatpush.msra.mxu0 %v72
  %359 = vmatpush.msra.mxu0 %v71
  %360 = vmatpush.msra.mxu0 %v70
  %361 = vmatpush.msra.mxu0 %v69
  %362 = vmatpush.msra.mxu0 %v68
  %363 = vmatpush.msra.mxu0 %v67
  %364 = vmatpush.msra.mxu0 %v66
  %365 = vmatpush.msra.mxu0 %v65
  %366 = vmatpush.msra.mxu0 %v64
  %367 = vmatpush.msra.mxu0 %v63
  %368 = vmatpush.msra.mxu0 %v62
  %369 = vmatpush.msra.mxu0 %v61
  %370 = vmatpush.msra.mxu0 %v60
  %371 = vmatmul.f32.gmra.mxu0 %v299
  %v372 = vpop.f32.mrf.mxu0
  %v373 = vadd.f32 %v332, %v372
  %374 = vmatmul.f32.gmra.mxu0 %v301
  %v375 = vpop.f32.mrf.mxu0
  %v376 = vadd.f32 %v335, %v375
  %377 = vmatmul.f32.gmra.mxu0 %v303
  %v378 = vpop.f32.mrf.mxu0
  %v379 = vadd.f32 %v338, %v378
  %380 = vmatmul.f32.gmra.mxu0 %v305
  %v381 = vpop.f32.mrf.mxu0
  %v382 = vadd.f32 %v341, %v381
  %383 = vmatmul.f32.gmra.mxu0 %v307
  %v384 = vpop.f32.mrf.mxu0
  %v385 = vadd.f32 %v344, %v384
  %386 = vmatmul.f32.gmra.mxu0 %v309
  %v387 = vpop.f32.mrf.mxu0
  %v388 = vadd.f32 %v347, %v387
  %389 = vmatmul.f32.gmra.mxu0 %v311
  %v390 = vpop.f32.mrf.mxu0
  %v391 = vadd.f32 %v350, %v390
  %392 = vmatmul.f32.gmra.mxu0 %v313
  %v393 = vpop.f32.mrf.mxu0
  %v394 = vadd.f32 %v353, %v393
  %395 = vdwg.mxu0
  %s396 = scalar_lea.vmem %s1, 192
  %v397 = vld [vmem:[%s396] sm:$0xff]
  %v398 = vld [vmem:[%s396 + $0x8] sm:$0xff]
  %v399 = vld [vmem:[%s396 + $0x10] sm:$0xff]
  %v400 = vld [vmem:[%s396 + $0x18] sm:$0xff]
  %v401 = vld [vmem:[%s396 + $0x20] sm:$0xff]
  %v402 = vld [vmem:[%s396 + $0x28] sm:$0xff]
  %v403 = vld [vmem:[%s396 + $0x30] sm:$0xff]
  %v404 = vld [vmem:[%s396 + $0x38] sm:$0xff]
  %v405 = vunpack.c.l.bf16 %v397
  %v406 = vunpack.c.h.bf16 %v397
  %v407 = vunpack.c.l.bf16 %v398
  %v408 = vunpack.c.h.bf16 %v398
  %v409 = vunpack.c.l.bf16 %v399
  %v410 = vunpack.c.h.bf16 %v399
  %v411 = vunpack.c.l.bf16 %v400
  %v412 = vunpack.c.h.bf16 %v400
  %v413 = vunpack.c.l.bf16 %v401
  %v414 = vunpack.c.h.bf16 %v401
  %v415 = vunpack.c.l.bf16 %v402
  %v416 = vunpack.c.h.bf16 %v402
  %v417 = vunpack.c.l.bf16 %v403
  %v418 = vunpack.c.h.bf16 %v403
  %v419 = vunpack.c.l.bf16 %v404
  %v420 = vunpack.c.h.bf16 %v404
  %421 = vmatpush.msra.mxu0 %v59
  %422 = vmatpush.msra.mxu0 %v58
  %423 = vmatpush.msra.mxu0 %v57
  %424 = vmatpush.msra.mxu0 %v56
  %425 = vmatpush.msra.mxu0 %v55
  %426 = vmatpush.msra.mxu0 %v54
  %427 = vmatpush.msra.mxu0 %v53
  %428 = vmatpush.msra.mxu0 %v52
  %429 = vmatpush.msra.mxu0 %v51
  %430 = vmatpush.msra.mxu0 %v50
  %431 = vmatpush.msra.mxu0 %v49
  %432 = vmatpush.msra.mxu0 %v48
  %433 = vmatpush.msra.mxu0 %v47
  %434 = vmatpush.msra.mxu0 %v46
  %435 = vmatpush.msra.mxu0 %v45
  %436 = vmatpush.msra.mxu0 %v44
  %437 = vmatmul.f32.gmra.mxu0 %v405
  %v438 = vpop.f32.mrf.mxu0
  %v439 = vadd.f32 0.0, %v438
  %440 = vmatmul.f32.gmra.mxu0 %v407
  %v441 = vpop.f32.mrf.mxu0
  %v442 = vadd.f32 0.0, %v441
  %443 = vmatmul.f32.gmra.mxu0 %v409
  %v444 = vpop.f32.mrf.mxu0
  %v445 = vadd.f32 0.0, %v444
  %446 = vmatmul.f32.gmra.mxu0 %v411
  %v447 = vpop.f32.mrf.mxu0
  %v448 = vadd.f32 0.0, %v447
  %449 = vmatmul.f32.gmra.mxu0 %v413
  %v450 = vpop.f32.mrf.mxu0
  %v451 = vadd.f32 0.0, %v450
  %452 = vmatmul.f32.gmra.mxu0 %v415
  %v453 = vpop.f32.mrf.mxu0
  %v454 = vadd.f32 0.0, %v453
  %455 = vmatmul.f32.gmra.mxu0 %v417
  %v456 = vpop.f32.mrf.mxu0
  %v457 = vadd.f32 0.0, %v456
  %458 = vmatmul.f32.gmra.mxu0 %v419
  %v459 = vpop.f32.mrf.mxu0
  %v460 = vadd.f32 0.0, %v459
  %461 = vdwg.mxu0
  %462 = vmatpush.msra.mxu0 %v75
  %463 = vmatpush.msra.mxu0 %v74
  %464 = vmatpush.msra.mxu0 %v73
  %465 = vmatpush.msra.mxu0 %v72
  %466 = vmatpush.msra.mxu0 %v71
  %467 = vmatpush.msra.mxu0 %v70
  %468 = vmatpush.msra.mxu0 %v69
  %469 = vmatpush.msra.mxu0 %v68
  %470 = vmatpush.msra.mxu0 %v67
  %471 = vmatpush.msra.mxu0 %v66
  %472 = vmatpush.msra.mxu0 %v65
  %473 = vmatpush.msra.mxu0 %v64
  %474 = vmatpush.msra.mxu0 %v63
  %475 = vmatpush.msra.mxu0 %v62
  %476 = vmatpush.msra.mxu0 %v61
  %477 = vmatpush.msra.mxu0 %v60
  %478 = vmatmul.f32.gmra.mxu0 %v406
  %v479 = vpop.f32.mrf.mxu0
  %v480 = vadd.f32 %v439, %v479
  %481 = vmatmul.f32.gmra.mxu0 %v408
  %v482 = vpop.f32.mrf.mxu0
  %v483 = vadd.f32 %v442, %v482
  %484 = vmatmul.f32.gmra.mxu0 %v410
  %v485 = vpop.f32.mrf.mxu0
  %v486 = vadd.f32 %v445, %v485
  %487 = vmatmul.f32.gmra.mxu0 %v412
  %v488 = vpop.f32.mrf.mxu0
  %v489 = vadd.f32 %v448, %v488
  %490 = vmatmul.f32.gmra.mxu0 %v414
  %v491 = vpop.f32.mrf.mxu0
  %v492 = vadd.f32 %v451, %v491
  %493 = vmatmul.f32.gmra.mxu0 %v416
  %v494 = vpop.f32.mrf.mxu0
  %v495 = vadd.f32 %v454, %v494
  %496 = vmatmul.f32.gmra.mxu0 %v418
  %v497 = vpop.f32.mrf.mxu0
  %v498 = vadd.f32 %v457, %v497
  %499 = vmatmul.f32.gmra.mxu0 %v420
  %v500 = vpop.f32.mrf.mxu0
  %v501 = vadd.f32 %v460, %v500
  %502 = vdwg.mxu0
  %s503 = scalar_lea.vmem %s1, 256
  %v504 = vld [vmem:[%s503] sm:$0xff]
  %v505 = vld [vmem:[%s503 + $0x8] sm:$0xff]
  %v506 = vld [vmem:[%s503 + $0x10] sm:$0xff]
  %v507 = vld [vmem:[%s503 + $0x18] sm:$0xff]
  %v508 = vld [vmem:[%s503 + $0x20] sm:$0xff]
  %v509 = vld [vmem:[%s503 + $0x28] sm:$0xff]
  %v510 = vld [vmem:[%s503 + $0x30] sm:$0xff]
  %v511 = vld [vmem:[%s503 + $0x38] sm:$0xff]
  %v512 = vunpack.c.l.bf16 %v504
  %v513 = vunpack.c.h.bf16 %v504
  %v514 = vunpack.c.l.bf16 %v505
  %v515 = vunpack.c.h.bf16 %v505
  %v516 = vunpack.c.l.bf16 %v506
  %v517 = vunpack.c.h.bf16 %v506
  %v518 = vunpack.c.l.bf16 %v507
  %v519 = vunpack.c.h.bf16 %v507
  %v520 = vunpack.c.l.bf16 %v508
  %v521 = vunpack.c.h.bf16 %v508
  %v522 = vunpack.c.l.bf16 %v509
  %v523 = vunpack.c.h.bf16 %v509
  %v524 = vunpack.c.l.bf16 %v510
  %v525 = vunpack.c.h.bf16 %v510
  %v526 = vunpack.c.l.bf16 %v511
  %v527 = vunpack.c.h.bf16 %v511
  %528 = vmatpush.msra.mxu0 %v59
  %529 = vmatpush.msra.mxu0 %v58
  %530 = vmatpush.msra.mxu0 %v57
  %531 = vmatpush.msra.mxu0 %v56
  %532 = vmatpush.msra.mxu0 %v55
  %533 = vmatpush.msra.mxu0 %v54
  %534 = vmatpush.msra.mxu0 %v53
  %535 = vmatpush.msra.mxu0 %v52
  %536 = vmatpush.msra.mxu0 %v51
  %537 = vmatpush.msra.mxu0 %v50
  %538 = vmatpush.msra.mxu0 %v49
  %539 = vmatpush.msra.mxu0 %v48
  %540 = vmatpush.msra.mxu0 %v47
  %541 = vmatpush.msra.mxu0 %v46
  %542 = vmatpush.msra.mxu0 %v45
  %543 = vmatpush.msra.mxu0 %v44
  %544 = vmatmul.f32.gmra.mxu0 %v512
  %v545 = vpop.f32.mrf.mxu0
  %v546 = vadd.f32 0.0, %v545
  %547 = vmatmul.f32.gmra.mxu0 %v514
  %v548 = vpop.f32.mrf.mxu0
  %v549 = vadd.f32 0.0, %v548
  %550 = vmatmul.f32.gmra.mxu0 %v516
  %v551 = vpop.f32.mrf.mxu0
  %v552 = vadd.f32 0.0, %v551
  %553 = vmatmul.f32.gmra.mxu0 %v518
  %v554 = vpop.f32.mrf.mxu0
  %v555 = vadd.f32 0.0, %v554
  %556 = vmatmul.f32.gmra.mxu0 %v520
  %v557 = vpop.f32.mrf.mxu0
  %v558 = vadd.f32 0.0, %v557
  %559 = vmatmul.f32.gmra.mxu0 %v522
  %v560 = vpop.f32.mrf.mxu0
  %v561 = vadd.f32 0.0, %v560
  %562 = vmatmul.f32.gmra.mxu0 %v524
  %v563 = vpop.f32.mrf.mxu0
  %v564 = vadd.f32 0.0, %v563
  %565 = vmatmul.f32.gmra.mxu0 %v526
  %v566 = vpop.f32.mrf.mxu0
  %v567 = vadd.f32 0.0, %v566
  %568 = vdwg.mxu0
  %569 = vmatpush.msra.mxu0 %v75
  %570 = vmatpush.msra.mxu0 %v74
  %571 = vmatpush.msra.mxu0 %v73
  %572 = vmatpush.msra.mxu0 %v72
  %573 = vmatpush.msra.mxu0 %v71
  %574 = vmatpush.msra.mxu0 %v70
  %575 = vmatpush.msra.mxu0 %v69
  %576 = vmatpush.msra.mxu0 %v68
  %577 = vmatpush.msra.mxu0 %v67
  %578 = vmatpush.msra.mxu0 %v66
  %579 = vmatpush.msra.mxu0 %v65
  %580 = vmatpush.msra.mxu0 %v64
  %581 = vmatpush.msra.mxu0 %v63
  %582 = vmatpush.msra.mxu0 %v62
  %583 = vmatpush.msra.mxu0 %v61
  %584 = vmatpush.msra.mxu0 %v60
  %585 = vmatmul.f32.gmra.mxu0 %v513
  %v586 = vpop.f32.mrf.mxu0
  %v587 = vadd.f32 %v546, %v586
  %588 = vmatmul.f32.gmra.mxu0 %v515
  %v589 = vpop.f32.mrf.mxu0
  %v590 = vadd.f32 %v549, %v589
  %591 = vmatmul.f32.gmra.mxu0 %v517
  %v592 = vpop.f32.mrf.mxu0
  %v593 = vadd.f32 %v552, %v592
  %594 = vmatmul.f32.gmra.mxu0 %v519
  %v595 = vpop.f32.mrf.mxu0
  %v596 = vadd.f32 %v555, %v595
  %597 = vmatmul.f32.gmra.mxu0 %v521
  %v598 = vpop.f32.mrf.mxu0
  %v599 = vadd.f32 %v558, %v598
  %600 = vmatmul.f32.gmra.mxu0 %v523
  %v601 = vpop.f32.mrf.mxu0
  %v602 = vadd.f32 %v561, %v601
  %603 = vmatmul.f32.gmra.mxu0 %v525
  %v604 = vpop.f32.mrf.mxu0
  %v605 = vadd.f32 %v564, %v604
  %606 = vmatmul.f32.gmra.mxu0 %v527
  %v607 = vpop.f32.mrf.mxu0
  %v608 = vadd.f32 %v567, %v607
  %609 = vdwg.mxu0
  %s610 = scalar_lea.vmem %s1, 320
  %v611 = vld [vmem:[%s610] sm:$0xff]
  %v612 = vld [vmem:[%s610 + $0x8] sm:$0xff]
  %v613 = vld [vmem:[%s610 + $0x10] sm:$0xff]
  %v614 = vld [vmem:[%s610 + $0x18] sm:$0xff]
  %v615 = vld [vmem:[%s610 + $0x20] sm:$0xff]
  %v616 = vld [vmem:[%s610 + $0x28] sm:$0xff]
  %v617 = vld [vmem:[%s610 + $0x30] sm:$0xff]
  %v618 = vld [vmem:[%s610 + $0x38] sm:$0xff]
  %v619 = vunpack.c.l.bf16 %v611
  %v620 = vunpack.c.h.bf16 %v611
  %v621 = vunpack.c.l.bf16 %v612
  %v622 = vunpack.c.h.bf16 %v612
  %v623 = vunpack.c.l.bf16 %v613
  %v624 = vunpack.c.h.bf16 %v613
  %v625 = vunpack.c.l.bf16 %v614
  %v626 = vunpack.c.h.bf16 %v614
  %v627 = vunpack.c.l.bf16 %v615
  %v628 = vunpack.c.h.bf16 %v615
  %v629 = vunpack.c.l.bf16 %v616
  %v630 = vunpack.c.h.bf16 %v616
  %v631 = vunpack.c.l.bf16 %v617
  %v632 = vunpack.c.h.bf16 %v617
  %v633 = vunpack.c.l.bf16 %v618
  %v634 = vunpack.c.h.bf16 %v618
  %635 = vmatpush.msra.mxu0 %v59
  %636 = vmatpush.msra.mxu0 %v58
  %637 = vmatpush.msra.mxu0 %v57
  %638 = vmatpush.msra.mxu0 %v56
  %639 = vmatpush.msra.mxu0 %v55
  %640 = vmatpush.msra.mxu0 %v54
  %641 = vmatpush.msra.mxu0 %v53
  %642 = vmatpush.msra.mxu0 %v52
  %643 = vmatpush.msra.mxu0 %v51
  %644 = vmatpush.msra.mxu0 %v50
  %645 = vmatpush.msra.mxu0 %v49
  %646 = vmatpush.msra.mxu0 %v48
  %647 = vmatpush.msra.mxu0 %v47
  %648 = vmatpush.msra.mxu0 %v46
  %649 = vmatpush.msra.mxu0 %v45
  %650 = vmatpush.msra.mxu0 %v44
  %651 = vmatmul.f32.gmra.mxu0 %v619
  %v652 = vpop.f32.mrf.mxu0
  %v653 = vadd.f32 0.0, %v652
  %654 = vmatmul.f32.gmra.mxu0 %v621
  %v655 = vpop.f32.mrf.mxu0
  %v656 = vadd.f32 0.0, %v655
  %657 = vmatmul.f32.gmra.mxu0 %v623
  %v658 = vpop.f32.mrf.mxu0
  %v659 = vadd.f32 0.0, %v658
  %660 = vmatmul.f32.gmra.mxu0 %v625
  %v661 = vpop.f32.mrf.mxu0
  %v662 = vadd.f32 0.0, %v661
  %663 = vmatmul.f32.gmra.mxu0 %v627
  %v664 = vpop.f32.mrf.mxu0
  %v665 = vadd.f32 0.0, %v664
  %666 = vmatmul.f32.gmra.mxu0 %v629
  %v667 = vpop.f32.mrf.mxu0
  %v668 = vadd.f32 0.0, %v667
  %669 = vmatmul.f32.gmra.mxu0 %v631
  %v670 = vpop.f32.mrf.mxu0
  %v671 = vadd.f32 0.0, %v670
  %672 = vmatmul.f32.gmra.mxu0 %v633
  %v673 = vpop.f32.mrf.mxu0
  %v674 = vadd.f32 0.0, %v673
  %675 = vdwg.mxu0
  %676 = vmatpush.msra.mxu0 %v75
  %677 = vmatpush.msra.mxu0 %v74
  %678 = vmatpush.msra.mxu0 %v73
  %679 = vmatpush.msra.mxu0 %v72
  %680 = vmatpush.msra.mxu0 %v71
  %681 = vmatpush.msra.mxu0 %v70
  %682 = vmatpush.msra.mxu0 %v69
  %683 = vmatpush.msra.mxu0 %v68
  %684 = vmatpush.msra.mxu0 %v67
  %685 = vmatpush.msra.mxu0 %v66
  %686 = vmatpush.msra.mxu0 %v65
  %687 = vmatpush.msra.mxu0 %v64
  %688 = vmatpush.msra.mxu0 %v63
  %689 = vmatpush.msra.mxu0 %v62
  %690 = vmatpush.msra.mxu0 %v61
  %691 = vmatpush.msra.mxu0 %v60
  %692 = vmatmul.f32.gmra.mxu0 %v620
  %v693 = vpop.f32.mrf.mxu0
  %v694 = vadd.f32 %v653, %v693
  %695 = vmatmul.f32.gmra.mxu0 %v622
  %v696 = vpop.f32.mrf.mxu0
  %v697 = vadd.f32 %v656, %v696
  %698 = vmatmul.f32.gmra.mxu0 %v624
  %v699 = vpop.f32.mrf.mxu0
  %v700 = vadd.f32 %v659, %v699
  %701 = vmatmul.f32.gmra.mxu0 %v626
  %v702 = vpop.f32.mrf.mxu0
  %v703 = vadd.f32 %v662, %v702
  %704 = vmatmul.f32.gmra.mxu0 %v628
  %v705 = vpop.f32.mrf.mxu0
  %v706 = vadd.f32 %v665, %v705
  %707 = vmatmul.f32.gmra.mxu0 %v630
  %v708 = vpop.f32.mrf.mxu0
  %v709 = vadd.f32 %v668, %v708
  %710 = vmatmul.f32.gmra.mxu0 %v632
  %v711 = vpop.f32.mrf.mxu0
  %v712 = vadd.f32 %v671, %v711
  %713 = vmatmul.f32.gmra.mxu0 %v634
  %v714 = vpop.f32.mrf.mxu0
  %v715 = vadd.f32 %v674, %v714
  %716 = vdwg.mxu0
  %s717 = scalar_lea.vmem %s1, 384
  %v718 = vld [vmem:[%s717] sm:$0xff]
  %v719 = vld [vmem:[%s717 + $0x8] sm:$0xff]
  %v720 = vld [vmem:[%s717 + $0x10] sm:$0xff]
  %v721 = vld [vmem:[%s717 + $0x18] sm:$0xff]
  %v722 = vld [vmem:[%s717 + $0x20] sm:$0xff]
  %v723 = vld [vmem:[%s717 + $0x28] sm:$0xff]
  %v724 = vld [vmem:[%s717 + $0x30] sm:$0xff]
  %v725 = vld [vmem:[%s717 + $0x38] sm:$0xff]
  %v726 = vunpack.c.l.bf16 %v718
  %v727 = vunpack.c.h.bf16 %v718
  %v728 = vunpack.c.l.bf16 %v719
  %v729 = vunpack.c.h.bf16 %v719
  %v730 = vunpack.c.l.bf16 %v720
  %v731 = vunpack.c.h.bf16 %v720
  %v732 = vunpack.c.l.bf16 %v721
  %v733 = vunpack.c.h.bf16 %v721
  %v734 = vunpack.c.l.bf16 %v722
  %v735 = vunpack.c.h.bf16 %v722
  %v736 = vunpack.c.l.bf16 %v723
  %v737 = vunpack.c.h.bf16 %v723
  %v738 = vunpack.c.l.bf16 %v724
  %v739 = vunpack.c.h.bf16 %v724
  %v740 = vunpack.c.l.bf16 %v725
  %v741 = vunpack.c.h.bf16 %v725
  %742 = vmatpush.msra.mxu0 %v59
  %743 = vmatpush.msra.mxu0 %v58
  %744 = vmatpush.msra.mxu0 %v57
  %745 = vmatpush.msra.mxu0 %v56
  %746 = vmatpush.msra.mxu0 %v55
  %747 = vmatpush.msra.mxu0 %v54
  %748 = vmatpush.msra.mxu0 %v53
  %749 = vmatpush.msra.mxu0 %v52
  %750 = vmatpush.msra.mxu0 %v51
  %751 = vmatpush.msra.mxu0 %v50
  %752 = vmatpush.msra.mxu0 %v49
  %753 = vmatpush.msra.mxu0 %v48
  %754 = vmatpush.msra.mxu0 %v47
  %755 = vmatpush.msra.mxu0 %v46
  %756 = vmatpush.msra.mxu0 %v45
  %757 = vmatpush.msra.mxu0 %v44
  %758 = vmatmul.f32.gmra.mxu0 %v726
  %v759 = vpop.f32.mrf.mxu0
  %v760 = vadd.f32 0.0, %v759
  %761 = vmatmul.f32.gmra.mxu0 %v728
  %v762 = vpop.f32.mrf.mxu0
  %v763 = vadd.f32 0.0, %v762
  %764 = vmatmul.f32.gmra.mxu0 %v730
  %v765 = vpop.f32.mrf.mxu0
  %v766 = vadd.f32 0.0, %v765
  %767 = vmatmul.f32.gmra.mxu0 %v732
  %v768 = vpop.f32.mrf.mxu0
  %v769 = vadd.f32 0.0, %v768
  %770 = vmatmul.f32.gmra.mxu0 %v734
  %v771 = vpop.f32.mrf.mxu0
  %v772 = vadd.f32 0.0, %v771
  %773 = vmatmul.f32.gmra.mxu0 %v736
  %v774 = vpop.f32.mrf.mxu0
  %v775 = vadd.f32 0.0, %v774
  %776 = vmatmul.f32.gmra.mxu0 %v738
  %v777 = vpop.f32.mrf.mxu0
  %v778 = vadd.f32 0.0, %v777
  %779 = vmatmul.f32.gmra.mxu0 %v740
  %v780 = vpop.f32.mrf.mxu0
  %v781 = vadd.f32 0.0, %v780
  %782 = vdwg.mxu0
  %783 = vmatpush.msra.mxu0 %v75
  %784 = vmatpush.msra.mxu0 %v74
  %785 = vmatpush.msra.mxu0 %v73
  %786 = vmatpush.msra.mxu0 %v72
  %787 = vmatpush.msra.mxu0 %v71
  %788 = vmatpush.msra.mxu0 %v70
  %789 = vmatpush.msra.mxu0 %v69
  %790 = vmatpush.msra.mxu0 %v68
  %791 = vmatpush.msra.mxu0 %v67
  %792 = vmatpush.msra.mxu0 %v66
  %793 = vmatpush.msra.mxu0 %v65
  %794 = vmatpush.msra.mxu0 %v64
  %795 = vmatpush.msra.mxu0 %v63
  %796 = vmatpush.msra.mxu0 %v62
  %797 = vmatpush.msra.mxu0 %v61
  %798 = vmatpush.msra.mxu0 %v60
  %799 = vmatmul.f32.gmra.mxu0 %v727
  %v800 = vpop.f32.mrf.mxu0
  %v801 = vadd.f32 %v760, %v800
  %802 = vmatmul.f32.gmra.mxu0 %v729
  %v803 = vpop.f32.mrf.mxu0
  %v804 = vadd.f32 %v763, %v803
  %805 = vmatmul.f32.gmra.mxu0 %v731
  %v806 = vpop.f32.mrf.mxu0
  %v807 = vadd.f32 %v766, %v806
  %808 = vmatmul.f32.gmra.mxu0 %v733
  %v809 = vpop.f32.mrf.mxu0
  %v810 = vadd.f32 %v769, %v809
  %811 = vmatmul.f32.gmra.mxu0 %v735
  %v812 = vpop.f32.mrf.mxu0
  %v813 = vadd.f32 %v772, %v812
  %814 = vmatmul.f32.gmra.mxu0 %v737
  %v815 = vpop.f32.mrf.mxu0
  %v816 = vadd.f32 %v775, %v815
  %817 = vmatmul.f32.gmra.mxu0 %v739
  %v818 = vpop.f32.mrf.mxu0
  %v819 = vadd.f32 %v778, %v818
  %820 = vmatmul.f32.gmra.mxu0 %v741
  %v821 = vpop.f32.mrf.mxu0
  %v822 = vadd.f32 %v781, %v821
  %823 = vdwg.mxu0
  %s824 = scalar_lea.vmem %s1, 448
  %v825 = vld [vmem:[%s824] sm:$0xff]
  %v826 = vld [vmem:[%s824 + $0x8] sm:$0xff]
  %v827 = vld [vmem:[%s824 + $0x10] sm:$0xff]
  %v828 = vld [vmem:[%s824 + $0x18] sm:$0xff]
  %v829 = vld [vmem:[%s824 + $0x20] sm:$0xff]
  %v830 = vld [vmem:[%s824 + $0x28] sm:$0xff]
  %v831 = vld [vmem:[%s824 + $0x30] sm:$0xff]
  %v832 = vld [vmem:[%s824 + $0x38] sm:$0xff]
  %v833 = vunpack.c.l.bf16 %v825
  %v834 = vunpack.c.h.bf16 %v825
  %v835 = vunpack.c.l.bf16 %v826
  %v836 = vunpack.c.h.bf16 %v826
  %v837 = vunpack.c.l.bf16 %v827
  %v838 = vunpack.c.h.bf16 %v827
  %v839 = vunpack.c.l.bf16 %v828
  %v840 = vunpack.c.h.bf16 %v828
  %v841 = vunpack.c.l.bf16 %v829
  %v842 = vunpack.c.h.bf16 %v829
  %v843 = vunpack.c.l.bf16 %v830
  %v844 = vunpack.c.h.bf16 %v830
  %v845 = vunpack.c.l.bf16 %v831
  %v846 = vunpack.c.h.bf16 %v831
  %v847 = vunpack.c.l.bf16 %v832
  %v848 = vunpack.c.h.bf16 %v832
  %849 = vmatpush.msra.mxu0 %v59
  %850 = vmatpush.msra.mxu0 %v58
  %851 = vmatpush.msra.mxu0 %v57
  %852 = vmatpush.msra.mxu0 %v56
  %853 = vmatpush.msra.mxu0 %v55
  %854 = vmatpush.msra.mxu0 %v54
  %855 = vmatpush.msra.mxu0 %v53
  %856 = vmatpush.msra.mxu0 %v52
  %857 = vmatpush.msra.mxu0 %v51
  %858 = vmatpush.msra.mxu0 %v50
  %859 = vmatpush.msra.mxu0 %v49
  %860 = vmatpush.msra.mxu0 %v48
  %861 = vmatpush.msra.mxu0 %v47
  %862 = vmatpush.msra.mxu0 %v46
  %863 = vmatpush.msra.mxu0 %v45
  %864 = vmatpush.msra.mxu0 %v44
  %865 = vmatmul.f32.gmra.mxu0 %v833
  %v866 = vpop.f32.mrf.mxu0
  %v867 = vadd.f32 0.0, %v866
  %868 = vmatmul.f32.gmra.mxu0 %v835
  %v869 = vpop.f32.mrf.mxu0
  %v870 = vadd.f32 0.0, %v869
  %871 = vmatmul.f32.gmra.mxu0 %v837
  %v872 = vpop.f32.mrf.mxu0
  %v873 = vadd.f32 0.0, %v872
  %874 = vmatmul.f32.gmra.mxu0 %v839
  %v875 = vpop.f32.mrf.mxu0
  %v876 = vadd.f32 0.0, %v875
  %877 = vmatmul.f32.gmra.mxu0 %v841
  %v878 = vpop.f32.mrf.mxu0
  %v879 = vadd.f32 0.0, %v878
  %880 = vmatmul.f32.gmra.mxu0 %v843
  %v881 = vpop.f32.mrf.mxu0
  %v882 = vadd.f32 0.0, %v881
  %883 = vmatmul.f32.gmra.mxu0 %v845
  %v884 = vpop.f32.mrf.mxu0
  %v885 = vadd.f32 0.0, %v884
  %886 = vmatmul.f32.gmra.mxu0 %v847
  %v887 = vpop.f32.mrf.mxu0
  %v888 = vadd.f32 0.0, %v887
  %889 = vdwg.mxu0
  %890 = vmatpush.msra.mxu0 %v75
  %891 = vmatpush.msra.mxu0 %v74
  %892 = vmatpush.msra.mxu0 %v73
  %893 = vmatpush.msra.mxu0 %v72
  %894 = vmatpush.msra.mxu0 %v71
  %895 = vmatpush.msra.mxu0 %v70
  %896 = vmatpush.msra.mxu0 %v69
  %897 = vmatpush.msra.mxu0 %v68
  %898 = vmatpush.msra.mxu0 %v67
  %899 = vmatpush.msra.mxu0 %v66
  %900 = vmatpush.msra.mxu0 %v65
  %901 = vmatpush.msra.mxu0 %v64
  %902 = vmatpush.msra.mxu0 %v63
  %903 = vmatpush.msra.mxu0 %v62
  %904 = vmatpush.msra.mxu0 %v61
  %905 = vmatpush.msra.mxu0 %v60
  %906 = vmatmul.f32.gmra.mxu0 %v834
  %v907 = vpop.f32.mrf.mxu0
  %v908 = vadd.f32 %v867, %v907
  %909 = vmatmul.f32.gmra.mxu0 %v836
  %v910 = vpop.f32.mrf.mxu0
  %v911 = vadd.f32 %v870, %v910
  %912 = vmatmul.f32.gmra.mxu0 %v838
  %v913 = vpop.f32.mrf.mxu0
  %v914 = vadd.f32 %v873, %v913
  %915 = vmatmul.f32.gmra.mxu0 %v840
  %v916 = vpop.f32.mrf.mxu0
  %v917 = vadd.f32 %v876, %v916
  %918 = vmatmul.f32.gmra.mxu0 %v842
  %v919 = vpop.f32.mrf.mxu0
  %v920 = vadd.f32 %v879, %v919
  %921 = vmatmul.f32.gmra.mxu0 %v844
  %v922 = vpop.f32.mrf.mxu0
  %v923 = vadd.f32 %v882, %v922
  %924 = vmatmul.f32.gmra.mxu0 %v846
  %v925 = vpop.f32.mrf.mxu0
  %v926 = vadd.f32 %v885, %v925
  %927 = vmatmul.f32.gmra.mxu0 %v848
  %v928 = vpop.f32.mrf.mxu0
  %v929 = vadd.f32 %v888, %v928
  %930 = vdwg.mxu0
  %s931 = scalar_lea.vmem %s1, 512
  %v932 = vld [vmem:[%s931] sm:$0xff]
  %v933 = vld [vmem:[%s931 + $0x8] sm:$0xff]
  %v934 = vld [vmem:[%s931 + $0x10] sm:$0xff]
  %v935 = vld [vmem:[%s931 + $0x18] sm:$0xff]
  %v936 = vld [vmem:[%s931 + $0x20] sm:$0xff]
  %v937 = vld [vmem:[%s931 + $0x28] sm:$0xff]
  %v938 = vld [vmem:[%s931 + $0x30] sm:$0xff]
  %v939 = vld [vmem:[%s931 + $0x38] sm:$0xff]
  %v940 = vunpack.c.l.bf16 %v932
  %v941 = vunpack.c.h.bf16 %v932
  %v942 = vunpack.c.l.bf16 %v933
  %v943 = vunpack.c.h.bf16 %v933
  %v944 = vunpack.c.l.bf16 %v934
  %v945 = vunpack.c.h.bf16 %v934
  %v946 = vunpack.c.l.bf16 %v935
  %v947 = vunpack.c.h.bf16 %v935
  %v948 = vunpack.c.l.bf16 %v936
  %v949 = vunpack.c.h.bf16 %v936
  %v950 = vunpack.c.l.bf16 %v937
  %v951 = vunpack.c.h.bf16 %v937
  %v952 = vunpack.c.l.bf16 %v938
  %v953 = vunpack.c.h.bf16 %v938
  %v954 = vunpack.c.l.bf16 %v939
  %v955 = vunpack.c.h.bf16 %v939
  %956 = vmatpush.msra.mxu0 %v59
  %957 = vmatpush.msra.mxu0 %v58
  %958 = vmatpush.msra.mxu0 %v57
  %959 = vmatpush.msra.mxu0 %v56
  %960 = vmatpush.msra.mxu0 %v55
  %961 = vmatpush.msra.mxu0 %v54
  %962 = vmatpush.msra.mxu0 %v53
  %963 = vmatpush.msra.mxu0 %v52
  %964 = vmatpush.msra.mxu0 %v51
  %965 = vmatpush.msra.mxu0 %v50
  %966 = vmatpush.msra.mxu0 %v49
  %967 = vmatpush.msra.mxu0 %v48
  %968 = vmatpush.msra.mxu0 %v47
  %969 = vmatpush.msra.mxu0 %v46
  %970 = vmatpush.msra.mxu0 %v45
  %971 = vmatpush.msra.mxu0 %v44
  %972 = vmatmul.f32.gmra.mxu0 %v940
  %v973 = vpop.f32.mrf.mxu0
  %v974 = vadd.f32 0.0, %v973
  %975 = vmatmul.f32.gmra.mxu0 %v942
  %v976 = vpop.f32.mrf.mxu0
  %v977 = vadd.f32 0.0, %v976
  %978 = vmatmul.f32.gmra.mxu0 %v944
  %v979 = vpop.f32.mrf.mxu0
  %v980 = vadd.f32 0.0, %v979
  %981 = vmatmul.f32.gmra.mxu0 %v946
  %v982 = vpop.f32.mrf.mxu0
  %v983 = vadd.f32 0.0, %v982
  %984 = vmatmul.f32.gmra.mxu0 %v948
  %v985 = vpop.f32.mrf.mxu0
  %v986 = vadd.f32 0.0, %v985
  %987 = vmatmul.f32.gmra.mxu0 %v950
  %v988 = vpop.f32.mrf.mxu0
  %v989 = vadd.f32 0.0, %v988
  %990 = vmatmul.f32.gmra.mxu0 %v952
  %v991 = vpop.f32.mrf.mxu0
  %v992 = vadd.f32 0.0, %v991
  %993 = vmatmul.f32.gmra.mxu0 %v954
  %v994 = vpop.f32.mrf.mxu0
  %v995 = vadd.f32 0.0, %v994
  %996 = vdwg.mxu0
  %997 = vmatpush.msra.mxu0 %v75
  %998 = vmatpush.msra.mxu0 %v74
  %999 = vmatpush.msra.mxu0 %v73
  %1000 = vmatpush.msra.mxu0 %v72
  %1001 = vmatpush.msra.mxu0 %v71
  %1002 = vmatpush.msra.mxu0 %v70
  %1003 = vmatpush.msra.mxu0 %v69
  %1004 = vmatpush.msra.mxu0 %v68
  %1005 = vmatpush.msra.mxu0 %v67
  %1006 = vmatpush.msra.mxu0 %v66
  %1007 = vmatpush.msra.mxu0 %v65
  %1008 = vmatpush.msra.mxu0 %v64
  %1009 = vmatpush.msra.mxu0 %v63
  %1010 = vmatpush.msra.mxu0 %v62
  %1011 = vmatpush.msra.mxu0 %v61
  %1012 = vmatpush.msra.mxu0 %v60
  %1013 = vmatmul.f32.gmra.mxu0 %v941
  %v1014 = vpop.f32.mrf.mxu0
  %v1015 = vadd.f32 %v974, %v1014
  %1016 = vmatmul.f32.gmra.mxu0 %v943
  %v1017 = vpop.f32.mrf.mxu0
  %v1018 = vadd.f32 %v977, %v1017
  %1019 = vmatmul.f32.gmra.mxu0 %v945
  %v1020 = vpop.f32.mrf.mxu0
  %v1021 = vadd.f32 %v980, %v1020
  %1022 = vmatmul.f32.gmra.mxu0 %v947
  %v1023 = vpop.f32.mrf.mxu0
  %v1024 = vadd.f32 %v983, %v1023
  %1025 = vmatmul.f32.gmra.mxu0 %v949
  %v1026 = vpop.f32.mrf.mxu0
  %v1027 = vadd.f32 %v986, %v1026
  %1028 = vmatmul.f32.gmra.mxu0 %v951
  %v1029 = vpop.f32.mrf.mxu0
  %v1030 = vadd.f32 %v989, %v1029
  %1031 = vmatmul.f32.gmra.mxu0 %v953
  %v1032 = vpop.f32.mrf.mxu0
  %v1033 = vadd.f32 %v992, %v1032
  %1034 = vmatmul.f32.gmra.mxu0 %v955
  %v1035 = vpop.f32.mrf.mxu0
  %v1036 = vadd.f32 %v995, %v1035
  %1037 = vdwg.mxu0
  %v1038 = vld [vmem:[%s2] sm:$0xff]
  %v1039 = vld [vmem:[%s2 + $0x8] sm:$0xff]
  %v1040 = vld [vmem:[%s2 + $0x10] sm:$0xff]
  %v1041 = vld [vmem:[%s2 + $0x18] sm:$0xff]
  %v1042 = vld [vmem:[%s2 + $0x20] sm:$0xff]
  %v1043 = vld [vmem:[%s2 + $0x28] sm:$0xff]
  %v1044 = vld [vmem:[%s2 + $0x30] sm:$0xff]
  %v1045 = vld [vmem:[%s2 + $0x38] sm:$0xff]
  %v1046 = vld [vmem:[%s2 + $0x40] sm:$0xff]
  %v1047 = vld [vmem:[%s2 + $0x48] sm:$0xff]
  %v1048 = vld [vmem:[%s2 + $0x50] sm:$0xff]
  %v1049 = vld [vmem:[%s2 + $0x58] sm:$0xff]
  %v1050 = vld [vmem:[%s2 + $0x60] sm:$0xff]
  %v1051 = vld [vmem:[%s2 + $0x68] sm:$0xff]
  %v1052 = vld [vmem:[%s2 + $0x70] sm:$0xff]
  %v1053 = vld [vmem:[%s2 + $0x78] sm:$0xff]
  %v1054 = vld [vmem:[%s2 + $0x80] sm:$0xff]
  %v1055 = vld [vmem:[%s2 + $0x88] sm:$0xff]
  %v1056 = vld [vmem:[%s2 + $0x90] sm:$0xff]
  %v1057 = vld [vmem:[%s2 + $0x98] sm:$0xff]
  %v1058 = vld [vmem:[%s2 + $0xa0] sm:$0xff]
  %v1059 = vld [vmem:[%s2 + $0xa8] sm:$0xff]
  %v1060 = vld [vmem:[%s2 + $0xb0] sm:$0xff]
  %v1061 = vld [vmem:[%s2 + $0xb8] sm:$0xff]
  %v1062 = vld [vmem:[%s2 + $0xc0] sm:$0xff]
  %v1063 = vld [vmem:[%s2 + $0xc8] sm:$0xff]
  %v1064 = vld [vmem:[%s2 + $0xd0] sm:$0xff]
  %v1065 = vld [vmem:[%s2 + $0xd8] sm:$0xff]
  %v1066 = vld [vmem:[%s2 + $0xe0] sm:$0xff]
  %v1067 = vld [vmem:[%s2 + $0xe8] sm:$0xff]
  %v1068 = vld [vmem:[%s2 + $0xf0] sm:$0xff]
  %v1069 = vld [vmem:[%s2 + $0xf8] sm:$0xff]
  %v1070 = vld [vmem:[%s2 + $0x100] sm:$0xff]
  %v1071 = vld [vmem:[%s2 + $0x108] sm:$0xff]
  %v1072 = vld [vmem:[%s2 + $0x110] sm:$0xff]
  %v1073 = vld [vmem:[%s2 + $0x118] sm:$0xff]
  %v1074 = vld [vmem:[%s2 + $0x120] sm:$0xff]
  %v1075 = vld [vmem:[%s2 + $0x128] sm:$0xff]
  %v1076 = vld [vmem:[%s2 + $0x130] sm:$0xff]
  %v1077 = vld [vmem:[%s2 + $0x138] sm:$0xff]
  %v1078 = vld [vmem:[%s2 + $0x140] sm:$0xff]
  %v1079 = vld [vmem:[%s2 + $0x148] sm:$0xff]
  %v1080 = vld [vmem:[%s2 + $0x150] sm:$0xff]
  %v1081 = vld [vmem:[%s2 + $0x158] sm:$0xff]
  %v1082 = vld [vmem:[%s2 + $0x160] sm:$0xff]
  %v1083 = vld [vmem:[%s2 + $0x168] sm:$0xff]
  %v1084 = vld [vmem:[%s2 + $0x170] sm:$0xff]
  %v1085 = vld [vmem:[%s2 + $0x178] sm:$0xff]
  %v1086 = vld [vmem:[%s2 + $0x180] sm:$0xff]
  %v1087 = vld [vmem:[%s2 + $0x188] sm:$0xff]
  %v1088 = vld [vmem:[%s2 + $0x190] sm:$0xff]
  %v1089 = vld [vmem:[%s2 + $0x198] sm:$0xff]
  %v1090 = vld [vmem:[%s2 + $0x1a0] sm:$0xff]
  %v1091 = vld [vmem:[%s2 + $0x1a8] sm:$0xff]
  %v1092 = vld [vmem:[%s2 + $0x1b0] sm:$0xff]
  %v1093 = vld [vmem:[%s2 + $0x1b8] sm:$0xff]
  %v1094 = vld [vmem:[%s2 + $0x1c0] sm:$0xff]
  %v1095 = vld [vmem:[%s2 + $0x1c8] sm:$0xff]
  %v1096 = vld [vmem:[%s2 + $0x1d0] sm:$0xff]
  %v1097 = vld [vmem:[%s2 + $0x1d8] sm:$0xff]
  %v1098 = vld [vmem:[%s2 + $0x1e0] sm:$0xff]
  %v1099 = vld [vmem:[%s2 + $0x1e8] sm:$0xff]
  %v1100 = vld [vmem:[%s2 + $0x1f0] sm:$0xff]
  %v1101 = vld [vmem:[%s2 + $0x1f8] sm:$0xff]
  %v1102 = vld [vmem:[%s2 + $0x200] sm:$0xff]
  %v1103 = vld [vmem:[%s2 + $0x208] sm:$0xff]
  %v1104 = vld [vmem:[%s2 + $0x210] sm:$0xff]
  %v1105 = vld [vmem:[%s2 + $0x218] sm:$0xff]
  %v1106 = vld [vmem:[%s2 + $0x220] sm:$0xff]
  %v1107 = vld [vmem:[%s2 + $0x228] sm:$0xff]
  %v1108 = vld [vmem:[%s2 + $0x230] sm:$0xff]
  %v1109 = vld [vmem:[%s2 + $0x238] sm:$0xff]
  %v1110 = vld [vmem:[%s2 + $0x240] sm:$0xff]
  %v1111 = vld [vmem:[%s2 + $0x248] sm:$0xff]
  %v1112 = vld [vmem:[%s2 + $0x250] sm:$0xff]
  %v1113 = vld [vmem:[%s2 + $0x258] sm:$0xff]
  %v1114 = vld [vmem:[%s2 + $0x260] sm:$0xff]
  %v1115 = vld [vmem:[%s2 + $0x268] sm:$0xff]
  %v1116 = vld [vmem:[%s2 + $0x270] sm:$0xff]
  %v1117 = vld [vmem:[%s2 + $0x278] sm:$0xff]
  %v1118 = vld [vmem:[%s2 + $0x280] sm:$0xff]
  %v1119 = vld [vmem:[%s2 + $0x288] sm:$0xff]
  %v1120 = vld [vmem:[%s2 + $0x290] sm:$0xff]
  %v1121 = vld [vmem:[%s2 + $0x298] sm:$0xff]
  %v1122 = vld [vmem:[%s2 + $0x2a0] sm:$0xff]
  %v1123 = vld [vmem:[%s2 + $0x2a8] sm:$0xff]
  %v1124 = vld [vmem:[%s2 + $0x2b0] sm:$0xff]
  %v1125 = vld [vmem:[%s2 + $0x2b8] sm:$0xff]
  %v1126 = vld [vmem:[%s2 + $0x2c0] sm:$0xff]
  %v1127 = vld [vmem:[%s2 + $0x2c8] sm:$0xff]
  %v1128 = vld [vmem:[%s2 + $0x2d0] sm:$0xff]
  %v1129 = vld [vmem:[%s2 + $0x2d8] sm:$0xff]
  %v1130 = vld [vmem:[%s2 + $0x2e0] sm:$0xff]
  %v1131 = vld [vmem:[%s2 + $0x2e8] sm:$0xff]
  %v1132 = vld [vmem:[%s2 + $0x2f0] sm:$0xff]
  %v1133 = vld [vmem:[%s2 + $0x2f8] sm:$0xff]
  %v1134 = vld [vmem:[%s2 + $0x300] sm:$0xff]
  %v1135 = vld [vmem:[%s2 + $0x308] sm:$0xff]
  %v1136 = vld [vmem:[%s2 + $0x310] sm:$0xff]
  %v1137 = vld [vmem:[%s2 + $0x318] sm:$0xff]
  %v1138 = vld [vmem:[%s2 + $0x320] sm:$0xff]
  %v1139 = vld [vmem:[%s2 + $0x328] sm:$0xff]
  %v1140 = vld [vmem:[%s2 + $0x330] sm:$0xff]
  %v1141 = vld [vmem:[%s2 + $0x338] sm:$0xff]
  %v1142 = vld [vmem:[%s2 + $0x340] sm:$0xff]
  %v1143 = vld [vmem:[%s2 + $0x348] sm:$0xff]
  %v1144 = vld [vmem:[%s2 + $0x350] sm:$0xff]
  %v1145 = vld [vmem:[%s2 + $0x358] sm:$0xff]
  %v1146 = vld [vmem:[%s2 + $0x360] sm:$0xff]
  %v1147 = vld [vmem:[%s2 + $0x368] sm:$0xff]
  %v1148 = vld [vmem:[%s2 + $0x370] sm:$0xff]
  %v1149 = vld [vmem:[%s2 + $0x378] sm:$0xff]
  %v1150 = vld [vmem:[%s2 + $0x380] sm:$0xff]
  %v1151 = vld [vmem:[%s2 + $0x388] sm:$0xff]
  %v1152 = vld [vmem:[%s2 + $0x390] sm:$0xff]
  %v1153 = vld [vmem:[%s2 + $0x398] sm:$0xff]
  %v1154 = vld [vmem:[%s2 + $0x3a0] sm:$0xff]
  %v1155 = vld [vmem:[%s2 + $0x3a8] sm:$0xff]
  %v1156 = vld [vmem:[%s2 + $0x3b0] sm:$0xff]
  %v1157 = vld [vmem:[%s2 + $0x3b8] sm:$0xff]
  %v1158 = vld [vmem:[%s2 + $0x3c0] sm:$0xff]
  %v1159 = vld [vmem:[%s2 + $0x3c8] sm:$0xff]
  %v1160 = vld [vmem:[%s2 + $0x3d0] sm:$0xff]
  %v1161 = vld [vmem:[%s2 + $0x3d8] sm:$0xff]
  %v1162 = vld [vmem:[%s2 + $0x3e0] sm:$0xff]
  %v1163 = vld [vmem:[%s2 + $0x3e8] sm:$0xff]
  %v1164 = vld [vmem:[%s2 + $0x3f0] sm:$0xff]
  %v1165 = vld [vmem:[%s2 + $0x3f8] sm:$0xff]
  %v1166 = vld [vmem:[%s2 + $0x400] sm:$0xff]
  %v1167 = vld [vmem:[%s2 + $0x408] sm:$0xff]
  %v1168 = vld [vmem:[%s2 + $0x410] sm:$0xff]
  %v1169 = vld [vmem:[%s2 + $0x418] sm:$0xff]
  %v1170 = vld [vmem:[%s2 + $0x420] sm:$0xff]
  %v1171 = vld [vmem:[%s2 + $0x428] sm:$0xff]
  %v1172 = vld [vmem:[%s2 + $0x430] sm:$0xff]
  %v1173 = vld [vmem:[%s2 + $0x438] sm:$0xff]
  %v1174 = vld [vmem:[%s2 + $0x440] sm:$0xff]
  %v1175 = vld [vmem:[%s2 + $0x448] sm:$0xff]
  %v1176 = vld [vmem:[%s2 + $0x450] sm:$0xff]
  %v1177 = vld [vmem:[%s2 + $0x458] sm:$0xff]
  %v1178 = vld [vmem:[%s2 + $0x460] sm:$0xff]
  %v1179 = vld [vmem:[%s2 + $0x468] sm:$0xff]
  %v1180 = vld [vmem:[%s2 + $0x470] sm:$0xff]
  %v1181 = vld [vmem:[%s2 + $0x478] sm:$0xff]
  %v1182 = vld [vmem:[%s3] sm:$0x1]
  %v1184 = vperm.slane %v1182, 0
  %1186 = vmatpush.msra.mxu0 %v1053
  %1187 = vmatpush.msra.mxu0 %v1052
  %1188 = vmatpush.msra.mxu0 %v1051
  %1189 = vmatpush.msra.mxu0 %v1050
  %1190 = vmatpush.msra.mxu0 %v1049
  %1191 = vmatpush.msra.mxu0 %v1048
  %1192 = vmatpush.msra.mxu0 %v1047
  %1193 = vmatpush.msra.mxu0 %v1046
  %1194 = vmatpush.msra.mxu0 %v1045
  %1195 = vmatpush.msra.mxu0 %v1044
  %1196 = vmatpush.msra.mxu0 %v1043
  %1197 = vmatpush.msra.mxu0 %v1042
  %1198 = vmatpush.msra.mxu0 %v1041
  %1199 = vmatpush.msra.mxu0 %v1040
  %1200 = vmatpush.msra.mxu0 %v1039
  %1201 = vmatpush.msra.mxu0 %v1038
  %1202 = vmatmul.f32.gmra.mxu0 %v159
  %v1203 = vpop.f32.mrf.mxu0
  %v1204 = vadd.f32 %v1184, %v1203
  %1205 = vmatmul.f32.gmra.mxu0 %v162
  %v1206 = vpop.f32.mrf.mxu0
  %v1207 = vadd.f32 %v1184, %v1206
  %1208 = vmatmul.f32.gmra.mxu0 %v165
  %v1209 = vpop.f32.mrf.mxu0
  %v1210 = vadd.f32 %v1184, %v1209
  %1211 = vmatmul.f32.gmra.mxu0 %v168
  %v1212 = vpop.f32.mrf.mxu0
  %v1213 = vadd.f32 %v1184, %v1212
  %1214 = vmatmul.f32.gmra.mxu0 %v171
  %v1215 = vpop.f32.mrf.mxu0
  %v1216 = vadd.f32 %v1184, %v1215
  %1217 = vmatmul.f32.gmra.mxu0 %v174
  %v1218 = vpop.f32.mrf.mxu0
  %v1219 = vadd.f32 %v1184, %v1218
  %1220 = vmatmul.f32.gmra.mxu0 %v177
  %v1221 = vpop.f32.mrf.mxu0
  %v1222 = vadd.f32 %v1184, %v1221
  %1223 = vmatmul.f32.gmra.mxu0 %v180
  %v1224 = vpop.f32.mrf.mxu0
  %v1225 = vadd.f32 %v1184, %v1224
  %1226 = vdwg.mxu0
  %1227 = vmatpush.msra.mxu0 %v1069
  %1228 = vmatpush.msra.mxu0 %v1068
  %1229 = vmatpush.msra.mxu0 %v1067
  %1230 = vmatpush.msra.mxu0 %v1066
  %1231 = vmatpush.msra.mxu0 %v1065
  %1232 = vmatpush.msra.mxu0 %v1064
  %1233 = vmatpush.msra.mxu0 %v1063
  %1234 = vmatpush.msra.mxu0 %v1062
  %1235 = vmatpush.msra.mxu0 %v1061
  %1236 = vmatpush.msra.mxu0 %v1060
  %1237 = vmatpush.msra.mxu0 %v1059
  %1238 = vmatpush.msra.mxu0 %v1058
  %1239 = vmatpush.msra.mxu0 %v1057
  %1240 = vmatpush.msra.mxu0 %v1056
  %1241 = vmatpush.msra.mxu0 %v1055
  %1242 = vmatpush.msra.mxu0 %v1054
  %1243 = vmatmul.f32.gmra.mxu0 %v266
  %v1244 = vpop.f32.mrf.mxu0
  %v1245 = vadd.f32 %v1204, %v1244
  %1246 = vmatmul.f32.gmra.mxu0 %v269
  %v1247 = vpop.f32.mrf.mxu0
  %v1248 = vadd.f32 %v1207, %v1247
  %1249 = vmatmul.f32.gmra.mxu0 %v272
  %v1250 = vpop.f32.mrf.mxu0
  %v1251 = vadd.f32 %v1210, %v1250
  %1252 = vmatmul.f32.gmra.mxu0 %v275
  %v1253 = vpop.f32.mrf.mxu0
  %v1254 = vadd.f32 %v1213, %v1253
  %1255 = vmatmul.f32.gmra.mxu0 %v278
  %v1256 = vpop.f32.mrf.mxu0
  %v1257 = vadd.f32 %v1216, %v1256
  %1258 = vmatmul.f32.gmra.mxu0 %v281
  %v1259 = vpop.f32.mrf.mxu0
  %v1260 = vadd.f32 %v1219, %v1259
  %1261 = vmatmul.f32.gmra.mxu0 %v284
  %v1262 = vpop.f32.mrf.mxu0
  %v1263 = vadd.f32 %v1222, %v1262
  %1264 = vmatmul.f32.gmra.mxu0 %v287
  %v1265 = vpop.f32.mrf.mxu0
  %v1266 = vadd.f32 %v1225, %v1265
  %1267 = vdwg.mxu0
  %1268 = vmatpush.msra.mxu0 %v1085
  %1269 = vmatpush.msra.mxu0 %v1084
  %1270 = vmatpush.msra.mxu0 %v1083
  %1271 = vmatpush.msra.mxu0 %v1082
  %1272 = vmatpush.msra.mxu0 %v1081
  %1273 = vmatpush.msra.mxu0 %v1080
  %1274 = vmatpush.msra.mxu0 %v1079
  %1275 = vmatpush.msra.mxu0 %v1078
  %1276 = vmatpush.msra.mxu0 %v1077
  %1277 = vmatpush.msra.mxu0 %v1076
  %1278 = vmatpush.msra.mxu0 %v1075
  %1279 = vmatpush.msra.mxu0 %v1074
  %1280 = vmatpush.msra.mxu0 %v1073
  %1281 = vmatpush.msra.mxu0 %v1072
  %1282 = vmatpush.msra.mxu0 %v1071
  %1283 = vmatpush.msra.mxu0 %v1070
  %1284 = vmatmul.f32.gmra.mxu0 %v373
  %v1285 = vpop.f32.mrf.mxu0
  %v1286 = vadd.f32 %v1245, %v1285
  %1287 = vmatmul.f32.gmra.mxu0 %v376
  %v1288 = vpop.f32.mrf.mxu0
  %v1289 = vadd.f32 %v1248, %v1288
  %1290 = vmatmul.f32.gmra.mxu0 %v379
  %v1291 = vpop.f32.mrf.mxu0
  %v1292 = vadd.f32 %v1251, %v1291
  %1293 = vmatmul.f32.gmra.mxu0 %v382
  %v1294 = vpop.f32.mrf.mxu0
  %v1295 = vadd.f32 %v1254, %v1294
  %1296 = vmatmul.f32.gmra.mxu0 %v385
  %v1297 = vpop.f32.mrf.mxu0
  %v1298 = vadd.f32 %v1257, %v1297
  %1299 = vmatmul.f32.gmra.mxu0 %v388
  %v1300 = vpop.f32.mrf.mxu0
  %v1301 = vadd.f32 %v1260, %v1300
  %1302 = vmatmul.f32.gmra.mxu0 %v391
  %v1303 = vpop.f32.mrf.mxu0
  %v1304 = vadd.f32 %v1263, %v1303
  %1305 = vmatmul.f32.gmra.mxu0 %v394
  %v1306 = vpop.f32.mrf.mxu0
  %v1307 = vadd.f32 %v1266, %v1306
  %1308 = vdwg.mxu0
  %1309 = vmatpush.msra.mxu0 %v1101
  %1310 = vmatpush.msra.mxu0 %v1100
  %1311 = vmatpush.msra.mxu0 %v1099
  %1312 = vmatpush.msra.mxu0 %v1098
  %1313 = vmatpush.msra.mxu0 %v1097
  %1314 = vmatpush.msra.mxu0 %v1096
  %1315 = vmatpush.msra.mxu0 %v1095
  %1316 = vmatpush.msra.mxu0 %v1094
  %1317 = vmatpush.msra.mxu0 %v1093
  %1318 = vmatpush.msra.mxu0 %v1092
  %1319 = vmatpush.msra.mxu0 %v1091
  %1320 = vmatpush.msra.mxu0 %v1090
  %1321 = vmatpush.msra.mxu0 %v1089
  %1322 = vmatpush.msra.mxu0 %v1088
  %1323 = vmatpush.msra.mxu0 %v1087
  %1324 = vmatpush.msra.mxu0 %v1086
  %1325 = vmatmul.f32.gmra.mxu0 %v480
  %v1326 = vpop.f32.mrf.mxu0
  %v1327 = vadd.f32 %v1286, %v1326
  %1328 = vmatmul.f32.gmra.mxu0 %v483
  %v1329 = vpop.f32.mrf.mxu0
  %v1330 = vadd.f32 %v1289, %v1329
  %1331 = vmatmul.f32.gmra.mxu0 %v486
  %v1332 = vpop.f32.mrf.mxu0
  %v1333 = vadd.f32 %v1292, %v1332
  %1334 = vmatmul.f32.gmra.mxu0 %v489
  %v1335 = vpop.f32.mrf.mxu0
  %v1336 = vadd.f32 %v1295, %v1335
  %1337 = vmatmul.f32.gmra.mxu0 %v492
  %v1338 = vpop.f32.mrf.mxu0
  %v1339 = vadd.f32 %v1298, %v1338
  %1340 = vmatmul.f32.gmra.mxu0 %v495
  %v1341 = vpop.f32.mrf.mxu0
  %v1342 = vadd.f32 %v1301, %v1341
  %1343 = vmatmul.f32.gmra.mxu0 %v498
  %v1344 = vpop.f32.mrf.mxu0
  %v1345 = vadd.f32 %v1304, %v1344
  %1346 = vmatmul.f32.gmra.mxu0 %v501
  %v1347 = vpop.f32.mrf.mxu0
  %v1348 = vadd.f32 %v1307, %v1347
  %1349 = vdwg.mxu0
  %1350 = vmatpush.msra.mxu0 %v1117
  %1351 = vmatpush.msra.mxu0 %v1116
  %1352 = vmatpush.msra.mxu0 %v1115
  %1353 = vmatpush.msra.mxu0 %v1114
  %1354 = vmatpush.msra.mxu0 %v1113
  %1355 = vmatpush.msra.mxu0 %v1112
  %1356 = vmatpush.msra.mxu0 %v1111
  %1357 = vmatpush.msra.mxu0 %v1110
  %1358 = vmatpush.msra.mxu0 %v1109
  %1359 = vmatpush.msra.mxu0 %v1108
  %1360 = vmatpush.msra.mxu0 %v1107
  %1361 = vmatpush.msra.mxu0 %v1106
  %1362 = vmatpush.msra.mxu0 %v1105
  %1363 = vmatpush.msra.mxu0 %v1104
  %1364 = vmatpush.msra.mxu0 %v1103
  %1365 = vmatpush.msra.mxu0 %v1102
  %1366 = vmatmul.f32.gmra.mxu0 %v587
  %v1367 = vpop.f32.mrf.mxu0
  %v1368 = vadd.f32 %v1327, %v1367
  %1369 = vmatmul.f32.gmra.mxu0 %v590
  %v1370 = vpop.f32.mrf.mxu0
  %v1371 = vadd.f32 %v1330, %v1370
  %1372 = vmatmul.f32.gmra.mxu0 %v593
  %v1373 = vpop.f32.mrf.mxu0
  %v1374 = vadd.f32 %v1333, %v1373
  %1375 = vmatmul.f32.gmra.mxu0 %v596
  %v1376 = vpop.f32.mrf.mxu0
  %v1377 = vadd.f32 %v1336, %v1376
  %1378 = vmatmul.f32.gmra.mxu0 %v599
  %v1379 = vpop.f32.mrf.mxu0
  %v1380 = vadd.f32 %v1339, %v1379
  %1381 = vmatmul.f32.gmra.mxu0 %v602
  %v1382 = vpop.f32.mrf.mxu0
  %v1383 = vadd.f32 %v1342, %v1382
  %1384 = vmatmul.f32.gmra.mxu0 %v605
  %v1385 = vpop.f32.mrf.mxu0
  %v1386 = vadd.f32 %v1345, %v1385
  %1387 = vmatmul.f32.gmra.mxu0 %v608
  %v1388 = vpop.f32.mrf.mxu0
  %v1389 = vadd.f32 %v1348, %v1388
  %1390 = vdwg.mxu0
  %1391 = vmatpush.msra.mxu0 %v1133
  %1392 = vmatpush.msra.mxu0 %v1132
  %1393 = vmatpush.msra.mxu0 %v1131
  %1394 = vmatpush.msra.mxu0 %v1130
  %1395 = vmatpush.msra.mxu0 %v1129
  %1396 = vmatpush.msra.mxu0 %v1128
  %1397 = vmatpush.msra.mxu0 %v1127
  %1398 = vmatpush.msra.mxu0 %v1126
  %1399 = vmatpush.msra.mxu0 %v1125
  %1400 = vmatpush.msra.mxu0 %v1124
  %1401 = vmatpush.msra.mxu0 %v1123
  %1402 = vmatpush.msra.mxu0 %v1122
  %1403 = vmatpush.msra.mxu0 %v1121
  %1404 = vmatpush.msra.mxu0 %v1120
  %1405 = vmatpush.msra.mxu0 %v1119
  %1406 = vmatpush.msra.mxu0 %v1118
  %1407 = vmatmul.f32.gmra.mxu0 %v694
  %v1408 = vpop.f32.mrf.mxu0
  %v1409 = vadd.f32 %v1368, %v1408
  %1410 = vmatmul.f32.gmra.mxu0 %v697
  %v1411 = vpop.f32.mrf.mxu0
  %v1412 = vadd.f32 %v1371, %v1411
  %1413 = vmatmul.f32.gmra.mxu0 %v700
  %v1414 = vpop.f32.mrf.mxu0
  %v1415 = vadd.f32 %v1374, %v1414
  %1416 = vmatmul.f32.gmra.mxu0 %v703
  %v1417 = vpop.f32.mrf.mxu0
  %v1418 = vadd.f32 %v1377, %v1417
  %1419 = vmatmul.f32.gmra.mxu0 %v706
  %v1420 = vpop.f32.mrf.mxu0
  %v1421 = vadd.f32 %v1380, %v1420
  %1422 = vmatmul.f32.gmra.mxu0 %v709
  %v1423 = vpop.f32.mrf.mxu0
  %v1424 = vadd.f32 %v1383, %v1423
  %1425 = vmatmul.f32.gmra.mxu0 %v712
  %v1426 = vpop.f32.mrf.mxu0
  %v1427 = vadd.f32 %v1386, %v1426
  %1428 = vmatmul.f32.gmra.mxu0 %v715
  %v1429 = vpop.f32.mrf.mxu0
  %v1430 = vadd.f32 %v1389, %v1429
  %1431 = vdwg.mxu0
  %1432 = vmatpush.msra.mxu0 %v1149
  %1433 = vmatpush.msra.mxu0 %v1148
  %1434 = vmatpush.msra.mxu0 %v1147
  %1435 = vmatpush.msra.mxu0 %v1146
  %1436 = vmatpush.msra.mxu0 %v1145
  %1437 = vmatpush.msra.mxu0 %v1144
  %1438 = vmatpush.msra.mxu0 %v1143
  %1439 = vmatpush.msra.mxu0 %v1142
  %1440 = vmatpush.msra.mxu0 %v1141
  %1441 = vmatpush.msra.mxu0 %v1140
  %1442 = vmatpush.msra.mxu0 %v1139
  %1443 = vmatpush.msra.mxu0 %v1138
  %1444 = vmatpush.msra.mxu0 %v1137
  %1445 = vmatpush.msra.mxu0 %v1136
  %1446 = vmatpush.msra.mxu0 %v1135
  %1447 = vmatpush.msra.mxu0 %v1134
  %1448 = vmatmul.f32.gmra.mxu0 %v801
  %v1449 = vpop.f32.mrf.mxu0
  %v1450 = vadd.f32 %v1409, %v1449
  %1451 = vmatmul.f32.gmra.mxu0 %v804
  %v1452 = vpop.f32.mrf.mxu0
  %v1453 = vadd.f32 %v1412, %v1452
  %1454 = vmatmul.f32.gmra.mxu0 %v807
  %v1455 = vpop.f32.mrf.mxu0
  %v1456 = vadd.f32 %v1415, %v1455
  %1457 = vmatmul.f32.gmra.mxu0 %v810
  %v1458 = vpop.f32.mrf.mxu0
  %v1459 = vadd.f32 %v1418, %v1458
  %1460 = vmatmul.f32.gmra.mxu0 %v813
  %v1461 = vpop.f32.mrf.mxu0
  %v1462 = vadd.f32 %v1421, %v1461
  %1463 = vmatmul.f32.gmra.mxu0 %v816
  %v1464 = vpop.f32.mrf.mxu0
  %v1465 = vadd.f32 %v1424, %v1464
  %1466 = vmatmul.f32.gmra.mxu0 %v819
  %v1467 = vpop.f32.mrf.mxu0
  %v1468 = vadd.f32 %v1427, %v1467
  %1469 = vmatmul.f32.gmra.mxu0 %v822
  %v1470 = vpop.f32.mrf.mxu0
  %v1471 = vadd.f32 %v1430, %v1470
  %1472 = vdwg.mxu0
  %1473 = vmatpush.msra.mxu0 %v1165
  %1474 = vmatpush.msra.mxu0 %v1164
  %1475 = vmatpush.msra.mxu0 %v1163
  %1476 = vmatpush.msra.mxu0 %v1162
  %1477 = vmatpush.msra.mxu0 %v1161
  %1478 = vmatpush.msra.mxu0 %v1160
  %1479 = vmatpush.msra.mxu0 %v1159
  %1480 = vmatpush.msra.mxu0 %v1158
  %1481 = vmatpush.msra.mxu0 %v1157
  %1482 = vmatpush.msra.mxu0 %v1156
  %1483 = vmatpush.msra.mxu0 %v1155
  %1484 = vmatpush.msra.mxu0 %v1154
  %1485 = vmatpush.msra.mxu0 %v1153
  %1486 = vmatpush.msra.mxu0 %v1152
  %1487 = vmatpush.msra.mxu0 %v1151
  %1488 = vmatpush.msra.mxu0 %v1150
  %1489 = vmatmul.f32.gmra.mxu0 %v908
  %v1490 = vpop.f32.mrf.mxu0
  %v1491 = vadd.f32 %v1450, %v1490
  %1492 = vmatmul.f32.gmra.mxu0 %v911
  %v1493 = vpop.f32.mrf.mxu0
  %v1494 = vadd.f32 %v1453, %v1493
  %1495 = vmatmul.f32.gmra.mxu0 %v914
  %v1496 = vpop.f32.mrf.mxu0
  %v1497 = vadd.f32 %v1456, %v1496
  %1498 = vmatmul.f32.gmra.mxu0 %v917
  %v1499 = vpop.f32.mrf.mxu0
  %v1500 = vadd.f32 %v1459, %v1499
  %1501 = vmatmul.f32.gmra.mxu0 %v920
  %v1502 = vpop.f32.mrf.mxu0
  %v1503 = vadd.f32 %v1462, %v1502
  %1504 = vmatmul.f32.gmra.mxu0 %v923
  %v1505 = vpop.f32.mrf.mxu0
  %v1506 = vadd.f32 %v1465, %v1505
  %1507 = vmatmul.f32.gmra.mxu0 %v926
  %v1508 = vpop.f32.mrf.mxu0
  %v1509 = vadd.f32 %v1468, %v1508
  %1510 = vmatmul.f32.gmra.mxu0 %v929
  %v1511 = vpop.f32.mrf.mxu0
  %v1512 = vadd.f32 %v1471, %v1511
  %1513 = vdwg.mxu0
  %1514 = vmatpush.msra.mxu0 %v1181
  %1515 = vmatpush.msra.mxu0 %v1180
  %1516 = vmatpush.msra.mxu0 %v1179
  %1517 = vmatpush.msra.mxu0 %v1178
  %1518 = vmatpush.msra.mxu0 %v1177
  %1519 = vmatpush.msra.mxu0 %v1176
  %1520 = vmatpush.msra.mxu0 %v1175
  %1521 = vmatpush.msra.mxu0 %v1174
  %1522 = vmatpush.msra.mxu0 %v1173
  %1523 = vmatpush.msra.mxu0 %v1172
  %1524 = vmatpush.msra.mxu0 %v1171
  %1525 = vmatpush.msra.mxu0 %v1170
  %1526 = vmatpush.msra.mxu0 %v1169
  %1527 = vmatpush.msra.mxu0 %v1168
  %1528 = vmatpush.msra.mxu0 %v1167
  %1529 = vmatpush.msra.mxu0 %v1166
  %1530 = vmatmul.f32.gmra.mxu0 %v1015
  %v1531 = vpop.f32.mrf.mxu0
  %v1532 = vadd.f32 %v1491, %v1531
  %1533 = vmatmul.f32.gmra.mxu0 %v1018
  %v1534 = vpop.f32.mrf.mxu0
  %v1535 = vadd.f32 %v1494, %v1534
  %1536 = vmatmul.f32.gmra.mxu0 %v1021
  %v1537 = vpop.f32.mrf.mxu0
  %v1538 = vadd.f32 %v1497, %v1537
  %1539 = vmatmul.f32.gmra.mxu0 %v1024
  %v1540 = vpop.f32.mrf.mxu0
  %v1541 = vadd.f32 %v1500, %v1540
  %1542 = vmatmul.f32.gmra.mxu0 %v1027
  %v1543 = vpop.f32.mrf.mxu0
  %v1544 = vadd.f32 %v1503, %v1543
  %1545 = vmatmul.f32.gmra.mxu0 %v1030
  %v1546 = vpop.f32.mrf.mxu0
  %v1547 = vadd.f32 %v1506, %v1546
  %1548 = vmatmul.f32.gmra.mxu0 %v1033
  %v1549 = vpop.f32.mrf.mxu0
  %v1550 = vadd.f32 %v1509, %v1549
  %1551 = vmatmul.f32.gmra.mxu0 %v1036
  %v1552 = vpop.f32.mrf.mxu0
  %v1553 = vadd.f32 %v1512, %v1552
  %1554 = vdwg.mxu0
  %v1555 = vmax.f32 %v1532, 0.0
  %v1556 = vmax.f32 %v1535, 0.0
  %v1557 = vmax.f32 %v1538, 0.0
  %v1558 = vmax.f32 %v1541, 0.0
  %v1559 = vmax.f32 %v1544, 0.0
  %v1560 = vmax.f32 %v1547, 0.0
  %v1561 = vmax.f32 %v1550, 0.0
  %v1562 = vmax.f32 %v1553, 0.0
  %v1563 = vld [vmem:[%s4] sm:$0xf]
  %v1564 = vld [vmem:[%s4 + $0x4] sm:$0xf]
  %v1565 = vunpack.c.l.bf16 %v1563
  %v1566 = vunpack.c.l.bf16 %v1564
  %vm1567 = vcmask 523264
  %v1569 = vsel %vm1567, %v1565, 0
  %v1572 = vsel %vm1567, %v1566, 0
  %1574 = vmatpush.msra.mxu0 0.0
  %1575 = vmatpush.msra.mxu0 0.0
  %1576 = vmatpush.msra.mxu0 0.0
  %1577 = vmatpush.msra.mxu0 0.0
  %1578 = vmatpush.msra.mxu0 0.0
  %1579 = vmatpush.msra.mxu0 0.0
  %1580 = vmatpush.msra.mxu0 0.0
  %1581 = vmatpush.msra.mxu0 0.0
  %1582 = vmatpush.msra.mxu0 %v1562
  %1583 = vmatpush.msra.mxu0 %v1561
  %1584 = vmatpush.msra.mxu0 %v1560
  %1585 = vmatpush.msra.mxu0 %v1559
  %1586 = vmatpush.msra.mxu0 %v1558
  %1587 = vmatpush.msra.mxu0 %v1557
  %1588 = vmatpush.msra.mxu0 %v1556
  %1589 = vmatpush.msra.mxu0 %v1555
  %1590 = vmatmul.f32.gmra.mxu0 %v1569
  %v1591 = vpop.f32.mrf.mxu0
  %v1592 = vadd.f32 0.0, %v1591
  %1593 = vmatmul.f32.gmra.mxu0 %v1572
  %v1594 = vpop.f32.mrf.mxu0
  %v1595 = vadd.f32 0.0, %v1594
  %1596 = vdwg.mxu0
  %s1597 = scalar_lea.vmem %s4, 8
  %v1598 = vld [vmem:[%s1597] sm:$0xf]
  %v1599 = vld [vmem:[%s1597 + $0x4] sm:$0xf]
  %v1600 = vunpack.c.l.bf16 %v1598
  %v1601 = vunpack.c.l.bf16 %v1599
  %v1603 = vsel %vm1567, %v1600, 0
  %v1606 = vsel %vm1567, %v1601, 0
  %1608 = vmatpush.msra.mxu0 0.0
  %1609 = vmatpush.msra.mxu0 0.0
  %1610 = vmatpush.msra.mxu0 0.0
  %1611 = vmatpush.msra.mxu0 0.0
  %1612 = vmatpush.msra.mxu0 0.0
  %1613 = vmatpush.msra.mxu0 0.0
  %1614 = vmatpush.msra.mxu0 0.0
  %1615 = vmatpush.msra.mxu0 0.0
  %1616 = vmatpush.msra.mxu0 %v1562
  %1617 = vmatpush.msra.mxu0 %v1561
  %1618 = vmatpush.msra.mxu0 %v1560
  %1619 = vmatpush.msra.mxu0 %v1559
  %1620 = vmatpush.msra.mxu0 %v1558
  %1621 = vmatpush.msra.mxu0 %v1557
  %1622 = vmatpush.msra.mxu0 %v1556
  %1623 = vmatpush.msra.mxu0 %v1555
  %1624 = vmatmul.f32.gmra.mxu0 %v1603
  %v1625 = vpop.f32.mrf.mxu0
  %v1626 = vadd.f32 0.0, %v1625
  %1627 = vmatmul.f32.gmra.mxu0 %v1606
  %v1628 = vpop.f32.mrf.mxu0
  %v1629 = vadd.f32 0.0, %v1628
  %1630 = vdwg.mxu0
  %s1631 = scalar_lea.vmem %s4, 16
  %v1632 = vld [vmem:[%s1631] sm:$0xf]
  %v1633 = vld [vmem:[%s1631 + $0x4] sm:$0xf]
  %v1634 = vunpack.c.l.bf16 %v1632
  %v1635 = vunpack.c.l.bf16 %v1633
  %v1637 = vsel %vm1567, %v1634, 0
  %v1640 = vsel %vm1567, %v1635, 0
  %1642 = vmatpush.msra.mxu0 0.0
  %1643 = vmatpush.msra.mxu0 0.0
  %1644 = vmatpush.msra.mxu0 0.0
  %1645 = vmatpush.msra.mxu0 0.0
  %1646 = vmatpush.msra.mxu0 0.0
  %1647 = vmatpush.msra.mxu0 0.0
  %1648 = vmatpush.msra.mxu0 0.0
  %1649 = vmatpush.msra.mxu0 0.0
  %1650 = vmatpush.msra.mxu0 %v1562
  %1651 = vmatpush.msra.mxu0 %v1561
  %1652 = vmatpush.msra.mxu0 %v1560
  %1653 = vmatpush.msra.mxu0 %v1559
  %1654 = vmatpush.msra.mxu0 %v1558
  %1655 = vmatpush.msra.mxu0 %v1557
  %1656 = vmatpush.msra.mxu0 %v1556
  %1657 = vmatpush.msra.mxu0 %v1555
  %1658 = vmatmul.f32.gmra.mxu0 %v1637
  %v1659 = vpop.f32.mrf.mxu0
  %v1660 = vadd.f32 0.0, %v1659
  %1661 = vmatmul.f32.gmra.mxu0 %v1640
  %v1662 = vpop.f32.mrf.mxu0
  %v1663 = vadd.f32 0.0, %v1662
  %1664 = vdwg.mxu0
  %s1665 = scalar_lea.vmem %s4, 24
  %v1666 = vld [vmem:[%s1665] sm:$0xf]
  %v1667 = vld [vmem:[%s1665 + $0x4] sm:$0xf]
  %v1668 = vunpack.c.l.bf16 %v1666
  %v1669 = vunpack.c.l.bf16 %v1667
  %v1671 = vsel %vm1567, %v1668, 0
  %v1674 = vsel %vm1567, %v1669, 0
  %1676 = vmatpush.msra.mxu0 0.0
  %1677 = vmatpush.msra.mxu0 0.0
  %1678 = vmatpush.msra.mxu0 0.0
  %1679 = vmatpush.msra.mxu0 0.0
  %1680 = vmatpush.msra.mxu0 0.0
  %1681 = vmatpush.msra.mxu0 0.0
  %1682 = vmatpush.msra.mxu0 0.0
  %1683 = vmatpush.msra.mxu0 0.0
  %1684 = vmatpush.msra.mxu0 %v1562
  %1685 = vmatpush.msra.mxu0 %v1561
  %1686 = vmatpush.msra.mxu0 %v1560
  %1687 = vmatpush.msra.mxu0 %v1559
  %1688 = vmatpush.msra.mxu0 %v1558
  %1689 = vmatpush.msra.mxu0 %v1557
  %1690 = vmatpush.msra.mxu0 %v1556
  %1691 = vmatpush.msra.mxu0 %v1555
  %1692 = vmatmul.f32.gmra.mxu0 %v1671
  %v1693 = vpop.f32.mrf.mxu0
  %v1694 = vadd.f32 0.0, %v1693
  %1695 = vmatmul.f32.gmra.mxu0 %v1674
  %v1696 = vpop.f32.mrf.mxu0
  %v1697 = vadd.f32 0.0, %v1696
  %1698 = vdwg.mxu0
  %s1699 = scalar_lea.vmem %s4, 32
  %v1700 = vld [vmem:[%s1699] sm:$0xf]
  %v1701 = vld [vmem:[%s1699 + $0x4] sm:$0xf]
  %v1702 = vunpack.c.l.bf16 %v1700
  %v1703 = vunpack.c.l.bf16 %v1701
  %v1705 = vsel %vm1567, %v1702, 0
  %v1708 = vsel %vm1567, %v1703, 0
  %1710 = vmatpush.msra.mxu0 0.0
  %1711 = vmatpush.msra.mxu0 0.0
  %1712 = vmatpush.msra.mxu0 0.0
  %1713 = vmatpush.msra.mxu0 0.0
  %1714 = vmatpush.msra.mxu0 0.0
  %1715 = vmatpush.msra.mxu0 0.0
  %1716 = vmatpush.msra.mxu0 0.0
  %1717 = vmatpush.msra.mxu0 0.0
  %1718 = vmatpush.msra.mxu0 %v1562
  %1719 = vmatpush.msra.mxu0 %v1561
  %1720 = vmatpush.msra.mxu0 %v1560
  %1721 = vmatpush.msra.mxu0 %v1559
  %1722 = vmatpush.msra.mxu0 %v1558
  %1723 = vmatpush.msra.mxu0 %v1557
  %1724 = vmatpush.msra.mxu0 %v1556
  %1725 = vmatpush.msra.mxu0 %v1555
  %1726 = vmatmul.f32.gmra.mxu0 %v1705
  %v1727 = vpop.f32.mrf.mxu0
  %v1728 = vadd.f32 0.0, %v1727
  %1729 = vmatmul.f32.gmra.mxu0 %v1708
  %v1730 = vpop.f32.mrf.mxu0
  %v1731 = vadd.f32 0.0, %v1730
  %1732 = vdwg.mxu0
  %s1733 = scalar_lea.vmem %s4, 40
  %v1734 = vld [vmem:[%s1733] sm:$0xf]
  %v1735 = vld [vmem:[%s1733 + $0x4] sm:$0xf]
  %v1736 = vunpack.c.l.bf16 %v1734
  %v1737 = vunpack.c.l.bf16 %v1735
  %v1739 = vsel %vm1567, %v1736, 0
  %v1742 = vsel %vm1567, %v1737, 0
  %1744 = vmatpush.msra.mxu0 0.0
  %1745 = vmatpush.msra.mxu0 0.0
  %1746 = vmatpush.msra.mxu0 0.0
  %1747 = vmatpush.msra.mxu0 0.0
  %1748 = vmatpush.msra.mxu0 0.0
  %1749 = vmatpush.msra.mxu0 0.0
  %1750 = vmatpush.msra.mxu0 0.0
  %1751 = vmatpush.msra.mxu0 0.0
  %1752 = vmatpush.msra.mxu0 %v1562
  %1753 = vmatpush.msra.mxu0 %v1561
  %1754 = vmatpush.msra.mxu0 %v1560
  %1755 = vmatpush.msra.mxu0 %v1559
  %1756 = vmatpush.msra.mxu0 %v1558
  %1757 = vmatpush.msra.mxu0 %v1557
  %1758 = vmatpush.msra.mxu0 %v1556
  %1759 = vmatpush.msra.mxu0 %v1555
  %1760 = vmatmul.f32.gmra.mxu0 %v1739
  %v1761 = vpop.f32.mrf.mxu0
  %v1762 = vadd.f32 0.0, %v1761
  %1763 = vmatmul.f32.gmra.mxu0 %v1742
  %v1764 = vpop.f32.mrf.mxu0
  %v1765 = vadd.f32 0.0, %v1764
  %1766 = vdwg.mxu0
  %s1767 = scalar_lea.vmem %s4, 48
  %v1768 = vld [vmem:[%s1767] sm:$0xf]
  %v1769 = vld [vmem:[%s1767 + $0x4] sm:$0xf]
  %v1770 = vunpack.c.l.bf16 %v1768
  %v1771 = vunpack.c.l.bf16 %v1769
  %v1773 = vsel %vm1567, %v1770, 0
  %v1776 = vsel %vm1567, %v1771, 0
  %1778 = vmatpush.msra.mxu0 0.0
  %1779 = vmatpush.msra.mxu0 0.0
  %1780 = vmatpush.msra.mxu0 0.0
  %1781 = vmatpush.msra.mxu0 0.0
  %1782 = vmatpush.msra.mxu0 0.0
  %1783 = vmatpush.msra.mxu0 0.0
  %1784 = vmatpush.msra.mxu0 0.0
  %1785 = vmatpush.msra.mxu0 0.0
  %1786 = vmatpush.msra.mxu0 %v1562
  %1787 = vmatpush.msra.mxu0 %v1561
  %1788 = vmatpush.msra.mxu0 %v1560
  %1789 = vmatpush.msra.mxu0 %v1559
  %1790 = vmatpush.msra.mxu0 %v1558
  %1791 = vmatpush.msra.mxu0 %v1557
  %1792 = vmatpush.msra.mxu0 %v1556
  %1793 = vmatpush.msra.mxu0 %v1555
  %1794 = vmatmul.f32.gmra.mxu0 %v1773
  %v1795 = vpop.f32.mrf.mxu0
  %v1796 = vadd.f32 0.0, %v1795
  %1797 = vmatmul.f32.gmra.mxu0 %v1776
  %v1798 = vpop.f32.mrf.mxu0
  %v1799 = vadd.f32 0.0, %v1798
  %1800 = vdwg.mxu0
  %s1801 = scalar_lea.vmem %s4, 56
  %v1802 = vld [vmem:[%s1801] sm:$0xf]
  %v1803 = vld [vmem:[%s1801 + $0x4] sm:$0xf]
  %v1804 = vunpack.c.l.bf16 %v1802
  %v1805 = vunpack.c.l.bf16 %v1803
  %v1807 = vsel %vm1567, %v1804, 0
  %v1810 = vsel %vm1567, %v1805, 0
  %1812 = vmatpush.msra.mxu0 0.0
  %1813 = vmatpush.msra.mxu0 0.0
  %1814 = vmatpush.msra.mxu0 0.0
  %1815 = vmatpush.msra.mxu0 0.0
  %1816 = vmatpush.msra.mxu0 0.0
  %1817 = vmatpush.msra.mxu0 0.0
  %1818 = vmatpush.msra.mxu0 0.0
  %1819 = vmatpush.msra.mxu0 0.0
  %1820 = vmatpush.msra.mxu0 %v1562
  %1821 = vmatpush.msra.mxu0 %v1561
  %1822 = vmatpush.msra.mxu0 %v1560
  %1823 = vmatpush.msra.mxu0 %v1559
  %1824 = vmatpush.msra.mxu0 %v1558
  %1825 = vmatpush.msra.mxu0 %v1557
  %1826 = vmatpush.msra.mxu0 %v1556
  %1827 = vmatpush.msra.mxu0 %v1555
  %1828 = vmatmul.f32.gmra.mxu0 %v1807
  %v1829 = vpop.f32.mrf.mxu0
  %v1830 = vadd.f32 0.0, %v1829
  %1831 = vmatmul.f32.gmra.mxu0 %v1810
  %v1832 = vpop.f32.mrf.mxu0
  %v1833 = vadd.f32 0.0, %v1832
  %1834 = vdwg.mxu0
  %s1835 = scalar_lea.vmem %s4, 64
  %v1836 = vld [vmem:[%s1835] sm:$0xf]
  %v1837 = vld [vmem:[%s1835 + $0x4] sm:$0xf]
  %v1838 = vunpack.c.l.bf16 %v1836
  %v1839 = vunpack.c.l.bf16 %v1837
  %v1841 = vsel %vm1567, %v1838, 0
  %v1844 = vsel %vm1567, %v1839, 0
  %1846 = vmatpush.msra.mxu0 0.0
  %1847 = vmatpush.msra.mxu0 0.0
  %1848 = vmatpush.msra.mxu0 0.0
  %1849 = vmatpush.msra.mxu0 0.0
  %1850 = vmatpush.msra.mxu0 0.0
  %1851 = vmatpush.msra.mxu0 0.0
  %1852 = vmatpush.msra.mxu0 0.0
  %1853 = vmatpush.msra.mxu0 0.0
  %1854 = vmatpush.msra.mxu0 %v1562
  %1855 = vmatpush.msra.mxu0 %v1561
  %1856 = vmatpush.msra.mxu0 %v1560
  %1857 = vmatpush.msra.mxu0 %v1559
  %1858 = vmatpush.msra.mxu0 %v1558
  %1859 = vmatpush.msra.mxu0 %v1557
  %1860 = vmatpush.msra.mxu0 %v1556
  %1861 = vmatpush.msra.mxu0 %v1555
  %1862 = vmatmul.f32.gmra.mxu0 %v1841
  %v1863 = vpop.f32.mrf.mxu0
  %v1864 = vadd.f32 0.0, %v1863
  %1865 = vmatmul.f32.gmra.mxu0 %v1844
  %v1866 = vpop.f32.mrf.mxu0
  %v1867 = vadd.f32 0.0, %v1866
  %1868 = vdwg.mxu0
  %v1869 = vld [vmem:[%s5] sm:$0xff]
  %v1870 = vld [vmem:[%s5 + $0x8] sm:$0xff]
  %v1871 = vld [vmem:[%s5 + $0x10] sm:$0xff]
  %v1872 = vld [vmem:[%s5 + $0x18] sm:$0xff]
  %v1873 = vld [vmem:[%s5 + $0x20] sm:$0xff]
  %v1874 = vld [vmem:[%s5 + $0x28] sm:$0xff]
  %v1875 = vld [vmem:[%s5 + $0x30] sm:$0xff]
  %v1876 = vld [vmem:[%s5 + $0x38] sm:$0xff]
  %v1877 = vld [vmem:[%s5 + $0x40] sm:$0xff]
  %v1878 = vld [vmem:[%s5 + $0x48] sm:$0xff]
  %v1879 = vld [vmem:[%s5 + $0x50] sm:$0xff]
  %v1880 = vld [vmem:[%s5 + $0x58] sm:$0xff]
  %v1881 = vld [vmem:[%s5 + $0x60] sm:$0xff]
  %v1882 = vld [vmem:[%s5 + $0x68] sm:$0xff]
  %v1883 = vld [vmem:[%s5 + $0x70] sm:$0xff]
  %v1884 = vld [vmem:[%s5 + $0x78] sm:$0xff]
  %v1885 = vld [vmem:[%s5 + $0x80] sm:$0xff]
  %v1886 = vld [vmem:[%s5 + $0x88] sm:$0xff]
  %v1887 = vld [vmem:[%s5 + $0x90] sm:$0xff]
  %v1888 = vld [vmem:[%s5 + $0x98] sm:$0xff]
  %v1889 = vld [vmem:[%s5 + $0xa0] sm:$0xff]
  %v1890 = vld [vmem:[%s5 + $0xa8] sm:$0xff]
  %v1891 = vld [vmem:[%s5 + $0xb0] sm:$0xff]
  %v1892 = vld [vmem:[%s5 + $0xb8] sm:$0xff]
  %v1893 = vld [vmem:[%s5 + $0xc0] sm:$0xff]
  %v1894 = vld [vmem:[%s5 + $0xc8] sm:$0xff]
  %v1895 = vld [vmem:[%s5 + $0xd0] sm:$0xff]
  %v1896 = vld [vmem:[%s5 + $0xd8] sm:$0xff]
  %v1897 = vld [vmem:[%s5 + $0xe0] sm:$0xff]
  %v1898 = vld [vmem:[%s5 + $0xe8] sm:$0xff]
  %v1899 = vld [vmem:[%s5 + $0xf0] sm:$0xff]
  %v1900 = vld [vmem:[%s5 + $0xf8] sm:$0xff]
  %v1901 = vld [vmem:[%s5 + $0x100] sm:$0xff]
  %v1902 = vld [vmem:[%s5 + $0x108] sm:$0xff]
  %v1903 = vld [vmem:[%s5 + $0x110] sm:$0xff]
  %v1904 = vld [vmem:[%s5 + $0x118] sm:$0xff]
  %v1905 = vld [vmem:[%s5 + $0x120] sm:$0xff]
  %v1906 = vld [vmem:[%s5 + $0x128] sm:$0xff]
  %v1907 = vld [vmem:[%s5 + $0x130] sm:$0xff]
  %v1908 = vld [vmem:[%s5 + $0x138] sm:$0xff]
  %v1909 = vld [vmem:[%s5 + $0x140] sm:$0xff]
  %v1910 = vld [vmem:[%s5 + $0x148] sm:$0xff]
  %v1911 = vld [vmem:[%s5 + $0x150] sm:$0xff]
  %v1912 = vld [vmem:[%s5 + $0x158] sm:$0xff]
  %v1913 = vld [vmem:[%s5 + $0x160] sm:$0xff]
  %v1914 = vld [vmem:[%s5 + $0x168] sm:$0xff]
  %v1915 = vld [vmem:[%s5 + $0x170] sm:$0xff]
  %v1916 = vld [vmem:[%s5 + $0x178] sm:$0xff]
  %v1917 = vld [vmem:[%s5 + $0x180] sm:$0xff]
  %v1918 = vld [vmem:[%s5 + $0x188] sm:$0xff]
  %v1919 = vld [vmem:[%s5 + $0x190] sm:$0xff]
  %v1920 = vld [vmem:[%s5 + $0x198] sm:$0xff]
  %v1921 = vld [vmem:[%s5 + $0x1a0] sm:$0xff]
  %v1922 = vld [vmem:[%s5 + $0x1a8] sm:$0xff]
  %v1923 = vld [vmem:[%s5 + $0x1b0] sm:$0xff]
  %v1924 = vld [vmem:[%s5 + $0x1b8] sm:$0xff]
  %v1925 = vld [vmem:[%s5 + $0x1c0] sm:$0xff]
  %v1926 = vld [vmem:[%s5 + $0x1c8] sm:$0xff]
  %v1927 = vld [vmem:[%s5 + $0x1d0] sm:$0xff]
  %v1928 = vld [vmem:[%s5 + $0x1d8] sm:$0xff]
  %v1929 = vld [vmem:[%s5 + $0x1e0] sm:$0xff]
  %v1930 = vld [vmem:[%s5 + $0x1e8] sm:$0xff]
  %v1931 = vld [vmem:[%s5 + $0x1f0] sm:$0xff]
  %v1932 = vld [vmem:[%s5 + $0x1f8] sm:$0xff]
  %v1933 = vld [vmem:[%s5 + $0x200] sm:$0xff]
  %v1934 = vld [vmem:[%s5 + $0x208] sm:$0xff]
  %v1935 = vld [vmem:[%s5 + $0x210] sm:$0xff]
  %v1936 = vld [vmem:[%s5 + $0x218] sm:$0xff]
  %v1937 = vld [vmem:[%s5 + $0x220] sm:$0xff]
  %v1938 = vld [vmem:[%s5 + $0x228] sm:$0xff]
  %v1939 = vld [vmem:[%s5 + $0x230] sm:$0xff]
  %v1940 = vld [vmem:[%s5 + $0x238] sm:$0xff]
  %v1941 = vld [vmem:[%s5 + $0x240] sm:$0xff]
  %v1942 = vld [vmem:[%s5 + $0x248] sm:$0xff]
  %v1943 = vld [vmem:[%s5 + $0x250] sm:$0xff]
  %v1944 = vld [vmem:[%s5 + $0x258] sm:$0xff]
  %v1945 = vld [vmem:[%s5 + $0x260] sm:$0xff]
  %v1946 = vld [vmem:[%s5 + $0x268] sm:$0xff]
  %v1947 = vld [vmem:[%s5 + $0x270] sm:$0xff]
  %v1948 = vld [vmem:[%s5 + $0x278] sm:$0xff]
  %v1949 = vld [vmem:[%s5 + $0x280] sm:$0xff]
  %v1950 = vld [vmem:[%s5 + $0x288] sm:$0xff]
  %v1951 = vld [vmem:[%s5 + $0x290] sm:$0xff]
  %v1952 = vld [vmem:[%s5 + $0x298] sm:$0xff]
  %v1953 = vld [vmem:[%s5 + $0x2a0] sm:$0xff]
  %v1954 = vld [vmem:[%s5 + $0x2a8] sm:$0xff]
  %v1955 = vld [vmem:[%s5 + $0x2b0] sm:$0xff]
  %v1956 = vld [vmem:[%s5 + $0x2b8] sm:$0xff]
  %v1957 = vld [vmem:[%s5 + $0x2c0] sm:$0xff]
  %v1958 = vld [vmem:[%s5 + $0x2c8] sm:$0xff]
  %v1959 = vld [vmem:[%s5 + $0x2d0] sm:$0xff]
  %v1960 = vld [vmem:[%s5 + $0x2d8] sm:$0xff]
  %v1961 = vld [vmem:[%s5 + $0x2e0] sm:$0xff]
  %v1962 = vld [vmem:[%s5 + $0x2e8] sm:$0xff]
  %v1963 = vld [vmem:[%s5 + $0x2f0] sm:$0xff]
  %v1964 = vld [vmem:[%s5 + $0x2f8] sm:$0xff]
  %v1965 = vld [vmem:[%s5 + $0x300] sm:$0xff]
  %v1966 = vld [vmem:[%s5 + $0x308] sm:$0xff]
  %v1967 = vld [vmem:[%s5 + $0x310] sm:$0xff]
  %v1968 = vld [vmem:[%s5 + $0x318] sm:$0xff]
  %v1969 = vld [vmem:[%s5 + $0x320] sm:$0xff]
  %v1970 = vld [vmem:[%s5 + $0x328] sm:$0xff]
  %v1971 = vld [vmem:[%s5 + $0x330] sm:$0xff]
  %v1972 = vld [vmem:[%s5 + $0x338] sm:$0xff]
  %v1973 = vld [vmem:[%s5 + $0x340] sm:$0xff]
  %v1974 = vld [vmem:[%s5 + $0x348] sm:$0xff]
  %v1975 = vld [vmem:[%s5 + $0x350] sm:$0xff]
  %v1976 = vld [vmem:[%s5 + $0x358] sm:$0xff]
  %v1977 = vld [vmem:[%s5 + $0x360] sm:$0xff]
  %v1978 = vld [vmem:[%s5 + $0x368] sm:$0xff]
  %v1979 = vld [vmem:[%s5 + $0x370] sm:$0xff]
  %v1980 = vld [vmem:[%s5 + $0x378] sm:$0xff]
  %v1981 = vld [vmem:[%s5 + $0x380] sm:$0xff]
  %v1982 = vld [vmem:[%s5 + $0x388] sm:$0xff]
  %v1983 = vld [vmem:[%s5 + $0x390] sm:$0xff]
  %v1984 = vld [vmem:[%s5 + $0x398] sm:$0xff]
  %v1985 = vld [vmem:[%s5 + $0x3a0] sm:$0xff]
  %v1986 = vld [vmem:[%s5 + $0x3a8] sm:$0xff]
  %v1987 = vld [vmem:[%s5 + $0x3b0] sm:$0xff]
  %v1988 = vld [vmem:[%s5 + $0x3b8] sm:$0xff]
  %v1989 = vld [vmem:[%s5 + $0x3c0] sm:$0xff]
  %v1990 = vld [vmem:[%s5 + $0x3c8] sm:$0xff]
  %v1991 = vld [vmem:[%s5 + $0x3d0] sm:$0xff]
  %v1992 = vld [vmem:[%s5 + $0x3d8] sm:$0xff]
  %v1993 = vld [vmem:[%s5 + $0x3e0] sm:$0xff]
  %v1994 = vld [vmem:[%s5 + $0x3e8] sm:$0xff]
  %v1995 = vld [vmem:[%s5 + $0x3f0] sm:$0xff]
  %v1996 = vld [vmem:[%s5 + $0x3f8] sm:$0xff]
  %v1997 = vld [vmem:[%s5 + $0x400] sm:$0xff]
  %v1998 = vld [vmem:[%s5 + $0x408] sm:$0xff]
  %v1999 = vld [vmem:[%s5 + $0x410] sm:$0xff]
  %v2000 = vld [vmem:[%s5 + $0x418] sm:$0xff]
  %v2001 = vld [vmem:[%s5 + $0x420] sm:$0xff]
  %v2002 = vld [vmem:[%s5 + $0x428] sm:$0xff]
  %v2003 = vld [vmem:[%s5 + $0x430] sm:$0xff]
  %v2004 = vld [vmem:[%s5 + $0x438] sm:$0xff]
  %v2005 = vld [vmem:[%s5 + $0x440] sm:$0xff]
  %v2006 = vld [vmem:[%s5 + $0x448] sm:$0xff]
  %v2007 = vld [vmem:[%s5 + $0x450] sm:$0xff]
  %v2008 = vld [vmem:[%s5 + $0x458] sm:$0xff]
  %v2009 = vld [vmem:[%s5 + $0x460] sm:$0xff]
  %v2010 = vld [vmem:[%s5 + $0x468] sm:$0xff]
  %v2011 = vld [vmem:[%s5 + $0x470] sm:$0xff]
  %v2012 = vld [vmem:[%s5 + $0x478] sm:$0xff]
  %v2013 = vld [vmem:[%s6] sm:$0x1]
  %v2015 = vperm.slane %v2013, 0
  %2017 = vmatpush.msra.mxu0 %v1884
  %2018 = vmatpush.msra.mxu0 %v1883
  %2019 = vmatpush.msra.mxu0 %v1882
  %2020 = vmatpush.msra.mxu0 %v1881
  %2021 = vmatpush.msra.mxu0 %v1880
  %2022 = vmatpush.msra.mxu0 %v1879
  %2023 = vmatpush.msra.mxu0 %v1878
  %2024 = vmatpush.msra.mxu0 %v1877
  %2025 = vmatpush.msra.mxu0 %v1876
  %2026 = vmatpush.msra.mxu0 %v1875
  %2027 = vmatpush.msra.mxu0 %v1874
  %2028 = vmatpush.msra.mxu0 %v1873
  %2029 = vmatpush.msra.mxu0 %v1872
  %2030 = vmatpush.msra.mxu0 %v1871
  %2031 = vmatpush.msra.mxu0 %v1870
  %2032 = vmatpush.msra.mxu0 %v1869
  %2033 = vmatmul.f32.gmra.mxu0 %v1592
  %v2034 = vpop.f32.mrf.mxu0
  %v2035 = vadd.f32 %v2015, %v2034
  %2036 = vmatmul.f32.gmra.mxu0 %v1595
  %v2037 = vpop.f32.mrf.mxu0
  %v2038 = vadd.f32 %v2015, %v2037
  %2039 = vdwg.mxu0
  %2040 = vmatpush.msra.mxu0 %v1900
  %2041 = vmatpush.msra.mxu0 %v1899
  %2042 = vmatpush.msra.mxu0 %v1898
  %2043 = vmatpush.msra.mxu0 %v1897
  %2044 = vmatpush.msra.mxu0 %v1896
  %2045 = vmatpush.msra.mxu0 %v1895
  %2046 = vmatpush.msra.mxu0 %v1894
  %2047 = vmatpush.msra.mxu0 %v1893
  %2048 = vmatpush.msra.mxu0 %v1892
  %2049 = vmatpush.msra.mxu0 %v1891
  %2050 = vmatpush.msra.mxu0 %v1890
  %2051 = vmatpush.msra.mxu0 %v1889
  %2052 = vmatpush.msra.mxu0 %v1888
  %2053 = vmatpush.msra.mxu0 %v1887
  %2054 = vmatpush.msra.mxu0 %v1886
  %2055 = vmatpush.msra.mxu0 %v1885
  %2056 = vmatmul.f32.gmra.mxu0 %v1626
  %v2057 = vpop.f32.mrf.mxu0
  %v2058 = vadd.f32 %v2035, %v2057
  %2059 = vmatmul.f32.gmra.mxu0 %v1629
  %v2060 = vpop.f32.mrf.mxu0
  %v2061 = vadd.f32 %v2038, %v2060
  %2062 = vdwg.mxu0
  %2063 = vmatpush.msra.mxu0 %v1916
  %2064 = vmatpush.msra.mxu0 %v1915
  %2065 = vmatpush.msra.mxu0 %v1914
  %2066 = vmatpush.msra.mxu0 %v1913
  %2067 = vmatpush.msra.mxu0 %v1912
  %2068 = vmatpush.msra.mxu0 %v1911
  %2069 = vmatpush.msra.mxu0 %v1910
  %2070 = vmatpush.msra.mxu0 %v1909
  %2071 = vmatpush.msra.mxu0 %v1908
  %2072 = vmatpush.msra.mxu0 %v1907
  %2073 = vmatpush.msra.mxu0 %v1906
  %2074 = vmatpush.msra.mxu0 %v1905
  %2075 = vmatpush.msra.mxu0 %v1904
  %2076 = vmatpush.msra.mxu0 %v1903
  %2077 = vmatpush.msra.mxu0 %v1902
  %2078 = vmatpush.msra.mxu0 %v1901
  %2079 = vmatmul.f32.gmra.mxu0 %v1660
  %v2080 = vpop.f32.mrf.mxu0
  %v2081 = vadd.f32 %v2058, %v2080
  %2082 = vmatmul.f32.gmra.mxu0 %v1663
  %v2083 = vpop.f32.mrf.mxu0
  %v2084 = vadd.f32 %v2061, %v2083
  %2085 = vdwg.mxu0
  %2086 = vmatpush.msra.mxu0 %v1932
  %2087 = vmatpush.msra.mxu0 %v1931
  %2088 = vmatpush.msra.mxu0 %v1930
  %2089 = vmatpush.msra.mxu0 %v1929
  %2090 = vmatpush.msra.mxu0 %v1928
  %2091 = vmatpush.msra.mxu0 %v1927
  %2092 = vmatpush.msra.mxu0 %v1926
  %2093 = vmatpush.msra.mxu0 %v1925
  %2094 = vmatpush.msra.mxu0 %v1924
  %2095 = vmatpush.msra.mxu0 %v1923
  %2096 = vmatpush.msra.mxu0 %v1922
  %2097 = vmatpush.msra.mxu0 %v1921
  %2098 = vmatpush.msra.mxu0 %v1920
  %2099 = vmatpush.msra.mxu0 %v1919
  %2100 = vmatpush.msra.mxu0 %v1918
  %2101 = vmatpush.msra.mxu0 %v1917
  %2102 = vmatmul.f32.gmra.mxu0 %v1694
  %v2103 = vpop.f32.mrf.mxu0
  %v2104 = vadd.f32 %v2081, %v2103
  %2105 = vmatmul.f32.gmra.mxu0 %v1697
  %v2106 = vpop.f32.mrf.mxu0
  %v2107 = vadd.f32 %v2084, %v2106
  %2108 = vdwg.mxu0
  %2109 = vmatpush.msra.mxu0 %v1948
  %2110 = vmatpush.msra.mxu0 %v1947
  %2111 = vmatpush.msra.mxu0 %v1946
  %2112 = vmatpush.msra.mxu0 %v1945
  %2113 = vmatpush.msra.mxu0 %v1944
  %2114 = vmatpush.msra.mxu0 %v1943
  %2115 = vmatpush.msra.mxu0 %v1942
  %2116 = vmatpush.msra.mxu0 %v1941
  %2117 = vmatpush.msra.mxu0 %v1940
  %2118 = vmatpush.msra.mxu0 %v1939
  %2119 = vmatpush.msra.mxu0 %v1938
  %2120 = vmatpush.msra.mxu0 %v1937
  %2121 = vmatpush.msra.mxu0 %v1936
  %2122 = vmatpush.msra.mxu0 %v1935
  %2123 = vmatpush.msra.mxu0 %v1934
  %2124 = vmatpush.msra.mxu0 %v1933
  %2125 = vmatmul.f32.gmra.mxu0 %v1728
  %v2126 = vpop.f32.mrf.mxu0
  %v2127 = vadd.f32 %v2104, %v2126
  %2128 = vmatmul.f32.gmra.mxu0 %v1731
  %v2129 = vpop.f32.mrf.mxu0
  %v2130 = vadd.f32 %v2107, %v2129
  %2131 = vdwg.mxu0
  %2132 = vmatpush.msra.mxu0 %v1964
  %2133 = vmatpush.msra.mxu0 %v1963
  %2134 = vmatpush.msra.mxu0 %v1962
  %2135 = vmatpush.msra.mxu0 %v1961
  %2136 = vmatpush.msra.mxu0 %v1960
  %2137 = vmatpush.msra.mxu0 %v1959
  %2138 = vmatpush.msra.mxu0 %v1958
  %2139 = vmatpush.msra.mxu0 %v1957
  %2140 = vmatpush.msra.mxu0 %v1956
  %2141 = vmatpush.msra.mxu0 %v1955
  %2142 = vmatpush.msra.mxu0 %v1954
  %2143 = vmatpush.msra.mxu0 %v1953
  %2144 = vmatpush.msra.mxu0 %v1952
  %2145 = vmatpush.msra.mxu0 %v1951
  %2146 = vmatpush.msra.mxu0 %v1950
  %2147 = vmatpush.msra.mxu0 %v1949
  %2148 = vmatmul.f32.gmra.mxu0 %v1762
  %v2149 = vpop.f32.mrf.mxu0
  %v2150 = vadd.f32 %v2127, %v2149
  %2151 = vmatmul.f32.gmra.mxu0 %v1765
  %v2152 = vpop.f32.mrf.mxu0
  %v2153 = vadd.f32 %v2130, %v2152
  %2154 = vdwg.mxu0
  %2155 = vmatpush.msra.mxu0 %v1980
  %2156 = vmatpush.msra.mxu0 %v1979
  %2157 = vmatpush.msra.mxu0 %v1978
  %2158 = vmatpush.msra.mxu0 %v1977
  %2159 = vmatpush.msra.mxu0 %v1976
  %2160 = vmatpush.msra.mxu0 %v1975
  %2161 = vmatpush.msra.mxu0 %v1974
  %2162 = vmatpush.msra.mxu0 %v1973
  %2163 = vmatpush.msra.mxu0 %v1972
  %2164 = vmatpush.msra.mxu0 %v1971
  %2165 = vmatpush.msra.mxu0 %v1970
  %2166 = vmatpush.msra.mxu0 %v1969
  %2167 = vmatpush.msra.mxu0 %v1968
  %2168 = vmatpush.msra.mxu0 %v1967
  %2169 = vmatpush.msra.mxu0 %v1966
  %2170 = vmatpush.msra.mxu0 %v1965
  %2171 = vmatmul.f32.gmra.mxu0 %v1796
  %v2172 = vpop.f32.mrf.mxu0
  %v2173 = vadd.f32 %v2150, %v2172
  %2174 = vmatmul.f32.gmra.mxu0 %v1799
  %v2175 = vpop.f32.mrf.mxu0
  %v2176 = vadd.f32 %v2153, %v2175
  %2177 = vdwg.mxu0
  %2178 = vmatpush.msra.mxu0 %v1996
  %2179 = vmatpush.msra.mxu0 %v1995
  %2180 = vmatpush.msra.mxu0 %v1994
  %2181 = vmatpush.msra.mxu0 %v1993
  %2182 = vmatpush.msra.mxu0 %v1992
  %2183 = vmatpush.msra.mxu0 %v1991
  %2184 = vmatpush.msra.mxu0 %v1990
  %2185 = vmatpush.msra.mxu0 %v1989
  %2186 = vmatpush.msra.mxu0 %v1988
  %2187 = vmatpush.msra.mxu0 %v1987
  %2188 = vmatpush.msra.mxu0 %v1986
  %2189 = vmatpush.msra.mxu0 %v1985
  %2190 = vmatpush.msra.mxu0 %v1984
  %2191 = vmatpush.msra.mxu0 %v1983
  %2192 = vmatpush.msra.mxu0 %v1982
  %2193 = vmatpush.msra.mxu0 %v1981
  %2194 = vmatmul.f32.gmra.mxu0 %v1830
  %v2195 = vpop.f32.mrf.mxu0
  %v2196 = vadd.f32 %v2173, %v2195
  %2197 = vmatmul.f32.gmra.mxu0 %v1833
  %v2198 = vpop.f32.mrf.mxu0
  %v2199 = vadd.f32 %v2176, %v2198
  %2200 = vdwg.mxu0
  %2201 = vmatpush.msra.mxu0 %v2012
  %2202 = vmatpush.msra.mxu0 %v2011
  %2203 = vmatpush.msra.mxu0 %v2010
  %2204 = vmatpush.msra.mxu0 %v2009
  %2205 = vmatpush.msra.mxu0 %v2008
  %2206 = vmatpush.msra.mxu0 %v2007
  %2207 = vmatpush.msra.mxu0 %v2006
  %2208 = vmatpush.msra.mxu0 %v2005
  %2209 = vmatpush.msra.mxu0 %v2004
  %2210 = vmatpush.msra.mxu0 %v2003
  %2211 = vmatpush.msra.mxu0 %v2002
  %2212 = vmatpush.msra.mxu0 %v2001
  %2213 = vmatpush.msra.mxu0 %v2000
  %2214 = vmatpush.msra.mxu0 %v1999
  %2215 = vmatpush.msra.mxu0 %v1998
  %2216 = vmatpush.msra.mxu0 %v1997
  %2217 = vmatmul.f32.gmra.mxu0 %v1864
  %v2218 = vpop.f32.mrf.mxu0
  %v2219 = vadd.f32 %v2196, %v2218
  %2220 = vmatmul.f32.gmra.mxu0 %v1867
  %v2221 = vpop.f32.mrf.mxu0
  %v2222 = vadd.f32 %v2199, %v2221
  %2223 = vdwg.mxu0
  %v2224 = vmax.f32 %v2219, 0.0
  %v2225 = vmax.f32 %v2222, 0.0
  %v2226 = vld [vmem:[%s8] sm:$0xff]
  %v2227 = vld [vmem:[%s8 + $0x8] sm:$0xff]
  %v2228 = vld [vmem:[%s8 + $0x10] sm:$0xff]
  %v2229 = vld [vmem:[%s8 + $0x18] sm:$0xff]
  %v2230 = vld [vmem:[%s8 + $0x20] sm:$0xff]
  %v2231 = vld [vmem:[%s8 + $0x28] sm:$0xff]
  %v2232 = vld [vmem:[%s8 + $0x30] sm:$0xff]
  %v2233 = vld [vmem:[%s8 + $0x38] sm:$0xff]
  %v2234 = vld [vmem:[%s8 + $0x40] sm:$0xff]
  %v2235 = vld [vmem:[%s8 + $0x48] sm:$0xff]
  %v2236 = vld [vmem:[%s8 + $0x50] sm:$0xff]
  %v2237 = vld [vmem:[%s8 + $0x58] sm:$0xff]
  %v2238 = vld [vmem:[%s8 + $0x60] sm:$0xff]
  %v2239 = vld [vmem:[%s8 + $0x68] sm:$0xff]
  %v2240 = vld [vmem:[%s8 + $0x70] sm:$0xff]
  %v2241 = vld [vmem:[%s8 + $0x78] sm:$0xff]
  %v2242 = vld [vmem:[%s8 + $0x80] sm:$0xff]
  %v2243 = vld [vmem:[%s8 + $0x88] sm:$0xff]
  %v2244 = vld [vmem:[%s8 + $0x90] sm:$0xff]
  %v2245 = vld [vmem:[%s8 + $0x98] sm:$0xff]
  %v2246 = vld [vmem:[%s8 + $0xa0] sm:$0xff]
  %v2247 = vld [vmem:[%s8 + $0xa8] sm:$0xff]
  %v2248 = vld [vmem:[%s8 + $0xb0] sm:$0xff]
  %v2249 = vld [vmem:[%s8 + $0xb8] sm:$0xff]
  %v2250 = vld [vmem:[%s8 + $0xc0] sm:$0xff]
  %v2251 = vld [vmem:[%s8 + $0xc8] sm:$0xff]
  %v2252 = vld [vmem:[%s8 + $0xd0] sm:$0xff]
  %v2253 = vld [vmem:[%s8 + $0xd8] sm:$0xff]
  %v2254 = vld [vmem:[%s8 + $0xe0] sm:$0xff]
  %v2255 = vld [vmem:[%s8 + $0xe8] sm:$0xff]
  %v2256 = vld [vmem:[%s8 + $0xf0] sm:$0xff]
  %v2257 = vld [vmem:[%s8 + $0xf8] sm:$0xff]
  %v2258 = vld [vmem:[%s8 + $0x100] sm:$0xff]
  %v2259 = vld [vmem:[%s8 + $0x108] sm:$0xff]
  %v2260 = vld [vmem:[%s8 + $0x110] sm:$0xff]
  %v2261 = vld [vmem:[%s8 + $0x118] sm:$0xff]
  %v2262 = vld [vmem:[%s8 + $0x120] sm:$0xff]
  %v2263 = vld [vmem:[%s8 + $0x128] sm:$0xff]
  %v2264 = vld [vmem:[%s8 + $0x130] sm:$0xff]
  %v2265 = vld [vmem:[%s8 + $0x138] sm:$0xff]
  %v2266 = vld [vmem:[%s8 + $0x140] sm:$0xff]
  %v2267 = vld [vmem:[%s8 + $0x148] sm:$0xff]
  %v2268 = vld [vmem:[%s8 + $0x150] sm:$0xff]
  %v2269 = vld [vmem:[%s8 + $0x158] sm:$0xff]
  %v2270 = vld [vmem:[%s8 + $0x160] sm:$0xff]
  %v2271 = vld [vmem:[%s8 + $0x168] sm:$0xff]
  %v2272 = vld [vmem:[%s8 + $0x170] sm:$0xff]
  %v2273 = vld [vmem:[%s8 + $0x178] sm:$0xff]
  %v2274 = vld [vmem:[%s8 + $0x180] sm:$0xff]
  %v2275 = vld [vmem:[%s8 + $0x188] sm:$0xff]
  %v2276 = vld [vmem:[%s8 + $0x190] sm:$0xff]
  %v2277 = vld [vmem:[%s8 + $0x198] sm:$0xff]
  %v2278 = vld [vmem:[%s8 + $0x1a0] sm:$0xff]
  %v2279 = vld [vmem:[%s8 + $0x1a8] sm:$0xff]
  %v2280 = vld [vmem:[%s8 + $0x1b0] sm:$0xff]
  %v2281 = vld [vmem:[%s8 + $0x1b8] sm:$0xff]
  %v2282 = vld [vmem:[%s8 + $0x1c0] sm:$0xff]
  %v2283 = vld [vmem:[%s8 + $0x1c8] sm:$0xff]
  %v2284 = vld [vmem:[%s8 + $0x1d0] sm:$0xff]
  %v2285 = vld [vmem:[%s8 + $0x1d8] sm:$0xff]
  %v2286 = vld [vmem:[%s8 + $0x1e0] sm:$0xff]
  %v2287 = vld [vmem:[%s8 + $0x1e8] sm:$0xff]
  %v2288 = vld [vmem:[%s8 + $0x1f0] sm:$0xff]
  %v2289 = vld [vmem:[%s8 + $0x1f8] sm:$0xff]
  %v2290 = vld [vmem:[%s8 + $0x200] sm:$0xff]
  %v2291 = vld [vmem:[%s8 + $0x208] sm:$0xff]
  %v2292 = vld [vmem:[%s8 + $0x210] sm:$0xff]
  %v2293 = vld [vmem:[%s8 + $0x218] sm:$0xff]
  %v2294 = vld [vmem:[%s8 + $0x220] sm:$0xff]
  %v2295 = vld [vmem:[%s8 + $0x228] sm:$0xff]
  %v2296 = vld [vmem:[%s8 + $0x230] sm:$0xff]
  %v2297 = vld [vmem:[%s8 + $0x238] sm:$0xff]
  %v2298 = vld [vmem:[%s8 + $0x240] sm:$0xff]
  %v2299 = vld [vmem:[%s8 + $0x248] sm:$0xff]
  %v2300 = vld [vmem:[%s8 + $0x250] sm:$0xff]
  %v2301 = vld [vmem:[%s8 + $0x258] sm:$0xff]
  %v2302 = vld [vmem:[%s8 + $0x260] sm:$0xff]
  %v2303 = vld [vmem:[%s8 + $0x268] sm:$0xff]
  %v2304 = vld [vmem:[%s8 + $0x270] sm:$0xff]
  %v2305 = vld [vmem:[%s8 + $0x278] sm:$0xff]
  %v2306 = vld [vmem:[%s8 + $0x280] sm:$0xff]
  %v2307 = vld [vmem:[%s8 + $0x288] sm:$0xff]
  %v2308 = vld [vmem:[%s8 + $0x290] sm:$0xff]
  %v2309 = vld [vmem:[%s8 + $0x298] sm:$0xff]
  %v2310 = vld [vmem:[%s8 + $0x2a0] sm:$0xff]
  %v2311 = vld [vmem:[%s8 + $0x2a8] sm:$0xff]
  %v2312 = vld [vmem:[%s8 + $0x2b0] sm:$0xff]
  %v2313 = vld [vmem:[%s8 + $0x2b8] sm:$0xff]
  %v2314 = vld [vmem:[%s8 + $0x2c0] sm:$0xff]
  %v2315 = vld [vmem:[%s8 + $0x2c8] sm:$0xff]
  %v2316 = vld [vmem:[%s8 + $0x2d0] sm:$0xff]
  %v2317 = vld [vmem:[%s8 + $0x2d8] sm:$0xff]
  %v2318 = vld [vmem:[%s8 + $0x2e0] sm:$0xff]
  %v2319 = vld [vmem:[%s8 + $0x2e8] sm:$0xff]
  %v2320 = vld [vmem:[%s8 + $0x2f0] sm:$0xff]
  %v2321 = vld [vmem:[%s8 + $0x2f8] sm:$0xff]
  %v2322 = vld [vmem:[%s8 + $0x300] sm:$0xff]
  %v2323 = vld [vmem:[%s8 + $0x308] sm:$0xff]
  %v2324 = vld [vmem:[%s8 + $0x310] sm:$0xff]
  %v2325 = vld [vmem:[%s8 + $0x318] sm:$0xff]
  %v2326 = vld [vmem:[%s8 + $0x320] sm:$0xff]
  %v2327 = vld [vmem:[%s8 + $0x328] sm:$0xff]
  %v2328 = vld [vmem:[%s8 + $0x330] sm:$0xff]
  %v2329 = vld [vmem:[%s8 + $0x338] sm:$0xff]
  %v2330 = vld [vmem:[%s8 + $0x340] sm:$0xff]
  %v2331 = vld [vmem:[%s8 + $0x348] sm:$0xff]
  %v2332 = vld [vmem:[%s8 + $0x350] sm:$0xff]
  %v2333 = vld [vmem:[%s8 + $0x358] sm:$0xff]
  %v2334 = vld [vmem:[%s8 + $0x360] sm:$0xff]
  %v2335 = vld [vmem:[%s8 + $0x368] sm:$0xff]
  %v2336 = vld [vmem:[%s8 + $0x370] sm:$0xff]
  %v2337 = vld [vmem:[%s8 + $0x378] sm:$0xff]
  %v2338 = vld [vmem:[%s8 + $0x380] sm:$0xff]
  %v2339 = vld [vmem:[%s8 + $0x388] sm:$0xff]
  %v2340 = vld [vmem:[%s8 + $0x390] sm:$0xff]
  %v2341 = vld [vmem:[%s8 + $0x398] sm:$0xff]
  %v2342 = vld [vmem:[%s8 + $0x3a0] sm:$0xff]
  %v2343 = vld [vmem:[%s8 + $0x3a8] sm:$0xff]
  %v2344 = vld [vmem:[%s8 + $0x3b0] sm:$0xff]
  %v2345 = vld [vmem:[%s8 + $0x3b8] sm:$0xff]
  %v2346 = vld [vmem:[%s8 + $0x3c0] sm:$0xff]
  %v2347 = vld [vmem:[%s8 + $0x3c8] sm:$0xff]
  %v2348 = vld [vmem:[%s8 + $0x3d0] sm:$0xff]
  %v2349 = vld [vmem:[%s8 + $0x3d8] sm:$0xff]
  %v2350 = vld [vmem:[%s8 + $0x3e0] sm:$0xff]
  %v2351 = vld [vmem:[%s8 + $0x3e8] sm:$0xff]
  %v2352 = vld [vmem:[%s8 + $0x3f0] sm:$0xff]
  %v2353 = vld [vmem:[%s8 + $0x3f8] sm:$0xff]
  %v2354 = vld [vmem:[%s8 + $0x400] sm:$0xff]
  %v2355 = vld [vmem:[%s8 + $0x408] sm:$0xff]
  %v2356 = vld [vmem:[%s8 + $0x410] sm:$0xff]
  %v2357 = vld [vmem:[%s8 + $0x418] sm:$0xff]
  %v2358 = vld [vmem:[%s8 + $0x420] sm:$0xff]
  %v2359 = vld [vmem:[%s8 + $0x428] sm:$0xff]
  %v2360 = vld [vmem:[%s8 + $0x430] sm:$0xff]
  %v2361 = vld [vmem:[%s8 + $0x438] sm:$0xff]
  %v2362 = vld [vmem:[%s8 + $0x440] sm:$0xff]
  %v2363 = vld [vmem:[%s8 + $0x448] sm:$0xff]
  %v2364 = vld [vmem:[%s8 + $0x450] sm:$0xff]
  %v2365 = vld [vmem:[%s8 + $0x458] sm:$0xff]
  %v2366 = vld [vmem:[%s8 + $0x460] sm:$0xff]
  %v2367 = vld [vmem:[%s8 + $0x468] sm:$0xff]
  %v2368 = vld [vmem:[%s8 + $0x470] sm:$0xff]
  %v2369 = vld [vmem:[%s8 + $0x478] sm:$0xff]
  %2370 = vmatpush.msra.mxu0 %v2361
  %2371 = vmatpush.msra.mxu0 %v2352
  %2372 = vmatpush.msra.mxu0 %v2343
  %2373 = vmatpush.msra.mxu0 %v2334
  %2374 = vmatpush.msra.mxu0 %v2325
  %2375 = vmatpush.msra.mxu0 %v2316
  %2376 = vmatpush.msra.mxu0 %v2307
  %2377 = vmatpush.msra.mxu0 %v2298
  %2378 = vmatpush.msra.mxu0 %v2289
  %2379 = vmatpush.msra.mxu0 %v2280
  %2380 = vmatpush.msra.mxu0 %v2271
  %2381 = vmatpush.msra.mxu0 %v2262
  %2382 = vmatpush.msra.mxu0 %v2253
  %2383 = vmatpush.msra.mxu0 %v2244
  %2384 = vmatpush.msra.mxu0 %v2235
  %2385 = vmatpush.msra.mxu0 %v2226
  %2386 = vmatmul.f32.gmra.mxu0 %v2224
  %v2387 = vpop.f32.mrf.mxu0
  %v2388 = vadd.f32 0.0, %v2387
  %2389 = vmatmul.f32.gmra.mxu0 %v2225
  %v2390 = vpop.f32.mrf.mxu0
  %v2391 = vadd.f32 0.0, %v2390
  %2392 = vdwg.mxu0
  %2393 = vmatpush.msra.mxu0 %v2362
  %2394 = vmatpush.msra.mxu0 %v2353
  %2395 = vmatpush.msra.mxu0 %v2344
  %2396 = vmatpush.msra.mxu0 %v2335
  %2397 = vmatpush.msra.mxu0 %v2326
  %2398 = vmatpush.msra.mxu0 %v2317
  %2399 = vmatpush.msra.mxu0 %v2308
  %2400 = vmatpush.msra.mxu0 %v2299
  %2401 = vmatpush.msra.mxu0 %v2290
  %2402 = vmatpush.msra.mxu0 %v2281
  %2403 = vmatpush.msra.mxu0 %v2272
  %2404 = vmatpush.msra.mxu0 %v2263
  %2405 = vmatpush.msra.mxu0 %v2254
  %2406 = vmatpush.msra.mxu0 %v2245
  %2407 = vmatpush.msra.mxu0 %v2236
  %2408 = vmatpush.msra.mxu0 %v2227
  %2409 = vmatmul.f32.gmra.mxu0 %v2224
  %v2410 = vpop.f32.mrf.mxu0
  %v2411 = vadd.f32 0.0, %v2410
  %2412 = vmatmul.f32.gmra.mxu0 %v2225
  %v2413 = vpop.f32.mrf.mxu0
  %v2414 = vadd.f32 0.0, %v2413
  %2415 = vdwg.mxu0
  %2416 = vmatpush.msra.mxu0 %v2363
  %2417 = vmatpush.msra.mxu0 %v2354
  %2418 = vmatpush.msra.mxu0 %v2345
  %2419 = vmatpush.msra.mxu0 %v2336
  %2420 = vmatpush.msra.mxu0 %v2327
  %2421 = vmatpush.msra.mxu0 %v2318
  %2422 = vmatpush.msra.mxu0 %v2309
  %2423 = vmatpush.msra.mxu0 %v2300
  %2424 = vmatpush.msra.mxu0 %v2291
  %2425 = vmatpush.msra.mxu0 %v2282
  %2426 = vmatpush.msra.mxu0 %v2273
  %2427 = vmatpush.msra.mxu0 %v2264
  %2428 = vmatpush.msra.mxu0 %v2255
  %2429 = vmatpush.msra.mxu0 %v2246
  %2430 = vmatpush.msra.mxu0 %v2237
  %2431 = vmatpush.msra.mxu0 %v2228
  %2432 = vmatmul.f32.gmra.mxu0 %v2224
  %v2433 = vpop.f32.mrf.mxu0
  %v2434 = vadd.f32 0.0, %v2433
  %2435 = vmatmul.f32.gmra.mxu0 %v2225
  %v2436 = vpop.f32.mrf.mxu0
  %v2437 = vadd.f32 0.0, %v2436
  %2438 = vdwg.mxu0
  %2439 = vmatpush.msra.mxu0 %v2364
  %2440 = vmatpush.msra.mxu0 %v2355
  %2441 = vmatpush.msra.mxu0 %v2346
  %2442 = vmatpush.msra.mxu0 %v2337
  %2443 = vmatpush.msra.mxu0 %v2328
  %2444 = vmatpush.msra.mxu0 %v2319
  %2445 = vmatpush.msra.mxu0 %v2310
  %2446 = vmatpush.msra.mxu0 %v2301
  %2447 = vmatpush.msra.mxu0 %v2292
  %2448 = vmatpush.msra.mxu0 %v2283
  %2449 = vmatpush.msra.mxu0 %v2274
  %2450 = vmatpush.msra.mxu0 %v2265
  %2451 = vmatpush.msra.mxu0 %v2256
  %2452 = vmatpush.msra.mxu0 %v2247
  %2453 = vmatpush.msra.mxu0 %v2238
  %2454 = vmatpush.msra.mxu0 %v2229
  %2455 = vmatmul.f32.gmra.mxu0 %v2224
  %v2456 = vpop.f32.mrf.mxu0
  %v2457 = vadd.f32 0.0, %v2456
  %2458 = vmatmul.f32.gmra.mxu0 %v2225
  %v2459 = vpop.f32.mrf.mxu0
  %v2460 = vadd.f32 0.0, %v2459
  %2461 = vdwg.mxu0
  %2462 = vmatpush.msra.mxu0 %v2365
  %2463 = vmatpush.msra.mxu0 %v2356
  %2464 = vmatpush.msra.mxu0 %v2347
  %2465 = vmatpush.msra.mxu0 %v2338
  %2466 = vmatpush.msra.mxu0 %v2329
  %2467 = vmatpush.msra.mxu0 %v2320
  %2468 = vmatpush.msra.mxu0 %v2311
  %2469 = vmatpush.msra.mxu0 %v2302
  %2470 = vmatpush.msra.mxu0 %v2293
  %2471 = vmatpush.msra.mxu0 %v2284
  %2472 = vmatpush.msra.mxu0 %v2275
  %2473 = vmatpush.msra.mxu0 %v2266
  %2474 = vmatpush.msra.mxu0 %v2257
  %2475 = vmatpush.msra.mxu0 %v2248
  %2476 = vmatpush.msra.mxu0 %v2239
  %2477 = vmatpush.msra.mxu0 %v2230
  %2478 = vmatmul.f32.gmra.mxu0 %v2224
  %v2479 = vpop.f32.mrf.mxu0
  %v2480 = vadd.f32 0.0, %v2479
  %2481 = vmatmul.f32.gmra.mxu0 %v2225
  %v2482 = vpop.f32.mrf.mxu0
  %v2483 = vadd.f32 0.0, %v2482
  %2484 = vdwg.mxu0
  %2485 = vmatpush.msra.mxu0 %v2366
  %2486 = vmatpush.msra.mxu0 %v2357
  %2487 = vmatpush.msra.mxu0 %v2348
  %2488 = vmatpush.msra.mxu0 %v2339
  %2489 = vmatpush.msra.mxu0 %v2330
  %2490 = vmatpush.msra.mxu0 %v2321
  %2491 = vmatpush.msra.mxu0 %v2312
  %2492 = vmatpush.msra.mxu0 %v2303
  %2493 = vmatpush.msra.mxu0 %v2294
  %2494 = vmatpush.msra.mxu0 %v2285
  %2495 = vmatpush.msra.mxu0 %v2276
  %2496 = vmatpush.msra.mxu0 %v2267
  %2497 = vmatpush.msra.mxu0 %v2258
  %2498 = vmatpush.msra.mxu0 %v2249
  %2499 = vmatpush.msra.mxu0 %v2240
  %2500 = vmatpush.msra.mxu0 %v2231
  %2501 = vmatmul.f32.gmra.mxu0 %v2224
  %v2502 = vpop.f32.mrf.mxu0
  %v2503 = vadd.f32 0.0, %v2502
  %2504 = vmatmul.f32.gmra.mxu0 %v2225
  %v2505 = vpop.f32.mrf.mxu0
  %v2506 = vadd.f32 0.0, %v2505
  %2507 = vdwg.mxu0
  %2508 = vmatpush.msra.mxu0 %v2367
  %2509 = vmatpush.msra.mxu0 %v2358
  %2510 = vmatpush.msra.mxu0 %v2349
  %2511 = vmatpush.msra.mxu0 %v2340
  %2512 = vmatpush.msra.mxu0 %v2331
  %2513 = vmatpush.msra.mxu0 %v2322
  %2514 = vmatpush.msra.mxu0 %v2313
  %2515 = vmatpush.msra.mxu0 %v2304
  %2516 = vmatpush.msra.mxu0 %v2295
  %2517 = vmatpush.msra.mxu0 %v2286
  %2518 = vmatpush.msra.mxu0 %v2277
  %2519 = vmatpush.msra.mxu0 %v2268
  %2520 = vmatpush.msra.mxu0 %v2259
  %2521 = vmatpush.msra.mxu0 %v2250
  %2522 = vmatpush.msra.mxu0 %v2241
  %2523 = vmatpush.msra.mxu0 %v2232
  %2524 = vmatmul.f32.gmra.mxu0 %v2224
  %v2525 = vpop.f32.mrf.mxu0
  %v2526 = vadd.f32 0.0, %v2525
  %2527 = vmatmul.f32.gmra.mxu0 %v2225
  %v2528 = vpop.f32.mrf.mxu0
  %v2529 = vadd.f32 0.0, %v2528
  %2530 = vdwg.mxu0
  %2531 = vmatpush.msra.mxu0 %v2368
  %2532 = vmatpush.msra.mxu0 %v2359
  %2533 = vmatpush.msra.mxu0 %v2350
  %2534 = vmatpush.msra.mxu0 %v2341
  %2535 = vmatpush.msra.mxu0 %v2332
  %2536 = vmatpush.msra.mxu0 %v2323
  %2537 = vmatpush.msra.mxu0 %v2314
  %2538 = vmatpush.msra.mxu0 %v2305
  %2539 = vmatpush.msra.mxu0 %v2296
  %2540 = vmatpush.msra.mxu0 %v2287
  %2541 = vmatpush.msra.mxu0 %v2278
  %2542 = vmatpush.msra.mxu0 %v2269
  %2543 = vmatpush.msra.mxu0 %v2260
  %2544 = vmatpush.msra.mxu0 %v2251
  %2545 = vmatpush.msra.mxu0 %v2242
  %2546 = vmatpush.msra.mxu0 %v2233
  %2547 = vmatmul.f32.gmra.mxu0 %v2224
  %v2548 = vpop.f32.mrf.mxu0
  %v2549 = vadd.f32 0.0, %v2548
  %2550 = vmatmul.f32.gmra.mxu0 %v2225
  %v2551 = vpop.f32.mrf.mxu0
  %v2552 = vadd.f32 0.0, %v2551
  %2553 = vdwg.mxu0
  %2554 = vmatpush.msra.mxu0 %v2369
  %2555 = vmatpush.msra.mxu0 %v2360
  %2556 = vmatpush.msra.mxu0 %v2351
  %2557 = vmatpush.msra.mxu0 %v2342
  %2558 = vmatpush.msra.mxu0 %v2333
  %2559 = vmatpush.msra.mxu0 %v2324
  %2560 = vmatpush.msra.mxu0 %v2315
  %2561 = vmatpush.msra.mxu0 %v2306
  %2562 = vmatpush.msra.mxu0 %v2297
  %2563 = vmatpush.msra.mxu0 %v2288
  %2564 = vmatpush.msra.mxu0 %v2279
  %2565 = vmatpush.msra.mxu0 %v2270
  %2566 = vmatpush.msra.mxu0 %v2261
  %2567 = vmatpush.msra.mxu0 %v2252
  %2568 = vmatpush.msra.mxu0 %v2243
  %2569 = vmatpush.msra.mxu0 %v2234
  %2570 = vmatmul.f32.gmra.mxu0 %v2224
  %v2571 = vpop.f32.mrf.mxu0
  %v2572 = vadd.f32 0.0, %v2571
  %2573 = vmatmul.f32.gmra.mxu0 %v2225
  %v2574 = vpop.f32.mrf.mxu0
  %v2575 = vadd.f32 0.0, %v2574
  %2576 = vdwg.mxu0
  %v2577 = vld [vmem:[%s7] sm:$0xf]
  %v2578 = vld [vmem:[%s7 + $0x4] sm:$0xf]
  %v2579 = vld [vmem:[%s7 + $0x8] sm:$0xf]
  %v2580 = vld [vmem:[%s7 + $0xc] sm:$0xf]
  %v2581 = vld [vmem:[%s7 + $0x10] sm:$0xf]
  %v2582 = vld [vmem:[%s7 + $0x14] sm:$0xf]
  %v2583 = vld [vmem:[%s7 + $0x18] sm:$0xf]
  %v2584 = vld [vmem:[%s7 + $0x1c] sm:$0xf]
  %v2585 = vunpack.c.l.bf16 %v2577
  %v2586 = vunpack.c.l.bf16 %v2578
  %v2587 = vunpack.c.l.bf16 %v2579
  %v2588 = vunpack.c.l.bf16 %v2580
  %v2589 = vunpack.c.l.bf16 %v2581
  %v2590 = vunpack.c.l.bf16 %v2582
  %v2591 = vunpack.c.l.bf16 %v2583
  %v2592 = vunpack.c.l.bf16 %v2584
  %s2593 = scalar_lea.vmem %s7, 32
  %v2594 = vld [vmem:[%s2593] sm:$0xf]
  %v2595 = vld [vmem:[%s2593 + $0x4] sm:$0xf]
  %v2596 = vld [vmem:[%s2593 + $0x8] sm:$0xf]
  %v2597 = vld [vmem:[%s2593 + $0xc] sm:$0xf]
  %v2598 = vld [vmem:[%s2593 + $0x10] sm:$0xf]
  %v2599 = vld [vmem:[%s2593 + $0x14] sm:$0xf]
  %v2600 = vld [vmem:[%s2593 + $0x18] sm:$0xf]
  %v2601 = vld [vmem:[%s2593 + $0x1c] sm:$0xf]
  %v2602 = vunpack.c.l.bf16 %v2594
  %v2603 = vunpack.c.l.bf16 %v2595
  %v2604 = vunpack.c.l.bf16 %v2596
  %v2605 = vunpack.c.l.bf16 %v2597
  %v2606 = vunpack.c.l.bf16 %v2598
  %v2607 = vunpack.c.l.bf16 %v2599
  %v2608 = vunpack.c.l.bf16 %v2600
  %v2609 = vunpack.c.l.bf16 %v2601
  %vm2610 = vcmask 130048
  %v2612 = vsel %vm2610, %v2602, 0
  %v2615 = vsel %vm2610, %v2603, 0
  %v2618 = vsel %vm2610, %v2604, 0
  %v2621 = vsel %vm2610, %v2605, 0
  %v2624 = vsel %vm2610, %v2606, 0
  %v2627 = vsel %vm2610, %v2607, 0
  %v2630 = vsel %vm2610, %v2608, 0
  %v2633 = vsel %vm2610, %v2609, 0
  %2635 = vmatpush.msra.mxu0 0.0
  %2636 = vmatpush.msra.mxu0 0.0
  %2637 = vmatpush.msra.mxu0 0.0
  %2638 = vmatpush.msra.mxu0 0.0
  %2639 = vmatpush.msra.mxu0 0.0
  %2640 = vmatpush.msra.mxu0 0.0
  %2641 = vmatpush.msra.mxu0 0.0
  %2642 = vmatpush.msra.mxu0 0.0
  %2643 = vmatpush.msra.mxu0 0.0
  %2644 = vmatpush.msra.mxu0 0.0
  %2645 = vmatpush.msra.mxu0 0.0
  %2646 = vmatpush.msra.mxu0 0.0
  %2647 = vmatpush.msra.mxu0 0.0
  %2648 = vmatpush.msra.mxu0 0.0
  %2649 = vmatpush.msra.mxu0 %v2414
  %2650 = vmatpush.msra.mxu0 %v2411
  %2651 = vmatmul.f32.gmra.mxu0 %v2612
  %v2652 = vpop.f32.mrf.mxu0
  %v2653 = vadd.f32 0.0, %v2652
  %2654 = vmatmul.f32.gmra.mxu0 %v2615
  %v2655 = vpop.f32.mrf.mxu0
  %v2656 = vadd.f32 0.0, %v2655
  %2657 = vmatmul.f32.gmra.mxu0 %v2618
  %v2658 = vpop.f32.mrf.mxu0
  %v2659 = vadd.f32 0.0, %v2658
  %2660 = vmatmul.f32.gmra.mxu0 %v2621
  %v2661 = vpop.f32.mrf.mxu0
  %v2662 = vadd.f32 0.0, %v2661
  %2663 = vmatmul.f32.gmra.mxu0 %v2624
  %v2664 = vpop.f32.mrf.mxu0
  %v2665 = vadd.f32 0.0, %v2664
  %2666 = vmatmul.f32.gmra.mxu0 %v2627
  %v2667 = vpop.f32.mrf.mxu0
  %v2668 = vadd.f32 0.0, %v2667
  %2669 = vmatmul.f32.gmra.mxu0 %v2630
  %v2670 = vpop.f32.mrf.mxu0
  %v2671 = vadd.f32 0.0, %v2670
  %2672 = vmatmul.f32.gmra.mxu0 %v2633
  %v2673 = vpop.f32.mrf.mxu0
  %v2674 = vadd.f32 0.0, %v2673
  %2675 = vdwg.mxu0
  %v2677 = vsel %vm2610, %v2585, 0
  %v2680 = vsel %vm2610, %v2586, 0
  %v2683 = vsel %vm2610, %v2587, 0
  %v2686 = vsel %vm2610, %v2588, 0
  %v2689 = vsel %vm2610, %v2589, 0
  %v2692 = vsel %vm2610, %v2590, 0
  %v2695 = vsel %vm2610, %v2591, 0
  %v2698 = vsel %vm2610, %v2592, 0
  %2700 = vmatpush.msra.mxu0 0.0
  %2701 = vmatpush.msra.mxu0 0.0
  %2702 = vmatpush.msra.mxu0 0.0
  %2703 = vmatpush.msra.mxu0 0.0
  %2704 = vmatpush.msra.mxu0 0.0
  %2705 = vmatpush.msra.mxu0 0.0
  %2706 = vmatpush.msra.mxu0 0.0
  %2707 = vmatpush.msra.mxu0 0.0
  %2708 = vmatpush.msra.mxu0 0.0
  %2709 = vmatpush.msra.mxu0 0.0
  %2710 = vmatpush.msra.mxu0 0.0
  %2711 = vmatpush.msra.mxu0 0.0
  %2712 = vmatpush.msra.mxu0 0.0
  %2713 = vmatpush.msra.mxu0 0.0
  %2714 = vmatpush.msra.mxu0 %v2391
  %2715 = vmatpush.msra.mxu0 %v2388
  %2716 = vmatmul.f32.gmra.mxu0 %v2677
  %v2717 = vpop.f32.mrf.mxu0
  %v2718 = vadd.f32 %v2653, %v2717
  %2719 = vmatmul.f32.gmra.mxu0 %v2680
  %v2720 = vpop.f32.mrf.mxu0
  %v2721 = vadd.f32 %v2656, %v2720
  %2722 = vmatmul.f32.gmra.mxu0 %v2683
  %v2723 = vpop.f32.mrf.mxu0
  %v2724 = vadd.f32 %v2659, %v2723
  %2725 = vmatmul.f32.gmra.mxu0 %v2686
  %v2726 = vpop.f32.mrf.mxu0
  %v2727 = vadd.f32 %v2662, %v2726
  %2728 = vmatmul.f32.gmra.mxu0 %v2689
  %v2729 = vpop.f32.mrf.mxu0
  %v2730 = vadd.f32 %v2665, %v2729
  %2731 = vmatmul.f32.gmra.mxu0 %v2692
  %v2732 = vpop.f32.mrf.mxu0
  %v2733 = vadd.f32 %v2668, %v2732
  %2734 = vmatmul.f32.gmra.mxu0 %v2695
  %v2735 = vpop.f32.mrf.mxu0
  %v2736 = vadd.f32 %v2671, %v2735
  %2737 = vmatmul.f32.gmra.mxu0 %v2698
  %v2738 = vpop.f32.mrf.mxu0
  %v2739 = vadd.f32 %v2674, %v2738
  %2740 = vdwg.mxu0
  %s2741 = scalar_lea.vmem %s7, 64
  %v2742 = vld [vmem:[%s2741] sm:$0xf]
  %v2743 = vld [vmem:[%s2741 + $0x4] sm:$0xf]
  %v2744 = vld [vmem:[%s2741 + $0x8] sm:$0xf]
  %v2745 = vld [vmem:[%s2741 + $0xc] sm:$0xf]
  %v2746 = vld [vmem:[%s2741 + $0x10] sm:$0xf]
  %v2747 = vld [vmem:[%s2741 + $0x14] sm:$0xf]
  %v2748 = vld [vmem:[%s2741 + $0x18] sm:$0xf]
  %v2749 = vld [vmem:[%s2741 + $0x1c] sm:$0xf]
  %v2750 = vunpack.c.l.bf16 %v2742
  %v2751 = vunpack.c.l.bf16 %v2743
  %v2752 = vunpack.c.l.bf16 %v2744
  %v2753 = vunpack.c.l.bf16 %v2745
  %v2754 = vunpack.c.l.bf16 %v2746
  %v2755 = vunpack.c.l.bf16 %v2747
  %v2756 = vunpack.c.l.bf16 %v2748
  %v2757 = vunpack.c.l.bf16 %v2749
  %v2759 = vsel %vm2610, %v2750, 0
  %v2762 = vsel %vm2610, %v2751, 0
  %v2765 = vsel %vm2610, %v2752, 0
  %v2768 = vsel %vm2610, %v2753, 0
  %v2771 = vsel %vm2610, %v2754, 0
  %v2774 = vsel %vm2610, %v2755, 0
  %v2777 = vsel %vm2610, %v2756, 0
  %v2780 = vsel %vm2610, %v2757, 0
  %2782 = vmatpush.msra.mxu0 0.0
  %2783 = vmatpush.msra.mxu0 0.0
  %2784 = vmatpush.msra.mxu0 0.0
  %2785 = vmatpush.msra.mxu0 0.0
  %2786 = vmatpush.msra.mxu0 0.0
  %2787 = vmatpush.msra.mxu0 0.0
  %2788 = vmatpush.msra.mxu0 0.0
  %2789 = vmatpush.msra.mxu0 0.0
  %2790 = vmatpush.msra.mxu0 0.0
  %2791 = vmatpush.msra.mxu0 0.0
  %2792 = vmatpush.msra.mxu0 0.0
  %2793 = vmatpush.msra.mxu0 0.0
  %2794 = vmatpush.msra.mxu0 0.0
  %2795 = vmatpush.msra.mxu0 0.0
  %2796 = vmatpush.msra.mxu0 %v2437
  %2797 = vmatpush.msra.mxu0 %v2434
  %2798 = vmatmul.f32.gmra.mxu0 %v2759
  %v2799 = vpop.f32.mrf.mxu0
  %v2800 = vadd.f32 0.0, %v2799
  %2801 = vmatmul.f32.gmra.mxu0 %v2762
  %v2802 = vpop.f32.mrf.mxu0
  %v2803 = vadd.f32 0.0, %v2802
  %2804 = vmatmul.f32.gmra.mxu0 %v2765
  %v2805 = vpop.f32.mrf.mxu0
  %v2806 = vadd.f32 0.0, %v2805
  %2807 = vmatmul.f32.gmra.mxu0 %v2768
  %v2808 = vpop.f32.mrf.mxu0
  %v2809 = vadd.f32 0.0, %v2808
  %2810 = vmatmul.f32.gmra.mxu0 %v2771
  %v2811 = vpop.f32.mrf.mxu0
  %v2812 = vadd.f32 0.0, %v2811
  %2813 = vmatmul.f32.gmra.mxu0 %v2774
  %v2814 = vpop.f32.mrf.mxu0
  %v2815 = vadd.f32 0.0, %v2814
  %2816 = vmatmul.f32.gmra.mxu0 %v2777
  %v2817 = vpop.f32.mrf.mxu0
  %v2818 = vadd.f32 0.0, %v2817
  %2819 = vmatmul.f32.gmra.mxu0 %v2780
  %v2820 = vpop.f32.mrf.mxu0
  %v2821 = vadd.f32 0.0, %v2820
  %2822 = vdwg.mxu0
  %v2823 = vadd.f32 %v2718, %v2800
  %v2824 = vadd.f32 %v2721, %v2803
  %v2825 = vadd.f32 %v2724, %v2806
  %v2826 = vadd.f32 %v2727, %v2809
  %v2827 = vadd.f32 %v2730, %v2812
  %v2828 = vadd.f32 %v2733, %v2815
  %v2829 = vadd.f32 %v2736, %v2818
  %v2830 = vadd.f32 %v2739, %v2821
  %s2831 = scalar_lea.vmem %s7, 96
  %v2832 = vld [vmem:[%s2831] sm:$0xf]
  %v2833 = vld [vmem:[%s2831 + $0x4] sm:$0xf]
  %v2834 = vld [vmem:[%s2831 + $0x8] sm:$0xf]
  %v2835 = vld [vmem:[%s2831 + $0xc] sm:$0xf]
  %v2836 = vld [vmem:[%s2831 + $0x10] sm:$0xf]
  %v2837 = vld [vmem:[%s2831 + $0x14] sm:$0xf]
  %v2838 = vld [vmem:[%s2831 + $0x18] sm:$0xf]
  %v2839 = vld [vmem:[%s2831 + $0x1c] sm:$0xf]
  %v2840 = vunpack.c.l.bf16 %v2832
  %v2841 = vunpack.c.l.bf16 %v2833
  %v2842 = vunpack.c.l.bf16 %v2834
  %v2843 = vunpack.c.l.bf16 %v2835
  %v2844 = vunpack.c.l.bf16 %v2836
  %v2845 = vunpack.c.l.bf16 %v2837
  %v2846 = vunpack.c.l.bf16 %v2838
  %v2847 = vunpack.c.l.bf16 %v2839
  %v2849 = vsel %vm2610, %v2840, 0
  %v2852 = vsel %vm2610, %v2841, 0
  %v2855 = vsel %vm2610, %v2842, 0
  %v2858 = vsel %vm2610, %v2843, 0
  %v2861 = vsel %vm2610, %v2844, 0
  %v2864 = vsel %vm2610, %v2845, 0
  %v2867 = vsel %vm2610, %v2846, 0
  %v2870 = vsel %vm2610, %v2847, 0
  %2872 = vmatpush.msra.mxu0 0.0
  %2873 = vmatpush.msra.mxu0 0.0
  %2874 = vmatpush.msra.mxu0 0.0
  %2875 = vmatpush.msra.mxu0 0.0
  %2876 = vmatpush.msra.mxu0 0.0
  %2877 = vmatpush.msra.mxu0 0.0
  %2878 = vmatpush.msra.mxu0 0.0
  %2879 = vmatpush.msra.mxu0 0.0
  %2880 = vmatpush.msra.mxu0 0.0
  %2881 = vmatpush.msra.mxu0 0.0
  %2882 = vmatpush.msra.mxu0 0.0
  %2883 = vmatpush.msra.mxu0 0.0
  %2884 = vmatpush.msra.mxu0 0.0
  %2885 = vmatpush.msra.mxu0 0.0
  %2886 = vmatpush.msra.mxu0 %v2460
  %2887 = vmatpush.msra.mxu0 %v2457
  %2888 = vmatmul.f32.gmra.mxu0 %v2849
  %v2889 = vpop.f32.mrf.mxu0
  %v2890 = vadd.f32 0.0, %v2889
  %2891 = vmatmul.f32.gmra.mxu0 %v2852
  %v2892 = vpop.f32.mrf.mxu0
  %v2893 = vadd.f32 0.0, %v2892
  %2894 = vmatmul.f32.gmra.mxu0 %v2855
  %v2895 = vpop.f32.mrf.mxu0
  %v2896 = vadd.f32 0.0, %v2895
  %2897 = vmatmul.f32.gmra.mxu0 %v2858
  %v2898 = vpop.f32.mrf.mxu0
  %v2899 = vadd.f32 0.0, %v2898
  %2900 = vmatmul.f32.gmra.mxu0 %v2861
  %v2901 = vpop.f32.mrf.mxu0
  %v2902 = vadd.f32 0.0, %v2901
  %2903 = vmatmul.f32.gmra.mxu0 %v2864
  %v2904 = vpop.f32.mrf.mxu0
  %v2905 = vadd.f32 0.0, %v2904
  %2906 = vmatmul.f32.gmra.mxu0 %v2867
  %v2907 = vpop.f32.mrf.mxu0
  %v2908 = vadd.f32 0.0, %v2907
  %2909 = vmatmul.f32.gmra.mxu0 %v2870
  %v2910 = vpop.f32.mrf.mxu0
  %v2911 = vadd.f32 0.0, %v2910
  %2912 = vdwg.mxu0
  %v2913 = vadd.f32 %v2823, %v2890
  %v2914 = vadd.f32 %v2824, %v2893
  %v2915 = vadd.f32 %v2825, %v2896
  %v2916 = vadd.f32 %v2826, %v2899
  %v2917 = vadd.f32 %v2827, %v2902
  %v2918 = vadd.f32 %v2828, %v2905
  %v2919 = vadd.f32 %v2829, %v2908
  %v2920 = vadd.f32 %v2830, %v2911
  %s2921 = scalar_lea.vmem %s7, 128
  %v2922 = vld [vmem:[%s2921] sm:$0xf]
  %v2923 = vld [vmem:[%s2921 + $0x4] sm:$0xf]
  %v2924 = vld [vmem:[%s2921 + $0x8] sm:$0xf]
  %v2925 = vld [vmem:[%s2921 + $0xc] sm:$0xf]
  %v2926 = vld [vmem:[%s2921 + $0x10] sm:$0xf]
  %v2927 = vld [vmem:[%s2921 + $0x14] sm:$0xf]
  %v2928 = vld [vmem:[%s2921 + $0x18] sm:$0xf]
  %v2929 = vld [vmem:[%s2921 + $0x1c] sm:$0xf]
  %v2930 = vunpack.c.l.bf16 %v2922
  %v2931 = vunpack.c.l.bf16 %v2923
  %v2932 = vunpack.c.l.bf16 %v2924
  %v2933 = vunpack.c.l.bf16 %v2925
  %v2934 = vunpack.c.l.bf16 %v2926
  %v2935 = vunpack.c.l.bf16 %v2927
  %v2936 = vunpack.c.l.bf16 %v2928
  %v2937 = vunpack.c.l.bf16 %v2929
  %v2939 = vsel %vm2610, %v2930, 0
  %v2942 = vsel %vm2610, %v2931, 0
  %v2945 = vsel %vm2610, %v2932, 0
  %v2948 = vsel %vm2610, %v2933, 0
  %v2951 = vsel %vm2610, %v2934, 0
  %v2954 = vsel %vm2610, %v2935, 0
  %v2957 = vsel %vm2610, %v2936, 0
  %v2960 = vsel %vm2610, %v2937, 0
  %2962 = vmatpush.msra.mxu0 0.0
  %2963 = vmatpush.msra.mxu0 0.0
  %2964 = vmatpush.msra.mxu0 0.0
  %2965 = vmatpush.msra.mxu0 0.0
  %2966 = vmatpush.msra.mxu0 0.0
  %2967 = vmatpush.msra.mxu0 0.0
  %2968 = vmatpush.msra.mxu0 0.0
  %2969 = vmatpush.msra.mxu0 0.0
  %2970 = vmatpush.msra.mxu0 0.0
  %2971 = vmatpush.msra.mxu0 0.0
  %2972 = vmatpush.msra.mxu0 0.0
  %2973 = vmatpush.msra.mxu0 0.0
  %2974 = vmatpush.msra.mxu0 0.0
  %2975 = vmatpush.msra.mxu0 0.0
  %2976 = vmatpush.msra.mxu0 %v2483
  %2977 = vmatpush.msra.mxu0 %v2480
  %2978 = vmatmul.f32.gmra.mxu0 %v2939
  %v2979 = vpop.f32.mrf.mxu0
  %v2980 = vadd.f32 0.0, %v2979
  %2981 = vmatmul.f32.gmra.mxu0 %v2942
  %v2982 = vpop.f32.mrf.mxu0
  %v2983 = vadd.f32 0.0, %v2982
  %2984 = vmatmul.f32.gmra.mxu0 %v2945
  %v2985 = vpop.f32.mrf.mxu0
  %v2986 = vadd.f32 0.0, %v2985
  %2987 = vmatmul.f32.gmra.mxu0 %v2948
  %v2988 = vpop.f32.mrf.mxu0
  %v2989 = vadd.f32 0.0, %v2988
  %2990 = vmatmul.f32.gmra.mxu0 %v2951
  %v2991 = vpop.f32.mrf.mxu0
  %v2992 = vadd.f32 0.0, %v2991
  %2993 = vmatmul.f32.gmra.mxu0 %v2954
  %v2994 = vpop.f32.mrf.mxu0
  %v2995 = vadd.f32 0.0, %v2994
  %2996 = vmatmul.f32.gmra.mxu0 %v2957
  %v2997 = vpop.f32.mrf.mxu0
  %v2998 = vadd.f32 0.0, %v2997
  %2999 = vmatmul.f32.gmra.mxu0 %v2960
  %v3000 = vpop.f32.mrf.mxu0
  %v3001 = vadd.f32 0.0, %v3000
  %3002 = vdwg.mxu0
  %v3003 = vadd.f32 %v2913, %v2980
  %v3004 = vadd.f32 %v2914, %v2983
  %v3005 = vadd.f32 %v2915, %v2986
  %v3006 = vadd.f32 %v2916, %v2989
  %v3007 = vadd.f32 %v2917, %v2992
  %v3008 = vadd.f32 %v2918, %v2995
  %v3009 = vadd.f32 %v2919, %v2998
  %v3010 = vadd.f32 %v2920, %v3001
  %s3011 = scalar_lea.vmem %s7, 160
  %v3012 = vld [vmem:[%s3011] sm:$0xf]
  %v3013 = vld [vmem:[%s3011 + $0x4] sm:$0xf]
  %v3014 = vld [vmem:[%s3011 + $0x8] sm:$0xf]
  %v3015 = vld [vmem:[%s3011 + $0xc] sm:$0xf]
  %v3016 = vld [vmem:[%s3011 + $0x10] sm:$0xf]
  %v3017 = vld [vmem:[%s3011 + $0x14] sm:$0xf]
  %v3018 = vld [vmem:[%s3011 + $0x18] sm:$0xf]
  %v3019 = vld [vmem:[%s3011 + $0x1c] sm:$0xf]
  %v3020 = vunpack.c.l.bf16 %v3012
  %v3021 = vunpack.c.l.bf16 %v3013
  %v3022 = vunpack.c.l.bf16 %v3014
  %v3023 = vunpack.c.l.bf16 %v3015
  %v3024 = vunpack.c.l.bf16 %v3016
  %v3025 = vunpack.c.l.bf16 %v3017
  %v3026 = vunpack.c.l.bf16 %v3018
  %v3027 = vunpack.c.l.bf16 %v3019
  %v3029 = vsel %vm2610, %v3020, 0
  %v3032 = vsel %vm2610, %v3021, 0
  %v3035 = vsel %vm2610, %v3022, 0
  %v3038 = vsel %vm2610, %v3023, 0
  %v3041 = vsel %vm2610, %v3024, 0
  %v3044 = vsel %vm2610, %v3025, 0
  %v3047 = vsel %vm2610, %v3026, 0
  %v3050 = vsel %vm2610, %v3027, 0
  %3052 = vmatpush.msra.mxu0 0.0
  %3053 = vmatpush.msra.mxu0 0.0
  %3054 = vmatpush.msra.mxu0 0.0
  %3055 = vmatpush.msra.mxu0 0.0
  %3056 = vmatpush.msra.mxu0 0.0
  %3057 = vmatpush.msra.mxu0 0.0
  %3058 = vmatpush.msra.mxu0 0.0
  %3059 = vmatpush.msra.mxu0 0.0
  %3060 = vmatpush.msra.mxu0 0.0
  %3061 = vmatpush.msra.mxu0 0.0
  %3062 = vmatpush.msra.mxu0 0.0
  %3063 = vmatpush.msra.mxu0 0.0
  %3064 = vmatpush.msra.mxu0 0.0
  %3065 = vmatpush.msra.mxu0 0.0
  %3066 = vmatpush.msra.mxu0 %v2506
  %3067 = vmatpush.msra.mxu0 %v2503
  %3068 = vmatmul.f32.gmra.mxu0 %v3029
  %v3069 = vpop.f32.mrf.mxu0
  %v3070 = vadd.f32 0.0, %v3069
  %3071 = vmatmul.f32.gmra.mxu0 %v3032
  %v3072 = vpop.f32.mrf.mxu0
  %v3073 = vadd.f32 0.0, %v3072
  %3074 = vmatmul.f32.gmra.mxu0 %v3035
  %v3075 = vpop.f32.mrf.mxu0
  %v3076 = vadd.f32 0.0, %v3075
  %3077 = vmatmul.f32.gmra.mxu0 %v3038
  %v3078 = vpop.f32.mrf.mxu0
  %v3079 = vadd.f32 0.0, %v3078
  %3080 = vmatmul.f32.gmra.mxu0 %v3041
  %v3081 = vpop.f32.mrf.mxu0
  %v3082 = vadd.f32 0.0, %v3081
  %3083 = vmatmul.f32.gmra.mxu0 %v3044
  %v3084 = vpop.f32.mrf.mxu0
  %v3085 = vadd.f32 0.0, %v3084
  %3086 = vmatmul.f32.gmra.mxu0 %v3047
  %v3087 = vpop.f32.mrf.mxu0
  %v3088 = vadd.f32 0.0, %v3087
  %3089 = vmatmul.f32.gmra.mxu0 %v3050
  %v3090 = vpop.f32.mrf.mxu0
  %v3091 = vadd.f32 0.0, %v3090
  %3092 = vdwg.mxu0
  %v3093 = vadd.f32 %v3003, %v3070
  %v3094 = vadd.f32 %v3004, %v3073
  %v3095 = vadd.f32 %v3005, %v3076
  %v3096 = vadd.f32 %v3006, %v3079
  %v3097 = vadd.f32 %v3007, %v3082
  %v3098 = vadd.f32 %v3008, %v3085
  %v3099 = vadd.f32 %v3009, %v3088
  %v3100 = vadd.f32 %v3010, %v3091
  %s3101 = scalar_lea.vmem %s7, 192
  %v3102 = vld [vmem:[%s3101] sm:$0xf]
  %v3103 = vld [vmem:[%s3101 + $0x4] sm:$0xf]
  %v3104 = vld [vmem:[%s3101 + $0x8] sm:$0xf]
  %v3105 = vld [vmem:[%s3101 + $0xc] sm:$0xf]
  %v3106 = vld [vmem:[%s3101 + $0x10] sm:$0xf]
  %v3107 = vld [vmem:[%s3101 + $0x14] sm:$0xf]
  %v3108 = vld [vmem:[%s3101 + $0x18] sm:$0xf]
  %v3109 = vld [vmem:[%s3101 + $0x1c] sm:$0xf]
  %v3110 = vunpack.c.l.bf16 %v3102
  %v3111 = vunpack.c.l.bf16 %v3103
  %v3112 = vunpack.c.l.bf16 %v3104
  %v3113 = vunpack.c.l.bf16 %v3105
  %v3114 = vunpack.c.l.bf16 %v3106
  %v3115 = vunpack.c.l.bf16 %v3107
  %v3116 = vunpack.c.l.bf16 %v3108
  %v3117 = vunpack.c.l.bf16 %v3109
  %v3119 = vsel %vm2610, %v3110, 0
  %v3122 = vsel %vm2610, %v3111, 0
  %v3125 = vsel %vm2610, %v3112, 0
  %v3128 = vsel %vm2610, %v3113, 0
  %v3131 = vsel %vm2610, %v3114, 0
  %v3134 = vsel %vm2610, %v3115, 0
  %v3137 = vsel %vm2610, %v3116, 0
  %v3140 = vsel %vm2610, %v3117, 0
  %3142 = vmatpush.msra.mxu0 0.0
  %3143 = vmatpush.msra.mxu0 0.0
  %3144 = vmatpush.msra.mxu0 0.0
  %3145 = vmatpush.msra.mxu0 0.0
  %3146 = vmatpush.msra.mxu0 0.0
  %3147 = vmatpush.msra.mxu0 0.0
  %3148 = vmatpush.msra.mxu0 0.0
  %3149 = vmatpush.msra.mxu0 0.0
  %3150 = vmatpush.msra.mxu0 0.0
  %3151 = vmatpush.msra.mxu0 0.0
  %3152 = vmatpush.msra.mxu0 0.0
  %3153 = vmatpush.msra.mxu0 0.0
  %3154 = vmatpush.msra.mxu0 0.0
  %3155 = vmatpush.msra.mxu0 0.0
  %3156 = vmatpush.msra.mxu0 %v2529
  %3157 = vmatpush.msra.mxu0 %v2526
  %3158 = vmatmul.f32.gmra.mxu0 %v3119
  %v3159 = vpop.f32.mrf.mxu0
  %v3160 = vadd.f32 0.0, %v3159
  %3161 = vmatmul.f32.gmra.mxu0 %v3122
  %v3162 = vpop.f32.mrf.mxu0
  %v3163 = vadd.f32 0.0, %v3162
  %3164 = vmatmul.f32.gmra.mxu0 %v3125
  %v3165 = vpop.f32.mrf.mxu0
  %v3166 = vadd.f32 0.0, %v3165
  %3167 = vmatmul.f32.gmra.mxu0 %v3128
  %v3168 = vpop.f32.mrf.mxu0
  %v3169 = vadd.f32 0.0, %v3168
  %3170 = vmatmul.f32.gmra.mxu0 %v3131
  %v3171 = vpop.f32.mrf.mxu0
  %v3172 = vadd.f32 0.0, %v3171
  %3173 = vmatmul.f32.gmra.mxu0 %v3134
  %v3174 = vpop.f32.mrf.mxu0
  %v3175 = vadd.f32 0.0, %v3174
  %3176 = vmatmul.f32.gmra.mxu0 %v3137
  %v3177 = vpop.f32.mrf.mxu0
  %v3178 = vadd.f32 0.0, %v3177
  %3179 = vmatmul.f32.gmra.mxu0 %v3140
  %v3180 = vpop.f32.mrf.mxu0
  %v3181 = vadd.f32 0.0, %v3180
  %3182 = vdwg.mxu0
  %v3183 = vadd.f32 %v3093, %v3160
  %v3184 = vadd.f32 %v3094, %v3163
  %v3185 = vadd.f32 %v3095, %v3166
  %v3186 = vadd.f32 %v3096, %v3169
  %v3187 = vadd.f32 %v3097, %v3172
  %v3188 = vadd.f32 %v3098, %v3175
  %v3189 = vadd.f32 %v3099, %v3178
  %v3190 = vadd.f32 %v3100, %v3181
  %s3191 = scalar_lea.vmem %s7, 224
  %v3192 = vld [vmem:[%s3191] sm:$0xf]
  %v3193 = vld [vmem:[%s3191 + $0x4] sm:$0xf]
  %v3194 = vld [vmem:[%s3191 + $0x8] sm:$0xf]
  %v3195 = vld [vmem:[%s3191 + $0xc] sm:$0xf]
  %v3196 = vld [vmem:[%s3191 + $0x10] sm:$0xf]
  %v3197 = vld [vmem:[%s3191 + $0x14] sm:$0xf]
  %v3198 = vld [vmem:[%s3191 + $0x18] sm:$0xf]
  %v3199 = vld [vmem:[%s3191 + $0x1c] sm:$0xf]
  %v3200 = vunpack.c.l.bf16 %v3192
  %v3201 = vunpack.c.l.bf16 %v3193
  %v3202 = vunpack.c.l.bf16 %v3194
  %v3203 = vunpack.c.l.bf16 %v3195
  %v3204 = vunpack.c.l.bf16 %v3196
  %v3205 = vunpack.c.l.bf16 %v3197
  %v3206 = vunpack.c.l.bf16 %v3198
  %v3207 = vunpack.c.l.bf16 %v3199
  %v3209 = vsel %vm2610, %v3200, 0
  %v3212 = vsel %vm2610, %v3201, 0
  %v3215 = vsel %vm2610, %v3202, 0
  %v3218 = vsel %vm2610, %v3203, 0
  %v3221 = vsel %vm2610, %v3204, 0
  %v3224 = vsel %vm2610, %v3205, 0
  %v3227 = vsel %vm2610, %v3206, 0
  %v3230 = vsel %vm2610, %v3207, 0
  %3232 = vmatpush.msra.mxu0 0.0
  %3233 = vmatpush.msra.mxu0 0.0
  %3234 = vmatpush.msra.mxu0 0.0
  %3235 = vmatpush.msra.mxu0 0.0
  %3236 = vmatpush.msra.mxu0 0.0
  %3237 = vmatpush.msra.mxu0 0.0
  %3238 = vmatpush.msra.mxu0 0.0
  %3239 = vmatpush.msra.mxu0 0.0
  %3240 = vmatpush.msra.mxu0 0.0
  %3241 = vmatpush.msra.mxu0 0.0
  %3242 = vmatpush.msra.mxu0 0.0
  %3243 = vmatpush.msra.mxu0 0.0
  %3244 = vmatpush.msra.mxu0 0.0
  %3245 = vmatpush.msra.mxu0 0.0
  %3246 = vmatpush.msra.mxu0 %v2552
  %3247 = vmatpush.msra.mxu0 %v2549
  %3248 = vmatmul.f32.gmra.mxu0 %v3209
  %v3249 = vpop.f32.mrf.mxu0
  %v3250 = vadd.f32 0.0, %v3249
  %3251 = vmatmul.f32.gmra.mxu0 %v3212
  %v3252 = vpop.f32.mrf.mxu0
  %v3253 = vadd.f32 0.0, %v3252
  %3254 = vmatmul.f32.gmra.mxu0 %v3215
  %v3255 = vpop.f32.mrf.mxu0
  %v3256 = vadd.f32 0.0, %v3255
  %3257 = vmatmul.f32.gmra.mxu0 %v3218
  %v3258 = vpop.f32.mrf.mxu0
  %v3259 = vadd.f32 0.0, %v3258
  %3260 = vmatmul.f32.gmra.mxu0 %v3221
  %v3261 = vpop.f32.mrf.mxu0
  %v3262 = vadd.f32 0.0, %v3261
  %3263 = vmatmul.f32.gmra.mxu0 %v3224
  %v3264 = vpop.f32.mrf.mxu0
  %v3265 = vadd.f32 0.0, %v3264
  %3266 = vmatmul.f32.gmra.mxu0 %v3227
  %v3267 = vpop.f32.mrf.mxu0
  %v3268 = vadd.f32 0.0, %v3267
  %3269 = vmatmul.f32.gmra.mxu0 %v3230
  %v3270 = vpop.f32.mrf.mxu0
  %v3271 = vadd.f32 0.0, %v3270
  %3272 = vdwg.mxu0
  %v3273 = vadd.f32 %v3183, %v3250
  %v3274 = vadd.f32 %v3184, %v3253
  %v3275 = vadd.f32 %v3185, %v3256
  %v3276 = vadd.f32 %v3186, %v3259
  %v3277 = vadd.f32 %v3187, %v3262
  %v3278 = vadd.f32 %v3188, %v3265
  %v3279 = vadd.f32 %v3189, %v3268
  %v3280 = vadd.f32 %v3190, %v3271
  %s3281 = scalar_lea.vmem %s7, 256
  %v3282 = vld [vmem:[%s3281] sm:$0xf]
  %v3283 = vld [vmem:[%s3281 + $0x4] sm:$0xf]
  %v3284 = vld [vmem:[%s3281 + $0x8] sm:$0xf]
  %v3285 = vld [vmem:[%s3281 + $0xc] sm:$0xf]
  %v3286 = vld [vmem:[%s3281 + $0x10] sm:$0xf]
  %v3287 = vld [vmem:[%s3281 + $0x14] sm:$0xf]
  %v3288 = vld [vmem:[%s3281 + $0x18] sm:$0xf]
  %v3289 = vld [vmem:[%s3281 + $0x1c] sm:$0xf]
  %v3290 = vunpack.c.l.bf16 %v3282
  %v3291 = vunpack.c.l.bf16 %v3283
  %v3292 = vunpack.c.l.bf16 %v3284
  %v3293 = vunpack.c.l.bf16 %v3285
  %v3294 = vunpack.c.l.bf16 %v3286
  %v3295 = vunpack.c.l.bf16 %v3287
  %v3296 = vunpack.c.l.bf16 %v3288
  %v3297 = vunpack.c.l.bf16 %v3289
  %v3299 = vsel %vm2610, %v3290, 0
  %v3302 = vsel %vm2610, %v3291, 0
  %v3305 = vsel %vm2610, %v3292, 0
  %v3308 = vsel %vm2610, %v3293, 0
  %v3311 = vsel %vm2610, %v3294, 0
  %v3314 = vsel %vm2610, %v3295, 0
  %v3317 = vsel %vm2610, %v3296, 0
  %v3320 = vsel %vm2610, %v3297, 0
  %3322 = vmatpush.msra.mxu0 0.0
  %3323 = vmatpush.msra.mxu0 0.0
  %3324 = vmatpush.msra.mxu0 0.0
  %3325 = vmatpush.msra.mxu0 0.0
  %3326 = vmatpush.msra.mxu0 0.0
  %3327 = vmatpush.msra.mxu0 0.0
  %3328 = vmatpush.msra.mxu0 0.0
  %3329 = vmatpush.msra.mxu0 0.0
  %3330 = vmatpush.msra.mxu0 0.0
  %3331 = vmatpush.msra.mxu0 0.0
  %3332 = vmatpush.msra.mxu0 0.0
  %3333 = vmatpush.msra.mxu0 0.0
  %3334 = vmatpush.msra.mxu0 0.0
  %3335 = vmatpush.msra.mxu0 0.0
  %3336 = vmatpush.msra.mxu0 %v2575
  %3337 = vmatpush.msra.mxu0 %v2572
  %3338 = vmatmul.f32.gmra.mxu0 %v3299
  %v3339 = vpop.f32.mrf.mxu0
  %v3340 = vadd.f32 0.0, %v3339
  %3341 = vmatmul.f32.gmra.mxu0 %v3302
  %v3342 = vpop.f32.mrf.mxu0
  %v3343 = vadd.f32 0.0, %v3342
  %3344 = vmatmul.f32.gmra.mxu0 %v3305
  %v3345 = vpop.f32.mrf.mxu0
  %v3346 = vadd.f32 0.0, %v3345
  %3347 = vmatmul.f32.gmra.mxu0 %v3308
  %v3348 = vpop.f32.mrf.mxu0
  %v3349 = vadd.f32 0.0, %v3348
  %3350 = vmatmul.f32.gmra.mxu0 %v3311
  %v3351 = vpop.f32.mrf.mxu0
  %v3352 = vadd.f32 0.0, %v3351
  %3353 = vmatmul.f32.gmra.mxu0 %v3314
  %v3354 = vpop.f32.mrf.mxu0
  %v3355 = vadd.f32 0.0, %v3354
  %3356 = vmatmul.f32.gmra.mxu0 %v3317
  %v3357 = vpop.f32.mrf.mxu0
  %v3358 = vadd.f32 0.0, %v3357
  %3359 = vmatmul.f32.gmra.mxu0 %v3320
  %v3360 = vpop.f32.mrf.mxu0
  %v3361 = vadd.f32 0.0, %v3360
  %3362 = vdwg.mxu0
  %v3363 = vadd.f32 %v3273, %v3340
  %v3364 = vadd.f32 %v3274, %v3343
  %v3365 = vadd.f32 %v3275, %v3346
  %v3366 = vadd.f32 %v3276, %v3349
  %v3367 = vadd.f32 %v3277, %v3352
  %v3368 = vadd.f32 %v3278, %v3355
  %v3369 = vadd.f32 %v3279, %v3358
  %v3370 = vadd.f32 %v3280, %v3361
  %v3371 = vld [vmem:[%s9] sm:$0x1]
  %v3373 = vperm.slane %v3371, 0
  %v3375 = vadd.f32 %v3363, %v3373
  %v3376 = vadd.f32 %v3364, %v3373
  %v3377 = vadd.f32 %v3365, %v3373
  %v3378 = vadd.f32 %v3366, %v3373
  %v3379 = vadd.f32 %v3367, %v3373
  %v3380 = vadd.f32 %v3368, %v3373
  %v3381 = vadd.f32 %v3369, %v3373
  %v3382 = vadd.f32 %v3370, %v3373
  %v3383 = vmax.f32 %v3375, 0.0
  %v3384 = vmax.f32 %v3376, 0.0
  %v3385 = vmax.f32 %v3377, 0.0
  %v3386 = vmax.f32 %v3378, 0.0
  %v3387 = vmax.f32 %v3379, 0.0
  %v3388 = vmax.f32 %v3380, 0.0
  %v3389 = vmax.f32 %v3381, 0.0
  %v3390 = vmax.f32 %v3382, 0.0
  %v3391 = vld [vmem:[%s11] sm:$0xff]
  %v3392 = vld [vmem:[%s11 + $0x8] sm:$0xff]
  %v3393 = vld [vmem:[%s11 + $0x10] sm:$0xff]
  %v3394 = vld [vmem:[%s11 + $0x18] sm:$0xff]
  %v3395 = vld [vmem:[%s11 + $0x20] sm:$0xff]
  %v3396 = vld [vmem:[%s11 + $0x28] sm:$0xff]
  %v3397 = vld [vmem:[%s11 + $0x30] sm:$0xff]
  %v3398 = vld [vmem:[%s11 + $0x38] sm:$0xff]
  %v3399 = vld [vmem:[%s11 + $0x40] sm:$0xff]
  %v3400 = vld [vmem:[%s11 + $0x48] sm:$0xff]
  %v3401 = vld [vmem:[%s11 + $0x50] sm:$0xff]
  %v3402 = vld [vmem:[%s11 + $0x58] sm:$0xff]
  %v3403 = vld [vmem:[%s11 + $0x60] sm:$0xff]
  %v3404 = vld [vmem:[%s11 + $0x68] sm:$0xff]
  %v3405 = vld [vmem:[%s11 + $0x70] sm:$0xff]
  %v3406 = vld [vmem:[%s11 + $0x78] sm:$0xff]
  %v3407 = vld [vmem:[%s11 + $0x80] sm:$0xff]
  %v3408 = vld [vmem:[%s11 + $0x88] sm:$0xff]
  %v3409 = vld [vmem:[%s11 + $0x90] sm:$0xff]
  %v3410 = vld [vmem:[%s11 + $0x98] sm:$0xff]
  %v3411 = vld [vmem:[%s11 + $0xa0] sm:$0xff]
  %v3412 = vld [vmem:[%s11 + $0xa8] sm:$0xff]
  %v3413 = vld [vmem:[%s11 + $0xb0] sm:$0xff]
  %v3414 = vld [vmem:[%s11 + $0xb8] sm:$0xff]
  %v3415 = vld [vmem:[%s11 + $0xc0] sm:$0xff]
  %v3416 = vld [vmem:[%s11 + $0xc8] sm:$0xff]
  %v3417 = vld [vmem:[%s11 + $0xd0] sm:$0xff]
  %v3418 = vld [vmem:[%s11 + $0xd8] sm:$0xff]
  %v3419 = vld [vmem:[%s11 + $0xe0] sm:$0xff]
  %v3420 = vld [vmem:[%s11 + $0xe8] sm:$0xff]
  %v3421 = vld [vmem:[%s11 + $0xf0] sm:$0xff]
  %v3422 = vld [vmem:[%s11 + $0xf8] sm:$0xff]
  %v3423 = vld [vmem:[%s11 + $0x100] sm:$0xff]
  %v3424 = vld [vmem:[%s11 + $0x108] sm:$0xff]
  %v3425 = vld [vmem:[%s11 + $0x110] sm:$0xff]
  %v3426 = vld [vmem:[%s11 + $0x118] sm:$0xff]
  %v3427 = vld [vmem:[%s11 + $0x120] sm:$0xff]
  %v3428 = vld [vmem:[%s11 + $0x128] sm:$0xff]
  %v3429 = vld [vmem:[%s11 + $0x130] sm:$0xff]
  %v3430 = vld [vmem:[%s11 + $0x138] sm:$0xff]
  %v3431 = vld [vmem:[%s11 + $0x140] sm:$0xff]
  %v3432 = vld [vmem:[%s11 + $0x148] sm:$0xff]
  %v3433 = vld [vmem:[%s11 + $0x150] sm:$0xff]
  %v3434 = vld [vmem:[%s11 + $0x158] sm:$0xff]
  %v3435 = vld [vmem:[%s11 + $0x160] sm:$0xff]
  %v3436 = vld [vmem:[%s11 + $0x168] sm:$0xff]
  %v3437 = vld [vmem:[%s11 + $0x170] sm:$0xff]
  %v3438 = vld [vmem:[%s11 + $0x178] sm:$0xff]
  %v3439 = vld [vmem:[%s11 + $0x180] sm:$0xff]
  %v3440 = vld [vmem:[%s11 + $0x188] sm:$0xff]
  %v3441 = vld [vmem:[%s11 + $0x190] sm:$0xff]
  %v3442 = vld [vmem:[%s11 + $0x198] sm:$0xff]
  %v3443 = vld [vmem:[%s11 + $0x1a0] sm:$0xff]
  %v3444 = vld [vmem:[%s11 + $0x1a8] sm:$0xff]
  %v3445 = vld [vmem:[%s11 + $0x1b0] sm:$0xff]
  %v3446 = vld [vmem:[%s11 + $0x1b8] sm:$0xff]
  %v3447 = vld [vmem:[%s11 + $0x1c0] sm:$0xff]
  %v3448 = vld [vmem:[%s11 + $0x1c8] sm:$0xff]
  %v3449 = vld [vmem:[%s11 + $0x1d0] sm:$0xff]
  %v3450 = vld [vmem:[%s11 + $0x1d8] sm:$0xff]
  %v3451 = vld [vmem:[%s11 + $0x1e0] sm:$0xff]
  %v3452 = vld [vmem:[%s11 + $0x1e8] sm:$0xff]
  %v3453 = vld [vmem:[%s11 + $0x1f0] sm:$0xff]
  %v3454 = vld [vmem:[%s11 + $0x1f8] sm:$0xff]
  %v3455 = vld [vmem:[%s11 + $0x200] sm:$0xff]
  %v3456 = vld [vmem:[%s11 + $0x208] sm:$0xff]
  %v3457 = vld [vmem:[%s11 + $0x210] sm:$0xff]
  %v3458 = vld [vmem:[%s11 + $0x218] sm:$0xff]
  %v3459 = vld [vmem:[%s11 + $0x220] sm:$0xff]
  %v3460 = vld [vmem:[%s11 + $0x228] sm:$0xff]
  %v3461 = vld [vmem:[%s11 + $0x230] sm:$0xff]
  %v3462 = vld [vmem:[%s11 + $0x238] sm:$0xff]
  %v3463 = vld [vmem:[%s11 + $0x240] sm:$0xff]
  %v3464 = vld [vmem:[%s11 + $0x248] sm:$0xff]
  %v3465 = vld [vmem:[%s11 + $0x250] sm:$0xff]
  %v3466 = vld [vmem:[%s11 + $0x258] sm:$0xff]
  %v3467 = vld [vmem:[%s11 + $0x260] sm:$0xff]
  %v3468 = vld [vmem:[%s11 + $0x268] sm:$0xff]
  %v3469 = vld [vmem:[%s11 + $0x270] sm:$0xff]
  %v3470 = vld [vmem:[%s11 + $0x278] sm:$0xff]
  %v3471 = vld [vmem:[%s11 + $0x280] sm:$0xff]
  %v3472 = vld [vmem:[%s11 + $0x288] sm:$0xff]
  %v3473 = vld [vmem:[%s11 + $0x290] sm:$0xff]
  %v3474 = vld [vmem:[%s11 + $0x298] sm:$0xff]
  %v3475 = vld [vmem:[%s11 + $0x2a0] sm:$0xff]
  %v3476 = vld [vmem:[%s11 + $0x2a8] sm:$0xff]
  %v3477 = vld [vmem:[%s11 + $0x2b0] sm:$0xff]
  %v3478 = vld [vmem:[%s11 + $0x2b8] sm:$0xff]
  %v3479 = vld [vmem:[%s11 + $0x2c0] sm:$0xff]
  %v3480 = vld [vmem:[%s11 + $0x2c8] sm:$0xff]
  %v3481 = vld [vmem:[%s11 + $0x2d0] sm:$0xff]
  %v3482 = vld [vmem:[%s11 + $0x2d8] sm:$0xff]
  %v3483 = vld [vmem:[%s11 + $0x2e0] sm:$0xff]
  %v3484 = vld [vmem:[%s11 + $0x2e8] sm:$0xff]
  %v3485 = vld [vmem:[%s11 + $0x2f0] sm:$0xff]
  %v3486 = vld [vmem:[%s11 + $0x2f8] sm:$0xff]
  %v3487 = vld [vmem:[%s11 + $0x300] sm:$0xff]
  %v3488 = vld [vmem:[%s11 + $0x308] sm:$0xff]
  %v3489 = vld [vmem:[%s11 + $0x310] sm:$0xff]
  %v3490 = vld [vmem:[%s11 + $0x318] sm:$0xff]
  %v3491 = vld [vmem:[%s11 + $0x320] sm:$0xff]
  %v3492 = vld [vmem:[%s11 + $0x328] sm:$0xff]
  %v3493 = vld [vmem:[%s11 + $0x330] sm:$0xff]
  %v3494 = vld [vmem:[%s11 + $0x338] sm:$0xff]
  %v3495 = vld [vmem:[%s11 + $0x340] sm:$0xff]
  %v3496 = vld [vmem:[%s11 + $0x348] sm:$0xff]
  %v3497 = vld [vmem:[%s11 + $0x350] sm:$0xff]
  %v3498 = vld [vmem:[%s11 + $0x358] sm:$0xff]
  %v3499 = vld [vmem:[%s11 + $0x360] sm:$0xff]
  %v3500 = vld [vmem:[%s11 + $0x368] sm:$0xff]
  %v3501 = vld [vmem:[%s11 + $0x370] sm:$0xff]
  %v3502 = vld [vmem:[%s11 + $0x378] sm:$0xff]
  %v3503 = vld [vmem:[%s11 + $0x380] sm:$0xff]
  %v3504 = vld [vmem:[%s11 + $0x388] sm:$0xff]
  %v3505 = vld [vmem:[%s11 + $0x390] sm:$0xff]
  %v3506 = vld [vmem:[%s11 + $0x398] sm:$0xff]
  %v3507 = vld [vmem:[%s11 + $0x3a0] sm:$0xff]
  %v3508 = vld [vmem:[%s11 + $0x3a8] sm:$0xff]
  %v3509 = vld [vmem:[%s11 + $0x3b0] sm:$0xff]
  %v3510 = vld [vmem:[%s11 + $0x3b8] sm:$0xff]
  %v3511 = vld [vmem:[%s11 + $0x3c0] sm:$0xff]
  %v3512 = vld [vmem:[%s11 + $0x3c8] sm:$0xff]
  %v3513 = vld [vmem:[%s11 + $0x3d0] sm:$0xff]
  %v3514 = vld [vmem:[%s11 + $0x3d8] sm:$0xff]
  %v3515 = vld [vmem:[%s11 + $0x3e0] sm:$0xff]
  %v3516 = vld [vmem:[%s11 + $0x3e8] sm:$0xff]
  %v3517 = vld [vmem:[%s11 + $0x3f0] sm:$0xff]
  %v3518 = vld [vmem:[%s11 + $0x3f8] sm:$0xff]
  %v3519 = vld [vmem:[%s11 + $0x400] sm:$0xff]
  %v3520 = vld [vmem:[%s11 + $0x408] sm:$0xff]
  %v3521 = vld [vmem:[%s11 + $0x410] sm:$0xff]
  %v3522 = vld [vmem:[%s11 + $0x418] sm:$0xff]
  %v3523 = vld [vmem:[%s11 + $0x420] sm:$0xff]
  %v3524 = vld [vmem:[%s11 + $0x428] sm:$0xff]
  %v3525 = vld [vmem:[%s11 + $0x430] sm:$0xff]
  %v3526 = vld [vmem:[%s11 + $0x438] sm:$0xff]
  %v3527 = vld [vmem:[%s11 + $0x440] sm:$0xff]
  %v3528 = vld [vmem:[%s11 + $0x448] sm:$0xff]
  %v3529 = vld [vmem:[%s11 + $0x450] sm:$0xff]
  %v3530 = vld [vmem:[%s11 + $0x458] sm:$0xff]
  %v3531 = vld [vmem:[%s11 + $0x460] sm:$0xff]
  %v3532 = vld [vmem:[%s11 + $0x468] sm:$0xff]
  %v3533 = vld [vmem:[%s11 + $0x470] sm:$0xff]
  %v3534 = vld [vmem:[%s11 + $0x478] sm:$0xff]
  %3535 = vmatpush.msra.mxu0 %v3526
  %3536 = vmatpush.msra.mxu0 %v3517
  %3537 = vmatpush.msra.mxu0 %v3508
  %3538 = vmatpush.msra.mxu0 %v3499
  %3539 = vmatpush.msra.mxu0 %v3490
  %3540 = vmatpush.msra.mxu0 %v3481
  %3541 = vmatpush.msra.mxu0 %v3472
  %3542 = vmatpush.msra.mxu0 %v3463
  %3543 = vmatpush.msra.mxu0 %v3454
  %3544 = vmatpush.msra.mxu0 %v3445
  %3545 = vmatpush.msra.mxu0 %v3436
  %3546 = vmatpush.msra.mxu0 %v3427
  %3547 = vmatpush.msra.mxu0 %v3418
  %3548 = vmatpush.msra.mxu0 %v3409
  %3549 = vmatpush.msra.mxu0 %v3400
  %3550 = vmatpush.msra.mxu0 %v3391
  %3551 = vmatmul.f32.gmra.mxu0 %v3383
  %v3552 = vpop.f32.mrf.mxu0
  %v3553 = vadd.f32 0.0, %v3552
  %3554 = vmatmul.f32.gmra.mxu0 %v3384
  %v3555 = vpop.f32.mrf.mxu0
  %v3556 = vadd.f32 0.0, %v3555
  %3557 = vmatmul.f32.gmra.mxu0 %v3385
  %v3558 = vpop.f32.mrf.mxu0
  %v3559 = vadd.f32 0.0, %v3558
  %3560 = vmatmul.f32.gmra.mxu0 %v3386
  %v3561 = vpop.f32.mrf.mxu0
  %v3562 = vadd.f32 0.0, %v3561
  %3563 = vmatmul.f32.gmra.mxu0 %v3387
  %v3564 = vpop.f32.mrf.mxu0
  %v3565 = vadd.f32 0.0, %v3564
  %3566 = vmatmul.f32.gmra.mxu0 %v3388
  %v3567 = vpop.f32.mrf.mxu0
  %v3568 = vadd.f32 0.0, %v3567
  %3569 = vmatmul.f32.gmra.mxu0 %v3389
  %v3570 = vpop.f32.mrf.mxu0
  %v3571 = vadd.f32 0.0, %v3570
  %3572 = vmatmul.f32.gmra.mxu0 %v3390
  %v3573 = vpop.f32.mrf.mxu0
  %v3574 = vadd.f32 0.0, %v3573
  %3575 = vdwg.mxu0
  %3576 = vmatpush.msra.mxu0 %v3527
  %3577 = vmatpush.msra.mxu0 %v3518
  %3578 = vmatpush.msra.mxu0 %v3509
  %3579 = vmatpush.msra.mxu0 %v3500
  %3580 = vmatpush.msra.mxu0 %v3491
  %3581 = vmatpush.msra.mxu0 %v3482
  %3582 = vmatpush.msra.mxu0 %v3473
  %3583 = vmatpush.msra.mxu0 %v3464
  %3584 = vmatpush.msra.mxu0 %v3455
  %3585 = vmatpush.msra.mxu0 %v3446
  %3586 = vmatpush.msra.mxu0 %v3437
  %3587 = vmatpush.msra.mxu0 %v3428
  %3588 = vmatpush.msra.mxu0 %v3419
  %3589 = vmatpush.msra.mxu0 %v3410
  %3590 = vmatpush.msra.mxu0 %v3401
  %3591 = vmatpush.msra.mxu0 %v3392
  %3592 = vmatmul.f32.gmra.mxu0 %v3383
  %v3593 = vpop.f32.mrf.mxu0
  %v3594 = vadd.f32 0.0, %v3593
  %3595 = vmatmul.f32.gmra.mxu0 %v3384
  %v3596 = vpop.f32.mrf.mxu0
  %v3597 = vadd.f32 0.0, %v3596
  %3598 = vmatmul.f32.gmra.mxu0 %v3385
  %v3599 = vpop.f32.mrf.mxu0
  %v3600 = vadd.f32 0.0, %v3599
  %3601 = vmatmul.f32.gmra.mxu0 %v3386
  %v3602 = vpop.f32.mrf.mxu0
  %v3603 = vadd.f32 0.0, %v3602
  %3604 = vmatmul.f32.gmra.mxu0 %v3387
  %v3605 = vpop.f32.mrf.mxu0
  %v3606 = vadd.f32 0.0, %v3605
  %3607 = vmatmul.f32.gmra.mxu0 %v3388
  %v3608 = vpop.f32.mrf.mxu0
  %v3609 = vadd.f32 0.0, %v3608
  %3610 = vmatmul.f32.gmra.mxu0 %v3389
  %v3611 = vpop.f32.mrf.mxu0
  %v3612 = vadd.f32 0.0, %v3611
  %3613 = vmatmul.f32.gmra.mxu0 %v3390
  %v3614 = vpop.f32.mrf.mxu0
  %v3615 = vadd.f32 0.0, %v3614
  %3616 = vdwg.mxu0
  %3617 = vmatpush.msra.mxu0 %v3528
  %3618 = vmatpush.msra.mxu0 %v3519
  %3619 = vmatpush.msra.mxu0 %v3510
  %3620 = vmatpush.msra.mxu0 %v3501
  %3621 = vmatpush.msra.mxu0 %v3492
  %3622 = vmatpush.msra.mxu0 %v3483
  %3623 = vmatpush.msra.mxu0 %v3474
  %3624 = vmatpush.msra.mxu0 %v3465
  %3625 = vmatpush.msra.mxu0 %v3456
  %3626 = vmatpush.msra.mxu0 %v3447
  %3627 = vmatpush.msra.mxu0 %v3438
  %3628 = vmatpush.msra.mxu0 %v3429
  %3629 = vmatpush.msra.mxu0 %v3420
  %3630 = vmatpush.msra.mxu0 %v3411
  %3631 = vmatpush.msra.mxu0 %v3402
  %3632 = vmatpush.msra.mxu0 %v3393
  %3633 = vmatmul.f32.gmra.mxu0 %v3383
  %v3634 = vpop.f32.mrf.mxu0
  %v3635 = vadd.f32 0.0, %v3634
  %3636 = vmatmul.f32.gmra.mxu0 %v3384
  %v3637 = vpop.f32.mrf.mxu0
  %v3638 = vadd.f32 0.0, %v3637
  %3639 = vmatmul.f32.gmra.mxu0 %v3385
  %v3640 = vpop.f32.mrf.mxu0
  %v3641 = vadd.f32 0.0, %v3640
  %3642 = vmatmul.f32.gmra.mxu0 %v3386
  %v3643 = vpop.f32.mrf.mxu0
  %v3644 = vadd.f32 0.0, %v3643
  %3645 = vmatmul.f32.gmra.mxu0 %v3387
  %v3646 = vpop.f32.mrf.mxu0
  %v3647 = vadd.f32 0.0, %v3646
  %3648 = vmatmul.f32.gmra.mxu0 %v3388
  %v3649 = vpop.f32.mrf.mxu0
  %v3650 = vadd.f32 0.0, %v3649
  %3651 = vmatmul.f32.gmra.mxu0 %v3389
  %v3652 = vpop.f32.mrf.mxu0
  %v3653 = vadd.f32 0.0, %v3652
  %3654 = vmatmul.f32.gmra.mxu0 %v3390
  %v3655 = vpop.f32.mrf.mxu0
  %v3656 = vadd.f32 0.0, %v3655
  %3657 = vdwg.mxu0
  %3658 = vmatpush.msra.mxu0 %v3529
  %3659 = vmatpush.msra.mxu0 %v3520
  %3660 = vmatpush.msra.mxu0 %v3511
  %3661 = vmatpush.msra.mxu0 %v3502
  %3662 = vmatpush.msra.mxu0 %v3493
  %3663 = vmatpush.msra.mxu0 %v3484
  %3664 = vmatpush.msra.mxu0 %v3475
  %3665 = vmatpush.msra.mxu0 %v3466
  %3666 = vmatpush.msra.mxu0 %v3457
  %3667 = vmatpush.msra.mxu0 %v3448
  %3668 = vmatpush.msra.mxu0 %v3439
  %3669 = vmatpush.msra.mxu0 %v3430
  %3670 = vmatpush.msra.mxu0 %v3421
  %3671 = vmatpush.msra.mxu0 %v3412
  %3672 = vmatpush.msra.mxu0 %v3403
  %3673 = vmatpush.msra.mxu0 %v3394
  %3674 = vmatmul.f32.gmra.mxu0 %v3383
  %v3675 = vpop.f32.mrf.mxu0
  %v3676 = vadd.f32 0.0, %v3675
  %3677 = vmatmul.f32.gmra.mxu0 %v3384
  %v3678 = vpop.f32.mrf.mxu0
  %v3679 = vadd.f32 0.0, %v3678
  %3680 = vmatmul.f32.gmra.mxu0 %v3385
  %v3681 = vpop.f32.mrf.mxu0
  %v3682 = vadd.f32 0.0, %v3681
  %3683 = vmatmul.f32.gmra.mxu0 %v3386
  %v3684 = vpop.f32.mrf.mxu0
  %v3685 = vadd.f32 0.0, %v3684
  %3686 = vmatmul.f32.gmra.mxu0 %v3387
  %v3687 = vpop.f32.mrf.mxu0
  %v3688 = vadd.f32 0.0, %v3687
  %3689 = vmatmul.f32.gmra.mxu0 %v3388
  %v3690 = vpop.f32.mrf.mxu0
  %v3691 = vadd.f32 0.0, %v3690
  %3692 = vmatmul.f32.gmra.mxu0 %v3389
  %v3693 = vpop.f32.mrf.mxu0
  %v3694 = vadd.f32 0.0, %v3693
  %3695 = vmatmul.f32.gmra.mxu0 %v3390
  %v3696 = vpop.f32.mrf.mxu0
  %v3697 = vadd.f32 0.0, %v3696
  %3698 = vdwg.mxu0
  %3699 = vmatpush.msra.mxu0 %v3530
  %3700 = vmatpush.msra.mxu0 %v3521
  %3701 = vmatpush.msra.mxu0 %v3512
  %3702 = vmatpush.msra.mxu0 %v3503
  %3703 = vmatpush.msra.mxu0 %v3494
  %3704 = vmatpush.msra.mxu0 %v3485
  %3705 = vmatpush.msra.mxu0 %v3476
  %3706 = vmatpush.msra.mxu0 %v3467
  %3707 = vmatpush.msra.mxu0 %v3458
  %3708 = vmatpush.msra.mxu0 %v3449
  %3709 = vmatpush.msra.mxu0 %v3440
  %3710 = vmatpush.msra.mxu0 %v3431
  %3711 = vmatpush.msra.mxu0 %v3422
  %3712 = vmatpush.msra.mxu0 %v3413
  %3713 = vmatpush.msra.mxu0 %v3404
  %3714 = vmatpush.msra.mxu0 %v3395
  %3715 = vmatmul.f32.gmra.mxu0 %v3383
  %v3716 = vpop.f32.mrf.mxu0
  %v3717 = vadd.f32 0.0, %v3716
  %3718 = vmatmul.f32.gmra.mxu0 %v3384
  %v3719 = vpop.f32.mrf.mxu0
  %v3720 = vadd.f32 0.0, %v3719
  %3721 = vmatmul.f32.gmra.mxu0 %v3385
  %v3722 = vpop.f32.mrf.mxu0
  %v3723 = vadd.f32 0.0, %v3722
  %3724 = vmatmul.f32.gmra.mxu0 %v3386
  %v3725 = vpop.f32.mrf.mxu0
  %v3726 = vadd.f32 0.0, %v3725
  %3727 = vmatmul.f32.gmra.mxu0 %v3387
  %v3728 = vpop.f32.mrf.mxu0
  %v3729 = vadd.f32 0.0, %v3728
  %3730 = vmatmul.f32.gmra.mxu0 %v3388
  %v3731 = vpop.f32.mrf.mxu0
  %v3732 = vadd.f32 0.0, %v3731
  %3733 = vmatmul.f32.gmra.mxu0 %v3389
  %v3734 = vpop.f32.mrf.mxu0
  %v3735 = vadd.f32 0.0, %v3734
  %3736 = vmatmul.f32.gmra.mxu0 %v3390
  %v3737 = vpop.f32.mrf.mxu0
  %v3738 = vadd.f32 0.0, %v3737
  %3739 = vdwg.mxu0
  %3740 = vmatpush.msra.mxu0 %v3531
  %3741 = vmatpush.msra.mxu0 %v3522
  %3742 = vmatpush.msra.mxu0 %v3513
  %3743 = vmatpush.msra.mxu0 %v3504
  %3744 = vmatpush.msra.mxu0 %v3495
  %3745 = vmatpush.msra.mxu0 %v3486
  %3746 = vmatpush.msra.mxu0 %v3477
  %3747 = vmatpush.msra.mxu0 %v3468
  %3748 = vmatpush.msra.mxu0 %v3459
  %3749 = vmatpush.msra.mxu0 %v3450
  %3750 = vmatpush.msra.mxu0 %v3441
  %3751 = vmatpush.msra.mxu0 %v3432
  %3752 = vmatpush.msra.mxu0 %v3423
  %3753 = vmatpush.msra.mxu0 %v3414
  %3754 = vmatpush.msra.mxu0 %v3405
  %3755 = vmatpush.msra.mxu0 %v3396
  %3756 = vmatmul.f32.gmra.mxu0 %v3383
  %v3757 = vpop.f32.mrf.mxu0
  %v3758 = vadd.f32 0.0, %v3757
  %3759 = vmatmul.f32.gmra.mxu0 %v3384
  %v3760 = vpop.f32.mrf.mxu0
  %v3761 = vadd.f32 0.0, %v3760
  %3762 = vmatmul.f32.gmra.mxu0 %v3385
  %v3763 = vpop.f32.mrf.mxu0
  %v3764 = vadd.f32 0.0, %v3763
  %3765 = vmatmul.f32.gmra.mxu0 %v3386
  %v3766 = vpop.f32.mrf.mxu0
  %v3767 = vadd.f32 0.0, %v3766
  %3768 = vmatmul.f32.gmra.mxu0 %v3387
  %v3769 = vpop.f32.mrf.mxu0
  %v3770 = vadd.f32 0.0, %v3769
  %3771 = vmatmul.f32.gmra.mxu0 %v3388
  %v3772 = vpop.f32.mrf.mxu0
  %v3773 = vadd.f32 0.0, %v3772
  %3774 = vmatmul.f32.gmra.mxu0 %v3389
  %v3775 = vpop.f32.mrf.mxu0
  %v3776 = vadd.f32 0.0, %v3775
  %3777 = vmatmul.f32.gmra.mxu0 %v3390
  %v3778 = vpop.f32.mrf.mxu0
  %v3779 = vadd.f32 0.0, %v3778
  %3780 = vdwg.mxu0
  %3781 = vmatpush.msra.mxu0 %v3532
  %3782 = vmatpush.msra.mxu0 %v3523
  %3783 = vmatpush.msra.mxu0 %v3514
  %3784 = vmatpush.msra.mxu0 %v3505
  %3785 = vmatpush.msra.mxu0 %v3496
  %3786 = vmatpush.msra.mxu0 %v3487
  %3787 = vmatpush.msra.mxu0 %v3478
  %3788 = vmatpush.msra.mxu0 %v3469
  %3789 = vmatpush.msra.mxu0 %v3460
  %3790 = vmatpush.msra.mxu0 %v3451
  %3791 = vmatpush.msra.mxu0 %v3442
  %3792 = vmatpush.msra.mxu0 %v3433
  %3793 = vmatpush.msra.mxu0 %v3424
  %3794 = vmatpush.msra.mxu0 %v3415
  %3795 = vmatpush.msra.mxu0 %v3406
  %3796 = vmatpush.msra.mxu0 %v3397
  %3797 = vmatmul.f32.gmra.mxu0 %v3383
  %v3798 = vpop.f32.mrf.mxu0
  %v3799 = vadd.f32 0.0, %v3798
  %3800 = vmatmul.f32.gmra.mxu0 %v3384
  %v3801 = vpop.f32.mrf.mxu0
  %v3802 = vadd.f32 0.0, %v3801
  %3803 = vmatmul.f32.gmra.mxu0 %v3385
  %v3804 = vpop.f32.mrf.mxu0
  %v3805 = vadd.f32 0.0, %v3804
  %3806 = vmatmul.f32.gmra.mxu0 %v3386
  %v3807 = vpop.f32.mrf.mxu0
  %v3808 = vadd.f32 0.0, %v3807
  %3809 = vmatmul.f32.gmra.mxu0 %v3387
  %v3810 = vpop.f32.mrf.mxu0
  %v3811 = vadd.f32 0.0, %v3810
  %3812 = vmatmul.f32.gmra.mxu0 %v3388
  %v3813 = vpop.f32.mrf.mxu0
  %v3814 = vadd.f32 0.0, %v3813
  %3815 = vmatmul.f32.gmra.mxu0 %v3389
  %v3816 = vpop.f32.mrf.mxu0
  %v3817 = vadd.f32 0.0, %v3816
  %3818 = vmatmul.f32.gmra.mxu0 %v3390
  %v3819 = vpop.f32.mrf.mxu0
  %v3820 = vadd.f32 0.0, %v3819
  %3821 = vdwg.mxu0
  %3822 = vmatpush.msra.mxu0 %v3533
  %3823 = vmatpush.msra.mxu0 %v3524
  %3824 = vmatpush.msra.mxu0 %v3515
  %3825 = vmatpush.msra.mxu0 %v3506
  %3826 = vmatpush.msra.mxu0 %v3497
  %3827 = vmatpush.msra.mxu0 %v3488
  %3828 = vmatpush.msra.mxu0 %v3479
  %3829 = vmatpush.msra.mxu0 %v3470
  %3830 = vmatpush.msra.mxu0 %v3461
  %3831 = vmatpush.msra.mxu0 %v3452
  %3832 = vmatpush.msra.mxu0 %v3443
  %3833 = vmatpush.msra.mxu0 %v3434
  %3834 = vmatpush.msra.mxu0 %v3425
  %3835 = vmatpush.msra.mxu0 %v3416
  %3836 = vmatpush.msra.mxu0 %v3407
  %3837 = vmatpush.msra.mxu0 %v3398
  %3838 = vmatmul.f32.gmra.mxu0 %v3383
  %v3839 = vpop.f32.mrf.mxu0
  %v3840 = vadd.f32 0.0, %v3839
  %3841 = vmatmul.f32.gmra.mxu0 %v3384
  %v3842 = vpop.f32.mrf.mxu0
  %v3843 = vadd.f32 0.0, %v3842
  %3844 = vmatmul.f32.gmra.mxu0 %v3385
  %v3845 = vpop.f32.mrf.mxu0
  %v3846 = vadd.f32 0.0, %v3845
  %3847 = vmatmul.f32.gmra.mxu0 %v3386
  %v3848 = vpop.f32.mrf.mxu0
  %v3849 = vadd.f32 0.0, %v3848
  %3850 = vmatmul.f32.gmra.mxu0 %v3387
  %v3851 = vpop.f32.mrf.mxu0
  %v3852 = vadd.f32 0.0, %v3851
  %3853 = vmatmul.f32.gmra.mxu0 %v3388
  %v3854 = vpop.f32.mrf.mxu0
  %v3855 = vadd.f32 0.0, %v3854
  %3856 = vmatmul.f32.gmra.mxu0 %v3389
  %v3857 = vpop.f32.mrf.mxu0
  %v3858 = vadd.f32 0.0, %v3857
  %3859 = vmatmul.f32.gmra.mxu0 %v3390
  %v3860 = vpop.f32.mrf.mxu0
  %v3861 = vadd.f32 0.0, %v3860
  %3862 = vdwg.mxu0
  %3863 = vmatpush.msra.mxu0 %v3534
  %3864 = vmatpush.msra.mxu0 %v3525
  %3865 = vmatpush.msra.mxu0 %v3516
  %3866 = vmatpush.msra.mxu0 %v3507
  %3867 = vmatpush.msra.mxu0 %v3498
  %3868 = vmatpush.msra.mxu0 %v3489
  %3869 = vmatpush.msra.mxu0 %v3480
  %3870 = vmatpush.msra.mxu0 %v3471
  %3871 = vmatpush.msra.mxu0 %v3462
  %3872 = vmatpush.msra.mxu0 %v3453
  %3873 = vmatpush.msra.mxu0 %v3444
  %3874 = vmatpush.msra.mxu0 %v3435
  %3875 = vmatpush.msra.mxu0 %v3426
  %3876 = vmatpush.msra.mxu0 %v3417
  %3877 = vmatpush.msra.mxu0 %v3408
  %3878 = vmatpush.msra.mxu0 %v3399
  %3879 = vmatmul.f32.gmra.mxu0 %v3383
  %v3880 = vpop.f32.mrf.mxu0
  %v3881 = vadd.f32 0.0, %v3880
  %3882 = vmatmul.f32.gmra.mxu0 %v3384
  %v3883 = vpop.f32.mrf.mxu0
  %v3884 = vadd.f32 0.0, %v3883
  %3885 = vmatmul.f32.gmra.mxu0 %v3385
  %v3886 = vpop.f32.mrf.mxu0
  %v3887 = vadd.f32 0.0, %v3886
  %3888 = vmatmul.f32.gmra.mxu0 %v3386
  %v3889 = vpop.f32.mrf.mxu0
  %v3890 = vadd.f32 0.0, %v3889
  %3891 = vmatmul.f32.gmra.mxu0 %v3387
  %v3892 = vpop.f32.mrf.mxu0
  %v3893 = vadd.f32 0.0, %v3892
  %3894 = vmatmul.f32.gmra.mxu0 %v3388
  %v3895 = vpop.f32.mrf.mxu0
  %v3896 = vadd.f32 0.0, %v3895
  %3897 = vmatmul.f32.gmra.mxu0 %v3389
  %v3898 = vpop.f32.mrf.mxu0
  %v3899 = vadd.f32 0.0, %v3898
  %3900 = vmatmul.f32.gmra.mxu0 %v3390
  %v3901 = vpop.f32.mrf.mxu0
  %v3902 = vadd.f32 0.0, %v3901
  %3903 = vdwg.mxu0
  %v3904 = vld [vmem:[%s10] sm:$0xf]
  %v3905 = vld [vmem:[%s10 + $0x4] sm:$0xf]
  %v3906 = vld [vmem:[%s10 + $0x8] sm:$0xf]
  %v3907 = vld [vmem:[%s10 + $0xc] sm:$0xf]
  %v3908 = vld [vmem:[%s10 + $0x10] sm:$0xf]
  %v3909 = vld [vmem:[%s10 + $0x14] sm:$0xf]
  %v3910 = vld [vmem:[%s10 + $0x18] sm:$0xf]
  %v3911 = vld [vmem:[%s10 + $0x1c] sm:$0xf]
  %v3912 = vld [vmem:[%s10 + $0x20] sm:$0xf]
  %v3913 = vld [vmem:[%s10 + $0x24] sm:$0xf]
  %v3914 = vld [vmem:[%s10 + $0x28] sm:$0xf]
  %v3915 = vld [vmem:[%s10 + $0x2c] sm:$0xf]
  %v3916 = vld [vmem:[%s10 + $0x30] sm:$0xf]
  %v3917 = vld [vmem:[%s10 + $0x34] sm:$0xf]
  %v3918 = vld [vmem:[%s10 + $0x38] sm:$0xf]
  %v3919 = vld [vmem:[%s10 + $0x3c] sm:$0xf]
  %v3920 = vld [vmem:[%s10 + $0x40] sm:$0xf]
  %v3921 = vld [vmem:[%s10 + $0x44] sm:$0xf]
  %v3922 = vld [vmem:[%s10 + $0x48] sm:$0xf]
  %v3923 = vld [vmem:[%s10 + $0x4c] sm:$0xf]
  %v3924 = vld [vmem:[%s10 + $0x50] sm:$0xf]
  %v3925 = vld [vmem:[%s10 + $0x54] sm:$0xf]
  %v3926 = vld [vmem:[%s10 + $0x58] sm:$0xf]
  %v3927 = vld [vmem:[%s10 + $0x5c] sm:$0xf]
  %v3928 = vld [vmem:[%s10 + $0x60] sm:$0xf]
  %v3929 = vld [vmem:[%s10 + $0x64] sm:$0xf]
  %v3930 = vld [vmem:[%s10 + $0x68] sm:$0xf]
  %v3931 = vld [vmem:[%s10 + $0x6c] sm:$0xf]
  %v3932 = vld [vmem:[%s10 + $0x70] sm:$0xf]
  %v3933 = vld [vmem:[%s10 + $0x74] sm:$0xf]
  %v3934 = vld [vmem:[%s10 + $0x78] sm:$0xf]
  %v3935 = vld [vmem:[%s10 + $0x7c] sm:$0xf]
  %v3936 = vunpack.c.l.bf16 %v3904
  %v3937 = vunpack.c.l.bf16 %v3905
  %v3938 = vunpack.c.l.bf16 %v3906
  %v3939 = vunpack.c.l.bf16 %v3907
  %v3940 = vunpack.c.l.bf16 %v3908
  %v3941 = vunpack.c.l.bf16 %v3909
  %v3942 = vunpack.c.l.bf16 %v3910
  %v3943 = vunpack.c.l.bf16 %v3911
  %v3944 = vunpack.c.l.bf16 %v3912
  %v3945 = vunpack.c.l.bf16 %v3913
  %v3946 = vunpack.c.l.bf16 %v3914
  %v3947 = vunpack.c.l.bf16 %v3915
  %v3948 = vunpack.c.l.bf16 %v3916
  %v3949 = vunpack.c.l.bf16 %v3917
  %v3950 = vunpack.c.l.bf16 %v3918
  %v3951 = vunpack.c.l.bf16 %v3919
  %v3952 = vunpack.c.l.bf16 %v3920
  %v3953 = vunpack.c.l.bf16 %v3921
  %v3954 = vunpack.c.l.bf16 %v3922
  %v3955 = vunpack.c.l.bf16 %v3923
  %v3956 = vunpack.c.l.bf16 %v3924
  %v3957 = vunpack.c.l.bf16 %v3925
  %v3958 = vunpack.c.l.bf16 %v3926
  %v3959 = vunpack.c.l.bf16 %v3927
  %v3960 = vunpack.c.l.bf16 %v3928
  %v3961 = vunpack.c.l.bf16 %v3929
  %v3962 = vunpack.c.l.bf16 %v3930
  %v3963 = vunpack.c.l.bf16 %v3931
  %v3964 = vunpack.c.l.bf16 %v3932
  %v3965 = vunpack.c.l.bf16 %v3933
  %v3966 = vunpack.c.l.bf16 %v3934
  %v3967 = vunpack.c.l.bf16 %v3935
  %s3968 = scalar_lea.vmem %s10, 128
  %v3969 = vld [vmem:[%s3968] sm:$0xf]
  %v3970 = vld [vmem:[%s3968 + $0x4] sm:$0xf]
  %v3971 = vld [vmem:[%s3968 + $0x8] sm:$0xf]
  %v3972 = vld [vmem:[%s3968 + $0xc] sm:$0xf]
  %v3973 = vld [vmem:[%s3968 + $0x10] sm:$0xf]
  %v3974 = vld [vmem:[%s3968 + $0x14] sm:$0xf]
  %v3975 = vld [vmem:[%s3968 + $0x18] sm:$0xf]
  %v3976 = vld [vmem:[%s3968 + $0x1c] sm:$0xf]
  %v3977 = vld [vmem:[%s3968 + $0x20] sm:$0xf]
  %v3978 = vld [vmem:[%s3968 + $0x24] sm:$0xf]
  %v3979 = vld [vmem:[%s3968 + $0x28] sm:$0xf]
  %v3980 = vld [vmem:[%s3968 + $0x2c] sm:$0xf]
  %v3981 = vld [vmem:[%s3968 + $0x30] sm:$0xf]
  %v3982 = vld [vmem:[%s3968 + $0x34] sm:$0xf]
  %v3983 = vld [vmem:[%s3968 + $0x38] sm:$0xf]
  %v3984 = vld [vmem:[%s3968 + $0x3c] sm:$0xf]
  %v3985 = vld [vmem:[%s3968 + $0x40] sm:$0xf]
  %v3986 = vld [vmem:[%s3968 + $0x44] sm:$0xf]
  %v3987 = vld [vmem:[%s3968 + $0x48] sm:$0xf]
  %v3988 = vld [vmem:[%s3968 + $0x4c] sm:$0xf]
  %v3989 = vld [vmem:[%s3968 + $0x50] sm:$0xf]
  %v3990 = vld [vmem:[%s3968 + $0x54] sm:$0xf]
  %v3991 = vld [vmem:[%s3968 + $0x58] sm:$0xf]
  %v3992 = vld [vmem:[%s3968 + $0x5c] sm:$0xf]
  %v3993 = vld [vmem:[%s3968 + $0x60] sm:$0xf]
  %v3994 = vld [vmem:[%s3968 + $0x64] sm:$0xf]
  %v3995 = vld [vmem:[%s3968 + $0x68] sm:$0xf]
  %v3996 = vld [vmem:[%s3968 + $0x6c] sm:$0xf]
  %v3997 = vld [vmem:[%s3968 + $0x70] sm:$0xf]
  %v3998 = vld [vmem:[%s3968 + $0x74] sm:$0xf]
  %v3999 = vld [vmem:[%s3968 + $0x78] sm:$0xf]
  %v4000 = vld [vmem:[%s3968 + $0x7c] sm:$0xf]
  %v4001 = vunpack.c.l.bf16 %v3969
  %v4002 = vunpack.c.l.bf16 %v3970
  %v4003 = vunpack.c.l.bf16 %v3971
  %v4004 = vunpack.c.l.bf16 %v3972
  %v4005 = vunpack.c.l.bf16 %v3973
  %v4006 = vunpack.c.l.bf16 %v3974
  %v4007 = vunpack.c.l.bf16 %v3975
  %v4008 = vunpack.c.l.bf16 %v3976
  %v4009 = vunpack.c.l.bf16 %v3977
  %v4010 = vunpack.c.l.bf16 %v3978
  %v4011 = vunpack.c.l.bf16 %v3979
  %v4012 = vunpack.c.l.bf16 %v3980
  %v4013 = vunpack.c.l.bf16 %v3981
  %v4014 = vunpack.c.l.bf16 %v3982
  %v4015 = vunpack.c.l.bf16 %v3983
  %v4016 = vunpack.c.l.bf16 %v3984
  %v4017 = vunpack.c.l.bf16 %v3985
  %v4018 = vunpack.c.l.bf16 %v3986
  %v4019 = vunpack.c.l.bf16 %v3987
  %v4020 = vunpack.c.l.bf16 %v3988
  %v4021 = vunpack.c.l.bf16 %v3989
  %v4022 = vunpack.c.l.bf16 %v3990
  %v4023 = vunpack.c.l.bf16 %v3991
  %v4024 = vunpack.c.l.bf16 %v3992
  %v4025 = vunpack.c.l.bf16 %v3993
  %v4026 = vunpack.c.l.bf16 %v3994
  %v4027 = vunpack.c.l.bf16 %v3995
  %v4028 = vunpack.c.l.bf16 %v3996
  %v4029 = vunpack.c.l.bf16 %v3997
  %v4030 = vunpack.c.l.bf16 %v3998
  %v4031 = vunpack.c.l.bf16 %v3999
  %v4032 = vunpack.c.l.bf16 %v4000
  %v4034 = vsel %vm1567, %v4001, 0
  %v4037 = vsel %vm1567, %v4002, 0
  %v4040 = vsel %vm1567, %v4003, 0
  %v4043 = vsel %vm1567, %v4004, 0
  %v4046 = vsel %vm1567, %v4005, 0
  %v4049 = vsel %vm1567, %v4006, 0
  %v4052 = vsel %vm1567, %v4007, 0
  %v4055 = vsel %vm1567, %v4008, 0
  %v4058 = vsel %vm1567, %v4009, 0
  %v4061 = vsel %vm1567, %v4010, 0
  %v4064 = vsel %vm1567, %v4011, 0
  %v4067 = vsel %vm1567, %v4012, 0
  %v4070 = vsel %vm1567, %v4013, 0
  %v4073 = vsel %vm1567, %v4014, 0
  %v4076 = vsel %vm1567, %v4015, 0
  %v4079 = vsel %vm1567, %v4016, 0
  %v4082 = vsel %vm1567, %v4017, 0
  %v4085 = vsel %vm1567, %v4018, 0
  %v4088 = vsel %vm1567, %v4019, 0
  %v4091 = vsel %vm1567, %v4020, 0
  %v4094 = vsel %vm1567, %v4021, 0
  %v4097 = vsel %vm1567, %v4022, 0
  %v4100 = vsel %vm1567, %v4023, 0
  %v4103 = vsel %vm1567, %v4024, 0
  %v4106 = vsel %vm1567, %v4025, 0
  %v4109 = vsel %vm1567, %v4026, 0
  %v4112 = vsel %vm1567, %v4027, 0
  %v4115 = vsel %vm1567, %v4028, 0
  %v4118 = vsel %vm1567, %v4029, 0
  %v4121 = vsel %vm1567, %v4030, 0
  %v4124 = vsel %vm1567, %v4031, 0
  %v4127 = vsel %vm1567, %v4032, 0
  %4129 = vmatpush.msra.mxu0 0.0
  %4130 = vmatpush.msra.mxu0 0.0
  %4131 = vmatpush.msra.mxu0 0.0
  %4132 = vmatpush.msra.mxu0 0.0
  %4133 = vmatpush.msra.mxu0 0.0
  %4134 = vmatpush.msra.mxu0 0.0
  %4135 = vmatpush.msra.mxu0 0.0
  %4136 = vmatpush.msra.mxu0 0.0
  %4137 = vmatpush.msra.mxu0 %v3615
  %4138 = vmatpush.msra.mxu0 %v3612
  %4139 = vmatpush.msra.mxu0 %v3609
  %4140 = vmatpush.msra.mxu0 %v3606
  %4141 = vmatpush.msra.mxu0 %v3603
  %4142 = vmatpush.msra.mxu0 %v3600
  %4143 = vmatpush.msra.mxu0 %v3597
  %4144 = vmatpush.msra.mxu0 %v3594
  %4145 = vmatmul.f32.gmra.mxu0 %v4034
  %v4146 = vpop.f32.mrf.mxu0
  %v4147 = vadd.f32 0.0, %v4146
  %4148 = vmatmul.f32.gmra.mxu0 %v4037
  %v4149 = vpop.f32.mrf.mxu0
  %v4150 = vadd.f32 0.0, %v4149
  %4151 = vmatmul.f32.gmra.mxu0 %v4040
  %v4152 = vpop.f32.mrf.mxu0
  %v4153 = vadd.f32 0.0, %v4152
  %4154 = vmatmul.f32.gmra.mxu0 %v4043
  %v4155 = vpop.f32.mrf.mxu0
  %v4156 = vadd.f32 0.0, %v4155
  %4157 = vmatmul.f32.gmra.mxu0 %v4046
  %v4158 = vpop.f32.mrf.mxu0
  %v4159 = vadd.f32 0.0, %v4158
  %4160 = vmatmul.f32.gmra.mxu0 %v4049
  %v4161 = vpop.f32.mrf.mxu0
  %v4162 = vadd.f32 0.0, %v4161
  %4163 = vmatmul.f32.gmra.mxu0 %v4052
  %v4164 = vpop.f32.mrf.mxu0
  %v4165 = vadd.f32 0.0, %v4164
  %4166 = vmatmul.f32.gmra.mxu0 %v4055
  %v4167 = vpop.f32.mrf.mxu0
  %v4168 = vadd.f32 0.0, %v4167
  %4169 = vmatmul.f32.gmra.mxu0 %v4058
  %v4170 = vpop.f32.mrf.mxu0
  %v4171 = vadd.f32 0.0, %v4170
  %4172 = vmatmul.f32.gmra.mxu0 %v4061
  %v4173 = vpop.f32.mrf.mxu0
  %v4174 = vadd.f32 0.0, %v4173
  %4175 = vmatmul.f32.gmra.mxu0 %v4064
  %v4176 = vpop.f32.mrf.mxu0
  %v4177 = vadd.f32 0.0, %v4176
  %4178 = vmatmul.f32.gmra.mxu0 %v4067
  %v4179 = vpop.f32.mrf.mxu0
  %v4180 = vadd.f32 0.0, %v4179
  %4181 = vmatmul.f32.gmra.mxu0 %v4070
  %v4182 = vpop.f32.mrf.mxu0
  %v4183 = vadd.f32 0.0, %v4182
  %4184 = vmatmul.f32.gmra.mxu0 %v4073
  %v4185 = vpop.f32.mrf.mxu0
  %v4186 = vadd.f32 0.0, %v4185
  %4187 = vmatmul.f32.gmra.mxu0 %v4076
  %v4188 = vpop.f32.mrf.mxu0
  %v4189 = vadd.f32 0.0, %v4188
  %4190 = vmatmul.f32.gmra.mxu0 %v4079
  %v4191 = vpop.f32.mrf.mxu0
  %v4192 = vadd.f32 0.0, %v4191
  %4193 = vmatmul.f32.gmra.mxu0 %v4082
  %v4194 = vpop.f32.mrf.mxu0
  %v4195 = vadd.f32 0.0, %v4194
  %4196 = vmatmul.f32.gmra.mxu0 %v4085
  %v4197 = vpop.f32.mrf.mxu0
  %v4198 = vadd.f32 0.0, %v4197
  %4199 = vmatmul.f32.gmra.mxu0 %v4088
  %v4200 = vpop.f32.mrf.mxu0
  %v4201 = vadd.f32 0.0, %v4200
  %4202 = vmatmul.f32.gmra.mxu0 %v4091
  %v4203 = vpop.f32.mrf.mxu0
  %v4204 = vadd.f32 0.0, %v4203
  %4205 = vmatmul.f32.gmra.mxu0 %v4094
  %v4206 = vpop.f32.mrf.mxu0
  %v4207 = vadd.f32 0.0, %v4206
  %4208 = vmatmul.f32.gmra.mxu0 %v4097
  %v4209 = vpop.f32.mrf.mxu0
  %v4210 = vadd.f32 0.0, %v4209
  %4211 = vmatmul.f32.gmra.mxu0 %v4100
  %v4212 = vpop.f32.mrf.mxu0
  %v4213 = vadd.f32 0.0, %v4212
  %4214 = vmatmul.f32.gmra.mxu0 %v4103
  %v4215 = vpop.f32.mrf.mxu0
  %v4216 = vadd.f32 0.0, %v4215
  %4217 = vmatmul.f32.gmra.mxu0 %v4106
  %v4218 = vpop.f32.mrf.mxu0
  %v4219 = vadd.f32 0.0, %v4218
  %4220 = vmatmul.f32.gmra.mxu0 %v4109
  %v4221 = vpop.f32.mrf.mxu0
  %v4222 = vadd.f32 0.0, %v4221
  %4223 = vmatmul.f32.gmra.mxu0 %v4112
  %v4224 = vpop.f32.mrf.mxu0
  %v4225 = vadd.f32 0.0, %v4224
  %4226 = vmatmul.f32.gmra.mxu0 %v4115
  %v4227 = vpop.f32.mrf.mxu0
  %v4228 = vadd.f32 0.0, %v4227
  %4229 = vmatmul.f32.gmra.mxu0 %v4118
  %v4230 = vpop.f32.mrf.mxu0
  %v4231 = vadd.f32 0.0, %v4230
  %4232 = vmatmul.f32.gmra.mxu0 %v4121
  %v4233 = vpop.f32.mrf.mxu0
  %v4234 = vadd.f32 0.0, %v4233
  %4235 = vmatmul.f32.gmra.mxu0 %v4124
  %v4236 = vpop.f32.mrf.mxu0
  %v4237 = vadd.f32 0.0, %v4236
  %4238 = vmatmul.f32.gmra.mxu0 %v4127
  %v4239 = vpop.f32.mrf.mxu0
  %v4240 = vadd.f32 0.0, %v4239
  %4241 = vdwg.mxu0
  %v4243 = vsel %vm1567, %v3936, 0
  %v4246 = vsel %vm1567, %v3937, 0
  %v4249 = vsel %vm1567, %v3938, 0
  %v4252 = vsel %vm1567, %v3939, 0
  %v4255 = vsel %vm1567, %v3940, 0
  %v4258 = vsel %vm1567, %v3941, 0
  %v4261 = vsel %vm1567, %v3942, 0
  %v4264 = vsel %vm1567, %v3943, 0
  %v4267 = vsel %vm1567, %v3944, 0
  %v4270 = vsel %vm1567, %v3945, 0
  %v4273 = vsel %vm1567, %v3946, 0
  %v4276 = vsel %vm1567, %v3947, 0
  %v4279 = vsel %vm1567, %v3948, 0
  %v4282 = vsel %vm1567, %v3949, 0
  %v4285 = vsel %vm1567, %v3950, 0
  %v4288 = vsel %vm1567, %v3951, 0
  %v4291 = vsel %vm1567, %v3952, 0
  %v4294 = vsel %vm1567, %v3953, 0
  %v4297 = vsel %vm1567, %v3954, 0
  %v4300 = vsel %vm1567, %v3955, 0
  %v4303 = vsel %vm1567, %v3956, 0
  %v4306 = vsel %vm1567, %v3957, 0
  %v4309 = vsel %vm1567, %v3958, 0
  %v4312 = vsel %vm1567, %v3959, 0
  %v4315 = vsel %vm1567, %v3960, 0
  %v4318 = vsel %vm1567, %v3961, 0
  %v4321 = vsel %vm1567, %v3962, 0
  %v4324 = vsel %vm1567, %v3963, 0
  %v4327 = vsel %vm1567, %v3964, 0
  %v4330 = vsel %vm1567, %v3965, 0
  %v4333 = vsel %vm1567, %v3966, 0
  %v4336 = vsel %vm1567, %v3967, 0
  %4338 = vmatpush.msra.mxu0 0.0
  %4339 = vmatpush.msra.mxu0 0.0
  %4340 = vmatpush.msra.mxu0 0.0
  %4341 = vmatpush.msra.mxu0 0.0
  %4342 = vmatpush.msra.mxu0 0.0
  %4343 = vmatpush.msra.mxu0 0.0
  %4344 = vmatpush.msra.mxu0 0.0
  %4345 = vmatpush.msra.mxu0 0.0
  %4346 = vmatpush.msra.mxu0 %v3574
  %4347 = vmatpush.msra.mxu0 %v3571
  %4348 = vmatpush.msra.mxu0 %v3568
  %4349 = vmatpush.msra.mxu0 %v3565
  %4350 = vmatpush.msra.mxu0 %v3562
  %4351 = vmatpush.msra.mxu0 %v3559
  %4352 = vmatpush.msra.mxu0 %v3556
  %4353 = vmatpush.msra.mxu0 %v3553
  %4354 = vmatmul.f32.gmra.mxu0 %v4243
  %v4355 = vpop.f32.mrf.mxu0
  %v4356 = vadd.f32 %v4147, %v4355
  %4357 = vmatmul.f32.gmra.mxu0 %v4246
  %v4358 = vpop.f32.mrf.mxu0
  %v4359 = vadd.f32 %v4150, %v4358
  %4360 = vmatmul.f32.gmra.mxu0 %v4249
  %v4361 = vpop.f32.mrf.mxu0
  %v4362 = vadd.f32 %v4153, %v4361
  %4363 = vmatmul.f32.gmra.mxu0 %v4252
  %v4364 = vpop.f32.mrf.mxu0
  %v4365 = vadd.f32 %v4156, %v4364
  %4366 = vmatmul.f32.gmra.mxu0 %v4255
  %v4367 = vpop.f32.mrf.mxu0
  %v4368 = vadd.f32 %v4159, %v4367
  %4369 = vmatmul.f32.gmra.mxu0 %v4258
  %v4370 = vpop.f32.mrf.mxu0
  %v4371 = vadd.f32 %v4162, %v4370
  %4372 = vmatmul.f32.gmra.mxu0 %v4261
  %v4373 = vpop.f32.mrf.mxu0
  %v4374 = vadd.f32 %v4165, %v4373
  %4375 = vmatmul.f32.gmra.mxu0 %v4264
  %v4376 = vpop.f32.mrf.mxu0
  %v4377 = vadd.f32 %v4168, %v4376
  %4378 = vmatmul.f32.gmra.mxu0 %v4267
  %v4379 = vpop.f32.mrf.mxu0
  %v4380 = vadd.f32 %v4171, %v4379
  %4381 = vmatmul.f32.gmra.mxu0 %v4270
  %v4382 = vpop.f32.mrf.mxu0
  %v4383 = vadd.f32 %v4174, %v4382
  %4384 = vmatmul.f32.gmra.mxu0 %v4273
  %v4385 = vpop.f32.mrf.mxu0
  %v4386 = vadd.f32 %v4177, %v4385
  %4387 = vmatmul.f32.gmra.mxu0 %v4276
  %v4388 = vpop.f32.mrf.mxu0
  %v4389 = vadd.f32 %v4180, %v4388
  %4390 = vmatmul.f32.gmra.mxu0 %v4279
  %v4391 = vpop.f32.mrf.mxu0
  %v4392 = vadd.f32 %v4183, %v4391
  %4393 = vmatmul.f32.gmra.mxu0 %v4282
  %v4394 = vpop.f32.mrf.mxu0
  %v4395 = vadd.f32 %v4186, %v4394
  %4396 = vmatmul.f32.gmra.mxu0 %v4285
  %v4397 = vpop.f32.mrf.mxu0
  %v4398 = vadd.f32 %v4189, %v4397
  %4399 = vmatmul.f32.gmra.mxu0 %v4288
  %v4400 = vpop.f32.mrf.mxu0
  %v4401 = vadd.f32 %v4192, %v4400
  %4402 = vmatmul.f32.gmra.mxu0 %v4291
  %v4403 = vpop.f32.mrf.mxu0
  %v4404 = vadd.f32 %v4195, %v4403
  %4405 = vmatmul.f32.gmra.mxu0 %v4294
  %v4406 = vpop.f32.mrf.mxu0
  %v4407 = vadd.f32 %v4198, %v4406
  %4408 = vmatmul.f32.gmra.mxu0 %v4297
  %v4409 = vpop.f32.mrf.mxu0
  %v4410 = vadd.f32 %v4201, %v4409
  %4411 = vmatmul.f32.gmra.mxu0 %v4300
  %v4412 = vpop.f32.mrf.mxu0
  %v4413 = vadd.f32 %v4204, %v4412
  %4414 = vmatmul.f32.gmra.mxu0 %v4303
  %v4415 = vpop.f32.mrf.mxu0
  %v4416 = vadd.f32 %v4207, %v4415
  %4417 = vmatmul.f32.gmra.mxu0 %v4306
  %v4418 = vpop.f32.mrf.mxu0
  %v4419 = vadd.f32 %v4210, %v4418
  %4420 = vmatmul.f32.gmra.mxu0 %v4309
  %v4421 = vpop.f32.mrf.mxu0
  %v4422 = vadd.f32 %v4213, %v4421
  %4423 = vmatmul.f32.gmra.mxu0 %v4312
  %v4424 = vpop.f32.mrf.mxu0
  %v4425 = vadd.f32 %v4216, %v4424
  %4426 = vmatmul.f32.gmra.mxu0 %v4315
  %v4427 = vpop.f32.mrf.mxu0
  %v4428 = vadd.f32 %v4219, %v4427
  %4429 = vmatmul.f32.gmra.mxu0 %v4318
  %v4430 = vpop.f32.mrf.mxu0
  %v4431 = vadd.f32 %v4222, %v4430
  %4432 = vmatmul.f32.gmra.mxu0 %v4321
  %v4433 = vpop.f32.mrf.mxu0
  %v4434 = vadd.f32 %v4225, %v4433
  %4435 = vmatmul.f32.gmra.mxu0 %v4324
  %v4436 = vpop.f32.mrf.mxu0
  %v4437 = vadd.f32 %v4228, %v4436
  %4438 = vmatmul.f32.gmra.mxu0 %v4327
  %v4439 = vpop.f32.mrf.mxu0
  %v4440 = vadd.f32 %v4231, %v4439
  %4441 = vmatmul.f32.gmra.mxu0 %v4330
  %v4442 = vpop.f32.mrf.mxu0
  %v4443 = vadd.f32 %v4234, %v4442
  %4444 = vmatmul.f32.gmra.mxu0 %v4333
  %v4445 = vpop.f32.mrf.mxu0
  %v4446 = vadd.f32 %v4237, %v4445
  %4447 = vmatmul.f32.gmra.mxu0 %v4336
  %v4448 = vpop.f32.mrf.mxu0
  %v4449 = vadd.f32 %v4240, %v4448
  %4450 = vdwg.mxu0
  %s4451 = scalar_lea.vmem %s10, 256
  %v4452 = vld [vmem:[%s4451] sm:$0xf]
  %v4453 = vld [vmem:[%s4451 + $0x4] sm:$0xf]
  %v4454 = vld [vmem:[%s4451 + $0x8] sm:$0xf]
  %v4455 = vld [vmem:[%s4451 + $0xc] sm:$0xf]
  %v4456 = vld [vmem:[%s4451 + $0x10] sm:$0xf]
  %v4457 = vld [vmem:[%s4451 + $0x14] sm:$0xf]
  %v4458 = vld [vmem:[%s4451 + $0x18] sm:$0xf]
  %v4459 = vld [vmem:[%s4451 + $0x1c] sm:$0xf]
  %v4460 = vld [vmem:[%s4451 + $0x20] sm:$0xf]
  %v4461 = vld [vmem:[%s4451 + $0x24] sm:$0xf]
  %v4462 = vld [vmem:[%s4451 + $0x28] sm:$0xf]
  %v4463 = vld [vmem:[%s4451 + $0x2c] sm:$0xf]
  %v4464 = vld [vmem:[%s4451 + $0x30] sm:$0xf]
  %v4465 = vld [vmem:[%s4451 + $0x34] sm:$0xf]
  %v4466 = vld [vmem:[%s4451 + $0x38] sm:$0xf]
  %v4467 = vld [vmem:[%s4451 + $0x3c] sm:$0xf]
  %v4468 = vld [vmem:[%s4451 + $0x40] sm:$0xf]
  %v4469 = vld [vmem:[%s4451 + $0x44] sm:$0xf]
  %v4470 = vld [vmem:[%s4451 + $0x48] sm:$0xf]
  %v4471 = vld [vmem:[%s4451 + $0x4c] sm:$0xf]
  %v4472 = vld [vmem:[%s4451 + $0x50] sm:$0xf]
  %v4473 = vld [vmem:[%s4451 + $0x54] sm:$0xf]
  %v4474 = vld [vmem:[%s4451 + $0x58] sm:$0xf]
  %v4475 = vld [vmem:[%s4451 + $0x5c] sm:$0xf]
  %v4476 = vld [vmem:[%s4451 + $0x60] sm:$0xf]
  %v4477 = vld [vmem:[%s4451 + $0x64] sm:$0xf]
  %v4478 = vld [vmem:[%s4451 + $0x68] sm:$0xf]
  %v4479 = vld [vmem:[%s4451 + $0x6c] sm:$0xf]
  %v4480 = vld [vmem:[%s4451 + $0x70] sm:$0xf]
  %v4481 = vld [vmem:[%s4451 + $0x74] sm:$0xf]
  %v4482 = vld [vmem:[%s4451 + $0x78] sm:$0xf]
  %v4483 = vld [vmem:[%s4451 + $0x7c] sm:$0xf]
  %v4484 = vunpack.c.l.bf16 %v4452
  %v4485 = vunpack.c.l.bf16 %v4453
  %v4486 = vunpack.c.l.bf16 %v4454
  %v4487 = vunpack.c.l.bf16 %v4455
  %v4488 = vunpack.c.l.bf16 %v4456
  %v4489 = vunpack.c.l.bf16 %v4457
  %v4490 = vunpack.c.l.bf16 %v4458
  %v4491 = vunpack.c.l.bf16 %v4459
  %v4492 = vunpack.c.l.bf16 %v4460
  %v4493 = vunpack.c.l.bf16 %v4461
  %v4494 = vunpack.c.l.bf16 %v4462
  %v4495 = vunpack.c.l.bf16 %v4463
  %v4496 = vunpack.c.l.bf16 %v4464
  %v4497 = vunpack.c.l.bf16 %v4465
  %v4498 = vunpack.c.l.bf16 %v4466
  %v4499 = vunpack.c.l.bf16 %v4467
  %v4500 = vunpack.c.l.bf16 %v4468
  %v4501 = vunpack.c.l.bf16 %v4469
  %v4502 = vunpack.c.l.bf16 %v4470
  %v4503 = vunpack.c.l.bf16 %v4471
  %v4504 = vunpack.c.l.bf16 %v4472
  %v4505 = vunpack.c.l.bf16 %v4473
  %v4506 = vunpack.c.l.bf16 %v4474
  %v4507 = vunpack.c.l.bf16 %v4475
  %v4508 = vunpack.c.l.bf16 %v4476
  %v4509 = vunpack.c.l.bf16 %v4477
  %v4510 = vunpack.c.l.bf16 %v4478
  %v4511 = vunpack.c.l.bf16 %v4479
  %v4512 = vunpack.c.l.bf16 %v4480
  %v4513 = vunpack.c.l.bf16 %v4481
  %v4514 = vunpack.c.l.bf16 %v4482
  %v4515 = vunpack.c.l.bf16 %v4483
  %v4517 = vsel %vm1567, %v4484, 0
  %v4520 = vsel %vm1567, %v4485, 0
  %v4523 = vsel %vm1567, %v4486, 0
  %v4526 = vsel %vm1567, %v4487, 0
  %v4529 = vsel %vm1567, %v4488, 0
  %v4532 = vsel %vm1567, %v4489, 0
  %v4535 = vsel %vm1567, %v4490, 0
  %v4538 = vsel %vm1567, %v4491, 0
  %v4541 = vsel %vm1567, %v4492, 0
  %v4544 = vsel %vm1567, %v4493, 0
  %v4547 = vsel %vm1567, %v4494, 0
  %v4550 = vsel %vm1567, %v4495, 0
  %v4553 = vsel %vm1567, %v4496, 0
  %v4556 = vsel %vm1567, %v4497, 0
  %v4559 = vsel %vm1567, %v4498, 0
  %v4562 = vsel %vm1567, %v4499, 0
  %v4565 = vsel %vm1567, %v4500, 0
  %v4568 = vsel %vm1567, %v4501, 0
  %v4571 = vsel %vm1567, %v4502, 0
  %v4574 = vsel %vm1567, %v4503, 0
  %v4577 = vsel %vm1567, %v4504, 0
  %v4580 = vsel %vm1567, %v4505, 0
  %v4583 = vsel %vm1567, %v4506, 0
  %v4586 = vsel %vm1567, %v4507, 0
  %v4589 = vsel %vm1567, %v4508, 0
  %v4592 = vsel %vm1567, %v4509, 0
  %v4595 = vsel %vm1567, %v4510, 0
  %v4598 = vsel %vm1567, %v4511, 0
  %v4601 = vsel %vm1567, %v4512, 0
  %v4604 = vsel %vm1567, %v4513, 0
  %v4607 = vsel %vm1567, %v4514, 0
  %v4610 = vsel %vm1567, %v4515, 0
  %4612 = vmatpush.msra.mxu0 0.0
  %4613 = vmatpush.msra.mxu0 0.0
  %4614 = vmatpush.msra.mxu0 0.0
  %4615 = vmatpush.msra.mxu0 0.0
  %4616 = vmatpush.msra.mxu0 0.0
  %4617 = vmatpush.msra.mxu0 0.0
  %4618 = vmatpush.msra.mxu0 0.0
  %4619 = vmatpush.msra.mxu0 0.0
  %4620 = vmatpush.msra.mxu0 %v3656
  %4621 = vmatpush.msra.mxu0 %v3653
  %4622 = vmatpush.msra.mxu0 %v3650
  %4623 = vmatpush.msra.mxu0 %v3647
  %4624 = vmatpush.msra.mxu0 %v3644
  %4625 = vmatpush.msra.mxu0 %v3641
  %4626 = vmatpush.msra.mxu0 %v3638
  %4627 = vmatpush.msra.mxu0 %v3635
  %4628 = vmatmul.f32.gmra.mxu0 %v4517
  %v4629 = vpop.f32.mrf.mxu0
  %v4630 = vadd.f32 0.0, %v4629
  %4631 = vmatmul.f32.gmra.mxu0 %v4520
  %v4632 = vpop.f32.mrf.mxu0
  %v4633 = vadd.f32 0.0, %v4632
  %4634 = vmatmul.f32.gmra.mxu0 %v4523
  %v4635 = vpop.f32.mrf.mxu0
  %v4636 = vadd.f32 0.0, %v4635
  %4637 = vmatmul.f32.gmra.mxu0 %v4526
  %v4638 = vpop.f32.mrf.mxu0
  %v4639 = vadd.f32 0.0, %v4638
  %4640 = vmatmul.f32.gmra.mxu0 %v4529
  %v4641 = vpop.f32.mrf.mxu0
  %v4642 = vadd.f32 0.0, %v4641
  %4643 = vmatmul.f32.gmra.mxu0 %v4532
  %v4644 = vpop.f32.mrf.mxu0
  %v4645 = vadd.f32 0.0, %v4644
  %4646 = vmatmul.f32.gmra.mxu0 %v4535
  %v4647 = vpop.f32.mrf.mxu0
  %v4648 = vadd.f32 0.0, %v4647
  %4649 = vmatmul.f32.gmra.mxu0 %v4538
  %v4650 = vpop.f32.mrf.mxu0
  %v4651 = vadd.f32 0.0, %v4650
  %4652 = vmatmul.f32.gmra.mxu0 %v4541
  %v4653 = vpop.f32.mrf.mxu0
  %v4654 = vadd.f32 0.0, %v4653
  %4655 = vmatmul.f32.gmra.mxu0 %v4544
  %v4656 = vpop.f32.mrf.mxu0
  %v4657 = vadd.f32 0.0, %v4656
  %4658 = vmatmul.f32.gmra.mxu0 %v4547
  %v4659 = vpop.f32.mrf.mxu0
  %v4660 = vadd.f32 0.0, %v4659
  %4661 = vmatmul.f32.gmra.mxu0 %v4550
  %v4662 = vpop.f32.mrf.mxu0
  %v4663 = vadd.f32 0.0, %v4662
  %4664 = vmatmul.f32.gmra.mxu0 %v4553
  %v4665 = vpop.f32.mrf.mxu0
  %v4666 = vadd.f32 0.0, %v4665
  %4667 = vmatmul.f32.gmra.mxu0 %v4556
  %v4668 = vpop.f32.mrf.mxu0
  %v4669 = vadd.f32 0.0, %v4668
  %4670 = vmatmul.f32.gmra.mxu0 %v4559
  %v4671 = vpop.f32.mrf.mxu0
  %v4672 = vadd.f32 0.0, %v4671
  %4673 = vmatmul.f32.gmra.mxu0 %v4562
  %v4674 = vpop.f32.mrf.mxu0
  %v4675 = vadd.f32 0.0, %v4674
  %4676 = vmatmul.f32.gmra.mxu0 %v4565
  %v4677 = vpop.f32.mrf.mxu0
  %v4678 = vadd.f32 0.0, %v4677
  %4679 = vmatmul.f32.gmra.mxu0 %v4568
  %v4680 = vpop.f32.mrf.mxu0
  %v4681 = vadd.f32 0.0, %v4680
  %4682 = vmatmul.f32.gmra.mxu0 %v4571
  %v4683 = vpop.f32.mrf.mxu0
  %v4684 = vadd.f32 0.0, %v4683
  %4685 = vmatmul.f32.gmra.mxu0 %v4574
  %v4686 = vpop.f32.mrf.mxu0
  %v4687 = vadd.f32 0.0, %v4686
  %4688 = vmatmul.f32.gmra.mxu0 %v4577
  %v4689 = vpop.f32.mrf.mxu0
  %v4690 = vadd.f32 0.0, %v4689
  %4691 = vmatmul.f32.gmra.mxu0 %v4580
  %v4692 = vpop.f32.mrf.mxu0
  %v4693 = vadd.f32 0.0, %v4692
  %4694 = vmatmul.f32.gmra.mxu0 %v4583
  %v4695 = vpop.f32.mrf.mxu0
  %v4696 = vadd.f32 0.0, %v4695
  %4697 = vmatmul.f32.gmra.mxu0 %v4586
  %v4698 = vpop.f32.mrf.mxu0
  %v4699 = vadd.f32 0.0, %v4698
  %4700 = vmatmul.f32.gmra.mxu0 %v4589
  %v4701 = vpop.f32.mrf.mxu0
  %v4702 = vadd.f32 0.0, %v4701
  %4703 = vmatmul.f32.gmra.mxu0 %v4592
  %v4704 = vpop.f32.mrf.mxu0
  %v4705 = vadd.f32 0.0, %v4704
  %4706 = vmatmul.f32.gmra.mxu0 %v4595
  %v4707 = vpop.f32.mrf.mxu0
  %v4708 = vadd.f32 0.0, %v4707
  %4709 = vmatmul.f32.gmra.mxu0 %v4598
  %v4710 = vpop.f32.mrf.mxu0
  %v4711 = vadd.f32 0.0, %v4710
  %4712 = vmatmul.f32.gmra.mxu0 %v4601
  %v4713 = vpop.f32.mrf.mxu0
  %v4714 = vadd.f32 0.0, %v4713
  %4715 = vmatmul.f32.gmra.mxu0 %v4604
  %v4716 = vpop.f32.mrf.mxu0
  %v4717 = vadd.f32 0.0, %v4716
  %4718 = vmatmul.f32.gmra.mxu0 %v4607
  %v4719 = vpop.f32.mrf.mxu0
  %v4720 = vadd.f32 0.0, %v4719
  %4721 = vmatmul.f32.gmra.mxu0 %v4610
  %v4722 = vpop.f32.mrf.mxu0
  %v4723 = vadd.f32 0.0, %v4722
  %4724 = vdwg.mxu0
  %v4725 = vadd.f32 %v4356, %v4630
  %v4726 = vadd.f32 %v4359, %v4633
  %v4727 = vadd.f32 %v4362, %v4636
  %v4728 = vadd.f32 %v4365, %v4639
  %v4729 = vadd.f32 %v4368, %v4642
  %v4730 = vadd.f32 %v4371, %v4645
  %v4731 = vadd.f32 %v4374, %v4648
  %v4732 = vadd.f32 %v4377, %v4651
  %v4733 = vadd.f32 %v4380, %v4654
  %v4734 = vadd.f32 %v4383, %v4657
  %v4735 = vadd.f32 %v4386, %v4660
  %v4736 = vadd.f32 %v4389, %v4663
  %v4737 = vadd.f32 %v4392, %v4666
  %v4738 = vadd.f32 %v4395, %v4669
  %v4739 = vadd.f32 %v4398, %v4672
  %v4740 = vadd.f32 %v4401, %v4675
  %v4741 = vadd.f32 %v4404, %v4678
  %v4742 = vadd.f32 %v4407, %v4681
  %v4743 = vadd.f32 %v4410, %v4684
  %v4744 = vadd.f32 %v4413, %v4687
  %v4745 = vadd.f32 %v4416, %v4690
  %v4746 = vadd.f32 %v4419, %v4693
  %v4747 = vadd.f32 %v4422, %v4696
  %v4748 = vadd.f32 %v4425, %v4699
  %v4749 = vadd.f32 %v4428, %v4702
  %v4750 = vadd.f32 %v4431, %v4705
  %v4751 = vadd.f32 %v4434, %v4708
  %v4752 = vadd.f32 %v4437, %v4711
  %v4753 = vadd.f32 %v4440, %v4714
  %v4754 = vadd.f32 %v4443, %v4717
  %v4755 = vadd.f32 %v4446, %v4720
  %v4756 = vadd.f32 %v4449, %v4723
  %s4757 = scalar_lea.vmem %s10, 384
  %v4758 = vld [vmem:[%s4757] sm:$0xf]
  %v4759 = vld [vmem:[%s4757 + $0x4] sm:$0xf]
  %v4760 = vld [vmem:[%s4757 + $0x8] sm:$0xf]
  %v4761 = vld [vmem:[%s4757 + $0xc] sm:$0xf]
  %v4762 = vld [vmem:[%s4757 + $0x10] sm:$0xf]
  %v4763 = vld [vmem:[%s4757 + $0x14] sm:$0xf]
  %v4764 = vld [vmem:[%s4757 + $0x18] sm:$0xf]
  %v4765 = vld [vmem:[%s4757 + $0x1c] sm:$0xf]
  %v4766 = vld [vmem:[%s4757 + $0x20] sm:$0xf]
  %v4767 = vld [vmem:[%s4757 + $0x24] sm:$0xf]
  %v4768 = vld [vmem:[%s4757 + $0x28] sm:$0xf]
  %v4769 = vld [vmem:[%s4757 + $0x2c] sm:$0xf]
  %v4770 = vld [vmem:[%s4757 + $0x30] sm:$0xf]
  %v4771 = vld [vmem:[%s4757 + $0x34] sm:$0xf]
  %v4772 = vld [vmem:[%s4757 + $0x38] sm:$0xf]
  %v4773 = vld [vmem:[%s4757 + $0x3c] sm:$0xf]
  %v4774 = vld [vmem:[%s4757 + $0x40] sm:$0xf]
  %v4775 = vld [vmem:[%s4757 + $0x44] sm:$0xf]
  %v4776 = vld [vmem:[%s4757 + $0x48] sm:$0xf]
  %v4777 = vld [vmem:[%s4757 + $0x4c] sm:$0xf]
  %v4778 = vld [vmem:[%s4757 + $0x50] sm:$0xf]
  %v4779 = vld [vmem:[%s4757 + $0x54] sm:$0xf]
  %v4780 = vld [vmem:[%s4757 + $0x58] sm:$0xf]
  %v4781 = vld [vmem:[%s4757 + $0x5c] sm:$0xf]
  %v4782 = vld [vmem:[%s4757 + $0x60] sm:$0xf]
  %v4783 = vld [vmem:[%s4757 + $0x64] sm:$0xf]
  %v4784 = vld [vmem:[%s4757 + $0x68] sm:$0xf]
  %v4785 = vld [vmem:[%s4757 + $0x6c] sm:$0xf]
  %v4786 = vld [vmem:[%s4757 + $0x70] sm:$0xf]
  %v4787 = vld [vmem:[%s4757 + $0x74] sm:$0xf]
  %v4788 = vld [vmem:[%s4757 + $0x78] sm:$0xf]
  %v4789 = vld [vmem:[%s4757 + $0x7c] sm:$0xf]
  %v4790 = vunpack.c.l.bf16 %v4758
  %v4791 = vunpack.c.l.bf16 %v4759
  %v4792 = vunpack.c.l.bf16 %v4760
  %v4793 = vunpack.c.l.bf16 %v4761
  %v4794 = vunpack.c.l.bf16 %v4762
  %v4795 = vunpack.c.l.bf16 %v4763
  %v4796 = vunpack.c.l.bf16 %v4764
  %v4797 = vunpack.c.l.bf16 %v4765
  %v4798 = vunpack.c.l.bf16 %v4766
  %v4799 = vunpack.c.l.bf16 %v4767
  %v4800 = vunpack.c.l.bf16 %v4768
  %v4801 = vunpack.c.l.bf16 %v4769
  %v4802 = vunpack.c.l.bf16 %v4770
  %v4803 = vunpack.c.l.bf16 %v4771
  %v4804 = vunpack.c.l.bf16 %v4772
  %v4805 = vunpack.c.l.bf16 %v4773
  %v4806 = vunpack.c.l.bf16 %v4774
  %v4807 = vunpack.c.l.bf16 %v4775
  %v4808 = vunpack.c.l.bf16 %v4776
  %v4809 = vunpack.c.l.bf16 %v4777
  %v4810 = vunpack.c.l.bf16 %v4778
  %v4811 = vunpack.c.l.bf16 %v4779
  %v4812 = vunpack.c.l.bf16 %v4780
  %v4813 = vunpack.c.l.bf16 %v4781
  %v4814 = vunpack.c.l.bf16 %v4782
  %v4815 = vunpack.c.l.bf16 %v4783
  %v4816 = vunpack.c.l.bf16 %v4784
  %v4817 = vunpack.c.l.bf16 %v4785
  %v4818 = vunpack.c.l.bf16 %v4786
  %v4819 = vunpack.c.l.bf16 %v4787
  %v4820 = vunpack.c.l.bf16 %v4788
  %v4821 = vunpack.c.l.bf16 %v4789
  %v4823 = vsel %vm1567, %v4790, 0
  %v4826 = vsel %vm1567, %v4791, 0
  %v4829 = vsel %vm1567, %v4792, 0
  %v4832 = vsel %vm1567, %v4793, 0
  %v4835 = vsel %vm1567, %v4794, 0
  %v4838 = vsel %vm1567, %v4795, 0
  %v4841 = vsel %vm1567, %v4796, 0
  %v4844 = vsel %vm1567, %v4797, 0
  %v4847 = vsel %vm1567, %v4798, 0
  %v4850 = vsel %vm1567, %v4799, 0
  %v4853 = vsel %vm1567, %v4800, 0
  %v4856 = vsel %vm1567, %v4801, 0
  %v4859 = vsel %vm1567, %v4802, 0
  %v4862 = vsel %vm1567, %v4803, 0
  %v4865 = vsel %vm1567, %v4804, 0
  %v4868 = vsel %vm1567, %v4805, 0
  %v4871 = vsel %vm1567, %v4806, 0
  %v4874 = vsel %vm1567, %v4807, 0
  %v4877 = vsel %vm1567, %v4808, 0
  %v4880 = vsel %vm1567, %v4809, 0
  %v4883 = vsel %vm1567, %v4810, 0
  %v4886 = vsel %vm1567, %v4811, 0
  %v4889 = vsel %vm1567, %v4812, 0
  %v4892 = vsel %vm1567, %v4813, 0
  %v4895 = vsel %vm1567, %v4814, 0
  %v4898 = vsel %vm1567, %v4815, 0
  %v4901 = vsel %vm1567, %v4816, 0
  %v4904 = vsel %vm1567, %v4817, 0
  %v4907 = vsel %vm1567, %v4818, 0
  %v4910 = vsel %vm1567, %v4819, 0
  %v4913 = vsel %vm1567, %v4820, 0
  %v4916 = vsel %vm1567, %v4821, 0
  %4918 = vmatpush.msra.mxu0 0.0
  %4919 = vmatpush.msra.mxu0 0.0
  %4920 = vmatpush.msra.mxu0 0.0
  %4921 = vmatpush.msra.mxu0 0.0
  %4922 = vmatpush.msra.mxu0 0.0
  %4923 = vmatpush.msra.mxu0 0.0
  %4924 = vmatpush.msra.mxu0 0.0
  %4925 = vmatpush.msra.mxu0 0.0
  %4926 = vmatpush.msra.mxu0 %v3697
  %4927 = vmatpush.msra.mxu0 %v3694
  %4928 = vmatpush.msra.mxu0 %v3691
  %4929 = vmatpush.msra.mxu0 %v3688
  %4930 = vmatpush.msra.mxu0 %v3685
  %4931 = vmatpush.msra.mxu0 %v3682
  %4932 = vmatpush.msra.mxu0 %v3679
  %4933 = vmatpush.msra.mxu0 %v3676
  %4934 = vmatmul.f32.gmra.mxu0 %v4823
  %v4935 = vpop.f32.mrf.mxu0
  %v4936 = vadd.f32 0.0, %v4935
  %4937 = vmatmul.f32.gmra.mxu0 %v4826
  %v4938 = vpop.f32.mrf.mxu0
  %v4939 = vadd.f32 0.0, %v4938
  %4940 = vmatmul.f32.gmra.mxu0 %v4829
  %v4941 = vpop.f32.mrf.mxu0
  %v4942 = vadd.f32 0.0, %v4941
  %4943 = vmatmul.f32.gmra.mxu0 %v4832
  %v4944 = vpop.f32.mrf.mxu0
  %v4945 = vadd.f32 0.0, %v4944
  %4946 = vmatmul.f32.gmra.mxu0 %v4835
  %v4947 = vpop.f32.mrf.mxu0
  %v4948 = vadd.f32 0.0, %v4947
  %4949 = vmatmul.f32.gmra.mxu0 %v4838
  %v4950 = vpop.f32.mrf.mxu0
  %v4951 = vadd.f32 0.0, %v4950
  %4952 = vmatmul.f32.gmra.mxu0 %v4841
  %v4953 = vpop.f32.mrf.mxu0
  %v4954 = vadd.f32 0.0, %v4953
  %4955 = vmatmul.f32.gmra.mxu0 %v4844
  %v4956 = vpop.f32.mrf.mxu0
  %v4957 = vadd.f32 0.0, %v4956
  %4958 = vmatmul.f32.gmra.mxu0 %v4847
  %v4959 = vpop.f32.mrf.mxu0
  %v4960 = vadd.f32 0.0, %v4959
  %4961 = vmatmul.f32.gmra.mxu0 %v4850
  %v4962 = vpop.f32.mrf.mxu0
  %v4963 = vadd.f32 0.0, %v4962
  %4964 = vmatmul.f32.gmra.mxu0 %v4853
  %v4965 = vpop.f32.mrf.mxu0
  %v4966 = vadd.f32 0.0, %v4965
  %4967 = vmatmul.f32.gmra.mxu0 %v4856
  %v4968 = vpop.f32.mrf.mxu0
  %v4969 = vadd.f32 0.0, %v4968
  %4970 = vmatmul.f32.gmra.mxu0 %v4859
  %v4971 = vpop.f32.mrf.mxu0
  %v4972 = vadd.f32 0.0, %v4971
  %4973 = vmatmul.f32.gmra.mxu0 %v4862
  %v4974 = vpop.f32.mrf.mxu0
  %v4975 = vadd.f32 0.0, %v4974
  %4976 = vmatmul.f32.gmra.mxu0 %v4865
  %v4977 = vpop.f32.mrf.mxu0
  %v4978 = vadd.f32 0.0, %v4977
  %4979 = vmatmul.f32.gmra.mxu0 %v4868
  %v4980 = vpop.f32.mrf.mxu0
  %v4981 = vadd.f32 0.0, %v4980
  %4982 = vmatmul.f32.gmra.mxu0 %v4871
  %v4983 = vpop.f32.mrf.mxu0
  %v4984 = vadd.f32 0.0, %v4983
  %4985 = vmatmul.f32.gmra.mxu0 %v4874
  %v4986 = vpop.f32.mrf.mxu0
  %v4987 = vadd.f32 0.0, %v4986
  %4988 = vmatmul.f32.gmra.mxu0 %v4877
  %v4989 = vpop.f32.mrf.mxu0
  %v4990 = vadd.f32 0.0, %v4989
  %4991 = vmatmul.f32.gmra.mxu0 %v4880
  %v4992 = vpop.f32.mrf.mxu0
  %v4993 = vadd.f32 0.0, %v4992
  %4994 = vmatmul.f32.gmra.mxu0 %v4883
  %v4995 = vpop.f32.mrf.mxu0
  %v4996 = vadd.f32 0.0, %v4995
  %4997 = vmatmul.f32.gmra.mxu0 %v4886
  %v4998 = vpop.f32.mrf.mxu0
  %v4999 = vadd.f32 0.0, %v4998
  %5000 = vmatmul.f32.gmra.mxu0 %v4889
  %v5001 = vpop.f32.mrf.mxu0
  %v5002 = vadd.f32 0.0, %v5001
  %5003 = vmatmul.f32.gmra.mxu0 %v4892
  %v5004 = vpop.f32.mrf.mxu0
  %v5005 = vadd.f32 0.0, %v5004
  %5006 = vmatmul.f32.gmra.mxu0 %v4895
  %v5007 = vpop.f32.mrf.mxu0
  %v5008 = vadd.f32 0.0, %v5007
  %5009 = vmatmul.f32.gmra.mxu0 %v4898
  %v5010 = vpop.f32.mrf.mxu0
  %v5011 = vadd.f32 0.0, %v5010
  %5012 = vmatmul.f32.gmra.mxu0 %v4901
  %v5013 = vpop.f32.mrf.mxu0
  %v5014 = vadd.f32 0.0, %v5013
  %5015 = vmatmul.f32.gmra.mxu0 %v4904
  %v5016 = vpop.f32.mrf.mxu0
  %v5017 = vadd.f32 0.0, %v5016
  %5018 = vmatmul.f32.gmra.mxu0 %v4907
  %v5019 = vpop.f32.mrf.mxu0
  %v5020 = vadd.f32 0.0, %v5019
  %5021 = vmatmul.f32.gmra.mxu0 %v4910
  %v5022 = vpop.f32.mrf.mxu0
  %v5023 = vadd.f32 0.0, %v5022
  %5024 = vmatmul.f32.gmra.mxu0 %v4913
  %v5025 = vpop.f32.mrf.mxu0
  %v5026 = vadd.f32 0.0, %v5025
  %5027 = vmatmul.f32.gmra.mxu0 %v4916
  %v5028 = vpop.f32.mrf.mxu0
  %v5029 = vadd.f32 0.0, %v5028
  %5030 = vdwg.mxu0
  %v5031 = vadd.f32 %v4725, %v4936
  %v5032 = vadd.f32 %v4726, %v4939
  %v5033 = vadd.f32 %v4727, %v4942
  %v5034 = vadd.f32 %v4728, %v4945
  %v5035 = vadd.f32 %v4729, %v4948
  %v5036 = vadd.f32 %v4730, %v4951
  %v5037 = vadd.f32 %v4731, %v4954
  %v5038 = vadd.f32 %v4732, %v4957
  %v5039 = vadd.f32 %v4733, %v4960
  %v5040 = vadd.f32 %v4734, %v4963
  %v5041 = vadd.f32 %v4735, %v4966
  %v5042 = vadd.f32 %v4736, %v4969
  %v5043 = vadd.f32 %v4737, %v4972
  %v5044 = vadd.f32 %v4738, %v4975
  %v5045 = vadd.f32 %v4739, %v4978
  %v5046 = vadd.f32 %v4740, %v4981
  %v5047 = vadd.f32 %v4741, %v4984
  %v5048 = vadd.f32 %v4742, %v4987
  %v5049 = vadd.f32 %v4743, %v4990
  %v5050 = vadd.f32 %v4744, %v4993
  %v5051 = vadd.f32 %v4745, %v4996
  %v5052 = vadd.f32 %v4746, %v4999
  %v5053 = vadd.f32 %v4747, %v5002
  %v5054 = vadd.f32 %v4748, %v5005
  %v5055 = vadd.f32 %v4749, %v5008
  %v5056 = vadd.f32 %v4750, %v5011
  %v5057 = vadd.f32 %v4751, %v5014
  %v5058 = vadd.f32 %v4752, %v5017
  %v5059 = vadd.f32 %v4753, %v5020
  %v5060 = vadd.f32 %v4754, %v5023
  %v5061 = vadd.f32 %v4755, %v5026
  %v5062 = vadd.f32 %v4756, %v5029
  %s5063 = scalar_lea.vmem %s10, 512
  %v5064 = vld [vmem:[%s5063] sm:$0xf]
  %v5065 = vld [vmem:[%s5063 + $0x4] sm:$0xf]
  %v5066 = vld [vmem:[%s5063 + $0x8] sm:$0xf]
  %v5067 = vld [vmem:[%s5063 + $0xc] sm:$0xf]
  %v5068 = vld [vmem:[%s5063 + $0x10] sm:$0xf]
  %v5069 = vld [vmem:[%s5063 + $0x14] sm:$0xf]
  %v5070 = vld [vmem:[%s5063 + $0x18] sm:$0xf]
  %v5071 = vld [vmem:[%s5063 + $0x1c] sm:$0xf]
  %v5072 = vld [vmem:[%s5063 + $0x20] sm:$0xf]
  %v5073 = vld [vmem:[%s5063 + $0x24] sm:$0xf]
  %v5074 = vld [vmem:[%s5063 + $0x28] sm:$0xf]
  %v5075 = vld [vmem:[%s5063 + $0x2c] sm:$0xf]
  %v5076 = vld [vmem:[%s5063 + $0x30] sm:$0xf]
  %v5077 = vld [vmem:[%s5063 + $0x34] sm:$0xf]
  %v5078 = vld [vmem:[%s5063 + $0x38] sm:$0xf]
  %v5079 = vld [vmem:[%s5063 + $0x3c] sm:$0xf]
  %v5080 = vld [vmem:[%s5063 + $0x40] sm:$0xf]
  %v5081 = vld [vmem:[%s5063 + $0x44] sm:$0xf]
  %v5082 = vld [vmem:[%s5063 + $0x48] sm:$0xf]
  %v5083 = vld [vmem:[%s5063 + $0x4c] sm:$0xf]
  %v5084 = vld [vmem:[%s5063 + $0x50] sm:$0xf]
  %v5085 = vld [vmem:[%s5063 + $0x54] sm:$0xf]
  %v5086 = vld [vmem:[%s5063 + $0x58] sm:$0xf]
  %v5087 = vld [vmem:[%s5063 + $0x5c] sm:$0xf]
  %v5088 = vld [vmem:[%s5063 + $0x60] sm:$0xf]
  %v5089 = vld [vmem:[%s5063 + $0x64] sm:$0xf]
  %v5090 = vld [vmem:[%s5063 + $0x68] sm:$0xf]
  %v5091 = vld [vmem:[%s5063 + $0x6c] sm:$0xf]
  %v5092 = vld [vmem:[%s5063 + $0x70] sm:$0xf]
  %v5093 = vld [vmem:[%s5063 + $0x74] sm:$0xf]
  %v5094 = vld [vmem:[%s5063 + $0x78] sm:$0xf]
  %v5095 = vld [vmem:[%s5063 + $0x7c] sm:$0xf]
  %v5096 = vunpack.c.l.bf16 %v5064
  %v5097 = vunpack.c.l.bf16 %v5065
  %v5098 = vunpack.c.l.bf16 %v5066
  %v5099 = vunpack.c.l.bf16 %v5067
  %v5100 = vunpack.c.l.bf16 %v5068
  %v5101 = vunpack.c.l.bf16 %v5069
  %v5102 = vunpack.c.l.bf16 %v5070
  %v5103 = vunpack.c.l.bf16 %v5071
  %v5104 = vunpack.c.l.bf16 %v5072
  %v5105 = vunpack.c.l.bf16 %v5073
  %v5106 = vunpack.c.l.bf16 %v5074
  %v5107 = vunpack.c.l.bf16 %v5075
  %v5108 = vunpack.c.l.bf16 %v5076
  %v5109 = vunpack.c.l.bf16 %v5077
  %v5110 = vunpack.c.l.bf16 %v5078
  %v5111 = vunpack.c.l.bf16 %v5079
  %v5112 = vunpack.c.l.bf16 %v5080
  %v5113 = vunpack.c.l.bf16 %v5081
  %v5114 = vunpack.c.l.bf16 %v5082
  %v5115 = vunpack.c.l.bf16 %v5083
  %v5116 = vunpack.c.l.bf16 %v5084
  %v5117 = vunpack.c.l.bf16 %v5085
  %v5118 = vunpack.c.l.bf16 %v5086
  %v5119 = vunpack.c.l.bf16 %v5087
  %v5120 = vunpack.c.l.bf16 %v5088
  %v5121 = vunpack.c.l.bf16 %v5089
  %v5122 = vunpack.c.l.bf16 %v5090
  %v5123 = vunpack.c.l.bf16 %v5091
  %v5124 = vunpack.c.l.bf16 %v5092
  %v5125 = vunpack.c.l.bf16 %v5093
  %v5126 = vunpack.c.l.bf16 %v5094
  %v5127 = vunpack.c.l.bf16 %v5095
  %v5129 = vsel %vm1567, %v5096, 0
  %v5132 = vsel %vm1567, %v5097, 0
  %v5135 = vsel %vm1567, %v5098, 0
  %v5138 = vsel %vm1567, %v5099, 0
  %v5141 = vsel %vm1567, %v5100, 0
  %v5144 = vsel %vm1567, %v5101, 0
  %v5147 = vsel %vm1567, %v5102, 0
  %v5150 = vsel %vm1567, %v5103, 0
  %v5153 = vsel %vm1567, %v5104, 0
  %v5156 = vsel %vm1567, %v5105, 0
  %v5159 = vsel %vm1567, %v5106, 0
  %v5162 = vsel %vm1567, %v5107, 0
  %v5165 = vsel %vm1567, %v5108, 0
  %v5168 = vsel %vm1567, %v5109, 0
  %v5171 = vsel %vm1567, %v5110, 0
  %v5174 = vsel %vm1567, %v5111, 0
  %v5177 = vsel %vm1567, %v5112, 0
  %v5180 = vsel %vm1567, %v5113, 0
  %v5183 = vsel %vm1567, %v5114, 0
  %v5186 = vsel %vm1567, %v5115, 0
  %v5189 = vsel %vm1567, %v5116, 0
  %v5192 = vsel %vm1567, %v5117, 0
  %v5195 = vsel %vm1567, %v5118, 0
  %v5198 = vsel %vm1567, %v5119, 0
  %v5201 = vsel %vm1567, %v5120, 0
  %v5204 = vsel %vm1567, %v5121, 0
  %v5207 = vsel %vm1567, %v5122, 0
  %v5210 = vsel %vm1567, %v5123, 0
  %v5213 = vsel %vm1567, %v5124, 0
  %v5216 = vsel %vm1567, %v5125, 0
  %v5219 = vsel %vm1567, %v5126, 0
  %v5222 = vsel %vm1567, %v5127, 0
  %5224 = vmatpush.msra.mxu0 0.0
  %5225 = vmatpush.msra.mxu0 0.0
  %5226 = vmatpush.msra.mxu0 0.0
  %5227 = vmatpush.msra.mxu0 0.0
  %5228 = vmatpush.msra.mxu0 0.0
  %5229 = vmatpush.msra.mxu0 0.0
  %5230 = vmatpush.msra.mxu0 0.0
  %5231 = vmatpush.msra.mxu0 0.0
  %5232 = vmatpush.msra.mxu0 %v3738
  %5233 = vmatpush.msra.mxu0 %v3735
  %5234 = vmatpush.msra.mxu0 %v3732
  %5235 = vmatpush.msra.mxu0 %v3729
  %5236 = vmatpush.msra.mxu0 %v3726
  %5237 = vmatpush.msra.mxu0 %v3723
  %5238 = vmatpush.msra.mxu0 %v3720
  %5239 = vmatpush.msra.mxu0 %v3717
  %5240 = vmatmul.f32.gmra.mxu0 %v5129
  %v5241 = vpop.f32.mrf.mxu0
  %v5242 = vadd.f32 0.0, %v5241
  %5243 = vmatmul.f32.gmra.mxu0 %v5132
  %v5244 = vpop.f32.mrf.mxu0
  %v5245 = vadd.f32 0.0, %v5244
  %5246 = vmatmul.f32.gmra.mxu0 %v5135
  %v5247 = vpop.f32.mrf.mxu0
  %v5248 = vadd.f32 0.0, %v5247
  %5249 = vmatmul.f32.gmra.mxu0 %v5138
  %v5250 = vpop.f32.mrf.mxu0
  %v5251 = vadd.f32 0.0, %v5250
  %5252 = vmatmul.f32.gmra.mxu0 %v5141
  %v5253 = vpop.f32.mrf.mxu0
  %v5254 = vadd.f32 0.0, %v5253
  %5255 = vmatmul.f32.gmra.mxu0 %v5144
  %v5256 = vpop.f32.mrf.mxu0
  %v5257 = vadd.f32 0.0, %v5256
  %5258 = vmatmul.f32.gmra.mxu0 %v5147
  %v5259 = vpop.f32.mrf.mxu0
  %v5260 = vadd.f32 0.0, %v5259
  %5261 = vmatmul.f32.gmra.mxu0 %v5150
  %v5262 = vpop.f32.mrf.mxu0
  %v5263 = vadd.f32 0.0, %v5262
  %5264 = vmatmul.f32.gmra.mxu0 %v5153
  %v5265 = vpop.f32.mrf.mxu0
  %v5266 = vadd.f32 0.0, %v5265
  %5267 = vmatmul.f32.gmra.mxu0 %v5156
  %v5268 = vpop.f32.mrf.mxu0
  %v5269 = vadd.f32 0.0, %v5268
  %5270 = vmatmul.f32.gmra.mxu0 %v5159
  %v5271 = vpop.f32.mrf.mxu0
  %v5272 = vadd.f32 0.0, %v5271
  %5273 = vmatmul.f32.gmra.mxu0 %v5162
  %v5274 = vpop.f32.mrf.mxu0
  %v5275 = vadd.f32 0.0, %v5274
  %5276 = vmatmul.f32.gmra.mxu0 %v5165
  %v5277 = vpop.f32.mrf.mxu0
  %v5278 = vadd.f32 0.0, %v5277
  %5279 = vmatmul.f32.gmra.mxu0 %v5168
  %v5280 = vpop.f32.mrf.mxu0
  %v5281 = vadd.f32 0.0, %v5280
  %5282 = vmatmul.f32.gmra.mxu0 %v5171
  %v5283 = vpop.f32.mrf.mxu0
  %v5284 = vadd.f32 0.0, %v5283
  %5285 = vmatmul.f32.gmra.mxu0 %v5174
  %v5286 = vpop.f32.mrf.mxu0
  %v5287 = vadd.f32 0.0, %v5286
  %5288 = vmatmul.f32.gmra.mxu0 %v5177
  %v5289 = vpop.f32.mrf.mxu0
  %v5290 = vadd.f32 0.0, %v5289
  %5291 = vmatmul.f32.gmra.mxu0 %v5180
  %v5292 = vpop.f32.mrf.mxu0
  %v5293 = vadd.f32 0.0, %v5292
  %5294 = vmatmul.f32.gmra.mxu0 %v5183
  %v5295 = vpop.f32.mrf.mxu0
  %v5296 = vadd.f32 0.0, %v5295
  %5297 = vmatmul.f32.gmra.mxu0 %v5186
  %v5298 = vpop.f32.mrf.mxu0
  %v5299 = vadd.f32 0.0, %v5298
  %5300 = vmatmul.f32.gmra.mxu0 %v5189
  %v5301 = vpop.f32.mrf.mxu0
  %v5302 = vadd.f32 0.0, %v5301
  %5303 = vmatmul.f32.gmra.mxu0 %v5192
  %v5304 = vpop.f32.mrf.mxu0
  %v5305 = vadd.f32 0.0, %v5304
  %5306 = vmatmul.f32.gmra.mxu0 %v5195
  %v5307 = vpop.f32.mrf.mxu0
  %v5308 = vadd.f32 0.0, %v5307
  %5309 = vmatmul.f32.gmra.mxu0 %v5198
  %v5310 = vpop.f32.mrf.mxu0
  %v5311 = vadd.f32 0.0, %v5310
  %5312 = vmatmul.f32.gmra.mxu0 %v5201
  %v5313 = vpop.f32.mrf.mxu0
  %v5314 = vadd.f32 0.0, %v5313
  %5315 = vmatmul.f32.gmra.mxu0 %v5204
  %v5316 = vpop.f32.mrf.mxu0
  %v5317 = vadd.f32 0.0, %v5316
  %5318 = vmatmul.f32.gmra.mxu0 %v5207
  %v5319 = vpop.f32.mrf.mxu0
  %v5320 = vadd.f32 0.0, %v5319
  %5321 = vmatmul.f32.gmra.mxu0 %v5210
  %v5322 = vpop.f32.mrf.mxu0
  %v5323 = vadd.f32 0.0, %v5322
  %5324 = vmatmul.f32.gmra.mxu0 %v5213
  %v5325 = vpop.f32.mrf.mxu0
  %v5326 = vadd.f32 0.0, %v5325
  %5327 = vmatmul.f32.gmra.mxu0 %v5216
  %v5328 = vpop.f32.mrf.mxu0
  %v5329 = vadd.f32 0.0, %v5328
  %5330 = vmatmul.f32.gmra.mxu0 %v5219
  %v5331 = vpop.f32.mrf.mxu0
  %v5332 = vadd.f32 0.0, %v5331
  %5333 = vmatmul.f32.gmra.mxu0 %v5222
  %v5334 = vpop.f32.mrf.mxu0
  %v5335 = vadd.f32 0.0, %v5334
  %5336 = vdwg.mxu0
  %v5337 = vadd.f32 %v5031, %v5242
  %v5338 = vadd.f32 %v5032, %v5245
  %v5339 = vadd.f32 %v5033, %v5248
  %v5340 = vadd.f32 %v5034, %v5251
  %v5341 = vadd.f32 %v5035, %v5254
  %v5342 = vadd.f32 %v5036, %v5257
  %v5343 = vadd.f32 %v5037, %v5260
  %v5344 = vadd.f32 %v5038, %v5263
  %v5345 = vadd.f32 %v5039, %v5266
  %v5346 = vadd.f32 %v5040, %v5269
  %v5347 = vadd.f32 %v5041, %v5272
  %v5348 = vadd.f32 %v5042, %v5275
  %v5349 = vadd.f32 %v5043, %v5278
  %v5350 = vadd.f32 %v5044, %v5281
  %v5351 = vadd.f32 %v5045, %v5284
  %v5352 = vadd.f32 %v5046, %v5287
  %v5353 = vadd.f32 %v5047, %v5290
  %v5354 = vadd.f32 %v5048, %v5293
  %v5355 = vadd.f32 %v5049, %v5296
  %v5356 = vadd.f32 %v5050, %v5299
  %v5357 = vadd.f32 %v5051, %v5302
  %v5358 = vadd.f32 %v5052, %v5305
  %v5359 = vadd.f32 %v5053, %v5308
  %v5360 = vadd.f32 %v5054, %v5311
  %v5361 = vadd.f32 %v5055, %v5314
  %v5362 = vadd.f32 %v5056, %v5317
  %v5363 = vadd.f32 %v5057, %v5320
  %v5364 = vadd.f32 %v5058, %v5323
  %v5365 = vadd.f32 %v5059, %v5326
  %v5366 = vadd.f32 %v5060, %v5329
  %v5367 = vadd.f32 %v5061, %v5332
  %v5368 = vadd.f32 %v5062, %v5335
  %s5369 = scalar_lea.vmem %s10, 640
  %v5370 = vld [vmem:[%s5369] sm:$0xf]
  %v5371 = vld [vmem:[%s5369 + $0x4] sm:$0xf]
  %v5372 = vld [vmem:[%s5369 + $0x8] sm:$0xf]
  %v5373 = vld [vmem:[%s5369 + $0xc] sm:$0xf]
  %v5374 = vld [vmem:[%s5369 + $0x10] sm:$0xf]
  %v5375 = vld [vmem:[%s5369 + $0x14] sm:$0xf]
  %v5376 = vld [vmem:[%s5369 + $0x18] sm:$0xf]
  %v5377 = vld [vmem:[%s5369 + $0x1c] sm:$0xf]
  %v5378 = vld [vmem:[%s5369 + $0x20] sm:$0xf]
  %v5379 = vld [vmem:[%s5369 + $0x24] sm:$0xf]
  %v5380 = vld [vmem:[%s5369 + $0x28] sm:$0xf]
  %v5381 = vld [vmem:[%s5369 + $0x2c] sm:$0xf]
  %v5382 = vld [vmem:[%s5369 + $0x30] sm:$0xf]
  %v5383 = vld [vmem:[%s5369 + $0x34] sm:$0xf]
  %v5384 = vld [vmem:[%s5369 + $0x38] sm:$0xf]
  %v5385 = vld [vmem:[%s5369 + $0x3c] sm:$0xf]
  %v5386 = vld [vmem:[%s5369 + $0x40] sm:$0xf]
  %v5387 = vld [vmem:[%s5369 + $0x44] sm:$0xf]
  %v5388 = vld [vmem:[%s5369 + $0x48] sm:$0xf]
  %v5389 = vld [vmem:[%s5369 + $0x4c] sm:$0xf]
  %v5390 = vld [vmem:[%s5369 + $0x50] sm:$0xf]
  %v5391 = vld [vmem:[%s5369 + $0x54] sm:$0xf]
  %v5392 = vld [vmem:[%s5369 + $0x58] sm:$0xf]
  %v5393 = vld [vmem:[%s5369 + $0x5c] sm:$0xf]
  %v5394 = vld [vmem:[%s5369 + $0x60] sm:$0xf]
  %v5395 = vld [vmem:[%s5369 + $0x64] sm:$0xf]
  %v5396 = vld [vmem:[%s5369 + $0x68] sm:$0xf]
  %v5397 = vld [vmem:[%s5369 + $0x6c] sm:$0xf]
  %v5398 = vld [vmem:[%s5369 + $0x70] sm:$0xf]
  %v5399 = vld [vmem:[%s5369 + $0x74] sm:$0xf]
  %v5400 = vld [vmem:[%s5369 + $0x78] sm:$0xf]
  %v5401 = vld [vmem:[%s5369 + $0x7c] sm:$0xf]
  %v5402 = vunpack.c.l.bf16 %v5370
  %v5403 = vunpack.c.l.bf16 %v5371
  %v5404 = vunpack.c.l.bf16 %v5372
  %v5405 = vunpack.c.l.bf16 %v5373
  %v5406 = vunpack.c.l.bf16 %v5374
  %v5407 = vunpack.c.l.bf16 %v5375
  %v5408 = vunpack.c.l.bf16 %v5376
  %v5409 = vunpack.c.l.bf16 %v5377
  %v5410 = vunpack.c.l.bf16 %v5378
  %v5411 = vunpack.c.l.bf16 %v5379
  %v5412 = vunpack.c.l.bf16 %v5380
  %v5413 = vunpack.c.l.bf16 %v5381
  %v5414 = vunpack.c.l.bf16 %v5382
  %v5415 = vunpack.c.l.bf16 %v5383
  %v5416 = vunpack.c.l.bf16 %v5384
  %v5417 = vunpack.c.l.bf16 %v5385
  %v5418 = vunpack.c.l.bf16 %v5386
  %v5419 = vunpack.c.l.bf16 %v5387
  %v5420 = vunpack.c.l.bf16 %v5388
  %v5421 = vunpack.c.l.bf16 %v5389
  %v5422 = vunpack.c.l.bf16 %v5390
  %v5423 = vunpack.c.l.bf16 %v5391
  %v5424 = vunpack.c.l.bf16 %v5392
  %v5425 = vunpack.c.l.bf16 %v5393
  %v5426 = vunpack.c.l.bf16 %v5394
  %v5427 = vunpack.c.l.bf16 %v5395
  %v5428 = vunpack.c.l.bf16 %v5396
  %v5429 = vunpack.c.l.bf16 %v5397
  %v5430 = vunpack.c.l.bf16 %v5398
  %v5431 = vunpack.c.l.bf16 %v5399
  %v5432 = vunpack.c.l.bf16 %v5400
  %v5433 = vunpack.c.l.bf16 %v5401
  %v5435 = vsel %vm1567, %v5402, 0
  %v5438 = vsel %vm1567, %v5403, 0
  %v5441 = vsel %vm1567, %v5404, 0
  %v5444 = vsel %vm1567, %v5405, 0
  %v5447 = vsel %vm1567, %v5406, 0
  %v5450 = vsel %vm1567, %v5407, 0
  %v5453 = vsel %vm1567, %v5408, 0
  %v5456 = vsel %vm1567, %v5409, 0
  %v5459 = vsel %vm1567, %v5410, 0
  %v5462 = vsel %vm1567, %v5411, 0
  %v5465 = vsel %vm1567, %v5412, 0
  %v5468 = vsel %vm1567, %v5413, 0
  %v5471 = vsel %vm1567, %v5414, 0
  %v5474 = vsel %vm1567, %v5415, 0
  %v5477 = vsel %vm1567, %v5416, 0
  %v5480 = vsel %vm1567, %v5417, 0
  %v5483 = vsel %vm1567, %v5418, 0
  %v5486 = vsel %vm1567, %v5419, 0
  %v5489 = vsel %vm1567, %v5420, 0
  %v5492 = vsel %vm1567, %v5421, 0
  %v5495 = vsel %vm1567, %v5422, 0
  %v5498 = vsel %vm1567, %v5423, 0
  %v5501 = vsel %vm1567, %v5424, 0
  %v5504 = vsel %vm1567, %v5425, 0
  %v5507 = vsel %vm1567, %v5426, 0
  %v5510 = vsel %vm1567, %v5427, 0
  %v5513 = vsel %vm1567, %v5428, 0
  %v5516 = vsel %vm1567, %v5429, 0
  %v5519 = vsel %vm1567, %v5430, 0
  %v5522 = vsel %vm1567, %v5431, 0
  %v5525 = vsel %vm1567, %v5432, 0
  %v5528 = vsel %vm1567, %v5433, 0
  %5530 = vmatpush.msra.mxu0 0.0
  %5531 = vmatpush.msra.mxu0 0.0
  %5532 = vmatpush.msra.mxu0 0.0
  %5533 = vmatpush.msra.mxu0 0.0
  %5534 = vmatpush.msra.mxu0 0.0
  %5535 = vmatpush.msra.mxu0 0.0
  %5536 = vmatpush.msra.mxu0 0.0
  %5537 = vmatpush.msra.mxu0 0.0
  %5538 = vmatpush.msra.mxu0 %v3779
  %5539 = vmatpush.msra.mxu0 %v3776
  %5540 = vmatpush.msra.mxu0 %v3773
  %5541 = vmatpush.msra.mxu0 %v3770
  %5542 = vmatpush.msra.mxu0 %v3767
  %5543 = vmatpush.msra.mxu0 %v3764
  %5544 = vmatpush.msra.mxu0 %v3761
  %5545 = vmatpush.msra.mxu0 %v3758
  %5546 = vmatmul.f32.gmra.mxu0 %v5435
  %v5547 = vpop.f32.mrf.mxu0
  %v5548 = vadd.f32 0.0, %v5547
  %5549 = vmatmul.f32.gmra.mxu0 %v5438
  %v5550 = vpop.f32.mrf.mxu0
  %v5551 = vadd.f32 0.0, %v5550
  %5552 = vmatmul.f32.gmra.mxu0 %v5441
  %v5553 = vpop.f32.mrf.mxu0
  %v5554 = vadd.f32 0.0, %v5553
  %5555 = vmatmul.f32.gmra.mxu0 %v5444
  %v5556 = vpop.f32.mrf.mxu0
  %v5557 = vadd.f32 0.0, %v5556
  %5558 = vmatmul.f32.gmra.mxu0 %v5447
  %v5559 = vpop.f32.mrf.mxu0
  %v5560 = vadd.f32 0.0, %v5559
  %5561 = vmatmul.f32.gmra.mxu0 %v5450
  %v5562 = vpop.f32.mrf.mxu0
  %v5563 = vadd.f32 0.0, %v5562
  %5564 = vmatmul.f32.gmra.mxu0 %v5453
  %v5565 = vpop.f32.mrf.mxu0
  %v5566 = vadd.f32 0.0, %v5565
  %5567 = vmatmul.f32.gmra.mxu0 %v5456
  %v5568 = vpop.f32.mrf.mxu0
  %v5569 = vadd.f32 0.0, %v5568
  %5570 = vmatmul.f32.gmra.mxu0 %v5459
  %v5571 = vpop.f32.mrf.mxu0
  %v5572 = vadd.f32 0.0, %v5571
  %5573 = vmatmul.f32.gmra.mxu0 %v5462
  %v5574 = vpop.f32.mrf.mxu0
  %v5575 = vadd.f32 0.0, %v5574
  %5576 = vmatmul.f32.gmra.mxu0 %v5465
  %v5577 = vpop.f32.mrf.mxu0
  %v5578 = vadd.f32 0.0, %v5577
  %5579 = vmatmul.f32.gmra.mxu0 %v5468
  %v5580 = vpop.f32.mrf.mxu0
  %v5581 = vadd.f32 0.0, %v5580
  %5582 = vmatmul.f32.gmra.mxu0 %v5471
  %v5583 = vpop.f32.mrf.mxu0
  %v5584 = vadd.f32 0.0, %v5583
  %5585 = vmatmul.f32.gmra.mxu0 %v5474
  %v5586 = vpop.f32.mrf.mxu0
  %v5587 = vadd.f32 0.0, %v5586
  %5588 = vmatmul.f32.gmra.mxu0 %v5477
  %v5589 = vpop.f32.mrf.mxu0
  %v5590 = vadd.f32 0.0, %v5589
  %5591 = vmatmul.f32.gmra.mxu0 %v5480
  %v5592 = vpop.f32.mrf.mxu0
  %v5593 = vadd.f32 0.0, %v5592
  %5594 = vmatmul.f32.gmra.mxu0 %v5483
  %v5595 = vpop.f32.mrf.mxu0
  %v5596 = vadd.f32 0.0, %v5595
  %5597 = vmatmul.f32.gmra.mxu0 %v5486
  %v5598 = vpop.f32.mrf.mxu0
  %v5599 = vadd.f32 0.0, %v5598
  %5600 = vmatmul.f32.gmra.mxu0 %v5489
  %v5601 = vpop.f32.mrf.mxu0
  %v5602 = vadd.f32 0.0, %v5601
  %5603 = vmatmul.f32.gmra.mxu0 %v5492
  %v5604 = vpop.f32.mrf.mxu0
  %v5605 = vadd.f32 0.0, %v5604
  %5606 = vmatmul.f32.gmra.mxu0 %v5495
  %v5607 = vpop.f32.mrf.mxu0
  %v5608 = vadd.f32 0.0, %v5607
  %5609 = vmatmul.f32.gmra.mxu0 %v5498
  %v5610 = vpop.f32.mrf.mxu0
  %v5611 = vadd.f32 0.0, %v5610
  %5612 = vmatmul.f32.gmra.mxu0 %v5501
  %v5613 = vpop.f32.mrf.mxu0
  %v5614 = vadd.f32 0.0, %v5613
  %5615 = vmatmul.f32.gmra.mxu0 %v5504
  %v5616 = vpop.f32.mrf.mxu0
  %v5617 = vadd.f32 0.0, %v5616
  %5618 = vmatmul.f32.gmra.mxu0 %v5507
  %v5619 = vpop.f32.mrf.mxu0
  %v5620 = vadd.f32 0.0, %v5619
  %5621 = vmatmul.f32.gmra.mxu0 %v5510
  %v5622 = vpop.f32.mrf.mxu0
  %v5623 = vadd.f32 0.0, %v5622
  %5624 = vmatmul.f32.gmra.mxu0 %v5513
  %v5625 = vpop.f32.mrf.mxu0
  %v5626 = vadd.f32 0.0, %v5625
  %5627 = vmatmul.f32.gmra.mxu0 %v5516
  %v5628 = vpop.f32.mrf.mxu0
  %v5629 = vadd.f32 0.0, %v5628
  %5630 = vmatmul.f32.gmra.mxu0 %v5519
  %v5631 = vpop.f32.mrf.mxu0
  %v5632 = vadd.f32 0.0, %v5631
  %5633 = vmatmul.f32.gmra.mxu0 %v5522
  %v5634 = vpop.f32.mrf.mxu0
  %v5635 = vadd.f32 0.0, %v5634
  %5636 = vmatmul.f32.gmra.mxu0 %v5525
  %v5637 = vpop.f32.mrf.mxu0
  %v5638 = vadd.f32 0.0, %v5637
  %5639 = vmatmul.f32.gmra.mxu0 %v5528
  %v5640 = vpop.f32.mrf.mxu0
  %v5641 = vadd.f32 0.0, %v5640
  %5642 = vdwg.mxu0
  %v5643 = vadd.f32 %v5337, %v5548
  %v5644 = vadd.f32 %v5338, %v5551
  %v5645 = vadd.f32 %v5339, %v5554
  %v5646 = vadd.f32 %v5340, %v5557
  %v5647 = vadd.f32 %v5341, %v5560
  %v5648 = vadd.f32 %v5342, %v5563
  %v5649 = vadd.f32 %v5343, %v5566
  %v5650 = vadd.f32 %v5344, %v5569
  %v5651 = vadd.f32 %v5345, %v5572
  %v5652 = vadd.f32 %v5346, %v5575
  %v5653 = vadd.f32 %v5347, %v5578
  %v5654 = vadd.f32 %v5348, %v5581
  %v5655 = vadd.f32 %v5349, %v5584
  %v5656 = vadd.f32 %v5350, %v5587
  %v5657 = vadd.f32 %v5351, %v5590
  %v5658 = vadd.f32 %v5352, %v5593
  %v5659 = vadd.f32 %v5353, %v5596
  %v5660 = vadd.f32 %v5354, %v5599
  %v5661 = vadd.f32 %v5355, %v5602
  %v5662 = vadd.f32 %v5356, %v5605
  %v5663 = vadd.f32 %v5357, %v5608
  %v5664 = vadd.f32 %v5358, %v5611
  %v5665 = vadd.f32 %v5359, %v5614
  %v5666 = vadd.f32 %v5360, %v5617
  %v5667 = vadd.f32 %v5361, %v5620
  %v5668 = vadd.f32 %v5362, %v5623
  %v5669 = vadd.f32 %v5363, %v5626
  %v5670 = vadd.f32 %v5364, %v5629
  %v5671 = vadd.f32 %v5365, %v5632
  %v5672 = vadd.f32 %v5366, %v5635
  %v5673 = vadd.f32 %v5367, %v5638
  %v5674 = vadd.f32 %v5368, %v5641
  %s5675 = scalar_lea.vmem %s10, 768
  %v5676 = vld [vmem:[%s5675] sm:$0xf]
  %v5677 = vld [vmem:[%s5675 + $0x4] sm:$0xf]
  %v5678 = vld [vmem:[%s5675 + $0x8] sm:$0xf]
  %v5679 = vld [vmem:[%s5675 + $0xc] sm:$0xf]
  %v5680 = vld [vmem:[%s5675 + $0x10] sm:$0xf]
  %v5681 = vld [vmem:[%s5675 + $0x14] sm:$0xf]
  %v5682 = vld [vmem:[%s5675 + $0x18] sm:$0xf]
  %v5683 = vld [vmem:[%s5675 + $0x1c] sm:$0xf]
  %v5684 = vld [vmem:[%s5675 + $0x20] sm:$0xf]
  %v5685 = vld [vmem:[%s5675 + $0x24] sm:$0xf]
  %v5686 = vld [vmem:[%s5675 + $0x28] sm:$0xf]
  %v5687 = vld [vmem:[%s5675 + $0x2c] sm:$0xf]
  %v5688 = vld [vmem:[%s5675 + $0x30] sm:$0xf]
  %v5689 = vld [vmem:[%s5675 + $0x34] sm:$0xf]
  %v5690 = vld [vmem:[%s5675 + $0x38] sm:$0xf]
  %v5691 = vld [vmem:[%s5675 + $0x3c] sm:$0xf]
  %v5692 = vld [vmem:[%s5675 + $0x40] sm:$0xf]
  %v5693 = vld [vmem:[%s5675 + $0x44] sm:$0xf]
  %v5694 = vld [vmem:[%s5675 + $0x48] sm:$0xf]
  %v5695 = vld [vmem:[%s5675 + $0x4c] sm:$0xf]
  %v5696 = vld [vmem:[%s5675 + $0x50] sm:$0xf]
  %v5697 = vld [vmem:[%s5675 + $0x54] sm:$0xf]
  %v5698 = vld [vmem:[%s5675 + $0x58] sm:$0xf]
  %v5699 = vld [vmem:[%s5675 + $0x5c] sm:$0xf]
  %v5700 = vld [vmem:[%s5675 + $0x60] sm:$0xf]
  %v5701 = vld [vmem:[%s5675 + $0x64] sm:$0xf]
  %v5702 = vld [vmem:[%s5675 + $0x68] sm:$0xf]
  %v5703 = vld [vmem:[%s5675 + $0x6c] sm:$0xf]
  %v5704 = vld [vmem:[%s5675 + $0x70] sm:$0xf]
  %v5705 = vld [vmem:[%s5675 + $0x74] sm:$0xf]
  %v5706 = vld [vmem:[%s5675 + $0x78] sm:$0xf]
  %v5707 = vld [vmem:[%s5675 + $0x7c] sm:$0xf]
  %v5708 = vunpack.c.l.bf16 %v5676
  %v5709 = vunpack.c.l.bf16 %v5677
  %v5710 = vunpack.c.l.bf16 %v5678
  %v5711 = vunpack.c.l.bf16 %v5679
  %v5712 = vunpack.c.l.bf16 %v5680
  %v5713 = vunpack.c.l.bf16 %v5681
  %v5714 = vunpack.c.l.bf16 %v5682
  %v5715 = vunpack.c.l.bf16 %v5683
  %v5716 = vunpack.c.l.bf16 %v5684
  %v5717 = vunpack.c.l.bf16 %v5685
  %v5718 = vunpack.c.l.bf16 %v5686
  %v5719 = vunpack.c.l.bf16 %v5687
  %v5720 = vunpack.c.l.bf16 %v5688
  %v5721 = vunpack.c.l.bf16 %v5689
  %v5722 = vunpack.c.l.bf16 %v5690
  %v5723 = vunpack.c.l.bf16 %v5691
  %v5724 = vunpack.c.l.bf16 %v5692
  %v5725 = vunpack.c.l.bf16 %v5693
  %v5726 = vunpack.c.l.bf16 %v5694
  %v5727 = vunpack.c.l.bf16 %v5695
  %v5728 = vunpack.c.l.bf16 %v5696
  %v5729 = vunpack.c.l.bf16 %v5697
  %v5730 = vunpack.c.l.bf16 %v5698
  %v5731 = vunpack.c.l.bf16 %v5699
  %v5732 = vunpack.c.l.bf16 %v5700
  %v5733 = vunpack.c.l.bf16 %v5701
  %v5734 = vunpack.c.l.bf16 %v5702
  %v5735 = vunpack.c.l.bf16 %v5703
  %v5736 = vunpack.c.l.bf16 %v5704
  %v5737 = vunpack.c.l.bf16 %v5705
  %v5738 = vunpack.c.l.bf16 %v5706
  %v5739 = vunpack.c.l.bf16 %v5707
  %v5741 = vsel %vm1567, %v5708, 0
  %v5744 = vsel %vm1567, %v5709, 0
  %v5747 = vsel %vm1567, %v5710, 0
  %v5750 = vsel %vm1567, %v5711, 0
  %v5753 = vsel %vm1567, %v5712, 0
  %v5756 = vsel %vm1567, %v5713, 0
  %v5759 = vsel %vm1567, %v5714, 0
  %v5762 = vsel %vm1567, %v5715, 0
  %v5765 = vsel %vm1567, %v5716, 0
  %v5768 = vsel %vm1567, %v5717, 0
  %v5771 = vsel %vm1567, %v5718, 0
  %v5774 = vsel %vm1567, %v5719, 0
  %v5777 = vsel %vm1567, %v5720, 0
  %v5780 = vsel %vm1567, %v5721, 0
  %v5783 = vsel %vm1567, %v5722, 0
  %v5786 = vsel %vm1567, %v5723, 0
  %v5789 = vsel %vm1567, %v5724, 0
  %v5792 = vsel %vm1567, %v5725, 0
  %v5795 = vsel %vm1567, %v5726, 0
  %v5798 = vsel %vm1567, %v5727, 0
  %v5801 = vsel %vm1567, %v5728, 0
  %v5804 = vsel %vm1567, %v5729, 0
  %v5807 = vsel %vm1567, %v5730, 0
  %v5810 = vsel %vm1567, %v5731, 0
  %v5813 = vsel %vm1567, %v5732, 0
  %v5816 = vsel %vm1567, %v5733, 0
  %v5819 = vsel %vm1567, %v5734, 0
  %v5822 = vsel %vm1567, %v5735, 0
  %v5825 = vsel %vm1567, %v5736, 0
  %v5828 = vsel %vm1567, %v5737, 0
  %v5831 = vsel %vm1567, %v5738, 0
  %v5834 = vsel %vm1567, %v5739, 0
  %5836 = vmatpush.msra.mxu0 0.0
  %5837 = vmatpush.msra.mxu0 0.0
  %5838 = vmatpush.msra.mxu0 0.0
  %5839 = vmatpush.msra.mxu0 0.0
  %5840 = vmatpush.msra.mxu0 0.0
  %5841 = vmatpush.msra.mxu0 0.0
  %5842 = vmatpush.msra.mxu0 0.0
  %5843 = vmatpush.msra.mxu0 0.0
  %5844 = vmatpush.msra.mxu0 %v3820
  %5845 = vmatpush.msra.mxu0 %v3817
  %5846 = vmatpush.msra.mxu0 %v3814
  %5847 = vmatpush.msra.mxu0 %v3811
  %5848 = vmatpush.msra.mxu0 %v3808
  %5849 = vmatpush.msra.mxu0 %v3805
  %5850 = vmatpush.msra.mxu0 %v3802
  %5851 = vmatpush.msra.mxu0 %v3799
  %5852 = vmatmul.f32.gmra.mxu0 %v5741
  %v5853 = vpop.f32.mrf.mxu0
  %v5854 = vadd.f32 0.0, %v5853
  %5855 = vmatmul.f32.gmra.mxu0 %v5744
  %v5856 = vpop.f32.mrf.mxu0
  %v5857 = vadd.f32 0.0, %v5856
  %5858 = vmatmul.f32.gmra.mxu0 %v5747
  %v5859 = vpop.f32.mrf.mxu0
  %v5860 = vadd.f32 0.0, %v5859
  %5861 = vmatmul.f32.gmra.mxu0 %v5750
  %v5862 = vpop.f32.mrf.mxu0
  %v5863 = vadd.f32 0.0, %v5862
  %5864 = vmatmul.f32.gmra.mxu0 %v5753
  %v5865 = vpop.f32.mrf.mxu0
  %v5866 = vadd.f32 0.0, %v5865
  %5867 = vmatmul.f32.gmra.mxu0 %v5756
  %v5868 = vpop.f32.mrf.mxu0
  %v5869 = vadd.f32 0.0, %v5868
  %5870 = vmatmul.f32.gmra.mxu0 %v5759
  %v5871 = vpop.f32.mrf.mxu0
  %v5872 = vadd.f32 0.0, %v5871
  %5873 = vmatmul.f32.gmra.mxu0 %v5762
  %v5874 = vpop.f32.mrf.mxu0
  %v5875 = vadd.f32 0.0, %v5874
  %5876 = vmatmul.f32.gmra.mxu0 %v5765
  %v5877 = vpop.f32.mrf.mxu0
  %v5878 = vadd.f32 0.0, %v5877
  %5879 = vmatmul.f32.gmra.mxu0 %v5768
  %v5880 = vpop.f32.mrf.mxu0
  %v5881 = vadd.f32 0.0, %v5880
  %5882 = vmatmul.f32.gmra.mxu0 %v5771
  %v5883 = vpop.f32.mrf.mxu0
  %v5884 = vadd.f32 0.0, %v5883
  %5885 = vmatmul.f32.gmra.mxu0 %v5774
  %v5886 = vpop.f32.mrf.mxu0
  %v5887 = vadd.f32 0.0, %v5886
  %5888 = vmatmul.f32.gmra.mxu0 %v5777
  %v5889 = vpop.f32.mrf.mxu0
  %v5890 = vadd.f32 0.0, %v5889
  %5891 = vmatmul.f32.gmra.mxu0 %v5780
  %v5892 = vpop.f32.mrf.mxu0
  %v5893 = vadd.f32 0.0, %v5892
  %5894 = vmatmul.f32.gmra.mxu0 %v5783
  %v5895 = vpop.f32.mrf.mxu0
  %v5896 = vadd.f32 0.0, %v5895
  %5897 = vmatmul.f32.gmra.mxu0 %v5786
  %v5898 = vpop.f32.mrf.mxu0
  %v5899 = vadd.f32 0.0, %v5898
  %5900 = vmatmul.f32.gmra.mxu0 %v5789
  %v5901 = vpop.f32.mrf.mxu0
  %v5902 = vadd.f32 0.0, %v5901
  %5903 = vmatmul.f32.gmra.mxu0 %v5792
  %v5904 = vpop.f32.mrf.mxu0
  %v5905 = vadd.f32 0.0, %v5904
  %5906 = vmatmul.f32.gmra.mxu0 %v5795
  %v5907 = vpop.f32.mrf.mxu0
  %v5908 = vadd.f32 0.0, %v5907
  %5909 = vmatmul.f32.gmra.mxu0 %v5798
  %v5910 = vpop.f32.mrf.mxu0
  %v5911 = vadd.f32 0.0, %v5910
  %5912 = vmatmul.f32.gmra.mxu0 %v5801
  %v5913 = vpop.f32.mrf.mxu0
  %v5914 = vadd.f32 0.0, %v5913
  %5915 = vmatmul.f32.gmra.mxu0 %v5804
  %v5916 = vpop.f32.mrf.mxu0
  %v5917 = vadd.f32 0.0, %v5916
  %5918 = vmatmul.f32.gmra.mxu0 %v5807
  %v5919 = vpop.f32.mrf.mxu0
  %v5920 = vadd.f32 0.0, %v5919
  %5921 = vmatmul.f32.gmra.mxu0 %v5810
  %v5922 = vpop.f32.mrf.mxu0
  %v5923 = vadd.f32 0.0, %v5922
  %5924 = vmatmul.f32.gmra.mxu0 %v5813
  %v5925 = vpop.f32.mrf.mxu0
  %v5926 = vadd.f32 0.0, %v5925
  %5927 = vmatmul.f32.gmra.mxu0 %v5816
  %v5928 = vpop.f32.mrf.mxu0
  %v5929 = vadd.f32 0.0, %v5928
  %5930 = vmatmul.f32.gmra.mxu0 %v5819
  %v5931 = vpop.f32.mrf.mxu0
  %v5932 = vadd.f32 0.0, %v5931
  %5933 = vmatmul.f32.gmra.mxu0 %v5822
  %v5934 = vpop.f32.mrf.mxu0
  %v5935 = vadd.f32 0.0, %v5934
  %5936 = vmatmul.f32.gmra.mxu0 %v5825
  %v5937 = vpop.f32.mrf.mxu0
  %v5938 = vadd.f32 0.0, %v5937
  %5939 = vmatmul.f32.gmra.mxu0 %v5828
  %v5940 = vpop.f32.mrf.mxu0
  %v5941 = vadd.f32 0.0, %v5940
  %5942 = vmatmul.f32.gmra.mxu0 %v5831
  %v5943 = vpop.f32.mrf.mxu0
  %v5944 = vadd.f32 0.0, %v5943
  %5945 = vmatmul.f32.gmra.mxu0 %v5834
  %v5946 = vpop.f32.mrf.mxu0
  %v5947 = vadd.f32 0.0, %v5946
  %5948 = vdwg.mxu0
  %v5949 = vadd.f32 %v5643, %v5854
  %v5950 = vadd.f32 %v5644, %v5857
  %v5951 = vadd.f32 %v5645, %v5860
  %v5952 = vadd.f32 %v5646, %v5863
  %v5953 = vadd.f32 %v5647, %v5866
  %v5954 = vadd.f32 %v5648, %v5869
  %v5955 = vadd.f32 %v5649, %v5872
  %v5956 = vadd.f32 %v5650, %v5875
  %v5957 = vadd.f32 %v5651, %v5878
  %v5958 = vadd.f32 %v5652, %v5881
  %v5959 = vadd.f32 %v5653, %v5884
  %v5960 = vadd.f32 %v5654, %v5887
  %v5961 = vadd.f32 %v5655, %v5890
  %v5962 = vadd.f32 %v5656, %v5893
  %v5963 = vadd.f32 %v5657, %v5896
  %v5964 = vadd.f32 %v5658, %v5899
  %v5965 = vadd.f32 %v5659, %v5902
  %v5966 = vadd.f32 %v5660, %v5905
  %v5967 = vadd.f32 %v5661, %v5908
  %v5968 = vadd.f32 %v5662, %v5911
  %v5969 = vadd.f32 %v5663, %v5914
  %v5970 = vadd.f32 %v5664, %v5917
  %v5971 = vadd.f32 %v5665, %v5920
  %v5972 = vadd.f32 %v5666, %v5923
  %v5973 = vadd.f32 %v5667, %v5926
  %v5974 = vadd.f32 %v5668, %v5929
  %v5975 = vadd.f32 %v5669, %v5932
  %v5976 = vadd.f32 %v5670, %v5935
  %v5977 = vadd.f32 %v5671, %v5938
  %v5978 = vadd.f32 %v5672, %v5941
  %v5979 = vadd.f32 %v5673, %v5944
  %v5980 = vadd.f32 %v5674, %v5947
  %s5981 = scalar_lea.vmem %s10, 896
  %v5982 = vld [vmem:[%s5981] sm:$0xf]
  %v5983 = vld [vmem:[%s5981 + $0x4] sm:$0xf]
  %v5984 = vld [vmem:[%s5981 + $0x8] sm:$0xf]
  %v5985 = vld [vmem:[%s5981 + $0xc] sm:$0xf]
  %v5986 = vld [vmem:[%s5981 + $0x10] sm:$0xf]
  %v5987 = vld [vmem:[%s5981 + $0x14] sm:$0xf]
  %v5988 = vld [vmem:[%s5981 + $0x18] sm:$0xf]
  %v5989 = vld [vmem:[%s5981 + $0x1c] sm:$0xf]
  %v5990 = vld [vmem:[%s5981 + $0x20] sm:$0xf]
  %v5991 = vld [vmem:[%s5981 + $0x24] sm:$0xf]
  %v5992 = vld [vmem:[%s5981 + $0x28] sm:$0xf]
  %v5993 = vld [vmem:[%s5981 + $0x2c] sm:$0xf]
  %v5994 = vld [vmem:[%s5981 + $0x30] sm:$0xf]
  %v5995 = vld [vmem:[%s5981 + $0x34] sm:$0xf]
  %v5996 = vld [vmem:[%s5981 + $0x38] sm:$0xf]
  %v5997 = vld [vmem:[%s5981 + $0x3c] sm:$0xf]
  %v5998 = vld [vmem:[%s5981 + $0x40] sm:$0xf]
  %v5999 = vld [vmem:[%s5981 + $0x44] sm:$0xf]
  %v6000 = vld [vmem:[%s5981 + $0x48] sm:$0xf]
  %v6001 = vld [vmem:[%s5981 + $0x4c] sm:$0xf]
  %v6002 = vld [vmem:[%s5981 + $0x50] sm:$0xf]
  %v6003 = vld [vmem:[%s5981 + $0x54] sm:$0xf]
  %v6004 = vld [vmem:[%s5981 + $0x58] sm:$0xf]
  %v6005 = vld [vmem:[%s5981 + $0x5c] sm:$0xf]
  %v6006 = vld [vmem:[%s5981 + $0x60] sm:$0xf]
  %v6007 = vld [vmem:[%s5981 + $0x64] sm:$0xf]
  %v6008 = vld [vmem:[%s5981 + $0x68] sm:$0xf]
  %v6009 = vld [vmem:[%s5981 + $0x6c] sm:$0xf]
  %v6010 = vld [vmem:[%s5981 + $0x70] sm:$0xf]
  %v6011 = vld [vmem:[%s5981 + $0x74] sm:$0xf]
  %v6012 = vld [vmem:[%s5981 + $0x78] sm:$0xf]
  %v6013 = vld [vmem:[%s5981 + $0x7c] sm:$0xf]
  %v6014 = vunpack.c.l.bf16 %v5982
  %v6015 = vunpack.c.l.bf16 %v5983
  %v6016 = vunpack.c.l.bf16 %v5984
  %v6017 = vunpack.c.l.bf16 %v5985
  %v6018 = vunpack.c.l.bf16 %v5986
  %v6019 = vunpack.c.l.bf16 %v5987
  %v6020 = vunpack.c.l.bf16 %v5988
  %v6021 = vunpack.c.l.bf16 %v5989
  %v6022 = vunpack.c.l.bf16 %v5990
  %v6023 = vunpack.c.l.bf16 %v5991
  %v6024 = vunpack.c.l.bf16 %v5992
  %v6025 = vunpack.c.l.bf16 %v5993
  %v6026 = vunpack.c.l.bf16 %v5994
  %v6027 = vunpack.c.l.bf16 %v5995
  %v6028 = vunpack.c.l.bf16 %v5996
  %v6029 = vunpack.c.l.bf16 %v5997
  %v6030 = vunpack.c.l.bf16 %v5998
  %v6031 = vunpack.c.l.bf16 %v5999
  %v6032 = vunpack.c.l.bf16 %v6000
  %v6033 = vunpack.c.l.bf16 %v6001
  %v6034 = vunpack.c.l.bf16 %v6002
  %v6035 = vunpack.c.l.bf16 %v6003
  %v6036 = vunpack.c.l.bf16 %v6004
  %v6037 = vunpack.c.l.bf16 %v6005
  %v6038 = vunpack.c.l.bf16 %v6006
  %v6039 = vunpack.c.l.bf16 %v6007
  %v6040 = vunpack.c.l.bf16 %v6008
  %v6041 = vunpack.c.l.bf16 %v6009
  %v6042 = vunpack.c.l.bf16 %v6010
  %v6043 = vunpack.c.l.bf16 %v6011
  %v6044 = vunpack.c.l.bf16 %v6012
  %v6045 = vunpack.c.l.bf16 %v6013
  %v6047 = vsel %vm1567, %v6014, 0
  %v6050 = vsel %vm1567, %v6015, 0
  %v6053 = vsel %vm1567, %v6016, 0
  %v6056 = vsel %vm1567, %v6017, 0
  %v6059 = vsel %vm1567, %v6018, 0
  %v6062 = vsel %vm1567, %v6019, 0
  %v6065 = vsel %vm1567, %v6020, 0
  %v6068 = vsel %vm1567, %v6021, 0
  %v6071 = vsel %vm1567, %v6022, 0
  %v6074 = vsel %vm1567, %v6023, 0
  %v6077 = vsel %vm1567, %v6024, 0
  %v6080 = vsel %vm1567, %v6025, 0
  %v6083 = vsel %vm1567, %v6026, 0
  %v6086 = vsel %vm1567, %v6027, 0
  %v6089 = vsel %vm1567, %v6028, 0
  %v6092 = vsel %vm1567, %v6029, 0
  %v6095 = vsel %vm1567, %v6030, 0
  %v6098 = vsel %vm1567, %v6031, 0
  %v6101 = vsel %vm1567, %v6032, 0
  %v6104 = vsel %vm1567, %v6033, 0
  %v6107 = vsel %vm1567, %v6034, 0
  %v6110 = vsel %vm1567, %v6035, 0
  %v6113 = vsel %vm1567, %v6036, 0
  %v6116 = vsel %vm1567, %v6037, 0
  %v6119 = vsel %vm1567, %v6038, 0
  %v6122 = vsel %vm1567, %v6039, 0
  %v6125 = vsel %vm1567, %v6040, 0
  %v6128 = vsel %vm1567, %v6041, 0
  %v6131 = vsel %vm1567, %v6042, 0
  %v6134 = vsel %vm1567, %v6043, 0
  %v6137 = vsel %vm1567, %v6044, 0
  %v6140 = vsel %vm1567, %v6045, 0
  %6142 = vmatpush.msra.mxu0 0.0
  %6143 = vmatpush.msra.mxu0 0.0
  %6144 = vmatpush.msra.mxu0 0.0
  %6145 = vmatpush.msra.mxu0 0.0
  %6146 = vmatpush.msra.mxu0 0.0
  %6147 = vmatpush.msra.mxu0 0.0
  %6148 = vmatpush.msra.mxu0 0.0
  %6149 = vmatpush.msra.mxu0 0.0
  %6150 = vmatpush.msra.mxu0 %v3861
  %6151 = vmatpush.msra.mxu0 %v3858
  %6152 = vmatpush.msra.mxu0 %v3855
  %6153 = vmatpush.msra.mxu0 %v3852
  %6154 = vmatpush.msra.mxu0 %v3849
  %6155 = vmatpush.msra.mxu0 %v3846
  %6156 = vmatpush.msra.mxu0 %v3843
  %6157 = vmatpush.msra.mxu0 %v3840
  %6158 = vmatmul.f32.gmra.mxu0 %v6047
  %v6159 = vpop.f32.mrf.mxu0
  %v6160 = vadd.f32 0.0, %v6159
  %6161 = vmatmul.f32.gmra.mxu0 %v6050
  %v6162 = vpop.f32.mrf.mxu0
  %v6163 = vadd.f32 0.0, %v6162
  %6164 = vmatmul.f32.gmra.mxu0 %v6053
  %v6165 = vpop.f32.mrf.mxu0
  %v6166 = vadd.f32 0.0, %v6165
  %6167 = vmatmul.f32.gmra.mxu0 %v6056
  %v6168 = vpop.f32.mrf.mxu0
  %v6169 = vadd.f32 0.0, %v6168
  %6170 = vmatmul.f32.gmra.mxu0 %v6059
  %v6171 = vpop.f32.mrf.mxu0
  %v6172 = vadd.f32 0.0, %v6171
  %6173 = vmatmul.f32.gmra.mxu0 %v6062
  %v6174 = vpop.f32.mrf.mxu0
  %v6175 = vadd.f32 0.0, %v6174
  %6176 = vmatmul.f32.gmra.mxu0 %v6065
  %v6177 = vpop.f32.mrf.mxu0
  %v6178 = vadd.f32 0.0, %v6177
  %6179 = vmatmul.f32.gmra.mxu0 %v6068
  %v6180 = vpop.f32.mrf.mxu0
  %v6181 = vadd.f32 0.0, %v6180
  %6182 = vmatmul.f32.gmra.mxu0 %v6071
  %v6183 = vpop.f32.mrf.mxu0
  %v6184 = vadd.f32 0.0, %v6183
  %6185 = vmatmul.f32.gmra.mxu0 %v6074
  %v6186 = vpop.f32.mrf.mxu0
  %v6187 = vadd.f32 0.0, %v6186
  %6188 = vmatmul.f32.gmra.mxu0 %v6077
  %v6189 = vpop.f32.mrf.mxu0
  %v6190 = vadd.f32 0.0, %v6189
  %6191 = vmatmul.f32.gmra.mxu0 %v6080
  %v6192 = vpop.f32.mrf.mxu0
  %v6193 = vadd.f32 0.0, %v6192
  %6194 = vmatmul.f32.gmra.mxu0 %v6083
  %v6195 = vpop.f32.mrf.mxu0
  %v6196 = vadd.f32 0.0, %v6195
  %6197 = vmatmul.f32.gmra.mxu0 %v6086
  %v6198 = vpop.f32.mrf.mxu0
  %v6199 = vadd.f32 0.0, %v6198
  %6200 = vmatmul.f32.gmra.mxu0 %v6089
  %v6201 = vpop.f32.mrf.mxu0
  %v6202 = vadd.f32 0.0, %v6201
  %6203 = vmatmul.f32.gmra.mxu0 %v6092
  %v6204 = vpop.f32.mrf.mxu0
  %v6205 = vadd.f32 0.0, %v6204
  %6206 = vmatmul.f32.gmra.mxu0 %v6095
  %v6207 = vpop.f32.mrf.mxu0
  %v6208 = vadd.f32 0.0, %v6207
  %6209 = vmatmul.f32.gmra.mxu0 %v6098
  %v6210 = vpop.f32.mrf.mxu0
  %v6211 = vadd.f32 0.0, %v6210
  %6212 = vmatmul.f32.gmra.mxu0 %v6101
  %v6213 = vpop.f32.mrf.mxu0
  %v6214 = vadd.f32 0.0, %v6213
  %6215 = vmatmul.f32.gmra.mxu0 %v6104
  %v6216 = vpop.f32.mrf.mxu0
  %v6217 = vadd.f32 0.0, %v6216
  %6218 = vmatmul.f32.gmra.mxu0 %v6107
  %v6219 = vpop.f32.mrf.mxu0
  %v6220 = vadd.f32 0.0, %v6219
  %6221 = vmatmul.f32.gmra.mxu0 %v6110
  %v6222 = vpop.f32.mrf.mxu0
  %v6223 = vadd.f32 0.0, %v6222
  %6224 = vmatmul.f32.gmra.mxu0 %v6113
  %v6225 = vpop.f32.mrf.mxu0
  %v6226 = vadd.f32 0.0, %v6225
  %6227 = vmatmul.f32.gmra.mxu0 %v6116
  %v6228 = vpop.f32.mrf.mxu0
  %v6229 = vadd.f32 0.0, %v6228
  %6230 = vmatmul.f32.gmra.mxu0 %v6119
  %v6231 = vpop.f32.mrf.mxu0
  %v6232 = vadd.f32 0.0, %v6231
  %6233 = vmatmul.f32.gmra.mxu0 %v6122
  %v6234 = vpop.f32.mrf.mxu0
  %v6235 = vadd.f32 0.0, %v6234
  %6236 = vmatmul.f32.gmra.mxu0 %v6125
  %v6237 = vpop.f32.mrf.mxu0
  %v6238 = vadd.f32 0.0, %v6237
  %6239 = vmatmul.f32.gmra.mxu0 %v6128
  %v6240 = vpop.f32.mrf.mxu0
  %v6241 = vadd.f32 0.0, %v6240
  %6242 = vmatmul.f32.gmra.mxu0 %v6131
  %v6243 = vpop.f32.mrf.mxu0
  %v6244 = vadd.f32 0.0, %v6243
  %6245 = vmatmul.f32.gmra.mxu0 %v6134
  %v6246 = vpop.f32.mrf.mxu0
  %v6247 = vadd.f32 0.0, %v6246
  %6248 = vmatmul.f32.gmra.mxu0 %v6137
  %v6249 = vpop.f32.mrf.mxu0
  %v6250 = vadd.f32 0.0, %v6249
  %6251 = vmatmul.f32.gmra.mxu0 %v6140
  %v6252 = vpop.f32.mrf.mxu0
  %v6253 = vadd.f32 0.0, %v6252
  %6254 = vdwg.mxu0
  %v6255 = vadd.f32 %v5949, %v6160
  %v6256 = vadd.f32 %v5950, %v6163
  %v6257 = vadd.f32 %v5951, %v6166
  %v6258 = vadd.f32 %v5952, %v6169
  %v6259 = vadd.f32 %v5953, %v6172
  %v6260 = vadd.f32 %v5954, %v6175
  %v6261 = vadd.f32 %v5955, %v6178
  %v6262 = vadd.f32 %v5956, %v6181
  %v6263 = vadd.f32 %v5957, %v6184
  %v6264 = vadd.f32 %v5958, %v6187
  %v6265 = vadd.f32 %v5959, %v6190
  %v6266 = vadd.f32 %v5960, %v6193
  %v6267 = vadd.f32 %v5961, %v6196
  %v6268 = vadd.f32 %v5962, %v6199
  %v6269 = vadd.f32 %v5963, %v6202
  %v6270 = vadd.f32 %v5964, %v6205
  %v6271 = vadd.f32 %v5965, %v6208
  %v6272 = vadd.f32 %v5966, %v6211
  %v6273 = vadd.f32 %v5967, %v6214
  %v6274 = vadd.f32 %v5968, %v6217
  %v6275 = vadd.f32 %v5969, %v6220
  %v6276 = vadd.f32 %v5970, %v6223
  %v6277 = vadd.f32 %v5971, %v6226
  %v6278 = vadd.f32 %v5972, %v6229
  %v6279 = vadd.f32 %v5973, %v6232
  %v6280 = vadd.f32 %v5974, %v6235
  %v6281 = vadd.f32 %v5975, %v6238
  %v6282 = vadd.f32 %v5976, %v6241
  %v6283 = vadd.f32 %v5977, %v6244
  %v6284 = vadd.f32 %v5978, %v6247
  %v6285 = vadd.f32 %v5979, %v6250
  %v6286 = vadd.f32 %v5980, %v6253
  %s6287 = scalar_lea.vmem %s10, 1024
  %v6288 = vld [vmem:[%s6287] sm:$0xf]
  %v6289 = vld [vmem:[%s6287 + $0x4] sm:$0xf]
  %v6290 = vld [vmem:[%s6287 + $0x8] sm:$0xf]
  %v6291 = vld [vmem:[%s6287 + $0xc] sm:$0xf]
  %v6292 = vld [vmem:[%s6287 + $0x10] sm:$0xf]
  %v6293 = vld [vmem:[%s6287 + $0x14] sm:$0xf]
  %v6294 = vld [vmem:[%s6287 + $0x18] sm:$0xf]
  %v6295 = vld [vmem:[%s6287 + $0x1c] sm:$0xf]
  %v6296 = vld [vmem:[%s6287 + $0x20] sm:$0xf]
  %v6297 = vld [vmem:[%s6287 + $0x24] sm:$0xf]
  %v6298 = vld [vmem:[%s6287 + $0x28] sm:$0xf]
  %v6299 = vld [vmem:[%s6287 + $0x2c] sm:$0xf]
  %v6300 = vld [vmem:[%s6287 + $0x30] sm:$0xf]
  %v6301 = vld [vmem:[%s6287 + $0x34] sm:$0xf]
  %v6302 = vld [vmem:[%s6287 + $0x38] sm:$0xf]
  %v6303 = vld [vmem:[%s6287 + $0x3c] sm:$0xf]
  %v6304 = vld [vmem:[%s6287 + $0x40] sm:$0xf]
  %v6305 = vld [vmem:[%s6287 + $0x44] sm:$0xf]
  %v6306 = vld [vmem:[%s6287 + $0x48] sm:$0xf]
  %v6307 = vld [vmem:[%s6287 + $0x4c] sm:$0xf]
  %v6308 = vld [vmem:[%s6287 + $0x50] sm:$0xf]
  %v6309 = vld [vmem:[%s6287 + $0x54] sm:$0xf]
  %v6310 = vld [vmem:[%s6287 + $0x58] sm:$0xf]
  %v6311 = vld [vmem:[%s6287 + $0x5c] sm:$0xf]
  %v6312 = vld [vmem:[%s6287 + $0x60] sm:$0xf]
  %v6313 = vld [vmem:[%s6287 + $0x64] sm:$0xf]
  %v6314 = vld [vmem:[%s6287 + $0x68] sm:$0xf]
  %v6315 = vld [vmem:[%s6287 + $0x6c] sm:$0xf]
  %v6316 = vld [vmem:[%s6287 + $0x70] sm:$0xf]
  %v6317 = vld [vmem:[%s6287 + $0x74] sm:$0xf]
  %v6318 = vld [vmem:[%s6287 + $0x78] sm:$0xf]
  %v6319 = vld [vmem:[%s6287 + $0x7c] sm:$0xf]
  %v6320 = vunpack.c.l.bf16 %v6288
  %v6321 = vunpack.c.l.bf16 %v6289
  %v6322 = vunpack.c.l.bf16 %v6290
  %v6323 = vunpack.c.l.bf16 %v6291
  %v6324 = vunpack.c.l.bf16 %v6292
  %v6325 = vunpack.c.l.bf16 %v6293
  %v6326 = vunpack.c.l.bf16 %v6294
  %v6327 = vunpack.c.l.bf16 %v6295
  %v6328 = vunpack.c.l.bf16 %v6296
  %v6329 = vunpack.c.l.bf16 %v6297
  %v6330 = vunpack.c.l.bf16 %v6298
  %v6331 = vunpack.c.l.bf16 %v6299
  %v6332 = vunpack.c.l.bf16 %v6300
  %v6333 = vunpack.c.l.bf16 %v6301
  %v6334 = vunpack.c.l.bf16 %v6302
  %v6335 = vunpack.c.l.bf16 %v6303
  %v6336 = vunpack.c.l.bf16 %v6304
  %v6337 = vunpack.c.l.bf16 %v6305
  %v6338 = vunpack.c.l.bf16 %v6306
  %v6339 = vunpack.c.l.bf16 %v6307
  %v6340 = vunpack.c.l.bf16 %v6308
  %v6341 = vunpack.c.l.bf16 %v6309
  %v6342 = vunpack.c.l.bf16 %v6310
  %v6343 = vunpack.c.l.bf16 %v6311
  %v6344 = vunpack.c.l.bf16 %v6312
  %v6345 = vunpack.c.l.bf16 %v6313
  %v6346 = vunpack.c.l.bf16 %v6314
  %v6347 = vunpack.c.l.bf16 %v6315
  %v6348 = vunpack.c.l.bf16 %v6316
  %v6349 = vunpack.c.l.bf16 %v6317
  %v6350 = vunpack.c.l.bf16 %v6318
  %v6351 = vunpack.c.l.bf16 %v6319
  %v6353 = vsel %vm1567, %v6320, 0
  %v6356 = vsel %vm1567, %v6321, 0
  %v6359 = vsel %vm1567, %v6322, 0
  %v6362 = vsel %vm1567, %v6323, 0
  %v6365 = vsel %vm1567, %v6324, 0
  %v6368 = vsel %vm1567, %v6325, 0
  %v6371 = vsel %vm1567, %v6326, 0
  %v6374 = vsel %vm1567, %v6327, 0
  %v6377 = vsel %vm1567, %v6328, 0
  %v6380 = vsel %vm1567, %v6329, 0
  %v6383 = vsel %vm1567, %v6330, 0
  %v6386 = vsel %vm1567, %v6331, 0
  %v6389 = vsel %vm1567, %v6332, 0
  %v6392 = vsel %vm1567, %v6333, 0
  %v6395 = vsel %vm1567, %v6334, 0
  %v6398 = vsel %vm1567, %v6335, 0
  %v6401 = vsel %vm1567, %v6336, 0
  %v6404 = vsel %vm1567, %v6337, 0
  %v6407 = vsel %vm1567, %v6338, 0
  %v6410 = vsel %vm1567, %v6339, 0
  %v6413 = vsel %vm1567, %v6340, 0
  %v6416 = vsel %vm1567, %v6341, 0
  %v6419 = vsel %vm1567, %v6342, 0
  %v6422 = vsel %vm1567, %v6343, 0
  %v6425 = vsel %vm1567, %v6344, 0
  %v6428 = vsel %vm1567, %v6345, 0
  %v6431 = vsel %vm1567, %v6346, 0
  %v6434 = vsel %vm1567, %v6347, 0
  %v6437 = vsel %vm1567, %v6348, 0
  %v6440 = vsel %vm1567, %v6349, 0
  %v6443 = vsel %vm1567, %v6350, 0
  %v6446 = vsel %vm1567, %v6351, 0
  %6448 = vmatpush.msra.mxu0 0.0
  %6449 = vmatpush.msra.mxu0 0.0
  %6450 = vmatpush.msra.mxu0 0.0
  %6451 = vmatpush.msra.mxu0 0.0
  %6452 = vmatpush.msra.mxu0 0.0
  %6453 = vmatpush.msra.mxu0 0.0
  %6454 = vmatpush.msra.mxu0 0.0
  %6455 = vmatpush.msra.mxu0 0.0
  %6456 = vmatpush.msra.mxu0 %v3902
  %6457 = vmatpush.msra.mxu0 %v3899
  %6458 = vmatpush.msra.mxu0 %v3896
  %6459 = vmatpush.msra.mxu0 %v3893
  %6460 = vmatpush.msra.mxu0 %v3890
  %6461 = vmatpush.msra.mxu0 %v3887
  %6462 = vmatpush.msra.mxu0 %v3884
  %6463 = vmatpush.msra.mxu0 %v3881
  %6464 = vmatmul.f32.gmra.mxu0 %v6353
  %v6465 = vpop.f32.mrf.mxu0
  %v6466 = vadd.f32 0.0, %v6465
  %6467 = vmatmul.f32.gmra.mxu0 %v6356
  %v6468 = vpop.f32.mrf.mxu0
  %v6469 = vadd.f32 0.0, %v6468
  %6470 = vmatmul.f32.gmra.mxu0 %v6359
  %v6471 = vpop.f32.mrf.mxu0
  %v6472 = vadd.f32 0.0, %v6471
  %6473 = vmatmul.f32.gmra.mxu0 %v6362
  %v6474 = vpop.f32.mrf.mxu0
  %v6475 = vadd.f32 0.0, %v6474
  %6476 = vmatmul.f32.gmra.mxu0 %v6365
  %v6477 = vpop.f32.mrf.mxu0
  %v6478 = vadd.f32 0.0, %v6477
  %6479 = vmatmul.f32.gmra.mxu0 %v6368
  %v6480 = vpop.f32.mrf.mxu0
  %v6481 = vadd.f32 0.0, %v6480
  %6482 = vmatmul.f32.gmra.mxu0 %v6371
  %v6483 = vpop.f32.mrf.mxu0
  %v6484 = vadd.f32 0.0, %v6483
  %6485 = vmatmul.f32.gmra.mxu0 %v6374
  %v6486 = vpop.f32.mrf.mxu0
  %v6487 = vadd.f32 0.0, %v6486
  %6488 = vmatmul.f32.gmra.mxu0 %v6377
  %v6489 = vpop.f32.mrf.mxu0
  %v6490 = vadd.f32 0.0, %v6489
  %6491 = vmatmul.f32.gmra.mxu0 %v6380
  %v6492 = vpop.f32.mrf.mxu0
  %v6493 = vadd.f32 0.0, %v6492
  %6494 = vmatmul.f32.gmra.mxu0 %v6383
  %v6495 = vpop.f32.mrf.mxu0
  %v6496 = vadd.f32 0.0, %v6495
  %6497 = vmatmul.f32.gmra.mxu0 %v6386
  %v6498 = vpop.f32.mrf.mxu0
  %v6499 = vadd.f32 0.0, %v6498
  %6500 = vmatmul.f32.gmra.mxu0 %v6389
  %v6501 = vpop.f32.mrf.mxu0
  %v6502 = vadd.f32 0.0, %v6501
  %6503 = vmatmul.f32.gmra.mxu0 %v6392
  %v6504 = vpop.f32.mrf.mxu0
  %v6505 = vadd.f32 0.0, %v6504
  %6506 = vmatmul.f32.gmra.mxu0 %v6395
  %v6507 = vpop.f32.mrf.mxu0
  %v6508 = vadd.f32 0.0, %v6507
  %6509 = vmatmul.f32.gmra.mxu0 %v6398
  %v6510 = vpop.f32.mrf.mxu0
  %v6511 = vadd.f32 0.0, %v6510
  %6512 = vmatmul.f32.gmra.mxu0 %v6401
  %v6513 = vpop.f32.mrf.mxu0
  %v6514 = vadd.f32 0.0, %v6513
  %6515 = vmatmul.f32.gmra.mxu0 %v6404
  %v6516 = vpop.f32.mrf.mxu0
  %v6517 = vadd.f32 0.0, %v6516
  %6518 = vmatmul.f32.gmra.mxu0 %v6407
  %v6519 = vpop.f32.mrf.mxu0
  %v6520 = vadd.f32 0.0, %v6519
  %6521 = vmatmul.f32.gmra.mxu0 %v6410
  %v6522 = vpop.f32.mrf.mxu0
  %v6523 = vadd.f32 0.0, %v6522
  %6524 = vmatmul.f32.gmra.mxu0 %v6413
  %v6525 = vpop.f32.mrf.mxu0
  %v6526 = vadd.f32 0.0, %v6525
  %6527 = vmatmul.f32.gmra.mxu0 %v6416
  %v6528 = vpop.f32.mrf.mxu0
  %v6529 = vadd.f32 0.0, %v6528
  %6530 = vmatmul.f32.gmra.mxu0 %v6419
  %v6531 = vpop.f32.mrf.mxu0
  %v6532 = vadd.f32 0.0, %v6531
  %6533 = vmatmul.f32.gmra.mxu0 %v6422
  %v6534 = vpop.f32.mrf.mxu0
  %v6535 = vadd.f32 0.0, %v6534
  %6536 = vmatmul.f32.gmra.mxu0 %v6425
  %v6537 = vpop.f32.mrf.mxu0
  %v6538 = vadd.f32 0.0, %v6537
  %6539 = vmatmul.f32.gmra.mxu0 %v6428
  %v6540 = vpop.f32.mrf.mxu0
  %v6541 = vadd.f32 0.0, %v6540
  %6542 = vmatmul.f32.gmra.mxu0 %v6431
  %v6543 = vpop.f32.mrf.mxu0
  %v6544 = vadd.f32 0.0, %v6543
  %6545 = vmatmul.f32.gmra.mxu0 %v6434
  %v6546 = vpop.f32.mrf.mxu0
  %v6547 = vadd.f32 0.0, %v6546
  %6548 = vmatmul.f32.gmra.mxu0 %v6437
  %v6549 = vpop.f32.mrf.mxu0
  %v6550 = vadd.f32 0.0, %v6549
  %6551 = vmatmul.f32.gmra.mxu0 %v6440
  %v6552 = vpop.f32.mrf.mxu0
  %v6553 = vadd.f32 0.0, %v6552
  %6554 = vmatmul.f32.gmra.mxu0 %v6443
  %v6555 = vpop.f32.mrf.mxu0
  %v6556 = vadd.f32 0.0, %v6555
  %6557 = vmatmul.f32.gmra.mxu0 %v6446
  %v6558 = vpop.f32.mrf.mxu0
  %v6559 = vadd.f32 0.0, %v6558
  %6560 = vdwg.mxu0
  %v6561 = vadd.f32 %v6255, %v6466
  %v6562 = vadd.f32 %v6256, %v6469
  %v6563 = vadd.f32 %v6257, %v6472
  %v6564 = vadd.f32 %v6258, %v6475
  %v6565 = vadd.f32 %v6259, %v6478
  %v6566 = vadd.f32 %v6260, %v6481
  %v6567 = vadd.f32 %v6261, %v6484
  %v6568 = vadd.f32 %v6262, %v6487
  %v6569 = vadd.f32 %v6263, %v6490
  %v6570 = vadd.f32 %v6264, %v6493
  %v6571 = vadd.f32 %v6265, %v6496
  %v6572 = vadd.f32 %v6266, %v6499
  %v6573 = vadd.f32 %v6267, %v6502
  %v6574 = vadd.f32 %v6268, %v6505
  %v6575 = vadd.f32 %v6269, %v6508
  %v6576 = vadd.f32 %v6270, %v6511
  %v6577 = vadd.f32 %v6271, %v6514
  %v6578 = vadd.f32 %v6272, %v6517
  %v6579 = vadd.f32 %v6273, %v6520
  %v6580 = vadd.f32 %v6274, %v6523
  %v6581 = vadd.f32 %v6275, %v6526
  %v6582 = vadd.f32 %v6276, %v6529
  %v6583 = vadd.f32 %v6277, %v6532
  %v6584 = vadd.f32 %v6278, %v6535
  %v6585 = vadd.f32 %v6279, %v6538
  %v6586 = vadd.f32 %v6280, %v6541
  %v6587 = vadd.f32 %v6281, %v6544
  %v6588 = vadd.f32 %v6282, %v6547
  %v6589 = vadd.f32 %v6283, %v6550
  %v6590 = vadd.f32 %v6284, %v6553
  %v6591 = vadd.f32 %v6285, %v6556
  %v6592 = vadd.f32 %v6286, %v6559
  %v6593 = vld [vmem:[%s12] sm:$0x1]
  %v6595 = vperm.slane %v6593, 0
  %v6597 = vadd.f32 %v6561, %v6595
  %v6598 = vadd.f32 %v6562, %v6595
  %v6599 = vadd.f32 %v6563, %v6595
  %v6600 = vadd.f32 %v6564, %v6595
  %v6601 = vadd.f32 %v6565, %v6595
  %v6602 = vadd.f32 %v6566, %v6595
  %v6603 = vadd.f32 %v6567, %v6595
  %v6604 = vadd.f32 %v6568, %v6595
  %v6605 = vadd.f32 %v6569, %v6595
  %v6606 = vadd.f32 %v6570, %v6595
  %v6607 = vadd.f32 %v6571, %v6595
  %v6608 = vadd.f32 %v6572, %v6595
  %v6609 = vadd.f32 %v6573, %v6595
  %v6610 = vadd.f32 %v6574, %v6595
  %v6611 = vadd.f32 %v6575, %v6595
  %v6612 = vadd.f32 %v6576, %v6595
  %v6613 = vadd.f32 %v6577, %v6595
  %v6614 = vadd.f32 %v6578, %v6595
  %v6615 = vadd.f32 %v6579, %v6595
  %v6616 = vadd.f32 %v6580, %v6595
  %v6617 = vadd.f32 %v6581, %v6595
  %v6618 = vadd.f32 %v6582, %v6595
  %v6619 = vadd.f32 %v6583, %v6595
  %v6620 = vadd.f32 %v6584, %v6595
  %v6621 = vadd.f32 %v6585, %v6595
  %v6622 = vadd.f32 %v6586, %v6595
  %v6623 = vadd.f32 %v6587, %v6595
  %v6624 = vadd.f32 %v6588, %v6595
  %v6625 = vadd.f32 %v6589, %v6595
  %v6626 = vadd.f32 %v6590, %v6595
  %v6627 = vadd.f32 %v6591, %v6595
  %v6628 = vadd.f32 %v6592, %v6595
  %v6629 = vxor.u32 %v6597, 2147483648
  %v6630 = vxor.u32 %v6598, 2147483648
  %v6631 = vxor.u32 %v6599, 2147483648
  %v6632 = vxor.u32 %v6600, 2147483648
  %v6633 = vxor.u32 %v6601, 2147483648
  %v6634 = vxor.u32 %v6602, 2147483648
  %v6635 = vxor.u32 %v6603, 2147483648
  %v6636 = vxor.u32 %v6604, 2147483648
  %v6637 = vxor.u32 %v6605, 2147483648
  %v6638 = vxor.u32 %v6606, 2147483648
  %v6639 = vxor.u32 %v6607, 2147483648
  %v6640 = vxor.u32 %v6608, 2147483648
  %v6641 = vxor.u32 %v6609, 2147483648
  %v6642 = vxor.u32 %v6610, 2147483648
  %v6643 = vxor.u32 %v6611, 2147483648
  %v6644 = vxor.u32 %v6612, 2147483648
  %v6645 = vxor.u32 %v6613, 2147483648
  %v6646 = vxor.u32 %v6614, 2147483648
  %v6647 = vxor.u32 %v6615, 2147483648
  %v6648 = vxor.u32 %v6616, 2147483648
  %v6649 = vxor.u32 %v6617, 2147483648
  %v6650 = vxor.u32 %v6618, 2147483648
  %v6651 = vxor.u32 %v6619, 2147483648
  %v6652 = vxor.u32 %v6620, 2147483648
  %v6653 = vxor.u32 %v6621, 2147483648
  %v6654 = vxor.u32 %v6622, 2147483648
  %v6655 = vxor.u32 %v6623, 2147483648
  %v6656 = vxor.u32 %v6624, 2147483648
  %v6657 = vxor.u32 %v6625, 2147483648
  %v6658 = vxor.u32 %v6626, 2147483648
  %v6659 = vxor.u32 %v6627, 2147483648
  %v6660 = vxor.u32 %v6628, 2147483648
  %v6661 = vmul.f32 %v6629, 1.442695
  %v6662 = vpow.pop %v6661
  %v6663 = vmul.f32 %v6630, 1.442695
  %v6664 = vpow.pop %v6663
  %v6665 = vmul.f32 %v6631, 1.442695
  %v6666 = vpow.pop %v6665
  %v6667 = vmul.f32 %v6632, 1.442695
  %v6668 = vpow.pop %v6667
  %v6669 = vmul.f32 %v6633, 1.442695
  %v6670 = vpow.pop %v6669
  %v6671 = vmul.f32 %v6634, 1.442695
  %v6672 = vpow.pop %v6671
  %v6673 = vmul.f32 %v6635, 1.442695
  %v6674 = vpow.pop %v6673
  %v6675 = vmul.f32 %v6636, 1.442695
  %v6676 = vpow.pop %v6675
  %v6677 = vmul.f32 %v6637, 1.442695
  %v6678 = vpow.pop %v6677
  %v6679 = vmul.f32 %v6638, 1.442695
  %v6680 = vpow.pop %v6679
  %v6681 = vmul.f32 %v6639, 1.442695
  %v6682 = vpow.pop %v6681
  %v6683 = vmul.f32 %v6640, 1.442695
  %v6684 = vpow.pop %v6683
  %v6685 = vmul.f32 %v6641, 1.442695
  %v6686 = vpow.pop %v6685
  %v6687 = vmul.f32 %v6642, 1.442695
  %v6688 = vpow.pop %v6687
  %v6689 = vmul.f32 %v6643, 1.442695
  %v6690 = vpow.pop %v6689
  %v6691 = vmul.f32 %v6644, 1.442695
  %v6692 = vpow.pop %v6691
  %v6693 = vmul.f32 %v6645, 1.442695
  %v6694 = vpow.pop %v6693
  %v6695 = vmul.f32 %v6646, 1.442695
  %v6696 = vpow.pop %v6695
  %v6697 = vmul.f32 %v6647, 1.442695
  %v6698 = vpow.pop %v6697
  %v6699 = vmul.f32 %v6648, 1.442695
  %v6700 = vpow.pop %v6699
  %v6701 = vmul.f32 %v6649, 1.442695
  %v6702 = vpow.pop %v6701
  %v6703 = vmul.f32 %v6650, 1.442695
  %v6704 = vpow.pop %v6703
  %v6705 = vmul.f32 %v6651, 1.442695
  %v6706 = vpow.pop %v6705
  %v6707 = vmul.f32 %v6652, 1.442695
  %v6708 = vpow.pop %v6707
  %v6709 = vmul.f32 %v6653, 1.442695
  %v6710 = vpow.pop %v6709
  %v6711 = vmul.f32 %v6654, 1.442695
  %v6712 = vpow.pop %v6711
  %v6713 = vmul.f32 %v6655, 1.442695
  %v6714 = vpow.pop %v6713
  %v6715 = vmul.f32 %v6656, 1.442695
  %v6716 = vpow.pop %v6715
  %v6717 = vmul.f32 %v6657, 1.442695
  %v6718 = vpow.pop %v6717
  %v6719 = vmul.f32 %v6658, 1.442695
  %v6720 = vpow.pop %v6719
  %v6721 = vmul.f32 %v6659, 1.442695
  %v6722 = vpow.pop %v6721
  %v6723 = vmul.f32 %v6660, 1.442695
  %v6724 = vpow.pop %v6723
  %v6725 = vadd.f32 %v6662, 1.0
  %v6726 = vadd.f32 %v6664, 1.0
  %v6727 = vadd.f32 %v6666, 1.0
  %v6728 = vadd.f32 %v6668, 1.0
  %v6729 = vadd.f32 %v6670, 1.0
  %v6730 = vadd.f32 %v6672, 1.0
  %v6731 = vadd.f32 %v6674, 1.0
  %v6732 = vadd.f32 %v6676, 1.0
  %v6733 = vadd.f32 %v6678, 1.0
  %v6734 = vadd.f32 %v6680, 1.0
  %v6735 = vadd.f32 %v6682, 1.0
  %v6736 = vadd.f32 %v6684, 1.0
  %v6737 = vadd.f32 %v6686, 1.0
  %v6738 = vadd.f32 %v6688, 1.0
  %v6739 = vadd.f32 %v6690, 1.0
  %v6740 = vadd.f32 %v6692, 1.0
  %v6741 = vadd.f32 %v6694, 1.0
  %v6742 = vadd.f32 %v6696, 1.0
  %v6743 = vadd.f32 %v6698, 1.0
  %v6744 = vadd.f32 %v6700, 1.0
  %v6745 = vadd.f32 %v6702, 1.0
  %v6746 = vadd.f32 %v6704, 1.0
  %v6747 = vadd.f32 %v6706, 1.0
  %v6748 = vadd.f32 %v6708, 1.0
  %v6749 = vadd.f32 %v6710, 1.0
  %v6750 = vadd.f32 %v6712, 1.0
  %v6751 = vadd.f32 %v6714, 1.0
  %v6752 = vadd.f32 %v6716, 1.0
  %v6753 = vadd.f32 %v6718, 1.0
  %v6754 = vadd.f32 %v6720, 1.0
  %v6755 = vadd.f32 %v6722, 1.0
  %v6756 = vadd.f32 %v6724, 1.0
  %v6757 = vrcp.pop %v6725
  %v6758 = vmul.f32 %v6725, %v6757
  %v6759 = vsub.f32 1.0, %v6758
  %v6760 = vmul.f32 %v6757, %v6759
  %v6761 = vadd.f32 %v6757, %v6760
  %vm6762 = vweird.f32 %v6725
  %vm6763 = vweird.f32 %v6757
  %vm6764 = vmor %vm6762, %vm6763
  %v6765 = vsel %vm6764, %v6757, %v6761
  %v6766 = vand.u32 2147483647, %v6725
  %vm6767 = vcmp.eq.f32.partialorder %v6766, 8.507059e+37
  %v6768 = vand.u32 %v6725, 2147483648
  %v6769 = vor.u32 1.1754944e-38, %v6768
  %v6770 = vsel %vm6767, %v6769, %v6765
  %v6771 = vmul.f32 1.0, %v6770
  %v6772 = vrcp.pop %v6726
  %v6773 = vmul.f32 %v6726, %v6772
  %v6774 = vsub.f32 1.0, %v6773
  %v6775 = vmul.f32 %v6772, %v6774
  %v6776 = vadd.f32 %v6772, %v6775
  %vm6777 = vweird.f32 %v6726
  %vm6778 = vweird.f32 %v6772
  %vm6779 = vmor %vm6777, %vm6778
  %v6780 = vsel %vm6779, %v6772, %v6776
  %v6781 = vand.u32 2147483647, %v6726
  %vm6782 = vcmp.eq.f32.partialorder %v6781, 8.507059e+37
  %v6783 = vand.u32 %v6726, 2147483648
  %v6784 = vor.u32 1.1754944e-38, %v6783
  %v6785 = vsel %vm6782, %v6784, %v6780
  %v6786 = vmul.f32 1.0, %v6785
  %v6787 = vrcp.pop %v6727
  %v6788 = vmul.f32 %v6727, %v6787
  %v6789 = vsub.f32 1.0, %v6788
  %v6790 = vmul.f32 %v6787, %v6789
  %v6791 = vadd.f32 %v6787, %v6790
  %vm6792 = vweird.f32 %v6727
  %vm6793 = vweird.f32 %v6787
  %vm6794 = vmor %vm6792, %vm6793
  %v6795 = vsel %vm6794, %v6787, %v6791
  %v6796 = vand.u32 2147483647, %v6727
  %vm6797 = vcmp.eq.f32.partialorder %v6796, 8.507059e+37
  %v6798 = vand.u32 %v6727, 2147483648
  %v6799 = vor.u32 1.1754944e-38, %v6798
  %v6800 = vsel %vm6797, %v6799, %v6795
  %v6801 = vmul.f32 1.0, %v6800
  %v6802 = vrcp.pop %v6728
  %v6803 = vmul.f32 %v6728, %v6802
  %v6804 = vsub.f32 1.0, %v6803
  %v6805 = vmul.f32 %v6802, %v6804
  %v6806 = vadd.f32 %v6802, %v6805
  %vm6807 = vweird.f32 %v6728
  %vm6808 = vweird.f32 %v6802
  %vm6809 = vmor %vm6807, %vm6808
  %v6810 = vsel %vm6809, %v6802, %v6806
  %v6811 = vand.u32 2147483647, %v6728
  %vm6812 = vcmp.eq.f32.partialorder %v6811, 8.507059e+37
  %v6813 = vand.u32 %v6728, 2147483648
  %v6814 = vor.u32 1.1754944e-38, %v6813
  %v6815 = vsel %vm6812, %v6814, %v6810
  %v6816 = vmul.f32 1.0, %v6815
  %v6817 = vrcp.pop %v6729
  %v6818 = vmul.f32 %v6729, %v6817
  %v6819 = vsub.f32 1.0, %v6818
  %v6820 = vmul.f32 %v6817, %v6819
  %v6821 = vadd.f32 %v6817, %v6820
  %vm6822 = vweird.f32 %v6729
  %vm6823 = vweird.f32 %v6817
  %vm6824 = vmor %vm6822, %vm6823
  %v6825 = vsel %vm6824, %v6817, %v6821
  %v6826 = vand.u32 2147483647, %v6729
  %vm6827 = vcmp.eq.f32.partialorder %v6826, 8.507059e+37
  %v6828 = vand.u32 %v6729, 2147483648
  %v6829 = vor.u32 1.1754944e-38, %v6828
  %v6830 = vsel %vm6827, %v6829, %v6825
  %v6831 = vmul.f32 1.0, %v6830
  %v6832 = vrcp.pop %v6730
  %v6833 = vmul.f32 %v6730, %v6832
  %v6834 = vsub.f32 1.0, %v6833
  %v6835 = vmul.f32 %v6832, %v6834
  %v6836 = vadd.f32 %v6832, %v6835
  %vm6837 = vweird.f32 %v6730
  %vm6838 = vweird.f32 %v6832
  %vm6839 = vmor %vm6837, %vm6838
  %v6840 = vsel %vm6839, %v6832, %v6836
  %v6841 = vand.u32 2147483647, %v6730
  %vm6842 = vcmp.eq.f32.partialorder %v6841, 8.507059e+37
  %v6843 = vand.u32 %v6730, 2147483648
  %v6844 = vor.u32 1.1754944e-38, %v6843
  %v6845 = vsel %vm6842, %v6844, %v6840
  %v6846 = vmul.f32 1.0, %v6845
  %v6847 = vrcp.pop %v6731
  %v6848 = vmul.f32 %v6731, %v6847
  %v6849 = vsub.f32 1.0, %v6848
  %v6850 = vmul.f32 %v6847, %v6849
  %v6851 = vadd.f32 %v6847, %v6850
  %vm6852 = vweird.f32 %v6731
  %vm6853 = vweird.f32 %v6847
  %vm6854 = vmor %vm6852, %vm6853
  %v6855 = vsel %vm6854, %v6847, %v6851
  %v6856 = vand.u32 2147483647, %v6731
  %vm6857 = vcmp.eq.f32.partialorder %v6856, 8.507059e+37
  %v6858 = vand.u32 %v6731, 2147483648
  %v6859 = vor.u32 1.1754944e-38, %v6858
  %v6860 = vsel %vm6857, %v6859, %v6855
  %v6861 = vmul.f32 1.0, %v6860
  %v6862 = vrcp.pop %v6732
  %v6863 = vmul.f32 %v6732, %v6862
  %v6864 = vsub.f32 1.0, %v6863
  %v6865 = vmul.f32 %v6862, %v6864
  %v6866 = vadd.f32 %v6862, %v6865
  %vm6867 = vweird.f32 %v6732
  %vm6868 = vweird.f32 %v6862
  %vm6869 = vmor %vm6867, %vm6868
  %v6870 = vsel %vm6869, %v6862, %v6866
  %v6871 = vand.u32 2147483647, %v6732
  %vm6872 = vcmp.eq.f32.partialorder %v6871, 8.507059e+37
  %v6873 = vand.u32 %v6732, 2147483648
  %v6874 = vor.u32 1.1754944e-38, %v6873
  %v6875 = vsel %vm6872, %v6874, %v6870
  %v6876 = vmul.f32 1.0, %v6875
  %v6877 = vrcp.pop %v6733
  %v6878 = vmul.f32 %v6733, %v6877
  %v6879 = vsub.f32 1.0, %v6878
  %v6880 = vmul.f32 %v6877, %v6879
  %v6881 = vadd.f32 %v6877, %v6880
  %vm6882 = vweird.f32 %v6733
  %vm6883 = vweird.f32 %v6877
  %vm6884 = vmor %vm6882, %vm6883
  %v6885 = vsel %vm6884, %v6877, %v6881
  %v6886 = vand.u32 2147483647, %v6733
  %vm6887 = vcmp.eq.f32.partialorder %v6886, 8.507059e+37
  %v6888 = vand.u32 %v6733, 2147483648
  %v6889 = vor.u32 1.1754944e-38, %v6888
  %v6890 = vsel %vm6887, %v6889, %v6885
  %v6891 = vmul.f32 1.0, %v6890
  %v6892 = vrcp.pop %v6734
  %v6893 = vmul.f32 %v6734, %v6892
  %v6894 = vsub.f32 1.0, %v6893
  %v6895 = vmul.f32 %v6892, %v6894
  %v6896 = vadd.f32 %v6892, %v6895
  %vm6897 = vweird.f32 %v6734
  %vm6898 = vweird.f32 %v6892
  %vm6899 = vmor %vm6897, %vm6898
  %v6900 = vsel %vm6899, %v6892, %v6896
  %v6901 = vand.u32 2147483647, %v6734
  %vm6902 = vcmp.eq.f32.partialorder %v6901, 8.507059e+37
  %v6903 = vand.u32 %v6734, 2147483648
  %v6904 = vor.u32 1.1754944e-38, %v6903
  %v6905 = vsel %vm6902, %v6904, %v6900
  %v6906 = vmul.f32 1.0, %v6905
  %v6907 = vrcp.pop %v6735
  %v6908 = vmul.f32 %v6735, %v6907
  %v6909 = vsub.f32 1.0, %v6908
  %v6910 = vmul.f32 %v6907, %v6909
  %v6911 = vadd.f32 %v6907, %v6910
  %vm6912 = vweird.f32 %v6735
  %vm6913 = vweird.f32 %v6907
  %vm6914 = vmor %vm6912, %vm6913
  %v6915 = vsel %vm6914, %v6907, %v6911
  %v6916 = vand.u32 2147483647, %v6735
  %vm6917 = vcmp.eq.f32.partialorder %v6916, 8.507059e+37
  %v6918 = vand.u32 %v6735, 2147483648
  %v6919 = vor.u32 1.1754944e-38, %v6918
  %v6920 = vsel %vm6917, %v6919, %v6915
  %v6921 = vmul.f32 1.0, %v6920
  %v6922 = vrcp.pop %v6736
  %v6923 = vmul.f32 %v6736, %v6922
  %v6924 = vsub.f32 1.0, %v6923
  %v6925 = vmul.f32 %v6922, %v6924
  %v6926 = vadd.f32 %v6922, %v6925
  %vm6927 = vweird.f32 %v6736
  %vm6928 = vweird.f32 %v6922
  %vm6929 = vmor %vm6927, %vm6928
  %v6930 = vsel %vm6929, %v6922, %v6926
  %v6931 = vand.u32 2147483647, %v6736
  %vm6932 = vcmp.eq.f32.partialorder %v6931, 8.507059e+37
  %v6933 = vand.u32 %v6736, 2147483648
  %v6934 = vor.u32 1.1754944e-38, %v6933
  %v6935 = vsel %vm6932, %v6934, %v6930
  %v6936 = vmul.f32 1.0, %v6935
  %v6937 = vrcp.pop %v6737
  %v6938 = vmul.f32 %v6737, %v6937
  %v6939 = vsub.f32 1.0, %v6938
  %v6940 = vmul.f32 %v6937, %v6939
  %v6941 = vadd.f32 %v6937, %v6940
  %vm6942 = vweird.f32 %v6737
  %vm6943 = vweird.f32 %v6937
  %vm6944 = vmor %vm6942, %vm6943
  %v6945 = vsel %vm6944, %v6937, %v6941
  %v6946 = vand.u32 2147483647, %v6737
  %vm6947 = vcmp.eq.f32.partialorder %v6946, 8.507059e+37
  %v6948 = vand.u32 %v6737, 2147483648
  %v6949 = vor.u32 1.1754944e-38, %v6948
  %v6950 = vsel %vm6947, %v6949, %v6945
  %v6951 = vmul.f32 1.0, %v6950
  %v6952 = vrcp.pop %v6738
  %v6953 = vmul.f32 %v6738, %v6952
  %v6954 = vsub.f32 1.0, %v6953
  %v6955 = vmul.f32 %v6952, %v6954
  %v6956 = vadd.f32 %v6952, %v6955
  %vm6957 = vweird.f32 %v6738
  %vm6958 = vweird.f32 %v6952
  %vm6959 = vmor %vm6957, %vm6958
  %v6960 = vsel %vm6959, %v6952, %v6956
  %v6961 = vand.u32 2147483647, %v6738
  %vm6962 = vcmp.eq.f32.partialorder %v6961, 8.507059e+37
  %v6963 = vand.u32 %v6738, 2147483648
  %v6964 = vor.u32 1.1754944e-38, %v6963
  %v6965 = vsel %vm6962, %v6964, %v6960
  %v6966 = vmul.f32 1.0, %v6965
  %v6967 = vrcp.pop %v6739
  %v6968 = vmul.f32 %v6739, %v6967
  %v6969 = vsub.f32 1.0, %v6968
  %v6970 = vmul.f32 %v6967, %v6969
  %v6971 = vadd.f32 %v6967, %v6970
  %vm6972 = vweird.f32 %v6739
  %vm6973 = vweird.f32 %v6967
  %vm6974 = vmor %vm6972, %vm6973
  %v6975 = vsel %vm6974, %v6967, %v6971
  %v6976 = vand.u32 2147483647, %v6739
  %vm6977 = vcmp.eq.f32.partialorder %v6976, 8.507059e+37
  %v6978 = vand.u32 %v6739, 2147483648
  %v6979 = vor.u32 1.1754944e-38, %v6978
  %v6980 = vsel %vm6977, %v6979, %v6975
  %v6981 = vmul.f32 1.0, %v6980
  %v6982 = vrcp.pop %v6740
  %v6983 = vmul.f32 %v6740, %v6982
  %v6984 = vsub.f32 1.0, %v6983
  %v6985 = vmul.f32 %v6982, %v6984
  %v6986 = vadd.f32 %v6982, %v6985
  %vm6987 = vweird.f32 %v6740
  %vm6988 = vweird.f32 %v6982
  %vm6989 = vmor %vm6987, %vm6988
  %v6990 = vsel %vm6989, %v6982, %v6986
  %v6991 = vand.u32 2147483647, %v6740
  %vm6992 = vcmp.eq.f32.partialorder %v6991, 8.507059e+37
  %v6993 = vand.u32 %v6740, 2147483648
  %v6994 = vor.u32 1.1754944e-38, %v6993
  %v6995 = vsel %vm6992, %v6994, %v6990
  %v6996 = vmul.f32 1.0, %v6995
  %v6997 = vrcp.pop %v6741
  %v6998 = vmul.f32 %v6741, %v6997
  %v6999 = vsub.f32 1.0, %v6998
  %v7000 = vmul.f32 %v6997, %v6999
  %v7001 = vadd.f32 %v6997, %v7000
  %vm7002 = vweird.f32 %v6741
  %vm7003 = vweird.f32 %v6997
  %vm7004 = vmor %vm7002, %vm7003
  %v7005 = vsel %vm7004, %v6997, %v7001
  %v7006 = vand.u32 2147483647, %v6741
  %vm7007 = vcmp.eq.f32.partialorder %v7006, 8.507059e+37
  %v7008 = vand.u32 %v6741, 2147483648
  %v7009 = vor.u32 1.1754944e-38, %v7008
  %v7010 = vsel %vm7007, %v7009, %v7005
  %v7011 = vmul.f32 1.0, %v7010
  %v7012 = vrcp.pop %v6742
  %v7013 = vmul.f32 %v6742, %v7012
  %v7014 = vsub.f32 1.0, %v7013
  %v7015 = vmul.f32 %v7012, %v7014
  %v7016 = vadd.f32 %v7012, %v7015
  %vm7017 = vweird.f32 %v6742
  %vm7018 = vweird.f32 %v7012
  %vm7019 = vmor %vm7017, %vm7018
  %v7020 = vsel %vm7019, %v7012, %v7016
  %v7021 = vand.u32 2147483647, %v6742
  %vm7022 = vcmp.eq.f32.partialorder %v7021, 8.507059e+37
  %v7023 = vand.u32 %v6742, 2147483648
  %v7024 = vor.u32 1.1754944e-38, %v7023
  %v7025 = vsel %vm7022, %v7024, %v7020
  %v7026 = vmul.f32 1.0, %v7025
  %v7027 = vrcp.pop %v6743
  %v7028 = vmul.f32 %v6743, %v7027
  %v7029 = vsub.f32 1.0, %v7028
  %v7030 = vmul.f32 %v7027, %v7029
  %v7031 = vadd.f32 %v7027, %v7030
  %vm7032 = vweird.f32 %v6743
  %vm7033 = vweird.f32 %v7027
  %vm7034 = vmor %vm7032, %vm7033
  %v7035 = vsel %vm7034, %v7027, %v7031
  %v7036 = vand.u32 2147483647, %v6743
  %vm7037 = vcmp.eq.f32.partialorder %v7036, 8.507059e+37
  %v7038 = vand.u32 %v6743, 2147483648
  %v7039 = vor.u32 1.1754944e-38, %v7038
  %v7040 = vsel %vm7037, %v7039, %v7035
  %v7041 = vmul.f32 1.0, %v7040
  %v7042 = vrcp.pop %v6744
  %v7043 = vmul.f32 %v6744, %v7042
  %v7044 = vsub.f32 1.0, %v7043
  %v7045 = vmul.f32 %v7042, %v7044
  %v7046 = vadd.f32 %v7042, %v7045
  %vm7047 = vweird.f32 %v6744
  %vm7048 = vweird.f32 %v7042
  %vm7049 = vmor %vm7047, %vm7048
  %v7050 = vsel %vm7049, %v7042, %v7046
  %v7051 = vand.u32 2147483647, %v6744
  %vm7052 = vcmp.eq.f32.partialorder %v7051, 8.507059e+37
  %v7053 = vand.u32 %v6744, 2147483648
  %v7054 = vor.u32 1.1754944e-38, %v7053
  %v7055 = vsel %vm7052, %v7054, %v7050
  %v7056 = vmul.f32 1.0, %v7055
  %v7057 = vrcp.pop %v6745
  %v7058 = vmul.f32 %v6745, %v7057
  %v7059 = vsub.f32 1.0, %v7058
  %v7060 = vmul.f32 %v7057, %v7059
  %v7061 = vadd.f32 %v7057, %v7060
  %vm7062 = vweird.f32 %v6745
  %vm7063 = vweird.f32 %v7057
  %vm7064 = vmor %vm7062, %vm7063
  %v7065 = vsel %vm7064, %v7057, %v7061
  %v7066 = vand.u32 2147483647, %v6745
  %vm7067 = vcmp.eq.f32.partialorder %v7066, 8.507059e+37
  %v7068 = vand.u32 %v6745, 2147483648
  %v7069 = vor.u32 1.1754944e-38, %v7068
  %v7070 = vsel %vm7067, %v7069, %v7065
  %v7071 = vmul.f32 1.0, %v7070
  %v7072 = vrcp.pop %v6746
  %v7073 = vmul.f32 %v6746, %v7072
  %v7074 = vsub.f32 1.0, %v7073
  %v7075 = vmul.f32 %v7072, %v7074
  %v7076 = vadd.f32 %v7072, %v7075
  %vm7077 = vweird.f32 %v6746
  %vm7078 = vweird.f32 %v7072
  %vm7079 = vmor %vm7077, %vm7078
  %v7080 = vsel %vm7079, %v7072, %v7076
  %v7081 = vand.u32 2147483647, %v6746
  %vm7082 = vcmp.eq.f32.partialorder %v7081, 8.507059e+37
  %v7083 = vand.u32 %v6746, 2147483648
  %v7084 = vor.u32 1.1754944e-38, %v7083
  %v7085 = vsel %vm7082, %v7084, %v7080
  %v7086 = vmul.f32 1.0, %v7085
  %v7087 = vrcp.pop %v6747
  %v7088 = vmul.f32 %v6747, %v7087
  %v7089 = vsub.f32 1.0, %v7088
  %v7090 = vmul.f32 %v7087, %v7089
  %v7091 = vadd.f32 %v7087, %v7090
  %vm7092 = vweird.f32 %v6747
  %vm7093 = vweird.f32 %v7087
  %vm7094 = vmor %vm7092, %vm7093
  %v7095 = vsel %vm7094, %v7087, %v7091
  %v7096 = vand.u32 2147483647, %v6747
  %vm7097 = vcmp.eq.f32.partialorder %v7096, 8.507059e+37
  %v7098 = vand.u32 %v6747, 2147483648
  %v7099 = vor.u32 1.1754944e-38, %v7098
  %v7100 = vsel %vm7097, %v7099, %v7095
  %v7101 = vmul.f32 1.0, %v7100
  %v7102 = vrcp.pop %v6748
  %v7103 = vmul.f32 %v6748, %v7102
  %v7104 = vsub.f32 1.0, %v7103
  %v7105 = vmul.f32 %v7102, %v7104
  %v7106 = vadd.f32 %v7102, %v7105
  %vm7107 = vweird.f32 %v6748
  %vm7108 = vweird.f32 %v7102
  %vm7109 = vmor %vm7107, %vm7108
  %v7110 = vsel %vm7109, %v7102, %v7106
  %v7111 = vand.u32 2147483647, %v6748
  %vm7112 = vcmp.eq.f32.partialorder %v7111, 8.507059e+37
  %v7113 = vand.u32 %v6748, 2147483648
  %v7114 = vor.u32 1.1754944e-38, %v7113
  %v7115 = vsel %vm7112, %v7114, %v7110
  %v7116 = vmul.f32 1.0, %v7115
  %v7117 = vrcp.pop %v6749
  %v7118 = vmul.f32 %v6749, %v7117
  %v7119 = vsub.f32 1.0, %v7118
  %v7120 = vmul.f32 %v7117, %v7119
  %v7121 = vadd.f32 %v7117, %v7120
  %vm7122 = vweird.f32 %v6749
  %vm7123 = vweird.f32 %v7117
  %vm7124 = vmor %vm7122, %vm7123
  %v7125 = vsel %vm7124, %v7117, %v7121
  %v7126 = vand.u32 2147483647, %v6749
  %vm7127 = vcmp.eq.f32.partialorder %v7126, 8.507059e+37
  %v7128 = vand.u32 %v6749, 2147483648
  %v7129 = vor.u32 1.1754944e-38, %v7128
  %v7130 = vsel %vm7127, %v7129, %v7125
  %v7131 = vmul.f32 1.0, %v7130
  %v7132 = vrcp.pop %v6750
  %v7133 = vmul.f32 %v6750, %v7132
  %v7134 = vsub.f32 1.0, %v7133
  %v7135 = vmul.f32 %v7132, %v7134
  %v7136 = vadd.f32 %v7132, %v7135
  %vm7137 = vweird.f32 %v6750
  %vm7138 = vweird.f32 %v7132
  %vm7139 = vmor %vm7137, %vm7138
  %v7140 = vsel %vm7139, %v7132, %v7136
  %v7141 = vand.u32 2147483647, %v6750
  %vm7142 = vcmp.eq.f32.partialorder %v7141, 8.507059e+37
  %v7143 = vand.u32 %v6750, 2147483648
  %v7144 = vor.u32 1.1754944e-38, %v7143
  %v7145 = vsel %vm7142, %v7144, %v7140
  %v7146 = vmul.f32 1.0, %v7145
  %v7147 = vrcp.pop %v6751
  %v7148 = vmul.f32 %v6751, %v7147
  %v7149 = vsub.f32 1.0, %v7148
  %v7150 = vmul.f32 %v7147, %v7149
  %v7151 = vadd.f32 %v7147, %v7150
  %vm7152 = vweird.f32 %v6751
  %vm7153 = vweird.f32 %v7147
  %vm7154 = vmor %vm7152, %vm7153
  %v7155 = vsel %vm7154, %v7147, %v7151
  %v7156 = vand.u32 2147483647, %v6751
  %vm7157 = vcmp.eq.f32.partialorder %v7156, 8.507059e+37
  %v7158 = vand.u32 %v6751, 2147483648
  %v7159 = vor.u32 1.1754944e-38, %v7158
  %v7160 = vsel %vm7157, %v7159, %v7155
  %v7161 = vmul.f32 1.0, %v7160
  %v7162 = vrcp.pop %v6752
  %v7163 = vmul.f32 %v6752, %v7162
  %v7164 = vsub.f32 1.0, %v7163
  %v7165 = vmul.f32 %v7162, %v7164
  %v7166 = vadd.f32 %v7162, %v7165
  %vm7167 = vweird.f32 %v6752
  %vm7168 = vweird.f32 %v7162
  %vm7169 = vmor %vm7167, %vm7168
  %v7170 = vsel %vm7169, %v7162, %v7166
  %v7171 = vand.u32 2147483647, %v6752
  %vm7172 = vcmp.eq.f32.partialorder %v7171, 8.507059e+37
  %v7173 = vand.u32 %v6752, 2147483648
  %v7174 = vor.u32 1.1754944e-38, %v7173
  %v7175 = vsel %vm7172, %v7174, %v7170
  %v7176 = vmul.f32 1.0, %v7175
  %v7177 = vrcp.pop %v6753
  %v7178 = vmul.f32 %v6753, %v7177
  %v7179 = vsub.f32 1.0, %v7178
  %v7180 = vmul.f32 %v7177, %v7179
  %v7181 = vadd.f32 %v7177, %v7180
  %vm7182 = vweird.f32 %v6753
  %vm7183 = vweird.f32 %v7177
  %vm7184 = vmor %vm7182, %vm7183
  %v7185 = vsel %vm7184, %v7177, %v7181
  %v7186 = vand.u32 2147483647, %v6753
  %vm7187 = vcmp.eq.f32.partialorder %v7186, 8.507059e+37
  %v7188 = vand.u32 %v6753, 2147483648
  %v7189 = vor.u32 1.1754944e-38, %v7188
  %v7190 = vsel %vm7187, %v7189, %v7185
  %v7191 = vmul.f32 1.0, %v7190
  %v7192 = vrcp.pop %v6754
  %v7193 = vmul.f32 %v6754, %v7192
  %v7194 = vsub.f32 1.0, %v7193
  %v7195 = vmul.f32 %v7192, %v7194
  %v7196 = vadd.f32 %v7192, %v7195
  %vm7197 = vweird.f32 %v6754
  %vm7198 = vweird.f32 %v7192
  %vm7199 = vmor %vm7197, %vm7198
  %v7200 = vsel %vm7199, %v7192, %v7196
  %v7201 = vand.u32 2147483647, %v6754
  %vm7202 = vcmp.eq.f32.partialorder %v7201, 8.507059e+37
  %v7203 = vand.u32 %v6754, 2147483648
  %v7204 = vor.u32 1.1754944e-38, %v7203
  %v7205 = vsel %vm7202, %v7204, %v7200
  %v7206 = vmul.f32 1.0, %v7205
  %v7207 = vrcp.pop %v6755
  %v7208 = vmul.f32 %v6755, %v7207
  %v7209 = vsub.f32 1.0, %v7208
  %v7210 = vmul.f32 %v7207, %v7209
  %v7211 = vadd.f32 %v7207, %v7210
  %vm7212 = vweird.f32 %v6755
  %vm7213 = vweird.f32 %v7207
  %vm7214 = vmor %vm7212, %vm7213
  %v7215 = vsel %vm7214, %v7207, %v7211
  %v7216 = vand.u32 2147483647, %v6755
  %vm7217 = vcmp.eq.f32.partialorder %v7216, 8.507059e+37
  %v7218 = vand.u32 %v6755, 2147483648
  %v7219 = vor.u32 1.1754944e-38, %v7218
  %v7220 = vsel %vm7217, %v7219, %v7215
  %v7221 = vmul.f32 1.0, %v7220
  %v7222 = vrcp.pop %v6756
  %v7223 = vmul.f32 %v6756, %v7222
  %v7224 = vsub.f32 1.0, %v7223
  %v7225 = vmul.f32 %v7222, %v7224
  %v7226 = vadd.f32 %v7222, %v7225
  %vm7227 = vweird.f32 %v6756
  %vm7228 = vweird.f32 %v7222
  %vm7229 = vmor %vm7227, %vm7228
  %v7230 = vsel %vm7229, %v7222, %v7226
  %v7231 = vand.u32 2147483647, %v6756
  %vm7232 = vcmp.eq.f32.partialorder %v7231, 8.507059e+37
  %v7233 = vand.u32 %v6756, 2147483648
  %v7234 = vor.u32 1.1754944e-38, %v7233
  %v7235 = vsel %vm7232, %v7234, %v7230
  %v7236 = vmul.f32 1.0, %v7235
  %7237 = vst [vmem:[%s13] sm:$0xff] %v6771
  %7238 = vst [vmem:[%s13 + $0x8] sm:$0xff] %v6786
  %7239 = vst [vmem:[%s13 + $0x10] sm:$0xff] %v6801
  %7240 = vst [vmem:[%s13 + $0x18] sm:$0xff] %v6816
  %7241 = vst [vmem:[%s13 + $0x20] sm:$0xff] %v6831
  %7242 = vst [vmem:[%s13 + $0x28] sm:$0xff] %v6846
  %7243 = vst [vmem:[%s13 + $0x30] sm:$0xff] %v6861
  %7244 = vst [vmem:[%s13 + $0x38] sm:$0xff] %v6876
  %7245 = vst [vmem:[%s13 + $0x40] sm:$0xff] %v6891
  %7246 = vst [vmem:[%s13 + $0x48] sm:$0xff] %v6906
  %7247 = vst [vmem:[%s13 + $0x50] sm:$0xff] %v6921
  %7248 = vst [vmem:[%s13 + $0x58] sm:$0xff] %v6936
  %7249 = vst [vmem:[%s13 + $0x60] sm:$0xff] %v6951
  %7250 = vst [vmem:[%s13 + $0x68] sm:$0xff] %v6966
  %7251 = vst [vmem:[%s13 + $0x70] sm:$0xff] %v6981
  %7252 = vst [vmem:[%s13 + $0x78] sm:$0xff] %v6996
  %7253 = vst [vmem:[%s13 + $0x80] sm:$0xff] %v7011
  %7254 = vst [vmem:[%s13 + $0x88] sm:$0xff] %v7026
  %7255 = vst [vmem:[%s13 + $0x90] sm:$0xff] %v7041
  %7256 = vst [vmem:[%s13 + $0x98] sm:$0xff] %v7056
  %7257 = vst [vmem:[%s13 + $0xa0] sm:$0xff] %v7071
  %7258 = vst [vmem:[%s13 + $0xa8] sm:$0xff] %v7086
  %7259 = vst [vmem:[%s13 + $0xb0] sm:$0xff] %v7101
  %7260 = vst [vmem:[%s13 + $0xb8] sm:$0xff] %v7116
  %7261 = vst [vmem:[%s13 + $0xc0] sm:$0xff] %v7131
  %7262 = vst [vmem:[%s13 + $0xc8] sm:$0xff] %v7146
  %7263 = vst [vmem:[%s13 + $0xd0] sm:$0xff] %v7161
  %7264 = vst [vmem:[%s13 + $0xd8] sm:$0xff] %v7176
  %7265 = vst [vmem:[%s13 + $0xe0] sm:$0xff] %v7191
  %7266 = vst [vmem:[%s13 + $0xe8] sm:$0xff] %v7206
  %7267 = vst [vmem:[%s13 + $0xf0] sm:$0xff] %v7221
  %7268 = vst [vmem:[%s13 + $0xf8] sm:$0xff] %v7236
  // Predicated region
  $region54: #{autoencoder_forward.1} parent=0 // pred_check
    _
  $region55: #{autoencoder_forward.1} parent=0 // pred_check_branch
    %7270 = sbr.rel (0) target = $region57
  $region56: #{autoencoder_forward.1} parent=0 // pred_region
    _
  $region57: #{autoencoder_forward.1} parent=0 // pred_fallthru
    _
  // Predicated region
  $region58: #{autoencoder_forward.1} parent=0 // pred_check
    _
  $region59: #{autoencoder_forward.1} parent=0 // pred_check_branch
    %7272 = sbr.rel (0) target = $region61
  $region60: #{autoencoder_forward.1} parent=0 // pred_region
    _
  $region61: #{autoencoder_forward.1} parent=0 // pred_fallthru
    _

</llo_original>
